<compile_context>
chip_gen: v7x
topology: tpu7x:2x2x1
jax: 0.10.0
libtpu: 0.0.40
codegen_flags: <defaults>
</compile_context>

<pallas_src>
import functools
import numpy as np

import jax
import jax.numpy as jnp
from jax.experimental import pallas as pl
from jax.experimental.pallas import tpu as pltpu


# ---------------------------------------------------------------------------
# Fused Pallas kernel: QKV conv -> windowed attention -> output projection
# ---------------------------------------------------------------------------
def _fused_attn_kernel(xw_ref, wqkv_ref, bqkv_ref, wp_ref, bp_ref, tab_ref,
                       o_ref, scr_ref, *, nh, dk, n_pairs, pw):
    C = nh * dk

    # ---- phase 1: fused q/kv 1x1 conv (shift + qk-scale pre-folded into W) ----
    x = xw_ref[0]                                            # (Cin2, S) bf16
    qkv = jax.lax.dot_general(
        wqkv_ref[...], x, (((1,), (0,)), ((), ())),
        preferred_element_type=jnp.float32)                  # (3C, S) f32
    scr_ref[...] = (qkv + bqkv_ref[...]).astype(jnp.bfloat16)

    # ---- phase 2: attention + projection per (window-pair, head) ----
    for pr in range(n_pairs):
        c0, c1 = pr * pw, (pr + 1) * pw
        ya = jnp.zeros((C, pw), jnp.float32)   # proj partial: heads [0, nh/2)
        yb = jnp.zeros((C, pw), jnp.float32)   # proj partial: heads [nh/2, nh)
        for h in range(nh):
            q = scr_ref[dk * h:dk * (h + 1), c0:c1]                  # (dk, pw) bf16
            k = scr_ref[C + dk * h:C + dk * (h + 1), c0:c1]
            v = scr_ref[2 * C + dk * h:2 * C + dk * (h + 1), c0:c1]

            # scores stored transposed: st[s, t] = sum_c k[c, s] * q[c, t]
            st = jax.lax.dot_general(
                k, q, (((0,), (0,)), ((), ())),
                preferred_element_type=jnp.float32)                  # (pw, pw) f32
            st = st + tab_ref[h, pr]   # rel-pos bias + shift mask + pair mask

            # numerically stable softmax over s (axis 0); normalization deferred
            st = st - jnp.max(st, axis=0, keepdims=True)
            e = jnp.exp(st)
            den = jnp.sum(e, axis=0, keepdims=True)                  # (1, pw)
            pe = e.astype(jnp.bfloat16)

            # out[c, t] = (sum_s v[c, s] * pe[s, t]) / den[t]
            o = jax.lax.dot_general(
                v, pe, (((1,), (0,)), ((), ())),
                preferred_element_type=jnp.float32)                  # (dk, pw)
            o = o * pl.reciprocal(den, approx=True)

            # fused output projection, split by channel half (reverse-shift fold)
            contrib = jax.lax.dot_general(
                wp_ref[h], o.astype(jnp.bfloat16), (((1,), (0,)), ((), ())),
                preferred_element_type=jnp.float32)                  # (C, pw)
            if h < nh // 2:
                ya = ya + contrib
            else:
                yb = yb + contrib

        # lane-dense (128-wide), tile-aligned stores
        o_ref[0, 0, :, c0:c1] = (ya + bp_ref[...]).astype(o_ref.dtype)
        o_ref[0, 1, :, c0:c1] = yb.astype(o_ref.dtype)


def double_window_attention_pallas(x, prep, cfg):
    B, C, H, W = x.shape
    ws = cfg["window_size"]
    shift = cfg["shift_size"]
    nh = cfg["num_heads"]
    dk = C // nh
    L = ws * ws
    Hn, Wn = H // ws, W // ws
    nW = Hn * Wn
    S = nW * L
    pair = prep["pair"]
    n_pairs = nW // pair
    pw = pair * L

    # -- pre: fold the (-shift,-shift) roll into doubled input channels and
    #    window-partition once (thin XLA reshuffle, ~0.1 MB).
    if shift > 0:
        x2 = jnp.concatenate(
            [x, jnp.roll(x, shift=(-shift, -shift), axis=(2, 3))], axis=1)
    else:
        x2 = x
    cin2 = x2.shape[1]
    xw = x2.reshape(B, cin2, Hn, ws, Wn, ws)
    xw = jnp.transpose(xw, (0, 1, 2, 4, 3, 5)).reshape(B, cin2, S)
    xw = xw.astype(jnp.bfloat16)

    kern = functools.partial(_fused_attn_kernel, nh=nh, dk=dk,
                             n_pairs=n_pairs, pw=pw)
    out = pl.pallas_call(
        kern,
        out_shape=jax.ShapeDtypeStruct((B, 2, C, S), jnp.float32),
        grid=(B,),
        in_specs=[
            pl.BlockSpec((1, cin2, S), lambda b: (b, 0, 0)),
            pl.BlockSpec((3 * C, cin2), lambda b: (0, 0)),        # fetched once
            pl.BlockSpec((3 * C, 1), lambda b: (0, 0)),
            pl.BlockSpec((nh, C, dk), lambda b: (0, 0, 0)),
            pl.BlockSpec((C, 1), lambda b: (0, 0)),
            pl.BlockSpec((nh, n_pairs, pw, pw), lambda b: (0, 0, 0, 0)),
        ],
        out_specs=pl.BlockSpec((1, 2, C, S), lambda b: (b, 0, 0, 0)),
        scratch_shapes=[pltpu.VMEM((3 * C, S), jnp.bfloat16)],
        compiler_params=pltpu.CompilerParams(
            dimension_semantics=("parallel",),
            vmem_limit_bytes=16 * 1024 * 1024,
        ),
    )(xw, prep["w_qkv"], prep["b_qkv"], prep["w_proj"], prep["b_proj"],
      prep["table"])

    # -- post: window reverse + reverse half-channel shift + combine
    y = out.reshape(B, 2, C, Hn, Wn, ws, ws)
    y = jnp.transpose(y, (0, 1, 2, 3, 5, 4, 6)).reshape(B, 2, C, H, W)
    ya, yb = y[:, 0], y[:, 1]
    if shift > 0:
        yb = jnp.roll(yb, shift=(shift, shift), axis=(2, 3))
    return ya + yb


# ---------------------------------------------------------------------------
# One-time parameter preparation (weight folding, bias/mask table)
# ---------------------------------------------------------------------------
def prepare_params(params, cfg):
    C = cfg["in_channels"]
    nh = cfg["num_heads"]
    dk = C // nh
    ws = cfg["window_size"]
    shift = cfg["shift_size"]
    scale = cfg["scale"]
    H, W = cfg["in_res"]
    L = ws * ws
    nW = (H // ws) * (W // ws)
    pair = 2 if nW % 2 == 0 else 1
    n_pairs = nW // pair
    pw = pair * L

    assert C % nh == 0 and nh % 2 == 0

    # fold the qk scale into the q projection (weights and bias)
    wq = params["wq"] * scale
    bq = params["bq"] * scale
    w_all = jnp.concatenate([wq, params["wkv"]], axis=0)          # (3C, C)
    b_all = jnp.concatenate([bq, params["bkv"]], axis=0)          # (3C,)

    # fold the (-shift,-shift) half-channel roll into doubled input channels:
    # columns [0, C) read x, columns [C, 2C) read roll(x).
    if shift > 0:
        half = C // 2
        w_fold = jnp.zeros((3 * C, 2 * C), jnp.float32)
        for i in range(3):
            r = i * C
            w_fold = w_fold.at[r:r + half, :C].set(w_all[r:r + half])
            w_fold = w_fold.at[r + half:r + C, C:].set(w_all[r + half:r + C])
    else:
        w_fold = w_all

    # output projection regrouped per head: w_proj[h, :, d] = Wp[:, h*dk + d]
    w_proj = jnp.transpose(params["wp"].reshape(C, nh, dk), (1, 0, 2))

    # pre-fold relative-position bias + shift mask into one (head, window-pair)
    # table, stored transposed ([s, t]) to match the kernel's score layout; the
    # cross-window blocks inside a pair get a large negative (softmaxed to 0).
    rel = cfg["rel_index"].reshape(-1)
    bias = jnp.take(params["rpb_table"], rel, axis=0).reshape(L, L, nh)
    bias = jnp.transpose(bias, (2, 0, 1))                          # (nh, L, L) [t,s]
    mask = jnp.asarray(cfg["attn_mask"], jnp.float32)              # (nWm, L, L)
    mask = jnp.broadcast_to(mask, (nW, L, L))
    full_t = jnp.swapaxes(bias[:, None] + mask[None], -1, -2)      # (nh, nW, L, L) [s,t]
    tab = jnp.full((nh, n_pairs, pair, L, pair, L), -1e9, jnp.float32)
    for p in range(n_pairs):
        for w in range(pair):
            tab = tab.at[:, p, w, :, w, :].set(full_t[:, p * pair + w])
    tab = tab.reshape(nh, n_pairs, pw, pw).astype(jnp.bfloat16)

    return {
        "w_qkv": w_fold.astype(jnp.bfloat16),
        "b_qkv": b_all.reshape(3 * C, 1).astype(jnp.float32),
        "w_proj": w_proj.astype(jnp.bfloat16),
        "b_proj": params["bp"].reshape(C, 1).astype(jnp.float32),
        "table": tab,
        "pair": pair,
    }


# ---------------------------------------------------------------------------
# Static tables (numpy) and the pure-JAX reference (mirrors the PyTorch module)
# ---------------------------------------------------------------------------
def build_relative_position_index(ws):
    coords = np.stack(np.meshgrid(np.arange(ws), np.arange(ws), indexing="ij"))
    cf = coords.reshape(2, -1)
    rel = cf[:, :, None] - cf[:, None, :]
    rel = rel.transpose(1, 2, 0).astype(np.int64)
    rel[:, :, 0] += ws - 1
    rel[:, :, 1] += ws - 1
    rel[:, :, 0] *= 2 * ws - 1
    return rel.sum(-1)  # (L, L)


def build_attn_mask(H, W, ws, shift):
    L = ws * ws
    if shift == 0:
        return np.zeros((1, L, L), np.float32)
    img_mask = np.zeros((1, 1, H, W), np.float32)
    slices = (slice(0, -ws), slice(-ws, -shift), slice(-shift, None))
    cnt = 0
    for hs in slices:
        for wsl in slices:
            img_mask[:, :, hs, wsl] = cnt
            cnt += 1
    mw = img_mask.reshape(1, 1, H // ws, ws, W // ws, ws)
    mw = mw.transpose(0, 2, 4, 1, 3, 5).reshape(-1, L)
    am = mw[:, None, :] - mw[:, :, None]
    return np.where(am != 0, -100.0, 0.0).astype(np.float32)


def window_partition(x, ws):
    B, C, H, W = x.shape
    x = x.reshape(B, C, H // ws, ws, W // ws, ws)
    return jnp.transpose(x, (0, 2, 4, 1, 3, 5)).reshape(-1, C, ws, ws)


def window_reverse(windows, ws, H, W):
    B = windows.shape[0] // (H * W // ws // ws)
    x = windows.reshape(B, H // ws, W // ws, -1, ws, ws)
    return jnp.transpose(x, (0, 3, 1, 4, 2, 5)).reshape(B, -1, H, W)


def _forward_reference(x, params, cfg):
    B, C, H, W = x.shape
    ws = cfg["window_size"]
    shift = cfg["shift_size"]
    nh = cfg["num_heads"]
    scale = cfg["scale"]
    L = ws * ws
    dk = C // nh

    conv = lambda t, w, b: jnp.einsum("bchw,oc->bohw", t, w) + b[None, :, None, None]
    q = conv(x, params["wq"], params["bq"])
    kv = conv(x, params["wkv"], params["bkv"])
    k, v = jnp.split(kv, 2, axis=1)

    if shift > 0:
        def shift_half(t):
            a, s = jnp.split(t, 2, axis=1)
            s = jnp.roll(s, shift=(-shift, -shift), axis=(-2, -1))
            return jnp.concatenate([a, s], axis=1)
        q, k, v = shift_half(q), shift_half(k), shift_half(v)

    qw = window_partition(q, ws).reshape(-1, nh, dk, L)
    kw = window_partition(k, ws).reshape(-1, nh, dk, L)
    vw = window_partition(v, ws).reshape(-1, nh, dk, L)

    bias = jnp.take(params["rpb_table"], cfg["rel_index"].reshape(-1), axis=0)
    bias = jnp.transpose(bias.reshape(L, L, nh), (2, 0, 1))
    mask = cfg["attn_mask"]
    nW = mask.shape[0]

    attn = jnp.einsum("bhct,bhcs->bhts", qw, kw) * scale
    attn = attn + bias[None]
    attn = attn.reshape(-1, nW, nh, L, L) + mask[None, :, None]
    attn = attn.reshape(-1, nh, L, L)
    attn = jax.nn.softmax(attn, axis=-1)
    out = jnp.einsum("bhts,bhcs->bhct", attn, vw)

    out = out.reshape(-1, C, ws, ws)
    out = window_reverse(out, ws, H, W)

    if shift > 0:
        a, s = jnp.split(out, 2, axis=1)
        s = jnp.roll(s, shift=(shift, shift), axis=(-2, -1))
        out = jnp.concatenate([a, s], axis=1)

    return conv(out, params["wp"], params["bp"])


# ---------------------------------------------------------------------------
if __name__ == "__main__":
    # in_channels=32, in_res=(16,16), window_size=8, num_heads=8
    B, C, H, W = 2, 32, 16, 16
    num_heads = 8
    window_size = 8
    shift_size = window_size // 2
    if min(H, W) <= window_size:            # module's small-resolution fallback
        shift_size = 0
        window_size = min(H, W)
    dk = C // num_heads
    scale = dk ** (-0.5)

    key = jax.random.PRNGKey(0)
    kx, kq, kbq, kkv, kbkv, kp, kbp, kt = jax.random.split(key, 8)
    x = jax.random.normal(kx, (B, C, H, W), jnp.float32)

    params = {
        "wq": 0.1 * jax.random.normal(kq, (C, C), jnp.float32),
        "bq": 0.02 * jax.random.normal(kbq, (C,), jnp.float32),
        "wkv": 0.1 * jax.random.normal(kkv, (2 * C, C), jnp.float32),
        "bkv": 0.02 * jax.random.normal(kbkv, (2 * C,), jnp.float32),
        "wp": 0.1 * jax.random.normal(kp, (C, C), jnp.float32),
        "bp": 0.02 * jax.random.normal(kbp, (C,), jnp.float32),
        # trunc_normal(std=0.02) replaced by deterministic normal*0.02 (synthetic)
        "rpb_table": 0.02
        * jax.random.normal(kt, ((2 * window_size - 1) ** 2, num_heads), jnp.float32),
    }

    cfg = {
        "in_channels": C,
        "in_res": (H, W),
        "window_size": window_size,
        "shift_size": shift_size,
        "num_heads": num_heads,
        "scale": scale,
        "rel_index": jnp.asarray(build_relative_position_index(window_size)),
        "attn_mask": jnp.asarray(build_attn_mask(H, W, window_size, shift_size)),
    }
    prep = prepare_params(params, cfg)   # one-time weight folding / table build

    fwd_pallas = jax.jit(lambda xx: double_window_attention_pallas(xx, prep, cfg))
    fwd_ref = jax.jit(lambda xx: _forward_reference(xx, params, cfg))

    out = jax.block_until_ready(fwd_pallas(x))
    ref = jax.block_until_ready(fwd_ref(x))

    assert out.shape == (B, C, H, W)
    assert bool(jnp.all(jnp.isfinite(out)))
    # bf16 activations/weights/MXU operands (f32 accumulation, f32 softmax) and
    # approx reciprocal vs the f32 reference.
    np.testing.assert_allclose(np.asarray(out), np.asarray(ref),
                               rtol=2.5e-2, atol=2.5e-2)
    print("KERNEL_OK")
</pallas_src>

<mosaic_0001>
module attributes {stable_mosaic.version = 11 : i64} {
  func.func @_fused_attn_kernel(%arg0: i32, %arg1: memref<1x64x256xbf16, #tpu.memory_space<vmem>>, %arg2: memref<96x64xbf16, #tpu.memory_space<vmem>>, %arg3: memref<96x1xf32, #tpu.memory_space<vmem>>, %arg4: memref<8x32x4xbf16, #tpu.memory_space<vmem>>, %arg5: memref<32x1xf32, #tpu.memory_space<vmem>>, %arg6: memref<8x2x128x128xbf16, #tpu.memory_space<vmem>>, %arg7: memref<1x2x32x256xf32, #tpu.memory_space<vmem>>, %arg8: memref<96x256xbf16, #tpu.memory_space<vmem>>) attributes {dimension_semantics = [#tpu.dimension_semantics<parallel>], iteration_bounds = array<i64: 2>, scalar_prefetch = 0 : i64, scratch_operands = 1 : i64, tpu.core_type = #tpu.core_type<tc>, window_params = [{transform_indices = @transform_0, window_bounds = array<i64: 1, 64, 256>}, {pipeline_mode = #tpu.pipeline_mode<synchronous>, transform_indices = @transform_1, window_bounds = array<i64: 96, 64>}, {pipeline_mode = #tpu.pipeline_mode<synchronous>, transform_indices = @transform_2, window_bounds = array<i64: 96, 1>}, {pipeline_mode = #tpu.pipeline_mode<synchronous>, transform_indices = @transform_3, window_bounds = array<i64: 8, 32, 4>}, {pipeline_mode = #tpu.pipeline_mode<synchronous>, transform_indices = @transform_4, window_bounds = array<i64: 32, 1>}, {pipeline_mode = #tpu.pipeline_mode<synchronous>, transform_indices = @transform_5, window_bounds = array<i64: 8, 2, 128, 128>}, {transform_indices = @transform_6, window_bounds = array<i64: 1, 2, 32, 256>}]} {
    %c0 = arith.constant 0 : index
    %c0_0 = arith.constant 0 : index
    %c0_1 = arith.constant 0 : index
    %0 = vector.load %arg1[%c0, %c0_0, %c0_1] : memref<1x64x256xbf16, #tpu.memory_space<vmem>>, vector<1x64x256xbf16>
    %1 = vector.shape_cast %0 : vector<1x64x256xbf16> to vector<64x256xbf16>
    %c0_2 = arith.constant 0 : index
    %c0_3 = arith.constant 0 : index
    %2 = vector.load %arg2[%c0_2, %c0_3] : memref<96x64xbf16, #tpu.memory_space<vmem>>, vector<96x64xbf16>
    %cst = arith.constant dense<0.000000e+00> : vector<96x256xf32>
    %3 = tpu.matmul %2, %1, %cst {dimension_numbers = #tpu.dot_dimension_numbers<[1], [0], [0], [1], [0, 0, 1, 1], [], []>} : vector<96x64xbf16>, vector<64x256xbf16>, vector<96x256xf32> -> vector<96x256xf32>
    %c0_4 = arith.constant 0 : index
    %c0_5 = arith.constant 0 : index
    %4 = vector.load %arg3[%c0_4, %c0_5] : memref<96x1xf32, #tpu.memory_space<vmem>>, vector<96x1xf32>
    %5 = vector.broadcast %4 : vector<96x1xf32> to vector<96x256xf32>
    %6 = arith.addf %3, %5 : vector<96x256xf32>
    %7 = arith.truncf %6 : vector<96x256xf32> to vector<96x256xbf16>
    %c0_6 = arith.constant 0 : index
    %c0_7 = arith.constant 0 : index
    %8 = vector.load %arg8[%c0_6, %c0_7] : memref<96x256xbf16, #tpu.memory_space<vmem>>, vector<96x256xbf16>
    tpu.vector_store %arg8[%c0_6, %c0_7], %7 {strides = array<i32>} : memref<96x256xbf16, #tpu.memory_space<vmem>>, vector<96x256xbf16>,
    %cst_8 = arith.constant 0.000000e+00 : f32
    %9 = vector.broadcast %cst_8 : f32 to vector<32x128xf32>
    %cst_9 = arith.constant 0.000000e+00 : f32
    %10 = vector.broadcast %cst_9 : f32 to vector<32x128xf32>
    %c0_10 = arith.constant 0 : index
    %c0_11 = arith.constant 0 : index
    %11 = vector.load %arg8[%c0_10, %c0_11] : memref<96x256xbf16, #tpu.memory_space<vmem>>, vector<4x128xbf16>
    %c32 = arith.constant 32 : index
    %c0_12 = arith.constant 0 : index
    %12 = vector.load %arg8[%c32, %c0_12] : memref<96x256xbf16, #tpu.memory_space<vmem>>, vector<4x128xbf16>
    %c64 = arith.constant 64 : index
    %c0_13 = arith.constant 0 : index
    %13 = vector.load %arg8[%c64, %c0_13] : memref<96x256xbf16, #tpu.memory_space<vmem>>, vector<4x128xbf16>
    %cst_14 = arith.constant dense<0.000000e+00> : vector<128x128xf32>
    %14 = tpu.matmul %12, %11, %cst_14 {dimension_numbers = #tpu.dot_dimension_numbers<[0], [0], [1], [1], [0, 1, 1, 1], [], []>} : vector<4x128xbf16>, vector<4x128xbf16>, vector<128x128xf32> -> vector<128x128xf32>
    %c0_15 = arith.constant 0 : index
    %c0_16 = arith.constant 0 : index
    %c0_17 = arith.constant 0 : index
    %c0_18 = arith.constant 0 : index
    %15 = vector.load %arg6[%c0_15, %c0_16, %c0_17, %c0_18] : memref<8x2x128x128xbf16, #tpu.memory_space<vmem>>, vector<1x1x128x128xbf16>
    %16 = vector.shape_cast %15 : vector<1x1x128x128xbf16> to vector<128x128xbf16>
    %17 = arith.extf %16 : vector<128x128xbf16> to vector<128x128xf32>
    %18 = arith.addf %14, %17 : vector<128x128xf32>
    %cst_19 = arith.constant dense<0xFF800000> : vector<128xf32>
    %19 = vector.multi_reduction <maximumf>, %18, %cst_19 [0] : vector<128x128xf32> to vector<128xf32>
    %20 = vector.shape_cast %19 : vector<128xf32> to vector<1x128xf32>
    %21 = vector.broadcast %20 : vector<1x128xf32> to vector<128x128xf32>
    %22 = arith.subf %18, %21 : vector<128x128xf32>
    %23 = math.exp %22 : vector<128x128xf32>
    %cst_20 = arith.constant dense<0.000000e+00> : vector<128xf32>
    %24 = vector.multi_reduction <add>, %23, %cst_20 [0] : vector<128x128xf32> to vector<128xf32>
    %25 = vector.shape_cast %24 : vector<128xf32> to vector<1x128xf32>
    %26 = arith.truncf %23 : vector<128x128xf32> to vector<128x128xbf16>
    %cst_21 = arith.constant dense<0.000000e+00> : vector<4x128xf32>
    %27 = tpu.matmul %13, %26, %cst_21 {dimension_numbers = #tpu.dot_dimension_numbers<[1], [0], [0], [1], [0, 0, 1, 1], [], []>} : vector<4x128xbf16>, vector<128x128xbf16>, vector<4x128xf32> -> vector<4x128xf32>
    %28 = tpu.reciprocal %25 {approx = true} : vector<1x128xf32> -> vector<1x128xf32>
    %29 = vector.broadcast %28 : vector<1x128xf32> to vector<4x128xf32>
    %30 = arith.mulf %27, %29 : vector<4x128xf32>
    %c0_22 = arith.constant 0 : index
    %c0_23 = arith.constant 0 : index
    %c0_24 = arith.constant 0 : index
    %31 = vector.load %arg4[%c0_22, %c0_23, %c0_24] : memref<8x32x4xbf16, #tpu.memory_space<vmem>>, vector<1x32x4xbf16>
    %32 = vector.shape_cast %31 : vector<1x32x4xbf16> to vector<32x4xbf16>
    %33 = arith.truncf %30 : vector<4x128xf32> to vector<4x128xbf16>
    %cst_25 = arith.constant dense<0.000000e+00> : vector<32x128xf32>
    %34 = tpu.matmul %32, %33, %cst_25 {dimension_numbers = #tpu.dot_dimension_numbers<[1], [0], [0], [1], [0, 0, 1, 1], [], []>} : vector<32x4xbf16>, vector<4x128xbf16>, vector<32x128xf32> -> vector<32x128xf32>
    %35 = arith.addf %9, %34 : vector<32x128xf32>
    %c4 = arith.constant 4 : index
    %c0_26 = arith.constant 0 : index
    %36 = vector.load %arg8[%c4, %c0_26] : memref<96x256xbf16, #tpu.memory_space<vmem>>, vector<4x128xbf16>
    %c36 = arith.constant 36 : index
    %c0_27 = arith.constant 0 : index
    %37 = vector.load %arg8[%c36, %c0_27] : memref<96x256xbf16, #tpu.memory_space<vmem>>, vector<4x128xbf16>
    %c68 = arith.constant 68 : index
    %c0_28 = arith.constant 0 : index
    %38 = vector.load %arg8[%c68, %c0_28] : memref<96x256xbf16, #tpu.memory_space<vmem>>, vector<4x128xbf16>
    %cst_29 = arith.constant dense<0.000000e+00> : vector<128x128xf32>
    %39 = tpu.matmul %37, %36, %cst_29 {dimension_numbers = #tpu.dot_dimension_numbers<[0], [0], [1], [1], [0, 1, 1, 1], [], []>} : vector<4x128xbf16>, vector<4x128xbf16>, vector<128x128xf32> -> vector<128x128xf32>
    %c1 = arith.constant 1 : index
    %c0_30 = arith.constant 0 : index
    %c0_31 = arith.constant 0 : index
    %c0_32 = arith.constant 0 : index
    %40 = vector.load %arg6[%c1, %c0_30, %c0_31, %c0_32] : memref<8x2x128x128xbf16, #tpu.memory_space<vmem>>, vector<1x1x128x128xbf16>
    %41 = vector.shape_cast %40 : vector<1x1x128x128xbf16> to vector<128x128xbf16>
    %42 = arith.extf %41 : vector<128x128xbf16> to vector<128x128xf32>
    %43 = arith.addf %39, %42 : vector<128x128xf32>
    %cst_33 = arith.constant dense<0xFF800000> : vector<128xf32>
    %44 = vector.multi_reduction <maximumf>, %43, %cst_33 [0] : vector<128x128xf32> to vector<128xf32>
    %45 = vector.shape_cast %44 : vector<128xf32> to vector<1x128xf32>
    %46 = vector.broadcast %45 : vector<1x128xf32> to vector<128x128xf32>
    %47 = arith.subf %43, %46 : vector<128x128xf32>
    %48 = math.exp %47 : vector<128x128xf32>
    %cst_34 = arith.constant dense<0.000000e+00> : vector<128xf32>
    %49 = vector.multi_reduction <add>, %48, %cst_34 [0] : vector<128x128xf32> to vector<128xf32>
    %50 = vector.shape_cast %49 : vector<128xf32> to vector<1x128xf32>
    %51 = arith.truncf %48 : vector<128x128xf32> to vector<128x128xbf16>
    %cst_35 = arith.constant dense<0.000000e+00> : vector<4x128xf32>
    %52 = tpu.matmul %38, %51, %cst_35 {dimension_numbers = #tpu.dot_dimension_numbers<[1], [0], [0], [1], [0, 0, 1, 1], [], []>} : vector<4x128xbf16>, vector<128x128xbf16>, vector<4x128xf32> -> vector<4x128xf32>
    %53 = tpu.reciprocal %50 {approx = true} : vector<1x128xf32> -> vector<1x128xf32>
    %54 = vector.broadcast %53 : vector<1x128xf32> to vector<4x128xf32>
    %55 = arith.mulf %52, %54 : vector<4x128xf32>
    %c1_36 = arith.constant 1 : index
    %c0_37 = arith.constant 0 : index
    %c0_38 = arith.constant 0 : index
    %56 = vector.load %arg4[%c1_36, %c0_37, %c0_38] : memref<8x32x4xbf16, #tpu.memory_space<vmem>>, vector<1x32x4xbf16>
    %57 = vector.shape_cast %56 : vector<1x32x4xbf16> to vector<32x4xbf16>
    %58 = arith.truncf %55 : vector<4x128xf32> to vector<4x128xbf16>
    %cst_39 = arith.constant dense<0.000000e+00> : vector<32x128xf32>
    %59 = tpu.matmul %57, %58, %cst_39 {dimension_numbers = #tpu.dot_dimension_numbers<[1], [0], [0], [1], [0, 0, 1, 1], [], []>} : vector<32x4xbf16>, vector<4x128xbf16>, vector<32x128xf32> -> vector<32x128xf32>
    %60 = arith.addf %35, %59 : vector<32x128xf32>
    %c8 = arith.constant 8 : index
    %c0_40 = arith.constant 0 : index
    %61 = vector.load %arg8[%c8, %c0_40] : memref<96x256xbf16, #tpu.memory_space<vmem>>, vector<4x128xbf16>
    %c40 = arith.constant 40 : index
    %c0_41 = arith.constant 0 : index
    %62 = vector.load %arg8[%c40, %c0_41] : memref<96x256xbf16, #tpu.memory_space<vmem>>, vector<4x128xbf16>
    %c72 = arith.constant 72 : index
    %c0_42 = arith.constant 0 : index
    %63 = vector.load %arg8[%c72, %c0_42] : memref<96x256xbf16, #tpu.memory_space<vmem>>, vector<4x128xbf16>
    %cst_43 = arith.constant dense<0.000000e+00> : vector<128x128xf32>
    %64 = tpu.matmul %62, %61, %cst_43 {dimension_numbers = #tpu.dot_dimension_numbers<[0], [0], [1], [1], [0, 1, 1, 1], [], []>} : vector<4x128xbf16>, vector<4x128xbf16>, vector<128x128xf32> -> vector<128x128xf32>
    %c2 = arith.constant 2 : index
    %c0_44 = arith.constant 0 : index
    %c0_45 = arith.constant 0 : index
    %c0_46 = arith.constant 0 : index
    %65 = vector.load %arg6[%c2, %c0_44, %c0_45, %c0_46] : memref<8x2x128x128xbf16, #tpu.memory_space<vmem>>, vector<1x1x128x128xbf16>
    %66 = vector.shape_cast %65 : vector<1x1x128x128xbf16> to vector<128x128xbf16>
    %67 = arith.extf %66 : vector<128x128xbf16> to vector<128x128xf32>
    %68 = arith.addf %64, %67 : vector<128x128xf32>
    %cst_47 = arith.constant dense<0xFF800000> : vector<128xf32>
    %69 = vector.multi_reduction <maximumf>, %68, %cst_47 [0] : vector<128x128xf32> to vector<128xf32>
    %70 = vector.shape_cast %69 : vector<128xf32> to vector<1x128xf32>
    %71 = vector.broadcast %70 : vector<1x128xf32> to vector<128x128xf32>
    %72 = arith.subf %68, %71 : vector<128x128xf32>
    %73 = math.exp %72 : vector<128x128xf32>
    %cst_48 = arith.constant dense<0.000000e+00> : vector<128xf32>
    %74 = vector.multi_reduction <add>, %73, %cst_48 [0] : vector<128x128xf32> to vector<128xf32>
    %75 = vector.shape_cast %74 : vector<128xf32> to vector<1x128xf32>
    %76 = arith.truncf %73 : vector<128x128xf32> to vector<128x128xbf16>
    %cst_49 = arith.constant dense<0.000000e+00> : vector<4x128xf32>
    %77 = tpu.matmul %63, %76, %cst_49 {dimension_numbers = #tpu.dot_dimension_numbers<[1], [0], [0], [1], [0, 0, 1, 1], [], []>} : vector<4x128xbf16>, vector<128x128xbf16>, vector<4x128xf32> -> vector<4x128xf32>
    %78 = tpu.reciprocal %75 {approx = true} : vector<1x128xf32> -> vector<1x128xf32>
    %79 = vector.broadcast %78 : vector<1x128xf32> to vector<4x128xf32>
    %80 = arith.mulf %77, %79 : vector<4x128xf32>
    %c2_50 = arith.constant 2 : index
    %c0_51 = arith.constant 0 : index
    %c0_52 = arith.constant 0 : index
    %81 = vector.load %arg4[%c2_50, %c0_51, %c0_52] : memref<8x32x4xbf16, #tpu.memory_space<vmem>>, vector<1x32x4xbf16>
    %82 = vector.shape_cast %81 : vector<1x32x4xbf16> to vector<32x4xbf16>
    %83 = arith.truncf %80 : vector<4x128xf32> to vector<4x128xbf16>
    %cst_53 = arith.constant dense<0.000000e+00> : vector<32x128xf32>
    %84 = tpu.matmul %82, %83, %cst_53 {dimension_numbers = #tpu.dot_dimension_numbers<[1], [0], [0], [1], [0, 0, 1, 1], [], []>} : vector<32x4xbf16>, vector<4x128xbf16>, vector<32x128xf32> -> vector<32x128xf32>
    %85 = arith.addf %60, %84 : vector<32x128xf32>
    %c12 = arith.constant 12 : index
    %c0_54 = arith.constant 0 : index
    %86 = vector.load %arg8[%c12, %c0_54] : memref<96x256xbf16, #tpu.memory_space<vmem>>, vector<4x128xbf16>
    %c44 = arith.constant 44 : index
    %c0_55 = arith.constant 0 : index
    %87 = vector.load %arg8[%c44, %c0_55] : memref<96x256xbf16, #tpu.memory_space<vmem>>, vector<4x128xbf16>
    %c76 = arith.constant 76 : index
    %c0_56 = arith.constant 0 : index
    %88 = vector.load %arg8[%c76, %c0_56] : memref<96x256xbf16, #tpu.memory_space<vmem>>, vector<4x128xbf16>
    %cst_57 = arith.constant dense<0.000000e+00> : vector<128x128xf32>
    %89 = tpu.matmul %87, %86, %cst_57 {dimension_numbers = #tpu.dot_dimension_numbers<[0], [0], [1], [1], [0, 1, 1, 1], [], []>} : vector<4x128xbf16>, vector<4x128xbf16>, vector<128x128xf32> -> vector<128x128xf32>
    %c3 = arith.constant 3 : index
    %c0_58 = arith.constant 0 : index
    %c0_59 = arith.constant 0 : index
    %c0_60 = arith.constant 0 : index
    %90 = vector.load %arg6[%c3, %c0_58, %c0_59, %c0_60] : memref<8x2x128x128xbf16, #tpu.memory_space<vmem>>, vector<1x1x128x128xbf16>
    %91 = vector.shape_cast %90 : vector<1x1x128x128xbf16> to vector<128x128xbf16>
    %92 = arith.extf %91 : vector<128x128xbf16> to vector<128x128xf32>
    %93 = arith.addf %89, %92 : vector<128x128xf32>
    %cst_61 = arith.constant dense<0xFF800000> : vector<128xf32>
    %94 = vector.multi_reduction <maximumf>, %93, %cst_61 [0] : vector<128x128xf32> to vector<128xf32>
    %95 = vector.shape_cast %94 : vector<128xf32> to vector<1x128xf32>
    %96 = vector.broadcast %95 : vector<1x128xf32> to vector<128x128xf32>
    %97 = arith.subf %93, %96 : vector<128x128xf32>
    %98 = math.exp %97 : vector<128x128xf32>
    %cst_62 = arith.constant dense<0.000000e+00> : vector<128xf32>
    %99 = vector.multi_reduction <add>, %98, %cst_62 [0] : vector<128x128xf32> to vector<128xf32>
    %100 = vector.shape_cast %99 : vector<128xf32> to vector<1x128xf32>
    %101 = arith.truncf %98 : vector<128x128xf32> to vector<128x128xbf16>
    %cst_63 = arith.constant dense<0.000000e+00> : vector<4x128xf32>
    %102 = tpu.matmul %88, %101, %cst_63 {dimension_numbers = #tpu.dot_dimension_numbers<[1], [0], [0], [1], [0, 0, 1, 1], [], []>} : vector<4x128xbf16>, vector<128x128xbf16>, vector<4x128xf32> -> vector<4x128xf32>
    %103 = tpu.reciprocal %100 {approx = true} : vector<1x128xf32> -> vector<1x128xf32>
    %104 = vector.broadcast %103 : vector<1x128xf32> to vector<4x128xf32>
    %105 = arith.mulf %102, %104 : vector<4x128xf32>
    %c3_64 = arith.constant 3 : index
    %c0_65 = arith.constant 0 : index
    %c0_66 = arith.constant 0 : index
    %106 = vector.load %arg4[%c3_64, %c0_65, %c0_66] : memref<8x32x4xbf16, #tpu.memory_space<vmem>>, vector<1x32x4xbf16>
    %107 = vector.shape_cast %106 : vector<1x32x4xbf16> to vector<32x4xbf16>
    %108 = arith.truncf %105 : vector<4x128xf32> to vector<4x128xbf16>
    %cst_67 = arith.constant dense<0.000000e+00> : vector<32x128xf32>
    %109 = tpu.matmul %107, %108, %cst_67 {dimension_numbers = #tpu.dot_dimension_numbers<[1], [0], [0], [1], [0, 0, 1, 1], [], []>} : vector<32x4xbf16>, vector<4x128xbf16>, vector<32x128xf32> -> vector<32x128xf32>
    %110 = arith.addf %85, %109 : vector<32x128xf32>
    %c16 = arith.constant 16 : index
    %c0_68 = arith.constant 0 : index
    %111 = vector.load %arg8[%c16, %c0_68] : memref<96x256xbf16, #tpu.memory_space<vmem>>, vector<4x128xbf16>
    %c48 = arith.constant 48 : index
    %c0_69 = arith.constant 0 : index
    %112 = vector.load %arg8[%c48, %c0_69] : memref<96x256xbf16, #tpu.memory_space<vmem>>, vector<4x128xbf16>
    %c80 = arith.constant 80 : index
    %c0_70 = arith.constant 0 : index
    %113 = vector.load %arg8[%c80, %c0_70] : memref<96x256xbf16, #tpu.memory_space<vmem>>, vector<4x128xbf16>
    %cst_71 = arith.constant dense<0.000000e+00> : vector<128x128xf32>
    %114 = tpu.matmul %112, %111, %cst_71 {dimension_numbers = #tpu.dot_dimension_numbers<[0], [0], [1], [1], [0, 1, 1, 1], [], []>} : vector<4x128xbf16>, vector<4x128xbf16>, vector<128x128xf32> -> vector<128x128xf32>
    %c4_72 = arith.constant 4 : index
    %c0_73 = arith.constant 0 : index
    %c0_74 = arith.constant 0 : index
    %c0_75 = arith.constant 0 : index
    %115 = vector.load %arg6[%c4_72, %c0_73, %c0_74, %c0_75] : memref<8x2x128x128xbf16, #tpu.memory_space<vmem>>, vector<1x1x128x128xbf16>
    %116 = vector.shape_cast %115 : vector<1x1x128x128xbf16> to vector<128x128xbf16>
    %117 = arith.extf %116 : vector<128x128xbf16> to vector<128x128xf32>
    %118 = arith.addf %114, %117 : vector<128x128xf32>
    %cst_76 = arith.constant dense<0xFF800000> : vector<128xf32>
    %119 = vector.multi_reduction <maximumf>, %118, %cst_76 [0] : vector<128x128xf32> to vector<128xf32>
    %120 = vector.shape_cast %119 : vector<128xf32> to vector<1x128xf32>
    %121 = vector.broadcast %120 : vector<1x128xf32> to vector<128x128xf32>
    %122 = arith.subf %118, %121 : vector<128x128xf32>
    %123 = math.exp %122 : vector<128x128xf32>
    %cst_77 = arith.constant dense<0.000000e+00> : vector<128xf32>
    %124 = vector.multi_reduction <add>, %123, %cst_77 [0] : vector<128x128xf32> to vector<128xf32>
    %125 = vector.shape_cast %124 : vector<128xf32> to vector<1x128xf32>
    %126 = arith.truncf %123 : vector<128x128xf32> to vector<128x128xbf16>
    %cst_78 = arith.constant dense<0.000000e+00> : vector<4x128xf32>
    %127 = tpu.matmul %113, %126, %cst_78 {dimension_numbers = #tpu.dot_dimension_numbers<[1], [0], [0], [1], [0, 0, 1, 1], [], []>} : vector<4x128xbf16>, vector<128x128xbf16>, vector<4x128xf32> -> vector<4x128xf32>
    %128 = tpu.reciprocal %125 {approx = true} : vector<1x128xf32> -> vector<1x128xf32>
    %129 = vector.broadcast %128 : vector<1x128xf32> to vector<4x128xf32>
    %130 = arith.mulf %127, %129 : vector<4x128xf32>
    %c4_79 = arith.constant 4 : index
    %c0_80 = arith.constant 0 : index
    %c0_81 = arith.constant 0 : index
    %131 = vector.load %arg4[%c4_79, %c0_80, %c0_81] : memref<8x32x4xbf16, #tpu.memory_space<vmem>>, vector<1x32x4xbf16>
    %132 = vector.shape_cast %131 : vector<1x32x4xbf16> to vector<32x4xbf16>
    %133 = arith.truncf %130 : vector<4x128xf32> to vector<4x128xbf16>
    %cst_82 = arith.constant dense<0.000000e+00> : vector<32x128xf32>
    %134 = tpu.matmul %132, %133, %cst_82 {dimension_numbers = #tpu.dot_dimension_numbers<[1], [0], [0], [1], [0, 0, 1, 1], [], []>} : vector<32x4xbf16>, vector<4x128xbf16>, vector<32x128xf32> -> vector<32x128xf32>
    %135 = arith.addf %10, %134 : vector<32x128xf32>
    %c20 = arith.constant 20 : index
    %c0_83 = arith.constant 0 : index
    %136 = vector.load %arg8[%c20, %c0_83] : memref<96x256xbf16, #tpu.memory_space<vmem>>, vector<4x128xbf16>
    %c52 = arith.constant 52 : index
    %c0_84 = arith.constant 0 : index
    %137 = vector.load %arg8[%c52, %c0_84] : memref<96x256xbf16, #tpu.memory_space<vmem>>, vector<4x128xbf16>
    %c84 = arith.constant 84 : index
    %c0_85 = arith.constant 0 : index
    %138 = vector.load %arg8[%c84, %c0_85] : memref<96x256xbf16, #tpu.memory_space<vmem>>, vector<4x128xbf16>
    %cst_86 = arith.constant dense<0.000000e+00> : vector<128x128xf32>
    %139 = tpu.matmul %137, %136, %cst_86 {dimension_numbers = #tpu.dot_dimension_numbers<[0], [0], [1], [1], [0, 1, 1, 1], [], []>} : vector<4x128xbf16>, vector<4x128xbf16>, vector<128x128xf32> -> vector<128x128xf32>
    %c5 = arith.constant 5 : index
    %c0_87 = arith.constant 0 : index
    %c0_88 = arith.constant 0 : index
    %c0_89 = arith.constant 0 : index
    %140 = vector.load %arg6[%c5, %c0_87, %c0_88, %c0_89] : memref<8x2x128x128xbf16, #tpu.memory_space<vmem>>, vector<1x1x128x128xbf16>
    %141 = vector.shape_cast %140 : vector<1x1x128x128xbf16> to vector<128x128xbf16>
    %142 = arith.extf %141 : vector<128x128xbf16> to vector<128x128xf32>
    %143 = arith.addf %139, %142 : vector<128x128xf32>
    %cst_90 = arith.constant dense<0xFF800000> : vector<128xf32>
    %144 = vector.multi_reduction <maximumf>, %143, %cst_90 [0] : vector<128x128xf32> to vector<128xf32>
    %145 = vector.shape_cast %144 : vector<128xf32> to vector<1x128xf32>
    %146 = vector.broadcast %145 : vector<1x128xf32> to vector<128x128xf32>
    %147 = arith.subf %143, %146 : vector<128x128xf32>
    %148 = math.exp %147 : vector<128x128xf32>
    %cst_91 = arith.constant dense<0.000000e+00> : vector<128xf32>
    %149 = vector.multi_reduction <add>, %148, %cst_91 [0] : vector<128x128xf32> to vector<128xf32>
    %150 = vector.shape_cast %149 : vector<128xf32> to vector<1x128xf32>
    %151 = arith.truncf %148 : vector<128x128xf32> to vector<128x128xbf16>
    %cst_92 = arith.constant dense<0.000000e+00> : vector<4x128xf32>
    %152 = tpu.matmul %138, %151, %cst_92 {dimension_numbers = #tpu.dot_dimension_numbers<[1], [0], [0], [1], [0, 0, 1, 1], [], []>} : vector<4x128xbf16>, vector<128x128xbf16>, vector<4x128xf32> -> vector<4x128xf32>
    %153 = tpu.reciprocal %150 {approx = true} : vector<1x128xf32> -> vector<1x128xf32>
    %154 = vector.broadcast %153 : vector<1x128xf32> to vector<4x128xf32>
    %155 = arith.mulf %152, %154 : vector<4x128xf32>
    %c5_93 = arith.constant 5 : index
    %c0_94 = arith.constant 0 : index
    %c0_95 = arith.constant 0 : index
    %156 = vector.load %arg4[%c5_93, %c0_94, %c0_95] : memref<8x32x4xbf16, #tpu.memory_space<vmem>>, vector<1x32x4xbf16>
    %157 = vector.shape_cast %156 : vector<1x32x4xbf16> to vector<32x4xbf16>
    %158 = arith.truncf %155 : vector<4x128xf32> to vector<4x128xbf16>
    %cst_96 = arith.constant dense<0.000000e+00> : vector<32x128xf32>
    %159 = tpu.matmul %157, %158, %cst_96 {dimension_numbers = #tpu.dot_dimension_numbers<[1], [0], [0], [1], [0, 0, 1, 1], [], []>} : vector<32x4xbf16>, vector<4x128xbf16>, vector<32x128xf32> -> vector<32x128xf32>
    %160 = arith.addf %135, %159 : vector<32x128xf32>
    %c24 = arith.constant 24 : index
    %c0_97 = arith.constant 0 : index
    %161 = vector.load %arg8[%c24, %c0_97] : memref<96x256xbf16, #tpu.memory_space<vmem>>, vector<4x128xbf16>
    %c56 = arith.constant 56 : index
    %c0_98 = arith.constant 0 : index
    %162 = vector.load %arg8[%c56, %c0_98] : memref<96x256xbf16, #tpu.memory_space<vmem>>, vector<4x128xbf16>
    %c88 = arith.constant 88 : index
    %c0_99 = arith.constant 0 : index
    %163 = vector.load %arg8[%c88, %c0_99] : memref<96x256xbf16, #tpu.memory_space<vmem>>, vector<4x128xbf16>
    %cst_100 = arith.constant dense<0.000000e+00> : vector<128x128xf32>
    %164 = tpu.matmul %162, %161, %cst_100 {dimension_numbers = #tpu.dot_dimension_numbers<[0], [0], [1], [1], [0, 1, 1, 1], [], []>} : vector<4x128xbf16>, vector<4x128xbf16>, vector<128x128xf32> -> vector<128x128xf32>
    %c6 = arith.constant 6 : index
    %c0_101 = arith.constant 0 : index
    %c0_102 = arith.constant 0 : index
    %c0_103 = arith.constant 0 : index
    %165 = vector.load %arg6[%c6, %c0_101, %c0_102, %c0_103] : memref<8x2x128x128xbf16, #tpu.memory_space<vmem>>, vector<1x1x128x128xbf16>
    %166 = vector.shape_cast %165 : vector<1x1x128x128xbf16> to vector<128x128xbf16>
    %167 = arith.extf %166 : vector<128x128xbf16> to vector<128x128xf32>
    %168 = arith.addf %164, %167 : vector<128x128xf32>
    %cst_104 = arith.constant dense<0xFF800000> : vector<128xf32>
    %169 = vector.multi_reduction <maximumf>, %168, %cst_104 [0] : vector<128x128xf32> to vector<128xf32>
    %170 = vector.shape_cast %169 : vector<128xf32> to vector<1x128xf32>
    %171 = vector.broadcast %170 : vector<1x128xf32> to vector<128x128xf32>
    %172 = arith.subf %168, %171 : vector<128x128xf32>
    %173 = math.exp %172 : vector<128x128xf32>
    %cst_105 = arith.constant dense<0.000000e+00> : vector<128xf32>
    %174 = vector.multi_reduction <add>, %173, %cst_105 [0] : vector<128x128xf32> to vector<128xf32>
    %175 = vector.shape_cast %174 : vector<128xf32> to vector<1x128xf32>
    %176 = arith.truncf %173 : vector<128x128xf32> to vector<128x128xbf16>
    %cst_106 = arith.constant dense<0.000000e+00> : vector<4x128xf32>
    %177 = tpu.matmul %163, %176, %cst_106 {dimension_numbers = #tpu.dot_dimension_numbers<[1], [0], [0], [1], [0, 0, 1, 1], [], []>} : vector<4x128xbf16>, vector<128x128xbf16>, vector<4x128xf32> -> vector<4x128xf32>
    %178 = tpu.reciprocal %175 {approx = true} : vector<1x128xf32> -> vector<1x128xf32>
    %179 = vector.broadcast %178 : vector<1x128xf32> to vector<4x128xf32>
    %180 = arith.mulf %177, %179 : vector<4x128xf32>
    %c6_107 = arith.constant 6 : index
    %c0_108 = arith.constant 0 : index
    %c0_109 = arith.constant 0 : index
    %181 = vector.load %arg4[%c6_107, %c0_108, %c0_109] : memref<8x32x4xbf16, #tpu.memory_space<vmem>>, vector<1x32x4xbf16>
    %182 = vector.shape_cast %181 : vector<1x32x4xbf16> to vector<32x4xbf16>
    %183 = arith.truncf %180 : vector<4x128xf32> to vector<4x128xbf16>
    %cst_110 = arith.constant dense<0.000000e+00> : vector<32x128xf32>
    %184 = tpu.matmul %182, %183, %cst_110 {dimension_numbers = #tpu.dot_dimension_numbers<[1], [0], [0], [1], [0, 0, 1, 1], [], []>} : vector<32x4xbf16>, vector<4x128xbf16>, vector<32x128xf32> -> vector<32x128xf32>
    %185 = arith.addf %160, %184 : vector<32x128xf32>
    %c28 = arith.constant 28 : index
    %c0_111 = arith.constant 0 : index
    %186 = vector.load %arg8[%c28, %c0_111] : memref<96x256xbf16, #tpu.memory_space<vmem>>, vector<4x128xbf16>
    %c60 = arith.constant 60 : index
    %c0_112 = arith.constant 0 : index
    %187 = vector.load %arg8[%c60, %c0_112] : memref<96x256xbf16, #tpu.memory_space<vmem>>, vector<4x128xbf16>
    %c92 = arith.constant 92 : index
    %c0_113 = arith.constant 0 : index
    %188 = vector.load %arg8[%c92, %c0_113] : memref<96x256xbf16, #tpu.memory_space<vmem>>, vector<4x128xbf16>
    %cst_114 = arith.constant dense<0.000000e+00> : vector<128x128xf32>
    %189 = tpu.matmul %187, %186, %cst_114 {dimension_numbers = #tpu.dot_dimension_numbers<[0], [0], [1], [1], [0, 1, 1, 1], [], []>} : vector<4x128xbf16>, vector<4x128xbf16>, vector<128x128xf32> -> vector<128x128xf32>
    %c7 = arith.constant 7 : index
    %c0_115 = arith.constant 0 : index
    %c0_116 = arith.constant 0 : index
    %c0_117 = arith.constant 0 : index
    %190 = vector.load %arg6[%c7, %c0_115, %c0_116, %c0_117] : memref<8x2x128x128xbf16, #tpu.memory_space<vmem>>, vector<1x1x128x128xbf16>
    %191 = vector.shape_cast %190 : vector<1x1x128x128xbf16> to vector<128x128xbf16>
    %192 = arith.extf %191 : vector<128x128xbf16> to vector<128x128xf32>
    %193 = arith.addf %189, %192 : vector<128x128xf32>
    %cst_118 = arith.constant dense<0xFF800000> : vector<128xf32>
    %194 = vector.multi_reduction <maximumf>, %193, %cst_118 [0] : vector<128x128xf32> to vector<128xf32>
    %195 = vector.shape_cast %194 : vector<128xf32> to vector<1x128xf32>
    %196 = vector.broadcast %195 : vector<1x128xf32> to vector<128x128xf32>
    %197 = arith.subf %193, %196 : vector<128x128xf32>
    %198 = math.exp %197 : vector<128x128xf32>
    %cst_119 = arith.constant dense<0.000000e+00> : vector<128xf32>
    %199 = vector.multi_reduction <add>, %198, %cst_119 [0] : vector<128x128xf32> to vector<128xf32>
    %200 = vector.shape_cast %199 : vector<128xf32> to vector<1x128xf32>
    %201 = arith.truncf %198 : vector<128x128xf32> to vector<128x128xbf16>
    %cst_120 = arith.constant dense<0.000000e+00> : vector<4x128xf32>
    %202 = tpu.matmul %188, %201, %cst_120 {dimension_numbers = #tpu.dot_dimension_numbers<[1], [0], [0], [1], [0, 0, 1, 1], [], []>} : vector<4x128xbf16>, vector<128x128xbf16>, vector<4x128xf32> -> vector<4x128xf32>
    %203 = tpu.reciprocal %200 {approx = true} : vector<1x128xf32> -> vector<1x128xf32>
    %204 = vector.broadcast %203 : vector<1x128xf32> to vector<4x128xf32>
    %205 = arith.mulf %202, %204 : vector<4x128xf32>
    %c7_121 = arith.constant 7 : index
    %c0_122 = arith.constant 0 : index
    %c0_123 = arith.constant 0 : index
    %206 = vector.load %arg4[%c7_121, %c0_122, %c0_123] : memref<8x32x4xbf16, #tpu.memory_space<vmem>>, vector<1x32x4xbf16>
    %207 = vector.shape_cast %206 : vector<1x32x4xbf16> to vector<32x4xbf16>
    %208 = arith.truncf %205 : vector<4x128xf32> to vector<4x128xbf16>
    %cst_124 = arith.constant dense<0.000000e+00> : vector<32x128xf32>
    %209 = tpu.matmul %207, %208, %cst_124 {dimension_numbers = #tpu.dot_dimension_numbers<[1], [0], [0], [1], [0, 0, 1, 1], [], []>} : vector<32x4xbf16>, vector<4x128xbf16>, vector<32x128xf32> -> vector<32x128xf32>
    %210 = arith.addf %185, %209 : vector<32x128xf32>
    %c0_125 = arith.constant 0 : index
    %c0_126 = arith.constant 0 : index
    %211 = vector.load %arg5[%c0_125, %c0_126] : memref<32x1xf32, #tpu.memory_space<vmem>>, vector<32x1xf32>
    %212 = vector.broadcast %211 : vector<32x1xf32> to vector<32x128xf32>
    %213 = arith.addf %110, %212 : vector<32x128xf32>
    %c0_127 = arith.constant 0 : index
    %c0_128 = arith.constant 0 : index
    %c0_129 = arith.constant 0 : index
    %c0_130 = arith.constant 0 : index
    %214 = vector.load %arg7[%c0_127, %c0_128, %c0_129, %c0_130] : memref<1x2x32x256xf32, #tpu.memory_space<vmem>>, vector<1x1x32x128xf32>
    %215 = vector.shape_cast %214 : vector<1x1x32x128xf32> to vector<32x128xf32>
    %216 = vector.shape_cast %213 : vector<32x128xf32> to vector<1x1x32x128xf32>
    tpu.vector_store %arg7[%c0_127, %c0_128, %c0_129, %c0_130], %216 {strides = array<i32>} : memref<1x2x32x256xf32, #tpu.memory_space<vmem>>, vector<1x1x32x128xf32>,
    %c0_131 = arith.constant 0 : index
    %c1_132 = arith.constant 1 : index
    %c0_133 = arith.constant 0 : index
    %c0_134 = arith.constant 0 : index
    %217 = vector.load %arg7[%c0_131, %c1_132, %c0_133, %c0_134] : memref<1x2x32x256xf32, #tpu.memory_space<vmem>>, vector<1x1x32x128xf32>
    %218 = vector.shape_cast %217 : vector<1x1x32x128xf32> to vector<32x128xf32>
    %219 = vector.shape_cast %210 : vector<32x128xf32> to vector<1x1x32x128xf32>
    tpu.vector_store %arg7[%c0_131, %c1_132, %c0_133, %c0_134], %219 {strides = array<i32>} : memref<1x2x32x256xf32, #tpu.memory_space<vmem>>, vector<1x1x32x128xf32>,
    %cst_135 = arith.constant 0.000000e+00 : f32
    %220 = vector.broadcast %cst_135 : f32 to vector<32x128xf32>
    %cst_136 = arith.constant 0.000000e+00 : f32
    %221 = vector.broadcast %cst_136 : f32 to vector<32x128xf32>
    %c0_137 = arith.constant 0 : index
    %c128 = arith.constant 128 : index
    %222 = vector.load %arg8[%c0_137, %c128] : memref<96x256xbf16, #tpu.memory_space<vmem>>, vector<4x128xbf16>
    %c32_138 = arith.constant 32 : index
    %c128_139 = arith.constant 128 : index
    %223 = vector.load %arg8[%c32_138, %c128_139] : memref<96x256xbf16, #tpu.memory_space<vmem>>, vector<4x128xbf16>
    %c64_140 = arith.constant 64 : index
    %c128_141 = arith.constant 128 : index
    %224 = vector.load %arg8[%c64_140, %c128_141] : memref<96x256xbf16, #tpu.memory_space<vmem>>, vector<4x128xbf16>
    %cst_142 = arith.constant dense<0.000000e+00> : vector<128x128xf32>
    %225 = tpu.matmul %223, %222, %cst_142 {dimension_numbers = #tpu.dot_dimension_numbers<[0], [0], [1], [1], [0, 1, 1, 1], [], []>} : vector<4x128xbf16>, vector<4x128xbf16>, vector<128x128xf32> -> vector<128x128xf32>
    %c0_143 = arith.constant 0 : index
    %c1_144 = arith.constant 1 : index
    %c0_145 = arith.constant 0 : index
    %c0_146 = arith.constant 0 : index
    %226 = vector.load %arg6[%c0_143, %c1_144, %c0_145, %c0_146] : memref<8x2x128x128xbf16, #tpu.memory_space<vmem>>, vector<1x1x128x128xbf16>
    %227 = vector.shape_cast %226 : vector<1x1x128x128xbf16> to vector<128x128xbf16>
    %228 = arith.extf %227 : vector<128x128xbf16> to vector<128x128xf32>
    %229 = arith.addf %225, %228 : vector<128x128xf32>
    %cst_147 = arith.constant dense<0xFF800000> : vector<128xf32>
    %230 = vector.multi_reduction <maximumf>, %229, %cst_147 [0] : vector<128x128xf32> to vector<128xf32>
    %231 = vector.shape_cast %230 : vector<128xf32> to vector<1x128xf32>
    %232 = vector.broadcast %231 : vector<1x128xf32> to vector<128x128xf32>
    %233 = arith.subf %229, %232 : vector<128x128xf32>
    %234 = math.exp %233 : vector<128x128xf32>
    %cst_148 = arith.constant dense<0.000000e+00> : vector<128xf32>
    %235 = vector.multi_reduction <add>, %234, %cst_148 [0] : vector<128x128xf32> to vector<128xf32>
    %236 = vector.shape_cast %235 : vector<128xf32> to vector<1x128xf32>
    %237 = arith.truncf %234 : vector<128x128xf32> to vector<128x128xbf16>
    %cst_149 = arith.constant dense<0.000000e+00> : vector<4x128xf32>
    %238 = tpu.matmul %224, %237, %cst_149 {dimension_numbers = #tpu.dot_dimension_numbers<[1], [0], [0], [1], [0, 0, 1, 1], [], []>} : vector<4x128xbf16>, vector<128x128xbf16>, vector<4x128xf32> -> vector<4x128xf32>
    %239 = tpu.reciprocal %236 {approx = true} : vector<1x128xf32> -> vector<1x128xf32>
    %240 = vector.broadcast %239 : vector<1x128xf32> to vector<4x128xf32>
    %241 = arith.mulf %238, %240 : vector<4x128xf32>
    %c0_150 = arith.constant 0 : index
    %c0_151 = arith.constant 0 : index
    %c0_152 = arith.constant 0 : index
    %242 = vector.load %arg4[%c0_150, %c0_151, %c0_152] : memref<8x32x4xbf16, #tpu.memory_space<vmem>>, vector<1x32x4xbf16>
    %243 = vector.shape_cast %242 : vector<1x32x4xbf16> to vector<32x4xbf16>
    %244 = arith.truncf %241 : vector<4x128xf32> to vector<4x128xbf16>
    %cst_153 = arith.constant dense<0.000000e+00> : vector<32x128xf32>
    %245 = tpu.matmul %243, %244, %cst_153 {dimension_numbers = #tpu.dot_dimension_numbers<[1], [0], [0], [1], [0, 0, 1, 1], [], []>} : vector<32x4xbf16>, vector<4x128xbf16>, vector<32x128xf32> -> vector<32x128xf32>
    %246 = arith.addf %220, %245 : vector<32x128xf32>
    %c4_154 = arith.constant 4 : index
    %c128_155 = arith.constant 128 : index
    %247 = vector.load %arg8[%c4_154, %c128_155] : memref<96x256xbf16, #tpu.memory_space<vmem>>, vector<4x128xbf16>
    %c36_156 = arith.constant 36 : index
    %c128_157 = arith.constant 128 : index
    %248 = vector.load %arg8[%c36_156, %c128_157] : memref<96x256xbf16, #tpu.memory_space<vmem>>, vector<4x128xbf16>
    %c68_158 = arith.constant 68 : index
    %c128_159 = arith.constant 128 : index
    %249 = vector.load %arg8[%c68_158, %c128_159] : memref<96x256xbf16, #tpu.memory_space<vmem>>, vector<4x128xbf16>
    %cst_160 = arith.constant dense<0.000000e+00> : vector<128x128xf32>
    %250 = tpu.matmul %248, %247, %cst_160 {dimension_numbers = #tpu.dot_dimension_numbers<[0], [0], [1], [1], [0, 1, 1, 1], [], []>} : vector<4x128xbf16>, vector<4x128xbf16>, vector<128x128xf32> -> vector<128x128xf32>
    %c1_161 = arith.constant 1 : index
    %c1_162 = arith.constant 1 : index
    %c0_163 = arith.constant 0 : index
    %c0_164 = arith.constant 0 : index
    %251 = vector.load %arg6[%c1_161, %c1_162, %c0_163, %c0_164] : memref<8x2x128x128xbf16, #tpu.memory_space<vmem>>, vector<1x1x128x128xbf16>
    %252 = vector.shape_cast %251 : vector<1x1x128x128xbf16> to vector<128x128xbf16>
    %253 = arith.extf %252 : vector<128x128xbf16> to vector<128x128xf32>
    %254 = arith.addf %250, %253 : vector<128x128xf32>
    %cst_165 = arith.constant dense<0xFF800000> : vector<128xf32>
    %255 = vector.multi_reduction <maximumf>, %254, %cst_165 [0] : vector<128x128xf32> to vector<128xf32>
    %256 = vector.shape_cast %255 : vector<128xf32> to vector<1x128xf32>
    %257 = vector.broadcast %256 : vector<1x128xf32> to vector<128x128xf32>
    %258 = arith.subf %254, %257 : vector<128x128xf32>
    %259 = math.exp %258 : vector<128x128xf32>
    %cst_166 = arith.constant dense<0.000000e+00> : vector<128xf32>
    %260 = vector.multi_reduction <add>, %259, %cst_166 [0] : vector<128x128xf32> to vector<128xf32>
    %261 = vector.shape_cast %260 : vector<128xf32> to vector<1x128xf32>
    %262 = arith.truncf %259 : vector<128x128xf32> to vector<128x128xbf16>
    %cst_167 = arith.constant dense<0.000000e+00> : vector<4x128xf32>
    %263 = tpu.matmul %249, %262, %cst_167 {dimension_numbers = #tpu.dot_dimension_numbers<[1], [0], [0], [1], [0, 0, 1, 1], [], []>} : vector<4x128xbf16>, vector<128x128xbf16>, vector<4x128xf32> -> vector<4x128xf32>
    %264 = tpu.reciprocal %261 {approx = true} : vector<1x128xf32> -> vector<1x128xf32>
    %265 = vector.broadcast %264 : vector<1x128xf32> to vector<4x128xf32>
    %266 = arith.mulf %263, %265 : vector<4x128xf32>
    %c1_168 = arith.constant 1 : index
    %c0_169 = arith.constant 0 : index
    %c0_170 = arith.constant 0 : index
    %267 = vector.load %arg4[%c1_168, %c0_169, %c0_170] : memref<8x32x4xbf16, #tpu.memory_space<vmem>>, vector<1x32x4xbf16>
    %268 = vector.shape_cast %267 : vector<1x32x4xbf16> to vector<32x4xbf16>
    %269 = arith.truncf %266 : vector<4x128xf32> to vector<4x128xbf16>
    %cst_171 = arith.constant dense<0.000000e+00> : vector<32x128xf32>
    %270 = tpu.matmul %268, %269, %cst_171 {dimension_numbers = #tpu.dot_dimension_numbers<[1], [0], [0], [1], [0, 0, 1, 1], [], []>} : vector<32x4xbf16>, vector<4x128xbf16>, vector<32x128xf32> -> vector<32x128xf32>
    %271 = arith.addf %246, %270 : vector<32x128xf32>
    %c8_172 = arith.constant 8 : index
    %c128_173 = arith.constant 128 : index
    %272 = vector.load %arg8[%c8_172, %c128_173] : memref<96x256xbf16, #tpu.memory_space<vmem>>, vector<4x128xbf16>
    %c40_174 = arith.constant 40 : index
    %c128_175 = arith.constant 128 : index
    %273 = vector.load %arg8[%c40_174, %c128_175] : memref<96x256xbf16, #tpu.memory_space<vmem>>, vector<4x128xbf16>
    %c72_176 = arith.constant 72 : index
    %c128_177 = arith.constant 128 : index
    %274 = vector.load %arg8[%c72_176, %c128_177] : memref<96x256xbf16, #tpu.memory_space<vmem>>, vector<4x128xbf16>
    %cst_178 = arith.constant dense<0.000000e+00> : vector<128x128xf32>
    %275 = tpu.matmul %273, %272, %cst_178 {dimension_numbers = #tpu.dot_dimension_numbers<[0], [0], [1], [1], [0, 1, 1, 1], [], []>} : vector<4x128xbf16>, vector<4x128xbf16>, vector<128x128xf32> -> vector<128x128xf32>
    %c2_179 = arith.constant 2 : index
    %c1_180 = arith.constant 1 : index
    %c0_181 = arith.constant 0 : index
    %c0_182 = arith.constant 0 : index
    %276 = vector.load %arg6[%c2_179, %c1_180, %c0_181, %c0_182] : memref<8x2x128x128xbf16, #tpu.memory_space<vmem>>, vector<1x1x128x128xbf16>
    %277 = vector.shape_cast %276 : vector<1x1x128x128xbf16> to vector<128x128xbf16>
    %278 = arith.extf %277 : vector<128x128xbf16> to vector<128x128xf32>
    %279 = arith.addf %275, %278 : vector<128x128xf32>
    %cst_183 = arith.constant dense<0xFF800000> : vector<128xf32>
    %280 = vector.multi_reduction <maximumf>, %279, %cst_183 [0] : vector<128x128xf32> to vector<128xf32>
    %281 = vector.shape_cast %280 : vector<128xf32> to vector<1x128xf32>
    %282 = vector.broadcast %281 : vector<1x128xf32> to vector<128x128xf32>
    %283 = arith.subf %279, %282 : vector<128x128xf32>
    %284 = math.exp %283 : vector<128x128xf32>
    %cst_184 = arith.constant dense<0.000000e+00> : vector<128xf32>
    %285 = vector.multi_reduction <add>, %284, %cst_184 [0] : vector<128x128xf32> to vector<128xf32>
    %286 = vector.shape_cast %285 : vector<128xf32> to vector<1x128xf32>
    %287 = arith.truncf %284 : vector<128x128xf32> to vector<128x128xbf16>
    %cst_185 = arith.constant dense<0.000000e+00> : vector<4x128xf32>
    %288 = tpu.matmul %274, %287, %cst_185 {dimension_numbers = #tpu.dot_dimension_numbers<[1], [0], [0], [1], [0, 0, 1, 1], [], []>} : vector<4x128xbf16>, vector<128x128xbf16>, vector<4x128xf32> -> vector<4x128xf32>
    %289 = tpu.reciprocal %286 {approx = true} : vector<1x128xf32> -> vector<1x128xf32>
    %290 = vector.broadcast %289 : vector<1x128xf32> to vector<4x128xf32>
    %291 = arith.mulf %288, %290 : vector<4x128xf32>
    %c2_186 = arith.constant 2 : index
    %c0_187 = arith.constant 0 : index
    %c0_188 = arith.constant 0 : index
    %292 = vector.load %arg4[%c2_186, %c0_187, %c0_188] : memref<8x32x4xbf16, #tpu.memory_space<vmem>>, vector<1x32x4xbf16>
    %293 = vector.shape_cast %292 : vector<1x32x4xbf16> to vector<32x4xbf16>
    %294 = arith.truncf %291 : vector<4x128xf32> to vector<4x128xbf16>
    %cst_189 = arith.constant dense<0.000000e+00> : vector<32x128xf32>
    %295 = tpu.matmul %293, %294, %cst_189 {dimension_numbers = #tpu.dot_dimension_numbers<[1], [0], [0], [1], [0, 0, 1, 1], [], []>} : vector<32x4xbf16>, vector<4x128xbf16>, vector<32x128xf32> -> vector<32x128xf32>
    %296 = arith.addf %271, %295 : vector<32x128xf32>
    %c12_190 = arith.constant 12 : index
    %c128_191 = arith.constant 128 : index
    %297 = vector.load %arg8[%c12_190, %c128_191] : memref<96x256xbf16, #tpu.memory_space<vmem>>, vector<4x128xbf16>
    %c44_192 = arith.constant 44 : index
    %c128_193 = arith.constant 128 : index
    %298 = vector.load %arg8[%c44_192, %c128_193] : memref<96x256xbf16, #tpu.memory_space<vmem>>, vector<4x128xbf16>
    %c76_194 = arith.constant 76 : index
    %c128_195 = arith.constant 128 : index
    %299 = vector.load %arg8[%c76_194, %c128_195] : memref<96x256xbf16, #tpu.memory_space<vmem>>, vector<4x128xbf16>
    %cst_196 = arith.constant dense<0.000000e+00> : vector<128x128xf32>
    %300 = tpu.matmul %298, %297, %cst_196 {dimension_numbers = #tpu.dot_dimension_numbers<[0], [0], [1], [1], [0, 1, 1, 1], [], []>} : vector<4x128xbf16>, vector<4x128xbf16>, vector<128x128xf32> -> vector<128x128xf32>
    %c3_197 = arith.constant 3 : index
    %c1_198 = arith.constant 1 : index
    %c0_199 = arith.constant 0 : index
    %c0_200 = arith.constant 0 : index
    %301 = vector.load %arg6[%c3_197, %c1_198, %c0_199, %c0_200] : memref<8x2x128x128xbf16, #tpu.memory_space<vmem>>, vector<1x1x128x128xbf16>
    %302 = vector.shape_cast %301 : vector<1x1x128x128xbf16> to vector<128x128xbf16>
    %303 = arith.extf %302 : vector<128x128xbf16> to vector<128x128xf32>
    %304 = arith.addf %300, %303 : vector<128x128xf32>
    %cst_201 = arith.constant dense<0xFF800000> : vector<128xf32>
    %305 = vector.multi_reduction <maximumf>, %304, %cst_201 [0] : vector<128x128xf32> to vector<128xf32>
    %306 = vector.shape_cast %305 : vector<128xf32> to vector<1x128xf32>
    %307 = vector.broadcast %306 : vector<1x128xf32> to vector<128x128xf32>
    %308 = arith.subf %304, %307 : vector<128x128xf32>
    %309 = math.exp %308 : vector<128x128xf32>
    %cst_202 = arith.constant dense<0.000000e+00> : vector<128xf32>
    %310 = vector.multi_reduction <add>, %309, %cst_202 [0] : vector<128x128xf32> to vector<128xf32>
    %311 = vector.shape_cast %310 : vector<128xf32> to vector<1x128xf32>
    %312 = arith.truncf %309 : vector<128x128xf32> to vector<128x128xbf16>
    %cst_203 = arith.constant dense<0.000000e+00> : vector<4x128xf32>
    %313 = tpu.matmul %299, %312, %cst_203 {dimension_numbers = #tpu.dot_dimension_numbers<[1], [0], [0], [1], [0, 0, 1, 1], [], []>} : vector<4x128xbf16>, vector<128x128xbf16>, vector<4x128xf32> -> vector<4x128xf32>
    %314 = tpu.reciprocal %311 {approx = true} : vector<1x128xf32> -> vector<1x128xf32>
    %315 = vector.broadcast %314 : vector<1x128xf32> to vector<4x128xf32>
    %316 = arith.mulf %313, %315 : vector<4x128xf32>
    %c3_204 = arith.constant 3 : index
    %c0_205 = arith.constant 0 : index
    %c0_206 = arith.constant 0 : index
    %317 = vector.load %arg4[%c3_204, %c0_205, %c0_206] : memref<8x32x4xbf16, #tpu.memory_space<vmem>>, vector<1x32x4xbf16>
    %318 = vector.shape_cast %317 : vector<1x32x4xbf16> to vector<32x4xbf16>
    %319 = arith.truncf %316 : vector<4x128xf32> to vector<4x128xbf16>
    %cst_207 = arith.constant dense<0.000000e+00> : vector<32x128xf32>
    %320 = tpu.matmul %318, %319, %cst_207 {dimension_numbers = #tpu.dot_dimension_numbers<[1], [0], [0], [1], [0, 0, 1, 1], [], []>} : vector<32x4xbf16>, vector<4x128xbf16>, vector<32x128xf32> -> vector<32x128xf32>
    %321 = arith.addf %296, %320 : vector<32x128xf32>
    %c16_208 = arith.constant 16 : index
    %c128_209 = arith.constant 128 : index
    %322 = vector.load %arg8[%c16_208, %c128_209] : memref<96x256xbf16, #tpu.memory_space<vmem>>, vector<4x128xbf16>
    %c48_210 = arith.constant 48 : index
    %c128_211 = arith.constant 128 : index
    %323 = vector.load %arg8[%c48_210, %c128_211] : memref<96x256xbf16, #tpu.memory_space<vmem>>, vector<4x128xbf16>
    %c80_212 = arith.constant 80 : index
    %c128_213 = arith.constant 128 : index
    %324 = vector.load %arg8[%c80_212, %c128_213] : memref<96x256xbf16, #tpu.memory_space<vmem>>, vector<4x128xbf16>
    %cst_214 = arith.constant dense<0.000000e+00> : vector<128x128xf32>
    %325 = tpu.matmul %323, %322, %cst_214 {dimension_numbers = #tpu.dot_dimension_numbers<[0], [0], [1], [1], [0, 1, 1, 1], [], []>} : vector<4x128xbf16>, vector<4x128xbf16>, vector<128x128xf32> -> vector<128x128xf32>
    %c4_215 = arith.constant 4 : index
    %c1_216 = arith.constant 1 : index
    %c0_217 = arith.constant 0 : index
    %c0_218 = arith.constant 0 : index
    %326 = vector.load %arg6[%c4_215, %c1_216, %c0_217, %c0_218] : memref<8x2x128x128xbf16, #tpu.memory_space<vmem>>, vector<1x1x128x128xbf16>
    %327 = vector.shape_cast %326 : vector<1x1x128x128xbf16> to vector<128x128xbf16>
    %328 = arith.extf %327 : vector<128x128xbf16> to vector<128x128xf32>
    %329 = arith.addf %325, %328 : vector<128x128xf32>
    %cst_219 = arith.constant dense<0xFF800000> : vector<128xf32>
    %330 = vector.multi_reduction <maximumf>, %329, %cst_219 [0] : vector<128x128xf32> to vector<128xf32>
    %331 = vector.shape_cast %330 : vector<128xf32> to vector<1x128xf32>
    %332 = vector.broadcast %331 : vector<1x128xf32> to vector<128x128xf32>
    %333 = arith.subf %329, %332 : vector<128x128xf32>
    %334 = math.exp %333 : vector<128x128xf32>
    %cst_220 = arith.constant dense<0.000000e+00> : vector<128xf32>
    %335 = vector.multi_reduction <add>, %334, %cst_220 [0] : vector<128x128xf32> to vector<128xf32>
    %336 = vector.shape_cast %335 : vector<128xf32> to vector<1x128xf32>
    %337 = arith.truncf %334 : vector<128x128xf32> to vector<128x128xbf16>
    %cst_221 = arith.constant dense<0.000000e+00> : vector<4x128xf32>
    %338 = tpu.matmul %324, %337, %cst_221 {dimension_numbers = #tpu.dot_dimension_numbers<[1], [0], [0], [1], [0, 0, 1, 1], [], []>} : vector<4x128xbf16>, vector<128x128xbf16>, vector<4x128xf32> -> vector<4x128xf32>
    %339 = tpu.reciprocal %336 {approx = true} : vector<1x128xf32> -> vector<1x128xf32>
    %340 = vector.broadcast %339 : vector<1x128xf32> to vector<4x128xf32>
    %341 = arith.mulf %338, %340 : vector<4x128xf32>
    %c4_222 = arith.constant 4 : index
    %c0_223 = arith.constant 0 : index
    %c0_224 = arith.constant 0 : index
    %342 = vector.load %arg4[%c4_222, %c0_223, %c0_224] : memref<8x32x4xbf16, #tpu.memory_space<vmem>>, vector<1x32x4xbf16>
    %343 = vector.shape_cast %342 : vector<1x32x4xbf16> to vector<32x4xbf16>
    %344 = arith.truncf %341 : vector<4x128xf32> to vector<4x128xbf16>
    %cst_225 = arith.constant dense<0.000000e+00> : vector<32x128xf32>
    %345 = tpu.matmul %343, %344, %cst_225 {dimension_numbers = #tpu.dot_dimension_numbers<[1], [0], [0], [1], [0, 0, 1, 1], [], []>} : vector<32x4xbf16>, vector<4x128xbf16>, vector<32x128xf32> -> vector<32x128xf32>
    %346 = arith.addf %221, %345 : vector<32x128xf32>
    %c20_226 = arith.constant 20 : index
    %c128_227 = arith.constant 128 : index
    %347 = vector.load %arg8[%c20_226, %c128_227] : memref<96x256xbf16, #tpu.memory_space<vmem>>, vector<4x128xbf16>
    %c52_228 = arith.constant 52 : index
    %c128_229 = arith.constant 128 : index
    %348 = vector.load %arg8[%c52_228, %c128_229] : memref<96x256xbf16, #tpu.memory_space<vmem>>, vector<4x128xbf16>
    %c84_230 = arith.constant 84 : index
    %c128_231 = arith.constant 128 : index
    %349 = vector.load %arg8[%c84_230, %c128_231] : memref<96x256xbf16, #tpu.memory_space<vmem>>, vector<4x128xbf16>
    %cst_232 = arith.constant dense<0.000000e+00> : vector<128x128xf32>
    %350 = tpu.matmul %348, %347, %cst_232 {dimension_numbers = #tpu.dot_dimension_numbers<[0], [0], [1], [1], [0, 1, 1, 1], [], []>} : vector<4x128xbf16>, vector<4x128xbf16>, vector<128x128xf32> -> vector<128x128xf32>
    %c5_233 = arith.constant 5 : index
    %c1_234 = arith.constant 1 : index
    %c0_235 = arith.constant 0 : index
    %c0_236 = arith.constant 0 : index
    %351 = vector.load %arg6[%c5_233, %c1_234, %c0_235, %c0_236] : memref<8x2x128x128xbf16, #tpu.memory_space<vmem>>, vector<1x1x128x128xbf16>
    %352 = vector.shape_cast %351 : vector<1x1x128x128xbf16> to vector<128x128xbf16>
    %353 = arith.extf %352 : vector<128x128xbf16> to vector<128x128xf32>
    %354 = arith.addf %350, %353 : vector<128x128xf32>
    %cst_237 = arith.constant dense<0xFF800000> : vector<128xf32>
    %355 = vector.multi_reduction <maximumf>, %354, %cst_237 [0] : vector<128x128xf32> to vector<128xf32>
    %356 = vector.shape_cast %355 : vector<128xf32> to vector<1x128xf32>
    %357 = vector.broadcast %356 : vector<1x128xf32> to vector<128x128xf32>
    %358 = arith.subf %354, %357 : vector<128x128xf32>
    %359 = math.exp %358 : vector<128x128xf32>
    %cst_238 = arith.constant dense<0.000000e+00> : vector<128xf32>
    %360 = vector.multi_reduction <add>, %359, %cst_238 [0] : vector<128x128xf32> to vector<128xf32>
    %361 = vector.shape_cast %360 : vector<128xf32> to vector<1x128xf32>
    %362 = arith.truncf %359 : vector<128x128xf32> to vector<128x128xbf16>
    %cst_239 = arith.constant dense<0.000000e+00> : vector<4x128xf32>
    %363 = tpu.matmul %349, %362, %cst_239 {dimension_numbers = #tpu.dot_dimension_numbers<[1], [0], [0], [1], [0, 0, 1, 1], [], []>} : vector<4x128xbf16>, vector<128x128xbf16>, vector<4x128xf32> -> vector<4x128xf32>
    %364 = tpu.reciprocal %361 {approx = true} : vector<1x128xf32> -> vector<1x128xf32>
    %365 = vector.broadcast %364 : vector<1x128xf32> to vector<4x128xf32>
    %366 = arith.mulf %363, %365 : vector<4x128xf32>
    %c5_240 = arith.constant 5 : index
    %c0_241 = arith.constant 0 : index
    %c0_242 = arith.constant 0 : index
    %367 = vector.load %arg4[%c5_240, %c0_241, %c0_242] : memref<8x32x4xbf16, #tpu.memory_space<vmem>>, vector<1x32x4xbf16>
    %368 = vector.shape_cast %367 : vector<1x32x4xbf16> to vector<32x4xbf16>
    %369 = arith.truncf %366 : vector<4x128xf32> to vector<4x128xbf16>
    %cst_243 = arith.constant dense<0.000000e+00> : vector<32x128xf32>
    %370 = tpu.matmul %368, %369, %cst_243 {dimension_numbers = #tpu.dot_dimension_numbers<[1], [0], [0], [1], [0, 0, 1, 1], [], []>} : vector<32x4xbf16>, vector<4x128xbf16>, vector<32x128xf32> -> vector<32x128xf32>
    %371 = arith.addf %346, %370 : vector<32x128xf32>
    %c24_244 = arith.constant 24 : index
    %c128_245 = arith.constant 128 : index
    %372 = vector.load %arg8[%c24_244, %c128_245] : memref<96x256xbf16, #tpu.memory_space<vmem>>, vector<4x128xbf16>
    %c56_246 = arith.constant 56 : index
    %c128_247 = arith.constant 128 : index
    %373 = vector.load %arg8[%c56_246, %c128_247] : memref<96x256xbf16, #tpu.memory_space<vmem>>, vector<4x128xbf16>
    %c88_248 = arith.constant 88 : index
    %c128_249 = arith.constant 128 : index
    %374 = vector.load %arg8[%c88_248, %c128_249] : memref<96x256xbf16, #tpu.memory_space<vmem>>, vector<4x128xbf16>
    %cst_250 = arith.constant dense<0.000000e+00> : vector<128x128xf32>
    %375 = tpu.matmul %373, %372, %cst_250 {dimension_numbers = #tpu.dot_dimension_numbers<[0], [0], [1], [1], [0, 1, 1, 1], [], []>} : vector<4x128xbf16>, vector<4x128xbf16>, vector<128x128xf32> -> vector<128x128xf32>
    %c6_251 = arith.constant 6 : index
    %c1_252 = arith.constant 1 : index
    %c0_253 = arith.constant 0 : index
    %c0_254 = arith.constant 0 : index
    %376 = vector.load %arg6[%c6_251, %c1_252, %c0_253, %c0_254] : memref<8x2x128x128xbf16, #tpu.memory_space<vmem>>, vector<1x1x128x128xbf16>
    %377 = vector.shape_cast %376 : vector<1x1x128x128xbf16> to vector<128x128xbf16>
    %378 = arith.extf %377 : vector<128x128xbf16> to vector<128x128xf32>
    %379 = arith.addf %375, %378 : vector<128x128xf32>
    %cst_255 = arith.constant dense<0xFF800000> : vector<128xf32>
    %380 = vector.multi_reduction <maximumf>, %379, %cst_255 [0] : vector<128x128xf32> to vector<128xf32>
    %381 = vector.shape_cast %380 : vector<128xf32> to vector<1x128xf32>
    %382 = vector.broadcast %381 : vector<1x128xf32> to vector<128x128xf32>
    %383 = arith.subf %379, %382 : vector<128x128xf32>
    %384 = math.exp %383 : vector<128x128xf32>
    %cst_256 = arith.constant dense<0.000000e+00> : vector<128xf32>
    %385 = vector.multi_reduction <add>, %384, %cst_256 [0] : vector<128x128xf32> to vector<128xf32>
    %386 = vector.shape_cast %385 : vector<128xf32> to vector<1x128xf32>
    %387 = arith.truncf %384 : vector<128x128xf32> to vector<128x128xbf16>
    %cst_257 = arith.constant dense<0.000000e+00> : vector<4x128xf32>
    %388 = tpu.matmul %374, %387, %cst_257 {dimension_numbers = #tpu.dot_dimension_numbers<[1], [0], [0], [1], [0, 0, 1, 1], [], []>} : vector<4x128xbf16>, vector<128x128xbf16>, vector<4x128xf32> -> vector<4x128xf32>
    %389 = tpu.reciprocal %386 {approx = true} : vector<1x128xf32> -> vector<1x128xf32>
    %390 = vector.broadcast %389 : vector<1x128xf32> to vector<4x128xf32>
    %391 = arith.mulf %388, %390 : vector<4x128xf32>
    %c6_258 = arith.constant 6 : index
    %c0_259 = arith.constant 0 : index
    %c0_260 = arith.constant 0 : index
    %392 = vector.load %arg4[%c6_258, %c0_259, %c0_260] : memref<8x32x4xbf16, #tpu.memory_space<vmem>>, vector<1x32x4xbf16>
    %393 = vector.shape_cast %392 : vector<1x32x4xbf16> to vector<32x4xbf16>
    %394 = arith.truncf %391 : vector<4x128xf32> to vector<4x128xbf16>
    %cst_261 = arith.constant dense<0.000000e+00> : vector<32x128xf32>
    %395 = tpu.matmul %393, %394, %cst_261 {dimension_numbers = #tpu.dot_dimension_numbers<[1], [0], [0], [1], [0, 0, 1, 1], [], []>} : vector<32x4xbf16>, vector<4x128xbf16>, vector<32x128xf32> -> vector<32x128xf32>
    %396 = arith.addf %371, %395 : vector<32x128xf32>
    %c28_262 = arith.constant 28 : index
    %c128_263 = arith.constant 128 : index
    %397 = vector.load %arg8[%c28_262, %c128_263] : memref<96x256xbf16, #tpu.memory_space<vmem>>, vector<4x128xbf16>
    %c60_264 = arith.constant 60 : index
    %c128_265 = arith.constant 128 : index
    %398 = vector.load %arg8[%c60_264, %c128_265] : memref<96x256xbf16, #tpu.memory_space<vmem>>, vector<4x128xbf16>
    %c92_266 = arith.constant 92 : index
    %c128_267 = arith.constant 128 : index
    %399 = vector.load %arg8[%c92_266, %c128_267] : memref<96x256xbf16, #tpu.memory_space<vmem>>, vector<4x128xbf16>
    %cst_268 = arith.constant dense<0.000000e+00> : vector<128x128xf32>
    %400 = tpu.matmul %398, %397, %cst_268 {dimension_numbers = #tpu.dot_dimension_numbers<[0], [0], [1], [1], [0, 1, 1, 1], [], []>} : vector<4x128xbf16>, vector<4x128xbf16>, vector<128x128xf32> -> vector<128x128xf32>
    %c7_269 = arith.constant 7 : index
    %c1_270 = arith.constant 1 : index
    %c0_271 = arith.constant 0 : index
    %c0_272 = arith.constant 0 : index
    %401 = vector.load %arg6[%c7_269, %c1_270, %c0_271, %c0_272] : memref<8x2x128x128xbf16, #tpu.memory_space<vmem>>, vector<1x1x128x128xbf16>
    %402 = vector.shape_cast %401 : vector<1x1x128x128xbf16> to vector<128x128xbf16>
    %403 = arith.extf %402 : vector<128x128xbf16> to vector<128x128xf32>
    %404 = arith.addf %400, %403 : vector<128x128xf32>
    %cst_273 = arith.constant dense<0xFF800000> : vector<128xf32>
    %405 = vector.multi_reduction <maximumf>, %404, %cst_273 [0] : vector<128x128xf32> to vector<128xf32>
    %406 = vector.shape_cast %405 : vector<128xf32> to vector<1x128xf32>
    %407 = vector.broadcast %406 : vector<1x128xf32> to vector<128x128xf32>
    %408 = arith.subf %404, %407 : vector<128x128xf32>
    %409 = math.exp %408 : vector<128x128xf32>
    %cst_274 = arith.constant dense<0.000000e+00> : vector<128xf32>
    %410 = vector.multi_reduction <add>, %409, %cst_274 [0] : vector<128x128xf32> to vector<128xf32>
    %411 = vector.shape_cast %410 : vector<128xf32> to vector<1x128xf32>
    %412 = arith.truncf %409 : vector<128x128xf32> to vector<128x128xbf16>
    %cst_275 = arith.constant dense<0.000000e+00> : vector<4x128xf32>
    %413 = tpu.matmul %399, %412, %cst_275 {dimension_numbers = #tpu.dot_dimension_numbers<[1], [0], [0], [1], [0, 0, 1, 1], [], []>} : vector<4x128xbf16>, vector<128x128xbf16>, vector<4x128xf32> -> vector<4x128xf32>
    %414 = tpu.reciprocal %411 {approx = true} : vector<1x128xf32> -> vector<1x128xf32>
    %415 = vector.broadcast %414 : vector<1x128xf32> to vector<4x128xf32>
    %416 = arith.mulf %413, %415 : vector<4x128xf32>
    %c7_276 = arith.constant 7 : index
    %c0_277 = arith.constant 0 : index
    %c0_278 = arith.constant 0 : index
    %417 = vector.load %arg4[%c7_276, %c0_277, %c0_278] : memref<8x32x4xbf16, #tpu.memory_space<vmem>>, vector<1x32x4xbf16>
    %418 = vector.shape_cast %417 : vector<1x32x4xbf16> to vector<32x4xbf16>
    %419 = arith.truncf %416 : vector<4x128xf32> to vector<4x128xbf16>
    %cst_279 = arith.constant dense<0.000000e+00> : vector<32x128xf32>
    %420 = tpu.matmul %418, %419, %cst_279 {dimension_numbers = #tpu.dot_dimension_numbers<[1], [0], [0], [1], [0, 0, 1, 1], [], []>} : vector<32x4xbf16>, vector<4x128xbf16>, vector<32x128xf32> -> vector<32x128xf32>
    %421 = arith.addf %396, %420 : vector<32x128xf32>
    %c0_280 = arith.constant 0 : index
    %c0_281 = arith.constant 0 : index
    %422 = vector.load %arg5[%c0_280, %c0_281] : memref<32x1xf32, #tpu.memory_space<vmem>>, vector<32x1xf32>
    %423 = vector.broadcast %422 : vector<32x1xf32> to vector<32x128xf32>
    %424 = arith.addf %321, %423 : vector<32x128xf32>
    %c0_282 = arith.constant 0 : index
    %c0_283 = arith.constant 0 : index
    %c0_284 = arith.constant 0 : index
    %c128_285 = arith.constant 128 : index
    %425 = vector.load %arg7[%c0_282, %c0_283, %c0_284, %c128_285] : memref<1x2x32x256xf32, #tpu.memory_space<vmem>>, vector<1x1x32x128xf32>
    %426 = vector.shape_cast %425 : vector<1x1x32x128xf32> to vector<32x128xf32>
    %427 = vector.shape_cast %424 : vector<32x128xf32> to vector<1x1x32x128xf32>
    tpu.vector_store %arg7[%c0_282, %c0_283, %c0_284, %c128_285], %427 {strides = array<i32>} : memref<1x2x32x256xf32, #tpu.memory_space<vmem>>, vector<1x1x32x128xf32>,
    %c0_286 = arith.constant 0 : index
    %c1_287 = arith.constant 1 : index
    %c0_288 = arith.constant 0 : index
    %c128_289 = arith.constant 128 : index
    %428 = vector.load %arg7[%c0_286, %c1_287, %c0_288, %c128_289] : memref<1x2x32x256xf32, #tpu.memory_space<vmem>>, vector<1x1x32x128xf32>
    %429 = vector.shape_cast %428 : vector<1x1x32x128xf32> to vector<32x128xf32>
    %430 = vector.shape_cast %421 : vector<32x128xf32> to vector<1x1x32x128xf32>
    tpu.vector_store %arg7[%c0_286, %c1_287, %c0_288, %c128_289], %430 {strides = array<i32>} : memref<1x2x32x256xf32, #tpu.memory_space<vmem>>, vector<1x1x32x128xf32>,
    return
  }
  func.func @transform_0(%arg0: i32) -> (i32, i32, i32) {
    %c0_i32 = arith.constant 0 : i32
    %c0_i32_0 = arith.constant 0 : i32
    %c0_i32_1 = arith.constant 0 : i32
    return %arg0, %c0_i32, %c0_i32_0 : i32, i32, i32
  }
  func.func @transform_1(%arg0: i32) -> (i32, i32) {
    %c0_i32 = arith.constant 0 : i32
    %c0_i32_0 = arith.constant 0 : i32
    %c0_i32_1 = arith.constant 0 : i32
    return %c0_i32, %c0_i32_0 : i32, i32
  }
  func.func @transform_2(%arg0: i32) -> (i32, i32) {
    %c0_i32 = arith.constant 0 : i32
    %c0_i32_0 = arith.constant 0 : i32
    %c0_i32_1 = arith.constant 0 : i32
    return %c0_i32, %c0_i32_0 : i32, i32
  }
  func.func @transform_3(%arg0: i32) -> (i32, i32, i32) {
    %c0_i32 = arith.constant 0 : i32
    %c0_i32_0 = arith.constant 0 : i32
    %c0_i32_1 = arith.constant 0 : i32
    %c0_i32_2 = arith.constant 0 : i32
    return %c0_i32, %c0_i32_0, %c0_i32_1 : i32, i32, i32
  }
  func.func @transform_4(%arg0: i32) -> (i32, i32) {
    %c0_i32 = arith.constant 0 : i32
    %c0_i32_0 = arith.constant 0 : i32
    %c0_i32_1 = arith.constant 0 : i32
    return %c0_i32, %c0_i32_0 : i32, i32
  }
  func.func @transform_5(%arg0: i32) -> (i32, i32, i32, i32) {
    %c0_i32 = arith.constant 0 : i32
    %c0_i32_0 = arith.constant 0 : i32
    %c0_i32_1 = arith.constant 0 : i32
    %c0_i32_2 = arith.constant 0 : i32
    %c0_i32_3 = arith.constant 0 : i32
    return %c0_i32, %c0_i32_0, %c0_i32_1, %c0_i32_2 : i32, i32, i32, i32
  }
  func.func @transform_6(%arg0: i32) -> (i32, i32, i32, i32) {
    %c0_i32 = arith.constant 0 : i32
    %c0_i32_0 = arith.constant 0 : i32
    %c0_i32_1 = arith.constant 0 : i32
    %c0_i32_2 = arith.constant 0 : i32
    return %arg0, %c0_i32, %c0_i32_0, %c0_i32_1 : i32, i32, i32, i32
  }
}

</mosaic_0001>

<llo_original>
// kernel: _lambda_.1
$region0: #{_lambda_.1}
  #allocation0 [shape = 'u32[]', space=smem, size = 0x4, offset = 0x4, fixed_abs, tag = 'smem constant byte address 0x4 - core index']
  #allocation1 [shape = 'u32[144,128]{1,0:T(1,128)}', space=vmem, size = 0x12000, scoped, tag = 'internal scratch']
  #allocation2 [shape = 'bf16[96,256]{1,0:T(16,128)(2,1)}', space=vmem, size = 0xc000, scoped, tag = 'scratch operand']
  %s0 = inlined_call_operand.vmem [shape: bf16[2,64,256], index: 0, kind: input, shape index: {}]
  %s1 = inlined_call_operand.vmem [shape: bf16[96,64], index: 1, kind: input, shape index: {}]
  %s2 = inlined_call_operand.vmem [shape: f32[96,1], index: 2, kind: input, shape index: {}]
  %s3 = inlined_call_operand.vmem [shape: bf16[8,32,4], index: 3, kind: input, shape index: {}]
  %s4 = inlined_call_operand.vmem [shape: f32[32,1], index: 4, kind: input, shape index: {}]
  %s5 = inlined_call_operand.vmem [shape: bf16[8,2,128,128], index: 5, kind: input, shape index: {}]
  %s6 = inlined_call_operand.vmem [shape: f32[2,2,32,256], index: 6, kind: output, shape index: {}]
  %s7 = sld [smem:[#allocation0]]
  $region57: #{_lambda_.1} parent=0
    _
  %s9 = ssub.s32 1, %s7
  %s10 = scalar_select 0, %s9, %s7
  loop: start=0, step=1, limit=4
  $region2: #{_lambda_.1} parent=0 // loop_pre_header
    _
  $region3: #{_lambda_.1} parent=0 // loop_header
    %s12 = sphi 0, %s16
    %p13 = scmp.ge.s32.totalorder %s12, 4
    %s22 = sphi 0, %s24
    %s25 = sphi 0, %s22
    %s26 = sphi 0, %s25
    %s42 = sphi 0, %s26
    %s46 = sphi 0, %s46
    %s48 = sphi 0, %s46
    %s49 = sphi 0, %s48
    %s63 = sphi 0, %s49
    %s67 = sphi 0, %s67
    %s69 = sphi 0, %s67
    %s70 = sphi 0, %s69
    %s84 = sphi 0, %s70
    %s88 = sphi 0, %s88
    %s90 = sphi 0, %s88
    %s91 = sphi 0, %s90
    %s105 = sphi 0, %s91
    %s109 = sphi 0, %s109
    %s111 = sphi 0, %s109
    %s112 = sphi 0, %s111
    %s126 = sphi 0, %s112
    %s130 = sphi 0, %s130
    %s132 = sphi 0, %s130
    %s133 = sphi 0, %s132
    %s147 = sphi 0, %s133
    %s153 = sphi 0, %s155
    %s156 = sphi 0, %s153
    %s157 = sphi 0, %s156
    %s173 = sphi 0, %s157
  $region4: #{_lambda_.1} parent=0 // loop_header_branch
    %15 = sbr.rel (%p13) target = $region8
  $region5: #{_lambda_.1} parent=0 // loop_body
    %s17 = ssub.s32 %s12, 1
    %s18 = ssub.s32 %s12, 2
    %s19 = sadd.s32 %s12, 1
    %s20 = ssub.s32 %s12, %s19
    %p21 = scmp.eq.s32.totalorder %s20, 0
    %s23 = sadd.s32 %s22, 1
    %s24 = scalar_select %p21, %s22, %s23
    %p27 = pneg %p21
    %p28 = scmp.eq.s32.totalorder %s12, 1
    %p29 = por %p27, %p28
    %p30 = scmp.ne.s32.totalorder %s22, %s25
    %p31 = scmp.eq.s32.totalorder %s12, 0
    %p32 = por %p30, %p31
    %p33 = scmp.ne.s32.totalorder %s22, %s25
    %p34 = scmp.eq.s32.totalorder %s17, 1
    %p35 = por %p33, %p34
    %p36 = scmp.ne.s32.totalorder %s25, %s26
    %p37 = scmp.eq.s32.totalorder %s17, 0
    %p38 = por %p36, %p37
    %p39 = scmp.ne.s32.totalorder %s25, %s26
    %p40 = scmp.eq.s32.totalorder %s18, 1
    %p41 = por %p39, %p40
    %p43 = scmp.ne.s32.totalorder %s26, %s42
    %p44 = scmp.eq.s32.totalorder %s18, 0
    %p45 = por %p43, %p44
    %s47 = sadd.s32 %s46, 1
    %p50 = scmp.eq.s32.totalorder %s12, 1
    %p51 = scmp.ne.s32.totalorder %s46, %s48
    %p52 = scmp.eq.s32.totalorder %s12, 0
    %p53 = por %p51, %p52
    %p54 = scmp.ne.s32.totalorder %s46, %s48
    %p55 = scmp.eq.s32.totalorder %s17, 1
    %p56 = por %p54, %p55
    %p57 = scmp.ne.s32.totalorder %s48, %s49
    %p58 = scmp.eq.s32.totalorder %s17, 0
    %p59 = por %p57, %p58
    %p60 = scmp.ne.s32.totalorder %s48, %s49
    %p61 = scmp.eq.s32.totalorder %s18, 1
    %p62 = por %p60, %p61
    %p64 = scmp.ne.s32.totalorder %s49, %s63
    %p65 = scmp.eq.s32.totalorder %s18, 0
    %p66 = por %p64, %p65
    %s68 = sadd.s32 %s67, 1
    %p71 = scmp.eq.s32.totalorder %s12, 1
    %p72 = scmp.ne.s32.totalorder %s67, %s69
    %p73 = scmp.eq.s32.totalorder %s12, 0
    %p74 = por %p72, %p73
    %p75 = scmp.ne.s32.totalorder %s67, %s69
    %p76 = scmp.eq.s32.totalorder %s17, 1
    %p77 = por %p75, %p76
    %p78 = scmp.ne.s32.totalorder %s69, %s70
    %p79 = scmp.eq.s32.totalorder %s17, 0
    %p80 = por %p78, %p79
    %p81 = scmp.ne.s32.totalorder %s69, %s70
    %p82 = scmp.eq.s32.totalorder %s18, 1
    %p83 = por %p81, %p82
    %p85 = scmp.ne.s32.totalorder %s70, %s84
    %p86 = scmp.eq.s32.totalorder %s18, 0
    %p87 = por %p85, %p86
    %s89 = sadd.s32 %s88, 1
    %p92 = scmp.eq.s32.totalorder %s12, 1
    %p93 = scmp.ne.s32.totalorder %s88, %s90
    %p94 = scmp.eq.s32.totalorder %s12, 0
    %p95 = por %p93, %p94
    %p96 = scmp.ne.s32.totalorder %s88, %s90
    %p97 = scmp.eq.s32.totalorder %s17, 1
    %p98 = por %p96, %p97
    %p99 = scmp.ne.s32.totalorder %s90, %s91
    %p100 = scmp.eq.s32.totalorder %s17, 0
    %p101 = por %p99, %p100
    %p102 = scmp.ne.s32.totalorder %s90, %s91
    %p103 = scmp.eq.s32.totalorder %s18, 1
    %p104 = por %p102, %p103
    %p106 = scmp.ne.s32.totalorder %s91, %s105
    %p107 = scmp.eq.s32.totalorder %s18, 0
    %p108 = por %p106, %p107
    %s110 = sadd.s32 %s109, 1
    %p113 = scmp.eq.s32.totalorder %s12, 1
    %p114 = scmp.ne.s32.totalorder %s109, %s111
    %p115 = scmp.eq.s32.totalorder %s12, 0
    %p116 = por %p114, %p115
    %p117 = scmp.ne.s32.totalorder %s109, %s111
    %p118 = scmp.eq.s32.totalorder %s17, 1
    %p119 = por %p117, %p118
    %p120 = scmp.ne.s32.totalorder %s111, %s112
    %p121 = scmp.eq.s32.totalorder %s17, 0
    %p122 = por %p120, %p121
    %p123 = scmp.ne.s32.totalorder %s111, %s112
    %p124 = scmp.eq.s32.totalorder %s18, 1
    %p125 = por %p123, %p124
    %p127 = scmp.ne.s32.totalorder %s112, %s126
    %p128 = scmp.eq.s32.totalorder %s18, 0
    %p129 = por %p127, %p128
    %s131 = sadd.s32 %s130, 1
    %p134 = scmp.eq.s32.totalorder %s12, 1
    %p135 = scmp.ne.s32.totalorder %s130, %s132
    %p136 = scmp.eq.s32.totalorder %s12, 0
    %p137 = por %p135, %p136
    %p138 = scmp.ne.s32.totalorder %s130, %s132
    %p139 = scmp.eq.s32.totalorder %s17, 1
    %p140 = por %p138, %p139
    %p141 = scmp.ne.s32.totalorder %s132, %s133
    %p142 = scmp.eq.s32.totalorder %s17, 0
    %p143 = por %p141, %p142
    %p144 = scmp.ne.s32.totalorder %s132, %s133
    %p145 = scmp.eq.s32.totalorder %s18, 1
    %p146 = por %p144, %p145
    %p148 = scmp.ne.s32.totalorder %s133, %s147
    %p149 = scmp.eq.s32.totalorder %s18, 0
    %p150 = por %p148, %p149
    %s151 = ssub.s32 %s12, %s19
    %p152 = scmp.eq.s32.totalorder %s151, 0
    %s154 = sadd.s32 %s153, 1
    %s155 = scalar_select %p152, %s153, %s154
    %p158 = pneg %p152
    %p159 = scmp.eq.s32.totalorder %s12, 1
    %p160 = por %p158, %p159
    %p161 = scmp.ne.s32.totalorder %s153, %s156
    %p162 = scmp.eq.s32.totalorder %s12, 0
    %p163 = por %p161, %p162
    %p164 = scmp.ne.s32.totalorder %s153, %s156
    %p165 = scmp.eq.s32.totalorder %s17, 1
    %p166 = por %p164, %p165
    %p167 = scmp.ne.s32.totalorder %s156, %s157
    %p168 = scmp.eq.s32.totalorder %s17, 0
    %p169 = por %p167, %p168
    %p170 = scmp.ne.s32.totalorder %s156, %s157
    %p171 = scmp.eq.s32.totalorder %s18, 1
    %p172 = por %p170, %p171
    %p174 = scmp.ne.s32.totalorder %s157, %s173
    %p175 = scmp.eq.s32.totalorder %s18, 0
    %p176 = por %p174, %p175
    %p177 = scmp.le.s32.totalorder 1, %s12
    %p178 = scmp.lt.s32.totalorder %s12, 3
    %p179 = pnand %p177, %p178
    %p180 = pneg %p179
    // Predicated region
    $region9: #{_lambda_.1} parent=5 // pred_check
      _
    $region10: #{_lambda_.1} parent=5 // pred_check_branch
      %182 = sbr.rel (%p179) target = $region12
    $region11: #{_lambda_.1} parent=5 // pred_region
      %s183 = ssub.s32 %s12, 1
      // Predicated region
      $region13: #{_lambda_.1} parent=11 // pred_check
        %p184 = pneg %p59
      $region14: #{_lambda_.1} parent=11 // pred_check_branch
        %186 = sbr.rel (%p184) target = $region16
      $region15: #{_lambda_.1} parent=11 // pred_region
        _
      $region16: #{_lambda_.1} parent=11 // pred_fallthru
        _
      // Predicated region
      $region17: #{_lambda_.1} parent=11 // pred_check
        %p187 = pneg %p80
      $region18: #{_lambda_.1} parent=11 // pred_check_branch
        %189 = sbr.rel (%p187) target = $region20
      $region19: #{_lambda_.1} parent=11 // pred_region
        _
      $region20: #{_lambda_.1} parent=11 // pred_fallthru
        _
      // Predicated region
      $region21: #{_lambda_.1} parent=11 // pred_check
        %p190 = pneg %p101
      $region22: #{_lambda_.1} parent=11 // pred_check_branch
        %192 = sbr.rel (%p190) target = $region24
      $region23: #{_lambda_.1} parent=11 // pred_region
        _
      $region24: #{_lambda_.1} parent=11 // pred_fallthru
        _
      // Predicated region
      $region25: #{_lambda_.1} parent=11 // pred_check
        %p193 = pneg %p122
      $region26: #{_lambda_.1} parent=11 // pred_check_branch
        %195 = sbr.rel (%p193) target = $region28
      $region27: #{_lambda_.1} parent=11 // pred_region
        _
      $region28: #{_lambda_.1} parent=11 // pred_fallthru
        _
      // Predicated region
      $region29: #{_lambda_.1} parent=11 // pred_check
        %p196 = pneg %p143
      $region30: #{_lambda_.1} parent=11 // pred_check_branch
        %198 = sbr.rel (%p196) target = $region32
      $region31: #{_lambda_.1} parent=11 // pred_region
        _
      $region32: #{_lambda_.1} parent=11 // pred_fallthru
        _
    $region12: #{_lambda_.1} parent=5 // pred_fallthru
      _
    %p199 = scmp.lt.s32.totalorder %s12, 2
    // Predicated region
    $region33: #{_lambda_.1} parent=5 // pred_check
      %p200 = pneg %p199
    $region34: #{_lambda_.1} parent=5 // pred_check_branch
      %202 = sbr.rel (%p200) target = $region36
    $region35: #{_lambda_.1} parent=5 // pred_region
      // Predicated region
      $region37: #{_lambda_.1} parent=35 // pred_check
        %p203 = pneg %p32
      $region38: #{_lambda_.1} parent=35 // pred_check_branch
        %205 = sbr.rel (%p203) target = $region40
      $region39: #{_lambda_.1} parent=35 // pred_region
        %p206 = scmp.lt.s32.totalorder %s12, 1
        %s207 = scalar_select %p206, %s12, 1
        %s208 = smul.addr %s207, 16
        %s209 = smul.addr %s208, 4
        %s210 = scalar_lea.vmem %s0, %s209
      $region40: #{_lambda_.1} parent=35 // pred_fallthru
        _
    $region36: #{_lambda_.1} parent=5 // pred_fallthru
      _
    %p211 = scmp.le.s32.totalorder 1, %s12
    %p212 = scmp.lt.s32.totalorder %s12, 3
    %p213 = pnand %p211, %p212
    %p214 = pneg %p213
    // Predicated region
    $region41: #{_lambda_.1} parent=5 // pred_check
      _
    $region42: #{_lambda_.1} parent=5 // pred_check_branch
      %216 = sbr.rel (%p213) target = $region44
    $region43: #{_lambda_.1} parent=5 // pred_region
      %s217 = ssub.s32 %s12, 1
      %p218 = scmp.lt.s32.totalorder %s17, 1
      %s219 = scalar_select %p218, %s17, 1
      %s220 = smul.addr %s219, 16
      %s221 = smul.addr %s220, 4
      %s222 = scalar_lea.vmem %s0, %s221
      %p223 = pneg %p38
      %p224 = pneg %p35
      %p225 = pneg %p59
      %p226 = pneg %p56
      %p227 = pneg %p80
      %p228 = pneg %p77
      %p229 = pneg %p101
      %p230 = pneg %p98
      %p231 = pneg %p122
      %p232 = pneg %p119
      %p233 = pneg %p143
      %p234 = pneg %p140
      %p235 = pneg %p169
      %p236 = pneg %p166
      %p237 = scmp.lt.s32.totalorder %s17, 1
      %s238 = scalar_select %p237, %s17, 1
      %s239 = smul.addr %s238, 16
      %s240 = smul.addr %s239, 8
      %s241 = scalar_lea.vmem %s6, %s240
      %p242 = scmp.lt.s32.totalorder %s17, 1
      %s243 = scalar_select %p242, %s17, 1
      %s244 = smul.addr %s243, 16
      %s245 = smul.addr %s244, 4
      %s246 = scalar_lea.vmem %s0, %s245
      %p247 = scmp.lt.s32.totalorder %s17, 1
      %s248 = scalar_select %p247, %s17, 1
      %s249 = smul.addr %s248, 16
      %s250 = smul.addr %s249, 8
      %s251 = scalar_lea.vmem %s6, %s250
      %v253 = vld [vmem:[%s246] sm:$0xff]
      %v254 = vld [vmem:[%s246 + $0x8] sm:$0xff]
      %v255 = vld [vmem:[%s246 + $0x10] sm:$0xff]
      %v256 = vld [vmem:[%s246 + $0x18] sm:$0xff]
      %v257 = vld [vmem:[%s246 + $0x20] sm:$0xff]
      %v258 = vld [vmem:[%s246 + $0x28] sm:$0xff]
      %v259 = vld [vmem:[%s246 + $0x30] sm:$0xff]
      %v260 = vld [vmem:[%s246 + $0x38] sm:$0xff]
      %v261 = vld [vmem:[%s1] sm:$0xf]
      %v262 = vld [vmem:[%s1 + $0x4] sm:$0xf]
      %v263 = vld [vmem:[%s1 + $0x8] sm:$0xf]
      %v264 = vld [vmem:[%s1 + $0xc] sm:$0xf]
      %v265 = vld [vmem:[%s1 + $0x10] sm:$0xf]
      %v266 = vld [vmem:[%s1 + $0x14] sm:$0xf]
      %v267 = vld [vmem:[%s1 + $0x18] sm:$0xf]
      %v268 = vld [vmem:[%s1 + $0x1c] sm:$0xf]
      %v269 = vld [vmem:[%s1 + $0x20] sm:$0xf]
      %v270 = vld [vmem:[%s1 + $0x24] sm:$0xf]
      %v271 = vld [vmem:[%s1 + $0x28] sm:$0xf]
      %v272 = vld [vmem:[%s1 + $0x2c] sm:$0xf]
      %v273 = vld [vmem:[%s2] sm:$0xff]
      %v274 = vld [vmem:[%s2 + $0x8] sm:$0xff]
      %v275 = vld [vmem:[%s2 + $0x10] sm:$0xff]
      %v276 = vld [vmem:[%s2 + $0x18] sm:$0xff]
      %v277 = vld [vmem:[%s2 + $0x20] sm:$0xff]
      %v278 = vld [vmem:[%s2 + $0x28] sm:$0xff]
      %v279 = vld [vmem:[%s2 + $0x30] sm:$0xff]
      %v280 = vld [vmem:[%s2 + $0x38] sm:$0xff]
      %v281 = vld [vmem:[%s2 + $0x40] sm:$0xff]
      %v282 = vld [vmem:[%s2 + $0x48] sm:$0xff]
      %v283 = vld [vmem:[%s2 + $0x50] sm:$0xff]
      %v284 = vld [vmem:[%s2 + $0x58] sm:$0xff]
      %286 = vset.pattern.permute.xlu0 0
      %287 = vperm.xlu0 %286, %v273
      %v288 = vpop.permute.xlu0 %287
      %291 = vset.pattern.permute.xlu0 0
      %292 = vperm.xlu0 %291, %v274
      %v293 = vpop.permute.xlu0 %292
      %296 = vset.pattern.permute.xlu0 0
      %297 = vperm.xlu0 %296, %v275
      %v298 = vpop.permute.xlu0 %297
      %301 = vset.pattern.permute.xlu0 0
      %302 = vperm.xlu0 %301, %v276
      %v303 = vpop.permute.xlu0 %302
      %306 = vset.pattern.permute.xlu0 0
      %307 = vperm.xlu0 %306, %v277
      %v308 = vpop.permute.xlu0 %307
      %311 = vset.pattern.permute.xlu0 0
      %312 = vperm.xlu0 %311, %v278
      %v313 = vpop.permute.xlu0 %312
      %316 = vset.pattern.permute.xlu0 0
      %317 = vperm.xlu0 %316, %v279
      %v318 = vpop.permute.xlu0 %317
      %321 = vset.pattern.permute.xlu0 0
      %322 = vperm.xlu0 %321, %v280
      %v323 = vpop.permute.xlu0 %322
      %326 = vset.pattern.permute.xlu0 0
      %327 = vperm.xlu0 %326, %v281
      %v328 = vpop.permute.xlu0 %327
      %331 = vset.pattern.permute.xlu0 0
      %332 = vperm.xlu0 %331, %v282
      %v333 = vpop.permute.xlu0 %332
      %336 = vset.pattern.permute.xlu0 0
      %337 = vperm.xlu0 %336, %v283
      %v338 = vpop.permute.xlu0 %337
      %341 = vset.pattern.permute.xlu0 0
      %342 = vperm.xlu0 %341, %v284
      %v343 = vpop.permute.xlu0 %342
      %v357 = vunpack.c.l.b16 %v261
      %v358 = vunpack.c.l.b16 %v262
      %v359 = vunpack.c.l.b16 %v263
      %v360 = vunpack.c.l.b16 %v264
      %v361 = vunpack.c.l.b16 %v265
      %v362 = vunpack.c.l.b16 %v266
      %v363 = vunpack.c.l.b16 %v267
      %v364 = vunpack.c.l.b16 %v268
      %v365 = vunpack.c.l.b16 %v269
      %v366 = vunpack.c.l.b16 %v270
      %v367 = vunpack.c.l.b16 %v271
      %v368 = vunpack.c.l.b16 %v272
      %v369 = vpack.c.b16 %v358, %v357
      %v370 = vpack.c.b16 %v360, %v359
      %v371 = vpack.c.b16 %v362, %v361
      %v372 = vpack.c.b16 %v364, %v363
      %v373 = vpack.c.b16 %v366, %v365
      %v374 = vpack.c.b16 %v368, %v367
      %v383 = vunpack.c.l.b16 %v253
      %v384 = vunpack.c.h.b16 %v253
      %v385 = vunpack.c.l.b16 %v254
      %v386 = vunpack.c.h.b16 %v254
      %v387 = vunpack.c.l.b16 %v255
      %v388 = vunpack.c.h.b16 %v255
      %v389 = vunpack.c.l.b16 %v256
      %v390 = vunpack.c.h.b16 %v256
      %v391 = vunpack.c.l.b16 %v257
      %v392 = vunpack.c.h.b16 %v257
      %v393 = vunpack.c.l.b16 %v258
      %v394 = vunpack.c.h.b16 %v258
      %v395 = vunpack.c.l.b16 %v259
      %v396 = vunpack.c.h.b16 %v259
      %v397 = vunpack.c.l.b16 %v260
      %v398 = vunpack.c.h.b16 %v260
      %v399 = vpack.c.b16 %v385, %v383
      %v400 = vpack.c.b16 %v386, %v384
      %v401 = vpack.c.b16 %v389, %v387
      %v402 = vpack.c.b16 %v390, %v388
      %v403 = vpack.c.b16 %v393, %v391
      %v404 = vpack.c.b16 %v394, %v392
      %v405 = vpack.c.b16 %v397, %v395
      %v406 = vpack.c.b16 %v398, %v396
      %vm415 = vcmask 523264
      %v417 = vsel %vm415, %v369, 0
      %v420 = vsel %vm415, %v370, 0
      %v423 = vsel %vm415, %v371, 0
      %v426 = vsel %vm415, %v372, 0
      %v429 = vsel %vm415, %v373, 0
      %v432 = vsel %vm415, %v374, 0
      %434 = vmatprep.subr.bf16.mxu0 %v400
      %435 = vmatpush1.bf16.msra.mxu0 %v399
      %436 = vmatprep.subr.bf16.mxu0 %v402
      %437 = vmatpush1.bf16.msra.mxu0 %v401
      %438 = vmatprep.subr.bf16.mxu0 %v404
      %439 = vmatpush1.bf16.msra.mxu0 %v403
      %440 = vmatprep.subr.bf16.mxu0 %v406
      %441 = vmatpush1.bf16.msra.mxu0 %v405
      %442 = vmatprep.subr.bf16.mxu0 0
      %443 = vmatpush1.bf16.msra.mxu0 0
      %444 = vmatprep.subr.bf16.mxu0 0
      %445 = vmatpush1.bf16.msra.mxu0 0
      %446 = vmatprep.subr.bf16.mxu0 0
      %447 = vmatpush1.bf16.msra.mxu0 0
      %448 = vmatprep.subr.bf16.mxu0 0
      %449 = vmatpush1.bf16.msra.mxu0 0
      %450 = vmatprep.subr.bf16.mxu0 0
      %451 = vmatpush1.bf16.msra.mxu0 0
      %452 = vmatprep.subr.bf16.mxu0 0
      %453 = vmatpush1.bf16.msra.mxu0 0
      %454 = vmatprep.subr.bf16.mxu0 0
      %455 = vmatpush1.bf16.msra.mxu0 0
      %456 = vmatprep.subr.bf16.mxu0 0
      %457 = vmatpush1.bf16.msra.mxu0 0
      %458 = vmatprep.subr.bf16.mxu0 0
      %459 = vmatpush1.bf16.msra.mxu0 0
      %460 = vmatprep.subr.bf16.mxu0 0
      %461 = vmatpush1.bf16.msra.mxu0 0
      %462 = vmatprep.subr.bf16.mxu0 0
      %463 = vmatpush1.bf16.msra.mxu0 0
      %464 = vmatprep.subr.bf16.mxu0 0
      %465 = vmatpush1.bf16.msra.mxu0 0
      %466 = vmatprep.mubr.bf16.mxu0 0
      %467 = vmatmul.mubr.bf16.gmra.mrb[0].mxu0 %v417
      %v468 = vpop.f32.mrb[0].mxu0
      %v469 = vadd.f32 %v288, %v468
      %v470 = vpop.f32.mrb[0].mxu0
      %v471 = vadd.f32 %v288, %v470
      %v472 = vpop.f32.mrb[0].mxu0
      %v473 = vadd.f32 %v293, %v472
      %v474 = vpop.f32.mrb[0].mxu0
      %v475 = vadd.f32 %v293, %v474
      %476 = vmatprep.mubr.bf16.mxu0 0
      %477 = vmatmul.mubr.bf16.gmra.mrb[0].mxu0 %v420
      %v478 = vpop.f32.mrb[0].mxu0
      %v479 = vadd.f32 %v298, %v478
      %v480 = vpop.f32.mrb[0].mxu0
      %v481 = vadd.f32 %v298, %v480
      %v482 = vpop.f32.mrb[0].mxu0
      %v483 = vadd.f32 %v303, %v482
      %v484 = vpop.f32.mrb[0].mxu0
      %v485 = vadd.f32 %v303, %v484
      %486 = vmatprep.mubr.bf16.mxu0 0
      %487 = vmatmul.mubr.bf16.gmra.mrb[0].mxu0 %v423
      %v488 = vpop.f32.mrb[0].mxu0
      %v489 = vadd.f32 %v308, %v488
      %v490 = vpop.f32.mrb[0].mxu0
      %v491 = vadd.f32 %v308, %v490
      %v492 = vpop.f32.mrb[0].mxu0
      %v493 = vadd.f32 %v313, %v492
      %v494 = vpop.f32.mrb[0].mxu0
      %v495 = vadd.f32 %v313, %v494
      %496 = vmatprep.mubr.bf16.mxu0 0
      %497 = vmatmul.mubr.bf16.gmra.mrb[0].mxu0 %v426
      %v498 = vpop.f32.mrb[0].mxu0
      %v499 = vadd.f32 %v318, %v498
      %v500 = vpop.f32.mrb[0].mxu0
      %v501 = vadd.f32 %v318, %v500
      %v502 = vpop.f32.mrb[0].mxu0
      %v503 = vadd.f32 %v323, %v502
      %v504 = vpop.f32.mrb[0].mxu0
      %v505 = vadd.f32 %v323, %v504
      %506 = vmatprep.mubr.bf16.mxu0 0
      %507 = vmatmul.mubr.bf16.gmra.mrb[0].mxu0 %v429
      %v508 = vpop.f32.mrb[0].mxu0
      %v509 = vadd.f32 %v328, %v508
      %v510 = vpop.f32.mrb[0].mxu0
      %v511 = vadd.f32 %v328, %v510
      %v512 = vpop.f32.mrb[0].mxu0
      %v513 = vadd.f32 %v333, %v512
      %v514 = vpop.f32.mrb[0].mxu0
      %v515 = vadd.f32 %v333, %v514
      %516 = vmatprep.mubr.bf16.mxu0 0
      %517 = vmatmul.mubr.bf16.gmra.mrb[0].mxu0 %v432
      %v518 = vpop.f32.mrb[0].mxu0
      %v519 = vadd.f32 %v338, %v518
      %v520 = vpop.f32.mrb[0].mxu0
      %v521 = vadd.f32 %v338, %v520
      %v522 = vpop.f32.mrb[0].mxu0
      %v523 = vadd.f32 %v343, %v522
      %v524 = vpop.f32.mrb[0].mxu0
      %v525 = vadd.f32 %v343, %v524
      %526 = vdwg.mxu0
      %v527 = vpack.c.bf16 %v473, %v469
      %v528 = vpack.c.bf16 %v475, %v471
      %v529 = vpack.c.bf16 %v483, %v479
      %v530 = vpack.c.bf16 %v485, %v481
      %v531 = vpack.c.bf16 %v493, %v489
      %v532 = vpack.c.bf16 %v495, %v491
      %v533 = vpack.c.bf16 %v503, %v499
      %v534 = vpack.c.bf16 %v505, %v501
      %v535 = vpack.c.bf16 %v513, %v509
      %v536 = vpack.c.bf16 %v515, %v511
      %v537 = vpack.c.bf16 %v523, %v519
      %v538 = vpack.c.bf16 %v525, %v521
      %539 = vst [vmem:[#allocation2] sm:$0xff] %v527
      %540 = vst [vmem:[#allocation2 + $0x8] sm:$0xff] %v528
      %541 = vst [vmem:[#allocation2 + $0x10] sm:$0xff] %v529
      %542 = vst [vmem:[#allocation2 + $0x18] sm:$0xff] %v530
      %543 = vst [vmem:[#allocation2 + $0x20] sm:$0xff] %v531
      %544 = vst [vmem:[#allocation2 + $0x28] sm:$0xff] %v532
      %545 = vst [vmem:[#allocation2 + $0x30] sm:$0xff] %v533
      %546 = vst [vmem:[#allocation2 + $0x38] sm:$0xff] %v534
      %547 = vst [vmem:[#allocation2 + $0x40] sm:$0xff] %v535
      %548 = vst [vmem:[#allocation2 + $0x48] sm:$0xff] %v536
      %549 = vst [vmem:[#allocation2 + $0x50] sm:$0xff] %v537
      %550 = vst [vmem:[#allocation2 + $0x58] sm:$0xff] %v538
      %v551 = vld [vmem:[#allocation2] sm:$0x3]
      %v552 = vld [vmem:[#allocation2 + $0x20] sm:$0x3]
      %v553 = vld [vmem:[#allocation2 + $0x40] sm:$0x3]
      %v554 = vld [vmem:[%s5] sm:$0xf]
      %v555 = vld [vmem:[%s5 + $0x4] sm:$0xf]
      %v556 = vld [vmem:[%s5 + $0x8] sm:$0xf]
      %v557 = vld [vmem:[%s5 + $0xc] sm:$0xf]
      %v558 = vld [vmem:[%s5 + $0x10] sm:$0xf]
      %v559 = vld [vmem:[%s5 + $0x14] sm:$0xf]
      %v560 = vld [vmem:[%s5 + $0x18] sm:$0xf]
      %v561 = vld [vmem:[%s5 + $0x1c] sm:$0xf]
      %v562 = vld [vmem:[%s5 + $0x20] sm:$0xf]
      %v563 = vld [vmem:[%s5 + $0x24] sm:$0xf]
      %v564 = vld [vmem:[%s5 + $0x28] sm:$0xf]
      %v565 = vld [vmem:[%s5 + $0x2c] sm:$0xf]
      %v566 = vld [vmem:[%s5 + $0x30] sm:$0xf]
      %v567 = vld [vmem:[%s5 + $0x34] sm:$0xf]
      %v568 = vld [vmem:[%s5 + $0x38] sm:$0xf]
      %v569 = vld [vmem:[%s5 + $0x3c] sm:$0xf]
      %v570 = vunpack.c.l.bf16 %v554
      %v571 = vunpack.c.l.bf16 %v555
      %v572 = vunpack.c.l.bf16 %v556
      %v573 = vunpack.c.l.bf16 %v557
      %v574 = vunpack.c.l.bf16 %v558
      %v575 = vunpack.c.l.bf16 %v559
      %v576 = vunpack.c.l.bf16 %v560
      %v577 = vunpack.c.l.bf16 %v561
      %v578 = vunpack.c.l.bf16 %v562
      %v579 = vunpack.c.l.bf16 %v563
      %v580 = vunpack.c.l.bf16 %v564
      %v581 = vunpack.c.l.bf16 %v565
      %v582 = vunpack.c.l.bf16 %v566
      %v583 = vunpack.c.l.bf16 %v567
      %v584 = vunpack.c.l.bf16 %v568
      %v585 = vunpack.c.l.bf16 %v569
      %586 = vxpose.xlu0.c.b16.start [1/8] %v552, 128
      %587 = vxpose.xlu0.c.b16.cont [2/8] 0, 128
      %588 = vxpose.xlu0.c.b16.cont [3/8] 0, 128
      %589 = vxpose.xlu0.c.b16.cont [4/8] 0, 128
      %590 = vxpose.xlu0.c.b16.cont [5/8] 0, 128
      %591 = vxpose.xlu0.c.b16.cont [6/8] 0, 128
      %592 = vxpose.xlu0.c.b16.cont [7/8] 0, 128
      %593 = vxpose.xlu0.c.b16.end [8/8] 0, 128
      %v594 = vpop.trf.xlu0
      %v595 = vpop.trf.xlu0
      %v596 = vpop.trf.xlu0
      %v597 = vpop.trf.xlu0
      %v598 = vpop.trf.xlu0
      %v599 = vpop.trf.xlu0
      %v600 = vpop.trf.xlu0
      %v601 = vpop.trf.xlu0
      %vm602 = vcmask 31744
      %v604 = vsel %vm602, %v594, 0
      %v607 = vsel %vm602, %v595, 0
      %v610 = vsel %vm602, %v596, 0
      %v613 = vsel %vm602, %v597, 0
      %v616 = vsel %vm602, %v598, 0
      %v619 = vsel %vm602, %v599, 0
      %v622 = vsel %vm602, %v600, 0
      %v625 = vsel %vm602, %v601, 0
      %vm627 = vcmask 1041408
      %v629 = vsel %vm627, %v551, 0
      %631 = vmatprep.subr.bf16.mxu0 0
      %632 = vmatpush1.bf16.msra.mxu0 %v629
      %633 = vmatprep.subr.bf16.mxu0 0
      %634 = vmatpush1.bf16.msra.mxu0 0
      %635 = vmatprep.subr.bf16.mxu0 0
      %636 = vmatpush1.bf16.msra.mxu0 0
      %637 = vmatprep.subr.bf16.mxu0 0
      %638 = vmatpush1.bf16.msra.mxu0 0
      %639 = vmatprep.subr.bf16.mxu0 0
      %640 = vmatpush1.bf16.msra.mxu0 0
      %641 = vmatprep.subr.bf16.mxu0 0
      %642 = vmatpush1.bf16.msra.mxu0 0
      %643 = vmatprep.subr.bf16.mxu0 0
      %644 = vmatpush1.bf16.msra.mxu0 0
      %645 = vmatprep.subr.bf16.mxu0 0
      %646 = vmatpush1.bf16.msra.mxu0 0
      %647 = vmatprep.subr.bf16.mxu0 0
      %648 = vmatpush1.bf16.msra.mxu0 0
      %649 = vmatprep.subr.bf16.mxu0 0
      %650 = vmatpush1.bf16.msra.mxu0 0
      %651 = vmatprep.subr.bf16.mxu0 0
      %652 = vmatpush1.bf16.msra.mxu0 0
      %653 = vmatprep.subr.bf16.mxu0 0
      %654 = vmatpush1.bf16.msra.mxu0 0
      %655 = vmatprep.subr.bf16.mxu0 0
      %656 = vmatpush1.bf16.msra.mxu0 0
      %657 = vmatprep.subr.bf16.mxu0 0
      %658 = vmatpush1.bf16.msra.mxu0 0
      %659 = vmatprep.subr.bf16.mxu0 0
      %660 = vmatpush1.bf16.msra.mxu0 0
      %661 = vmatprep.subr.bf16.mxu0 0
      %662 = vmatpush1.bf16.msra.mxu0 0
      %663 = vmatprep.mubr.bf16.mxu0 0
      %664 = vmatmul.mubr.bf16.gmra.mrb[0].mxu0 %v604
      %v665 = vpop.f32.mrb[0].mxu0
      %v666 = vadd.f32 %v570, %v665
      %v667 = vpop.f32.mrb[0].mxu0
      %v668 = vpop.f32.mrb[0].mxu0
      %v669 = vadd.f32 %v571, %v668
      %v670 = vpop.f32.mrb[0].mxu0
      %671 = vmatprep.mubr.bf16.mxu0 0
      %672 = vmatmul.mubr.bf16.gmra.mrb[0].mxu0 %v607
      %v673 = vpop.f32.mrb[0].mxu0
      %v674 = vadd.f32 %v572, %v673
      %v675 = vpop.f32.mrb[0].mxu0
      %v676 = vpop.f32.mrb[0].mxu0
      %v677 = vadd.f32 %v573, %v676
      %v678 = vpop.f32.mrb[0].mxu0
      %679 = vmatprep.mubr.bf16.mxu0 0
      %680 = vmatmul.mubr.bf16.gmra.mrb[0].mxu0 %v610
      %v681 = vpop.f32.mrb[0].mxu0
      %v682 = vadd.f32 %v574, %v681
      %v683 = vpop.f32.mrb[0].mxu0
      %v684 = vpop.f32.mrb[0].mxu0
      %v685 = vadd.f32 %v575, %v684
      %v686 = vpop.f32.mrb[0].mxu0
      %687 = vmatprep.mubr.bf16.mxu0 0
      %688 = vmatmul.mubr.bf16.gmra.mrb[0].mxu0 %v613
      %v689 = vpop.f32.mrb[0].mxu0
      %v690 = vadd.f32 %v576, %v689
      %v691 = vpop.f32.mrb[0].mxu0
      %v692 = vpop.f32.mrb[0].mxu0
      %v693 = vadd.f32 %v577, %v692
      %v694 = vpop.f32.mrb[0].mxu0
      %695 = vmatprep.mubr.bf16.mxu0 0
      %696 = vmatmul.mubr.bf16.gmra.mrb[0].mxu0 %v616
      %v697 = vpop.f32.mrb[0].mxu0
      %v698 = vadd.f32 %v578, %v697
      %v699 = vpop.f32.mrb[0].mxu0
      %v700 = vpop.f32.mrb[0].mxu0
      %v701 = vadd.f32 %v579, %v700
      %v702 = vpop.f32.mrb[0].mxu0
      %703 = vmatprep.mubr.bf16.mxu0 0
      %704 = vmatmul.mubr.bf16.gmra.mrb[0].mxu0 %v619
      %v705 = vpop.f32.mrb[0].mxu0
      %v706 = vadd.f32 %v580, %v705
      %v707 = vpop.f32.mrb[0].mxu0
      %v708 = vpop.f32.mrb[0].mxu0
      %v709 = vadd.f32 %v581, %v708
      %v710 = vpop.f32.mrb[0].mxu0
      %711 = vmatprep.mubr.bf16.mxu0 0
      %712 = vmatmul.mubr.bf16.gmra.mrb[0].mxu0 %v622
      %v713 = vpop.f32.mrb[0].mxu0
      %v714 = vadd.f32 %v582, %v713
      %v715 = vpop.f32.mrb[0].mxu0
      %v716 = vpop.f32.mrb[0].mxu0
      %v717 = vadd.f32 %v583, %v716
      %v718 = vpop.f32.mrb[0].mxu0
      %719 = vmatprep.mubr.bf16.mxu0 0
      %720 = vmatmul.mubr.bf16.gmra.mrb[0].mxu0 %v625
      %v721 = vpop.f32.mrb[0].mxu0
      %v722 = vadd.f32 %v584, %v721
      %v723 = vpop.f32.mrb[0].mxu0
      %v724 = vpop.f32.mrb[0].mxu0
      %v725 = vadd.f32 %v585, %v724
      %v726 = vpop.f32.mrb[0].mxu0
      %727 = vdwg.mxu0
      %v728 = vmax.f32 %v666, %v682
      %v729 = vmax.f32 %v669, %v685
      %v730 = vmax.f32 %v674, %v690
      %v731 = vmax.f32 %v677, %v693
      %v732 = vmax.f32 %v728, %v698
      %v733 = vmax.f32 %v729, %v701
      %v734 = vmax.f32 %v730, %v706
      %v735 = vmax.f32 %v731, %v709
      %v736 = vmax.f32 %v732, %v714
      %v737 = vmax.f32 %v733, %v717
      %v738 = vmax.f32 %v734, %v722
      %v739 = vmax.f32 %v735, %v725
      %v740 = vmax.f32 %v736, %v737
      %v741 = vmax.f32 %v738, %v739
      %v742 = vmax.f32 %v740, %v741
      %v743 = vrot.slane %v742, 4
      %v744 = vmax.f32 %v742, %v743
      %v745 = vrot.slane %v744, 2
      %v746 = vmax.f32 %v744, %v745
      %v747 = vrot.slane %v746, 1
      %v748 = vmax.f32 %v746, %v747
      %v749 = vsub.f32 %v666, %v748
      %v750 = vsub.f32 %v669, %v748
      %v751 = vsub.f32 %v674, %v748
      %v752 = vsub.f32 %v677, %v748
      %v753 = vsub.f32 %v682, %v748
      %v754 = vsub.f32 %v685, %v748
      %v755 = vsub.f32 %v690, %v748
      %v756 = vsub.f32 %v693, %v748
      %v757 = vsub.f32 %v698, %v748
      %v758 = vsub.f32 %v701, %v748
      %v759 = vsub.f32 %v706, %v748
      %v760 = vsub.f32 %v709, %v748
      %v761 = vsub.f32 %v714, %v748
      %v762 = vsub.f32 %v717, %v748
      %v763 = vsub.f32 %v722, %v748
      %v764 = vsub.f32 %v725, %v748
      %v765 = vmul.f32 %v749, 1.442695
      %v766 = vpow.pop %v765
      %v767 = vmul.f32 %v750, 1.442695
      %v768 = vpow.pop %v767
      %v769 = vmul.f32 %v751, 1.442695
      %v770 = vpow.pop %v769
      %v771 = vmul.f32 %v752, 1.442695
      %v772 = vpow.pop %v771
      %v773 = vmul.f32 %v753, 1.442695
      %v774 = vpow.pop %v773
      %v775 = vmul.f32 %v754, 1.442695
      %v776 = vpow.pop %v775
      %v777 = vmul.f32 %v755, 1.442695
      %v778 = vpow.pop %v777
      %v779 = vmul.f32 %v756, 1.442695
      %v780 = vpow.pop %v779
      %v781 = vmul.f32 %v757, 1.442695
      %v782 = vpow.pop %v781
      %v783 = vmul.f32 %v758, 1.442695
      %v784 = vpow.pop %v783
      %v785 = vmul.f32 %v759, 1.442695
      %v786 = vpow.pop %v785
      %v787 = vmul.f32 %v760, 1.442695
      %v788 = vpow.pop %v787
      %v789 = vmul.f32 %v761, 1.442695
      %v790 = vpow.pop %v789
      %v791 = vmul.f32 %v762, 1.442695
      %v792 = vpow.pop %v791
      %v793 = vmul.f32 %v763, 1.442695
      %v794 = vpow.pop %v793
      %v795 = vmul.f32 %v764, 1.442695
      %v796 = vpow.pop %v795
      %v797 = vadd.f32 %v766, %v768
      %v798 = vadd.f32 %v797, %v770
      %v799 = vadd.f32 %v798, %v772
      %v800 = vadd.f32 %v799, %v774
      %v801 = vadd.f32 %v800, %v776
      %v802 = vadd.f32 %v801, %v778
      %v803 = vadd.f32 %v802, %v780
      %v804 = vadd.f32 %v803, %v782
      %v805 = vadd.f32 %v804, %v784
      %v806 = vadd.f32 %v805, %v786
      %v807 = vadd.f32 %v806, %v788
      %v808 = vadd.f32 %v807, %v790
      %v809 = vadd.f32 %v808, %v792
      %v810 = vadd.f32 %v809, %v794
      %v811 = vadd.f32 %v810, %v796
      %v812 = vrot.slane %v811, 4
      %v813 = vadd.f32 %v811, %v812
      %v814 = vrot.slane %v813, 2
      %v815 = vadd.f32 %v813, %v814
      %v816 = vrot.slane %v815, 1
      %v817 = vadd.f32 %v815, %v816
      %v818 = vpack.c.bf16 %v768, %v766
      %v819 = vpack.c.bf16 %v772, %v770
      %v820 = vpack.c.bf16 %v776, %v774
      %v821 = vpack.c.bf16 %v780, %v778
      %v822 = vpack.c.bf16 %v784, %v782
      %v823 = vpack.c.bf16 %v788, %v786
      %v824 = vpack.c.bf16 %v792, %v790
      %v825 = vpack.c.bf16 %v796, %v794
      %826 = vmatprep.subr.bf16.mxu0 0
      %827 = vmatpush1.bf16.msra.mxu0 %v818
      %828 = vmatprep.subr.bf16.mxu0 0
      %829 = vmatpush1.bf16.msra.mxu0 %v819
      %830 = vmatprep.subr.bf16.mxu0 0
      %831 = vmatpush1.bf16.msra.mxu0 %v820
      %832 = vmatprep.subr.bf16.mxu0 0
      %833 = vmatpush1.bf16.msra.mxu0 %v821
      %834 = vmatprep.subr.bf16.mxu0 0
      %835 = vmatpush1.bf16.msra.mxu0 %v822
      %836 = vmatprep.subr.bf16.mxu0 0
      %837 = vmatpush1.bf16.msra.mxu0 %v823
      %838 = vmatprep.subr.bf16.mxu0 0
      %839 = vmatpush1.bf16.msra.mxu0 %v824
      %840 = vmatprep.subr.bf16.mxu0 0
      %841 = vmatpush1.bf16.msra.mxu0 %v825
      %842 = vmatprep.subr.bf16.mxu0 0
      %843 = vmatpush1.bf16.msra.mxu0 0
      %844 = vmatprep.subr.bf16.mxu0 0
      %845 = vmatpush1.bf16.msra.mxu0 0
      %846 = vmatprep.subr.bf16.mxu0 0
      %847 = vmatpush1.bf16.msra.mxu0 0
      %848 = vmatprep.subr.bf16.mxu0 0
      %849 = vmatpush1.bf16.msra.mxu0 0
      %850 = vmatprep.subr.bf16.mxu0 0
      %851 = vmatpush1.bf16.msra.mxu0 0
      %852 = vmatprep.subr.bf16.mxu0 0
      %853 = vmatpush1.bf16.msra.mxu0 0
      %854 = vmatprep.subr.bf16.mxu0 0
      %855 = vmatpush1.bf16.msra.mxu0 0
      %856 = vmatprep.subr.bf16.mxu0 0
      %857 = vmatpush1.bf16.msra.mxu0 0
      %858 = vmatprep.mubr.bf16.mxu0 0
      %859 = vmatmul.mubr.bf16.gmra.mrb[0].mxu0 %v553
      %v860 = vpop.f32.mrb[0].mxu0
      %v861 = vadd.f32 0.0, %v860
      %v862 = vpop.f32.mrb[0].mxu0
      %v863 = vpop.f32.mrb[0].mxu0
      %v864 = vpop.f32.mrb[0].mxu0
      %865 = vdwg.mxu0
      %v866 = vrcp.pop %v817
      %v867 = vmul.f32 %v861, %v866
      %v868 = vld [vmem:[%s3] sm:$0xf]
      %v869 = vld [vmem:[%s3 + $0x4] sm:$0xf]
      %v870 = vld [vmem:[%s3 + $0x8] sm:$0xf]
      %v871 = vld [vmem:[%s3 + $0xc] sm:$0xf]
      %v872 = vpack.c.bf16 %v867, %v867
      %v873 = vld [vmem:[#allocation2] sm:$0xc]
      %v874 = vld [vmem:[#allocation2 + $0x20] sm:$0xc]
      %v875 = vld [vmem:[#allocation2 + $0x40] sm:$0xc]
      %s876 = scalar_lea.vmem %s5, 128
      %v877 = vld [vmem:[%s876] sm:$0xf]
      %v878 = vld [vmem:[%s876 + $0x4] sm:$0xf]
      %v879 = vld [vmem:[%s876 + $0x8] sm:$0xf]
      %v880 = vld [vmem:[%s876 + $0xc] sm:$0xf]
      %v881 = vld [vmem:[%s876 + $0x10] sm:$0xf]
      %v882 = vld [vmem:[%s876 + $0x14] sm:$0xf]
      %v883 = vld [vmem:[%s876 + $0x18] sm:$0xf]
      %v884 = vld [vmem:[%s876 + $0x1c] sm:$0xf]
      %v885 = vld [vmem:[%s876 + $0x20] sm:$0xf]
      %v886 = vld [vmem:[%s876 + $0x24] sm:$0xf]
      %v887 = vld [vmem:[%s876 + $0x28] sm:$0xf]
      %v888 = vld [vmem:[%s876 + $0x2c] sm:$0xf]
      %v889 = vld [vmem:[%s876 + $0x30] sm:$0xf]
      %v890 = vld [vmem:[%s876 + $0x34] sm:$0xf]
      %v891 = vld [vmem:[%s876 + $0x38] sm:$0xf]
      %v892 = vld [vmem:[%s876 + $0x3c] sm:$0xf]
      %v893 = vunpack.c.l.bf16 %v877
      %v894 = vunpack.c.l.bf16 %v878
      %v895 = vunpack.c.l.bf16 %v879
      %v896 = vunpack.c.l.bf16 %v880
      %v897 = vunpack.c.l.bf16 %v881
      %v898 = vunpack.c.l.bf16 %v882
      %v899 = vunpack.c.l.bf16 %v883
      %v900 = vunpack.c.l.bf16 %v884
      %v901 = vunpack.c.l.bf16 %v885
      %v902 = vunpack.c.l.bf16 %v886
      %v903 = vunpack.c.l.bf16 %v887
      %v904 = vunpack.c.l.bf16 %v888
      %v905 = vunpack.c.l.bf16 %v889
      %v906 = vunpack.c.l.bf16 %v890
      %v907 = vunpack.c.l.bf16 %v891
      %v908 = vunpack.c.l.bf16 %v892
      %v910 = vrot.slane %v874, 2
      %912 = vxpose.xlu0.c.b16.start [1/8] %v910, 128
      %913 = vxpose.xlu0.c.b16.cont [2/8] 0, 128
      %914 = vxpose.xlu0.c.b16.cont [3/8] 0, 128
      %915 = vxpose.xlu0.c.b16.cont [4/8] 0, 128
      %916 = vxpose.xlu0.c.b16.cont [5/8] 0, 128
      %917 = vxpose.xlu0.c.b16.cont [6/8] 0, 128
      %918 = vxpose.xlu0.c.b16.cont [7/8] 0, 128
      %919 = vxpose.xlu0.c.b16.end [8/8] 0, 128
      %v920 = vpop.trf.xlu0
      %v921 = vpop.trf.xlu0
      %v922 = vpop.trf.xlu0
      %v923 = vpop.trf.xlu0
      %v924 = vpop.trf.xlu0
      %v925 = vpop.trf.xlu0
      %v926 = vpop.trf.xlu0
      %v927 = vpop.trf.xlu0
      %v929 = vrot.slane %v873, 2
      %v931 = vsel %vm602, %v920, 0
      %v934 = vsel %vm602, %v921, 0
      %v937 = vsel %vm602, %v922, 0
      %v940 = vsel %vm602, %v923, 0
      %v943 = vsel %vm602, %v924, 0
      %v946 = vsel %vm602, %v925, 0
      %v949 = vsel %vm602, %v926, 0
      %v952 = vsel %vm602, %v927, 0
      %v955 = vsel %vm627, %v929, 0
      %957 = vmatprep.subr.bf16.mxu0 0
      %958 = vmatpush1.bf16.msra.mxu0 %v955
      %959 = vmatprep.subr.bf16.mxu0 0
      %960 = vmatpush1.bf16.msra.mxu0 0
      %961 = vmatprep.subr.bf16.mxu0 0
      %962 = vmatpush1.bf16.msra.mxu0 0
      %963 = vmatprep.subr.bf16.mxu0 0
      %964 = vmatpush1.bf16.msra.mxu0 0
      %965 = vmatprep.subr.bf16.mxu0 0
      %966 = vmatpush1.bf16.msra.mxu0 0
      %967 = vmatprep.subr.bf16.mxu0 0
      %968 = vmatpush1.bf16.msra.mxu0 0
      %969 = vmatprep.subr.bf16.mxu0 0
      %970 = vmatpush1.bf16.msra.mxu0 0
      %971 = vmatprep.subr.bf16.mxu0 0
      %972 = vmatpush1.bf16.msra.mxu0 0
      %973 = vmatprep.subr.bf16.mxu0 0
      %974 = vmatpush1.bf16.msra.mxu0 0
      %975 = vmatprep.subr.bf16.mxu0 0
      %976 = vmatpush1.bf16.msra.mxu0 0
      %977 = vmatprep.subr.bf16.mxu0 0
      %978 = vmatpush1.bf16.msra.mxu0 0
      %979 = vmatprep.subr.bf16.mxu0 0
      %980 = vmatpush1.bf16.msra.mxu0 0
      %981 = vmatprep.subr.bf16.mxu0 0
      %982 = vmatpush1.bf16.msra.mxu0 0
      %983 = vmatprep.subr.bf16.mxu0 0
      %984 = vmatpush1.bf16.msra.mxu0 0
      %985 = vmatprep.subr.bf16.mxu0 0
      %986 = vmatpush1.bf16.msra.mxu0 0
      %987 = vmatprep.subr.bf16.mxu0 0
      %988 = vmatpush1.bf16.msra.mxu0 0
      %989 = vmatprep.mubr.bf16.mxu0 0
      %990 = vmatmul.mubr.bf16.gmra.mrb[0].mxu0 %v931
      %v991 = vpop.f32.mrb[0].mxu0
      %v992 = vadd.f32 %v893, %v991
      %v993 = vpop.f32.mrb[0].mxu0
      %v994 = vpop.f32.mrb[0].mxu0
      %v995 = vadd.f32 %v894, %v994
      %v996 = vpop.f32.mrb[0].mxu0
      %997 = vmatprep.mubr.bf16.mxu0 0
      %998 = vmatmul.mubr.bf16.gmra.mrb[0].mxu0 %v934
      %v999 = vpop.f32.mrb[0].mxu0
      %v1000 = vadd.f32 %v895, %v999
      %v1001 = vpop.f32.mrb[0].mxu0
      %v1002 = vpop.f32.mrb[0].mxu0
      %v1003 = vadd.f32 %v896, %v1002
      %v1004 = vpop.f32.mrb[0].mxu0
      %1005 = vmatprep.mubr.bf16.mxu0 0
      %1006 = vmatmul.mubr.bf16.gmra.mrb[0].mxu0 %v937
      %v1007 = vpop.f32.mrb[0].mxu0
      %v1008 = vadd.f32 %v897, %v1007
      %v1009 = vpop.f32.mrb[0].mxu0
      %v1010 = vpop.f32.mrb[0].mxu0
      %v1011 = vadd.f32 %v898, %v1010
      %v1012 = vpop.f32.mrb[0].mxu0
      %1013 = vmatprep.mubr.bf16.mxu0 0
      %1014 = vmatmul.mubr.bf16.gmra.mrb[0].mxu0 %v940
      %v1015 = vpop.f32.mrb[0].mxu0
      %v1016 = vadd.f32 %v899, %v1015
      %v1017 = vpop.f32.mrb[0].mxu0
      %v1018 = vpop.f32.mrb[0].mxu0
      %v1019 = vadd.f32 %v900, %v1018
      %v1020 = vpop.f32.mrb[0].mxu0
      %1021 = vmatprep.mubr.bf16.mxu0 0
      %1022 = vmatmul.mubr.bf16.gmra.mrb[0].mxu0 %v943
      %v1023 = vpop.f32.mrb[0].mxu0
      %v1024 = vadd.f32 %v901, %v1023
      %v1025 = vpop.f32.mrb[0].mxu0
      %v1026 = vpop.f32.mrb[0].mxu0
      %v1027 = vadd.f32 %v902, %v1026
      %v1028 = vpop.f32.mrb[0].mxu0
      %1029 = vmatprep.mubr.bf16.mxu0 0
      %1030 = vmatmul.mubr.bf16.gmra.mrb[0].mxu0 %v946
      %v1031 = vpop.f32.mrb[0].mxu0
      %v1032 = vadd.f32 %v903, %v1031
      %v1033 = vpop.f32.mrb[0].mxu0
      %v1034 = vpop.f32.mrb[0].mxu0
      %v1035 = vadd.f32 %v904, %v1034
      %v1036 = vpop.f32.mrb[0].mxu0
      %1037 = vmatprep.mubr.bf16.mxu0 0
      %1038 = vmatmul.mubr.bf16.gmra.mrb[0].mxu0 %v949
      %v1039 = vpop.f32.mrb[0].mxu0
      %v1040 = vadd.f32 %v905, %v1039
      %v1041 = vpop.f32.mrb[0].mxu0
      %v1042 = vpop.f32.mrb[0].mxu0
      %v1043 = vadd.f32 %v906, %v1042
      %v1044 = vpop.f32.mrb[0].mxu0
      %1045 = vmatprep.mubr.bf16.mxu0 0
      %1046 = vmatmul.mubr.bf16.gmra.mrb[0].mxu0 %v952
      %v1047 = vpop.f32.mrb[0].mxu0
      %v1048 = vadd.f32 %v907, %v1047
      %v1049 = vpop.f32.mrb[0].mxu0
      %v1050 = vpop.f32.mrb[0].mxu0
      %v1051 = vadd.f32 %v908, %v1050
      %v1052 = vpop.f32.mrb[0].mxu0
      %1053 = vdwg.mxu0
      %v1054 = vmax.f32 %v992, %v1008
      %v1055 = vmax.f32 %v995, %v1011
      %v1056 = vmax.f32 %v1000, %v1016
      %v1057 = vmax.f32 %v1003, %v1019
      %v1058 = vmax.f32 %v1054, %v1024
      %v1059 = vmax.f32 %v1055, %v1027
      %v1060 = vmax.f32 %v1056, %v1032
      %v1061 = vmax.f32 %v1057, %v1035
      %v1062 = vmax.f32 %v1058, %v1040
      %v1063 = vmax.f32 %v1059, %v1043
      %v1064 = vmax.f32 %v1060, %v1048
      %v1065 = vmax.f32 %v1061, %v1051
      %v1066 = vmax.f32 %v1062, %v1063
      %v1067 = vmax.f32 %v1064, %v1065
      %v1068 = vmax.f32 %v1066, %v1067
      %v1069 = vrot.slane %v1068, 4
      %v1070 = vmax.f32 %v1068, %v1069
      %v1071 = vrot.slane %v1070, 2
      %v1072 = vmax.f32 %v1070, %v1071
      %v1073 = vrot.slane %v1072, 1
      %v1074 = vmax.f32 %v1072, %v1073
      %v1075 = vsub.f32 %v992, %v1074
      %v1076 = vsub.f32 %v995, %v1074
      %v1077 = vsub.f32 %v1000, %v1074
      %v1078 = vsub.f32 %v1003, %v1074
      %v1079 = vsub.f32 %v1008, %v1074
      %v1080 = vsub.f32 %v1011, %v1074
      %v1081 = vsub.f32 %v1016, %v1074
      %v1082 = vsub.f32 %v1019, %v1074
      %v1083 = vsub.f32 %v1024, %v1074
      %v1084 = vsub.f32 %v1027, %v1074
      %v1085 = vsub.f32 %v1032, %v1074
      %v1086 = vsub.f32 %v1035, %v1074
      %v1087 = vsub.f32 %v1040, %v1074
      %v1088 = vsub.f32 %v1043, %v1074
      %v1089 = vsub.f32 %v1048, %v1074
      %v1090 = vsub.f32 %v1051, %v1074
      %v1091 = vmul.f32 %v1075, 1.442695
      %v1092 = vpow.pop %v1091
      %v1093 = vmul.f32 %v1076, 1.442695
      %v1094 = vpow.pop %v1093
      %v1095 = vmul.f32 %v1077, 1.442695
      %v1096 = vpow.pop %v1095
      %v1097 = vmul.f32 %v1078, 1.442695
      %v1098 = vpow.pop %v1097
      %v1099 = vmul.f32 %v1079, 1.442695
      %v1100 = vpow.pop %v1099
      %v1101 = vmul.f32 %v1080, 1.442695
      %v1102 = vpow.pop %v1101
      %v1103 = vmul.f32 %v1081, 1.442695
      %v1104 = vpow.pop %v1103
      %v1105 = vmul.f32 %v1082, 1.442695
      %v1106 = vpow.pop %v1105
      %v1107 = vmul.f32 %v1083, 1.442695
      %v1108 = vpow.pop %v1107
      %v1109 = vmul.f32 %v1084, 1.442695
      %v1110 = vpow.pop %v1109
      %v1111 = vmul.f32 %v1085, 1.442695
      %v1112 = vpow.pop %v1111
      %v1113 = vmul.f32 %v1086, 1.442695
      %v1114 = vpow.pop %v1113
      %v1115 = vmul.f32 %v1087, 1.442695
      %v1116 = vpow.pop %v1115
      %v1117 = vmul.f32 %v1088, 1.442695
      %v1118 = vpow.pop %v1117
      %v1119 = vmul.f32 %v1089, 1.442695
      %v1120 = vpow.pop %v1119
      %v1121 = vmul.f32 %v1090, 1.442695
      %v1122 = vpow.pop %v1121
      %v1123 = vadd.f32 %v1092, %v1094
      %v1124 = vadd.f32 %v1123, %v1096
      %v1125 = vadd.f32 %v1124, %v1098
      %v1126 = vadd.f32 %v1125, %v1100
      %v1127 = vadd.f32 %v1126, %v1102
      %v1128 = vadd.f32 %v1127, %v1104
      %v1129 = vadd.f32 %v1128, %v1106
      %v1130 = vadd.f32 %v1129, %v1108
      %v1131 = vadd.f32 %v1130, %v1110
      %v1132 = vadd.f32 %v1131, %v1112
      %v1133 = vadd.f32 %v1132, %v1114
      %v1134 = vadd.f32 %v1133, %v1116
      %v1135 = vadd.f32 %v1134, %v1118
      %v1136 = vadd.f32 %v1135, %v1120
      %v1137 = vadd.f32 %v1136, %v1122
      %v1138 = vrot.slane %v1137, 4
      %v1139 = vadd.f32 %v1137, %v1138
      %v1140 = vrot.slane %v1139, 2
      %v1141 = vadd.f32 %v1139, %v1140
      %v1142 = vrot.slane %v1141, 1
      %v1143 = vadd.f32 %v1141, %v1142
      %v1144 = vpack.c.bf16 %v1094, %v1092
      %v1145 = vpack.c.bf16 %v1098, %v1096
      %v1146 = vpack.c.bf16 %v1102, %v1100
      %v1147 = vpack.c.bf16 %v1106, %v1104
      %v1148 = vpack.c.bf16 %v1110, %v1108
      %v1149 = vpack.c.bf16 %v1114, %v1112
      %v1150 = vpack.c.bf16 %v1118, %v1116
      %v1151 = vpack.c.bf16 %v1122, %v1120
      %v1153 = vrot.slane %v875, 2
      %1155 = vmatprep.subr.bf16.mxu0 0
      %1156 = vmatpush1.bf16.msra.mxu0 %v1144
      %1157 = vmatprep.subr.bf16.mxu0 0
      %1158 = vmatpush1.bf16.msra.mxu0 %v1145
      %1159 = vmatprep.subr.bf16.mxu0 0
      %1160 = vmatpush1.bf16.msra.mxu0 %v1146
      %1161 = vmatprep.subr.bf16.mxu0 0
      %1162 = vmatpush1.bf16.msra.mxu0 %v1147
      %1163 = vmatprep.subr.bf16.mxu0 0
      %1164 = vmatpush1.bf16.msra.mxu0 %v1148
      %1165 = vmatprep.subr.bf16.mxu0 0
      %1166 = vmatpush1.bf16.msra.mxu0 %v1149
      %1167 = vmatprep.subr.bf16.mxu0 0
      %1168 = vmatpush1.bf16.msra.mxu0 %v1150
      %1169 = vmatprep.subr.bf16.mxu0 0
      %1170 = vmatpush1.bf16.msra.mxu0 %v1151
      %1171 = vmatprep.subr.bf16.mxu0 0
      %1172 = vmatpush1.bf16.msra.mxu0 0
      %1173 = vmatprep.subr.bf16.mxu0 0
      %1174 = vmatpush1.bf16.msra.mxu0 0
      %1175 = vmatprep.subr.bf16.mxu0 0
      %1176 = vmatpush1.bf16.msra.mxu0 0
      %1177 = vmatprep.subr.bf16.mxu0 0
      %1178 = vmatpush1.bf16.msra.mxu0 0
      %1179 = vmatprep.subr.bf16.mxu0 0
      %1180 = vmatpush1.bf16.msra.mxu0 0
      %1181 = vmatprep.subr.bf16.mxu0 0
      %1182 = vmatpush1.bf16.msra.mxu0 0
      %1183 = vmatprep.subr.bf16.mxu0 0
      %1184 = vmatpush1.bf16.msra.mxu0 0
      %1185 = vmatprep.subr.bf16.mxu0 0
      %1186 = vmatpush1.bf16.msra.mxu0 0
      %1187 = vmatprep.mubr.bf16.mxu0 0
      %1188 = vmatmul.mubr.bf16.gmra.mrb[0].mxu0 %v1153
      %v1189 = vpop.f32.mrb[0].mxu0
      %v1190 = vadd.f32 0.0, %v1189
      %v1191 = vpop.f32.mrb[0].mxu0
      %v1192 = vpop.f32.mrb[0].mxu0
      %v1193 = vpop.f32.mrb[0].mxu0
      %1194 = vdwg.mxu0
      %v1195 = vrcp.pop %v1143
      %v1196 = vmul.f32 %v1190, %v1195
      %s1197 = scalar_lea.vmem %s3, 16
      %v1198 = vld [vmem:[%s1197] sm:$0xf]
      %v1199 = vld [vmem:[%s1197 + $0x4] sm:$0xf]
      %v1200 = vld [vmem:[%s1197 + $0x8] sm:$0xf]
      %v1201 = vld [vmem:[%s1197 + $0xc] sm:$0xf]
      %v1202 = vpack.c.bf16 %v1196, %v1196
      %v1207 = vunpack.c.l.b16 %v1198
      %v1208 = vunpack.c.l.b16 %v1199
      %v1209 = vunpack.c.l.b16 %v1200
      %v1210 = vunpack.c.l.b16 %v1201
      %v1211 = vpack.c.b16 %v1208, %v1207
      %v1212 = vpack.c.b16 %v1210, %v1209
      %v1214 = vsel %vm602, %v1211, 0
      %v1217 = vsel %vm602, %v1212, 0
      %v1220 = vsel %vm627, %v1202, 0
      %1222 = vmatprep.subr.bf16.mxu0 0
      %1223 = vmatpush1.bf16.msra.mxu0 %v1220
      %1224 = vmatprep.subr.bf16.mxu0 0
      %1225 = vmatpush1.bf16.msra.mxu0 0
      %1226 = vmatprep.subr.bf16.mxu0 0
      %1227 = vmatpush1.bf16.msra.mxu0 0
      %1228 = vmatprep.subr.bf16.mxu0 0
      %1229 = vmatpush1.bf16.msra.mxu0 0
      %1230 = vmatprep.subr.bf16.mxu0 0
      %1231 = vmatpush1.bf16.msra.mxu0 0
      %1232 = vmatprep.subr.bf16.mxu0 0
      %1233 = vmatpush1.bf16.msra.mxu0 0
      %1234 = vmatprep.subr.bf16.mxu0 0
      %1235 = vmatpush1.bf16.msra.mxu0 0
      %1236 = vmatprep.subr.bf16.mxu0 0
      %1237 = vmatpush1.bf16.msra.mxu0 0
      %1238 = vmatprep.subr.bf16.mxu0 0
      %1239 = vmatpush1.bf16.msra.mxu0 0
      %1240 = vmatprep.subr.bf16.mxu0 0
      %1241 = vmatpush1.bf16.msra.mxu0 0
      %1242 = vmatprep.subr.bf16.mxu0 0
      %1243 = vmatpush1.bf16.msra.mxu0 0
      %1244 = vmatprep.subr.bf16.mxu0 0
      %1245 = vmatpush1.bf16.msra.mxu0 0
      %1246 = vmatprep.subr.bf16.mxu0 0
      %1247 = vmatpush1.bf16.msra.mxu0 0
      %1248 = vmatprep.subr.bf16.mxu0 0
      %1249 = vmatpush1.bf16.msra.mxu0 0
      %1250 = vmatprep.subr.bf16.mxu0 0
      %1251 = vmatpush1.bf16.msra.mxu0 0
      %1252 = vmatprep.subr.bf16.mxu0 0
      %1253 = vmatpush1.bf16.msra.mxu0 0
      %1254 = vmatprep.mubr.bf16.mxu0 0
      %1255 = vmatmul.mubr.bf16.gmra.mrb[0].mxu0 %v1214
      %v1256 = vpop.f32.mrb[0].mxu0
      %v1257 = vadd.f32 0.0, %v1256
      %v1258 = vpop.f32.mrb[0].mxu0
      %v1259 = vpop.f32.mrb[0].mxu0
      %v1260 = vadd.f32 0.0, %v1259
      %v1261 = vpop.f32.mrb[0].mxu0
      %1262 = vmatprep.mubr.bf16.mxu0 0
      %1263 = vmatmul.mubr.bf16.gmra.mrb[0].mxu0 %v1217
      %v1264 = vpop.f32.mrb[0].mxu0
      %v1265 = vadd.f32 0.0, %v1264
      %v1266 = vpop.f32.mrb[0].mxu0
      %v1267 = vpop.f32.mrb[0].mxu0
      %v1268 = vadd.f32 0.0, %v1267
      %v1269 = vpop.f32.mrb[0].mxu0
      %1270 = vdwg.mxu0
      %v1275 = vunpack.c.l.b16 %v868
      %v1276 = vunpack.c.l.b16 %v869
      %v1277 = vunpack.c.l.b16 %v870
      %v1278 = vunpack.c.l.b16 %v871
      %v1279 = vpack.c.b16 %v1276, %v1275
      %v1280 = vpack.c.b16 %v1278, %v1277
      %v1282 = vsel %vm602, %v1279, 0
      %v1285 = vsel %vm602, %v1280, 0
      %v1288 = vsel %vm627, %v872, 0
      %1290 = vmatprep.subr.bf16.mxu0 0
      %1291 = vmatpush1.bf16.msra.mxu0 %v1288
      %1292 = vmatprep.subr.bf16.mxu0 0
      %1293 = vmatpush1.bf16.msra.mxu0 0
      %1294 = vmatprep.subr.bf16.mxu0 0
      %1295 = vmatpush1.bf16.msra.mxu0 0
      %1296 = vmatprep.subr.bf16.mxu0 0
      %1297 = vmatpush1.bf16.msra.mxu0 0
      %1298 = vmatprep.subr.bf16.mxu0 0
      %1299 = vmatpush1.bf16.msra.mxu0 0
      %1300 = vmatprep.subr.bf16.mxu0 0
      %1301 = vmatpush1.bf16.msra.mxu0 0
      %1302 = vmatprep.subr.bf16.mxu0 0
      %1303 = vmatpush1.bf16.msra.mxu0 0
      %1304 = vmatprep.subr.bf16.mxu0 0
      %1305 = vmatpush1.bf16.msra.mxu0 0
      %1306 = vmatprep.subr.bf16.mxu0 0
      %1307 = vmatpush1.bf16.msra.mxu0 0
      %1308 = vmatprep.subr.bf16.mxu0 0
      %1309 = vmatpush1.bf16.msra.mxu0 0
      %1310 = vmatprep.subr.bf16.mxu0 0
      %1311 = vmatpush1.bf16.msra.mxu0 0
      %1312 = vmatprep.subr.bf16.mxu0 0
      %1313 = vmatpush1.bf16.msra.mxu0 0
      %1314 = vmatprep.subr.bf16.mxu0 0
      %1315 = vmatpush1.bf16.msra.mxu0 0
      %1316 = vmatprep.subr.bf16.mxu0 0
      %1317 = vmatpush1.bf16.msra.mxu0 0
      %1318 = vmatprep.subr.bf16.mxu0 0
      %1319 = vmatpush1.bf16.msra.mxu0 0
      %1320 = vmatprep.subr.bf16.mxu0 0
      %1321 = vmatpush1.bf16.msra.mxu0 0
      %1322 = vmatprep.mubr.bf16.mxu0 0
      %1323 = vmatmul.mubr.bf16.gmra.mrb[0].mxu0 %v1282
      %v1324 = vpop.f32.mrb[0].mxu0
      %v1325 = vadd.f32 %v1257, %v1324
      %v1326 = vpop.f32.mrb[0].mxu0
      %v1327 = vpop.f32.mrb[0].mxu0
      %v1328 = vadd.f32 %v1260, %v1327
      %v1329 = vpop.f32.mrb[0].mxu0
      %1330 = vmatprep.mubr.bf16.mxu0 0
      %1331 = vmatmul.mubr.bf16.gmra.mrb[0].mxu0 %v1285
      %v1332 = vpop.f32.mrb[0].mxu0
      %v1333 = vadd.f32 %v1265, %v1332
      %v1334 = vpop.f32.mrb[0].mxu0
      %v1335 = vpop.f32.mrb[0].mxu0
      %v1336 = vadd.f32 %v1268, %v1335
      %v1337 = vpop.f32.mrb[0].mxu0
      %1338 = vdwg.mxu0
      %v1339 = vld [vmem:[#allocation2] sm:$0x30]
      %v1340 = vld [vmem:[#allocation2 + $0x20] sm:$0x30]
      %v1341 = vld [vmem:[#allocation2 + $0x40] sm:$0x30]
      %s1342 = scalar_lea.vmem %s5, 256
      %v1343 = vld [vmem:[%s1342] sm:$0xf]
      %v1344 = vld [vmem:[%s1342 + $0x4] sm:$0xf]
      %v1345 = vld [vmem:[%s1342 + $0x8] sm:$0xf]
      %v1346 = vld [vmem:[%s1342 + $0xc] sm:$0xf]
      %v1347 = vld [vmem:[%s1342 + $0x10] sm:$0xf]
      %v1348 = vld [vmem:[%s1342 + $0x14] sm:$0xf]
      %v1349 = vld [vmem:[%s1342 + $0x18] sm:$0xf]
      %v1350 = vld [vmem:[%s1342 + $0x1c] sm:$0xf]
      %v1351 = vld [vmem:[%s1342 + $0x20] sm:$0xf]
      %v1352 = vld [vmem:[%s1342 + $0x24] sm:$0xf]
      %v1353 = vld [vmem:[%s1342 + $0x28] sm:$0xf]
      %v1354 = vld [vmem:[%s1342 + $0x2c] sm:$0xf]
      %v1355 = vld [vmem:[%s1342 + $0x30] sm:$0xf]
      %v1356 = vld [vmem:[%s1342 + $0x34] sm:$0xf]
      %v1357 = vld [vmem:[%s1342 + $0x38] sm:$0xf]
      %v1358 = vld [vmem:[%s1342 + $0x3c] sm:$0xf]
      %v1359 = vunpack.c.l.bf16 %v1343
      %v1360 = vunpack.c.l.bf16 %v1344
      %v1361 = vunpack.c.l.bf16 %v1345
      %v1362 = vunpack.c.l.bf16 %v1346
      %v1363 = vunpack.c.l.bf16 %v1347
      %v1364 = vunpack.c.l.bf16 %v1348
      %v1365 = vunpack.c.l.bf16 %v1349
      %v1366 = vunpack.c.l.bf16 %v1350
      %v1367 = vunpack.c.l.bf16 %v1351
      %v1368 = vunpack.c.l.bf16 %v1352
      %v1369 = vunpack.c.l.bf16 %v1353
      %v1370 = vunpack.c.l.bf16 %v1354
      %v1371 = vunpack.c.l.bf16 %v1355
      %v1372 = vunpack.c.l.bf16 %v1356
      %v1373 = vunpack.c.l.bf16 %v1357
      %v1374 = vunpack.c.l.bf16 %v1358
      %v1376 = vrot.slane %v1340, 4
      %1378 = vxpose.xlu0.c.b16.start [1/8] %v1376, 128
      %1379 = vxpose.xlu0.c.b16.cont [2/8] 0, 128
      %1380 = vxpose.xlu0.c.b16.cont [3/8] 0, 128
      %1381 = vxpose.xlu0.c.b16.cont [4/8] 0, 128
      %1382 = vxpose.xlu0.c.b16.cont [5/8] 0, 128
      %1383 = vxpose.xlu0.c.b16.cont [6/8] 0, 128
      %1384 = vxpose.xlu0.c.b16.cont [7/8] 0, 128
      %1385 = vxpose.xlu0.c.b16.end [8/8] 0, 128
      %v1386 = vpop.trf.xlu0
      %v1387 = vpop.trf.xlu0
      %v1388 = vpop.trf.xlu0
      %v1389 = vpop.trf.xlu0
      %v1390 = vpop.trf.xlu0
      %v1391 = vpop.trf.xlu0
      %v1392 = vpop.trf.xlu0
      %v1393 = vpop.trf.xlu0
      %v1395 = vrot.slane %v1339, 4
      %v1397 = vsel %vm602, %v1386, 0
      %v1400 = vsel %vm602, %v1387, 0
      %v1403 = vsel %vm602, %v1388, 0
      %v1406 = vsel %vm602, %v1389, 0
      %v1409 = vsel %vm602, %v1390, 0
      %v1412 = vsel %vm602, %v1391, 0
      %v1415 = vsel %vm602, %v1392, 0
      %v1418 = vsel %vm602, %v1393, 0
      %v1421 = vsel %vm627, %v1395, 0
      %1423 = vmatprep.subr.bf16.mxu0 0
      %1424 = vmatpush1.bf16.msra.mxu0 %v1421
      %1425 = vmatprep.subr.bf16.mxu0 0
      %1426 = vmatpush1.bf16.msra.mxu0 0
      %1427 = vmatprep.subr.bf16.mxu0 0
      %1428 = vmatpush1.bf16.msra.mxu0 0
      %1429 = vmatprep.subr.bf16.mxu0 0
      %1430 = vmatpush1.bf16.msra.mxu0 0
      %1431 = vmatprep.subr.bf16.mxu0 0
      %1432 = vmatpush1.bf16.msra.mxu0 0
      %1433 = vmatprep.subr.bf16.mxu0 0
      %1434 = vmatpush1.bf16.msra.mxu0 0
      %1435 = vmatprep.subr.bf16.mxu0 0
      %1436 = vmatpush1.bf16.msra.mxu0 0
      %1437 = vmatprep.subr.bf16.mxu0 0
      %1438 = vmatpush1.bf16.msra.mxu0 0
      %1439 = vmatprep.subr.bf16.mxu0 0
      %1440 = vmatpush1.bf16.msra.mxu0 0
      %1441 = vmatprep.subr.bf16.mxu0 0
      %1442 = vmatpush1.bf16.msra.mxu0 0
      %1443 = vmatprep.subr.bf16.mxu0 0
      %1444 = vmatpush1.bf16.msra.mxu0 0
      %1445 = vmatprep.subr.bf16.mxu0 0
      %1446 = vmatpush1.bf16.msra.mxu0 0
      %1447 = vmatprep.subr.bf16.mxu0 0
      %1448 = vmatpush1.bf16.msra.mxu0 0
      %1449 = vmatprep.subr.bf16.mxu0 0
      %1450 = vmatpush1.bf16.msra.mxu0 0
      %1451 = vmatprep.subr.bf16.mxu0 0
      %1452 = vmatpush1.bf16.msra.mxu0 0
      %1453 = vmatprep.subr.bf16.mxu0 0
      %1454 = vmatpush1.bf16.msra.mxu0 0
      %1455 = vmatprep.mubr.bf16.mxu0 0
      %1456 = vmatmul.mubr.bf16.gmra.mrb[0].mxu0 %v1397
      %v1457 = vpop.f32.mrb[0].mxu0
      %v1458 = vadd.f32 %v1359, %v1457
      %v1459 = vpop.f32.mrb[0].mxu0
      %v1460 = vpop.f32.mrb[0].mxu0
      %v1461 = vadd.f32 %v1360, %v1460
      %v1462 = vpop.f32.mrb[0].mxu0
      %1463 = vmatprep.mubr.bf16.mxu0 0
      %1464 = vmatmul.mubr.bf16.gmra.mrb[0].mxu0 %v1400
      %v1465 = vpop.f32.mrb[0].mxu0
      %v1466 = vadd.f32 %v1361, %v1465
      %v1467 = vpop.f32.mrb[0].mxu0
      %v1468 = vpop.f32.mrb[0].mxu0
      %v1469 = vadd.f32 %v1362, %v1468
      %v1470 = vpop.f32.mrb[0].mxu0
      %1471 = vmatprep.mubr.bf16.mxu0 0
      %1472 = vmatmul.mubr.bf16.gmra.mrb[0].mxu0 %v1403
      %v1473 = vpop.f32.mrb[0].mxu0
      %v1474 = vadd.f32 %v1363, %v1473
      %v1475 = vpop.f32.mrb[0].mxu0
      %v1476 = vpop.f32.mrb[0].mxu0
      %v1477 = vadd.f32 %v1364, %v1476
      %v1478 = vpop.f32.mrb[0].mxu0
      %1479 = vmatprep.mubr.bf16.mxu0 0
      %1480 = vmatmul.mubr.bf16.gmra.mrb[0].mxu0 %v1406
      %v1481 = vpop.f32.mrb[0].mxu0
      %v1482 = vadd.f32 %v1365, %v1481
      %v1483 = vpop.f32.mrb[0].mxu0
      %v1484 = vpop.f32.mrb[0].mxu0
      %v1485 = vadd.f32 %v1366, %v1484
      %v1486 = vpop.f32.mrb[0].mxu0
      %1487 = vmatprep.mubr.bf16.mxu0 0
      %1488 = vmatmul.mubr.bf16.gmra.mrb[0].mxu0 %v1409
      %v1489 = vpop.f32.mrb[0].mxu0
      %v1490 = vadd.f32 %v1367, %v1489
      %v1491 = vpop.f32.mrb[0].mxu0
      %v1492 = vpop.f32.mrb[0].mxu0
      %v1493 = vadd.f32 %v1368, %v1492
      %v1494 = vpop.f32.mrb[0].mxu0
      %1495 = vmatprep.mubr.bf16.mxu0 0
      %1496 = vmatmul.mubr.bf16.gmra.mrb[0].mxu0 %v1412
      %v1497 = vpop.f32.mrb[0].mxu0
      %v1498 = vadd.f32 %v1369, %v1497
      %v1499 = vpop.f32.mrb[0].mxu0
      %v1500 = vpop.f32.mrb[0].mxu0
      %v1501 = vadd.f32 %v1370, %v1500
      %v1502 = vpop.f32.mrb[0].mxu0
      %1503 = vmatprep.mubr.bf16.mxu0 0
      %1504 = vmatmul.mubr.bf16.gmra.mrb[0].mxu0 %v1415
      %v1505 = vpop.f32.mrb[0].mxu0
      %v1506 = vadd.f32 %v1371, %v1505
      %v1507 = vpop.f32.mrb[0].mxu0
      %v1508 = vpop.f32.mrb[0].mxu0
      %v1509 = vadd.f32 %v1372, %v1508
      %v1510 = vpop.f32.mrb[0].mxu0
      %1511 = vmatprep.mubr.bf16.mxu0 0
      %1512 = vmatmul.mubr.bf16.gmra.mrb[0].mxu0 %v1418
      %v1513 = vpop.f32.mrb[0].mxu0
      %v1514 = vadd.f32 %v1373, %v1513
      %v1515 = vpop.f32.mrb[0].mxu0
      %v1516 = vpop.f32.mrb[0].mxu0
      %v1517 = vadd.f32 %v1374, %v1516
      %v1518 = vpop.f32.mrb[0].mxu0
      %1519 = vdwg.mxu0
      %v1520 = vmax.f32 %v1458, %v1474
      %v1521 = vmax.f32 %v1461, %v1477
      %v1522 = vmax.f32 %v1466, %v1482
      %v1523 = vmax.f32 %v1469, %v1485
      %v1524 = vmax.f32 %v1520, %v1490
      %v1525 = vmax.f32 %v1521, %v1493
      %v1526 = vmax.f32 %v1522, %v1498
      %v1527 = vmax.f32 %v1523, %v1501
      %v1528 = vmax.f32 %v1524, %v1506
      %v1529 = vmax.f32 %v1525, %v1509
      %v1530 = vmax.f32 %v1526, %v1514
      %v1531 = vmax.f32 %v1527, %v1517
      %v1532 = vmax.f32 %v1528, %v1529
      %v1533 = vmax.f32 %v1530, %v1531
      %v1534 = vmax.f32 %v1532, %v1533
      %v1535 = vrot.slane %v1534, 4
      %v1536 = vmax.f32 %v1534, %v1535
      %v1537 = vrot.slane %v1536, 2
      %v1538 = vmax.f32 %v1536, %v1537
      %v1539 = vrot.slane %v1538, 1
      %v1540 = vmax.f32 %v1538, %v1539
      %v1541 = vsub.f32 %v1458, %v1540
      %v1542 = vsub.f32 %v1461, %v1540
      %v1543 = vsub.f32 %v1466, %v1540
      %v1544 = vsub.f32 %v1469, %v1540
      %v1545 = vsub.f32 %v1474, %v1540
      %v1546 = vsub.f32 %v1477, %v1540
      %v1547 = vsub.f32 %v1482, %v1540
      %v1548 = vsub.f32 %v1485, %v1540
      %v1549 = vsub.f32 %v1490, %v1540
      %v1550 = vsub.f32 %v1493, %v1540
      %v1551 = vsub.f32 %v1498, %v1540
      %v1552 = vsub.f32 %v1501, %v1540
      %v1553 = vsub.f32 %v1506, %v1540
      %v1554 = vsub.f32 %v1509, %v1540
      %v1555 = vsub.f32 %v1514, %v1540
      %v1556 = vsub.f32 %v1517, %v1540
      %v1557 = vmul.f32 %v1541, 1.442695
      %v1558 = vpow.pop %v1557
      %v1559 = vmul.f32 %v1542, 1.442695
      %v1560 = vpow.pop %v1559
      %v1561 = vmul.f32 %v1543, 1.442695
      %v1562 = vpow.pop %v1561
      %v1563 = vmul.f32 %v1544, 1.442695
      %v1564 = vpow.pop %v1563
      %v1565 = vmul.f32 %v1545, 1.442695
      %v1566 = vpow.pop %v1565
      %v1567 = vmul.f32 %v1546, 1.442695
      %v1568 = vpow.pop %v1567
      %v1569 = vmul.f32 %v1547, 1.442695
      %v1570 = vpow.pop %v1569
      %v1571 = vmul.f32 %v1548, 1.442695
      %v1572 = vpow.pop %v1571
      %v1573 = vmul.f32 %v1549, 1.442695
      %v1574 = vpow.pop %v1573
      %v1575 = vmul.f32 %v1550, 1.442695
      %v1576 = vpow.pop %v1575
      %v1577 = vmul.f32 %v1551, 1.442695
      %v1578 = vpow.pop %v1577
      %v1579 = vmul.f32 %v1552, 1.442695
      %v1580 = vpow.pop %v1579
      %v1581 = vmul.f32 %v1553, 1.442695
      %v1582 = vpow.pop %v1581
      %v1583 = vmul.f32 %v1554, 1.442695
      %v1584 = vpow.pop %v1583
      %v1585 = vmul.f32 %v1555, 1.442695
      %v1586 = vpow.pop %v1585
      %v1587 = vmul.f32 %v1556, 1.442695
      %v1588 = vpow.pop %v1587
      %v1589 = vadd.f32 %v1558, %v1560
      %v1590 = vadd.f32 %v1589, %v1562
      %v1591 = vadd.f32 %v1590, %v1564
      %v1592 = vadd.f32 %v1591, %v1566
      %v1593 = vadd.f32 %v1592, %v1568
      %v1594 = vadd.f32 %v1593, %v1570
      %v1595 = vadd.f32 %v1594, %v1572
      %v1596 = vadd.f32 %v1595, %v1574
      %v1597 = vadd.f32 %v1596, %v1576
      %v1598 = vadd.f32 %v1597, %v1578
      %v1599 = vadd.f32 %v1598, %v1580
      %v1600 = vadd.f32 %v1599, %v1582
      %v1601 = vadd.f32 %v1600, %v1584
      %v1602 = vadd.f32 %v1601, %v1586
      %v1603 = vadd.f32 %v1602, %v1588
      %v1604 = vrot.slane %v1603, 4
      %v1605 = vadd.f32 %v1603, %v1604
      %v1606 = vrot.slane %v1605, 2
      %v1607 = vadd.f32 %v1605, %v1606
      %v1608 = vrot.slane %v1607, 1
      %v1609 = vadd.f32 %v1607, %v1608
      %v1610 = vpack.c.bf16 %v1560, %v1558
      %v1611 = vpack.c.bf16 %v1564, %v1562
      %v1612 = vpack.c.bf16 %v1568, %v1566
      %v1613 = vpack.c.bf16 %v1572, %v1570
      %v1614 = vpack.c.bf16 %v1576, %v1574
      %v1615 = vpack.c.bf16 %v1580, %v1578
      %v1616 = vpack.c.bf16 %v1584, %v1582
      %v1617 = vpack.c.bf16 %v1588, %v1586
      %v1619 = vrot.slane %v1341, 4
      %1621 = vmatprep.subr.bf16.mxu0 0
      %1622 = vmatpush1.bf16.msra.mxu0 %v1610
      %1623 = vmatprep.subr.bf16.mxu0 0
      %1624 = vmatpush1.bf16.msra.mxu0 %v1611
      %1625 = vmatprep.subr.bf16.mxu0 0
      %1626 = vmatpush1.bf16.msra.mxu0 %v1612
      %1627 = vmatprep.subr.bf16.mxu0 0
      %1628 = vmatpush1.bf16.msra.mxu0 %v1613
      %1629 = vmatprep.subr.bf16.mxu0 0
      %1630 = vmatpush1.bf16.msra.mxu0 %v1614
      %1631 = vmatprep.subr.bf16.mxu0 0
      %1632 = vmatpush1.bf16.msra.mxu0 %v1615
      %1633 = vmatprep.subr.bf16.mxu0 0
      %1634 = vmatpush1.bf16.msra.mxu0 %v1616
      %1635 = vmatprep.subr.bf16.mxu0 0
      %1636 = vmatpush1.bf16.msra.mxu0 %v1617
      %1637 = vmatprep.subr.bf16.mxu0 0
      %1638 = vmatpush1.bf16.msra.mxu0 0
      %1639 = vmatprep.subr.bf16.mxu0 0
      %1640 = vmatpush1.bf16.msra.mxu0 0
      %1641 = vmatprep.subr.bf16.mxu0 0
      %1642 = vmatpush1.bf16.msra.mxu0 0
      %1643 = vmatprep.subr.bf16.mxu0 0
      %1644 = vmatpush1.bf16.msra.mxu0 0
      %1645 = vmatprep.subr.bf16.mxu0 0
      %1646 = vmatpush1.bf16.msra.mxu0 0
      %1647 = vmatprep.subr.bf16.mxu0 0
      %1648 = vmatpush1.bf16.msra.mxu0 0
      %1649 = vmatprep.subr.bf16.mxu0 0
      %1650 = vmatpush1.bf16.msra.mxu0 0
      %1651 = vmatprep.subr.bf16.mxu0 0
      %1652 = vmatpush1.bf16.msra.mxu0 0
      %1653 = vmatprep.mubr.bf16.mxu0 0
      %1654 = vmatmul.mubr.bf16.gmra.mrb[0].mxu0 %v1619
      %v1655 = vpop.f32.mrb[0].mxu0
      %v1656 = vadd.f32 0.0, %v1655
      %v1657 = vpop.f32.mrb[0].mxu0
      %v1658 = vpop.f32.mrb[0].mxu0
      %v1659 = vpop.f32.mrb[0].mxu0
      %1660 = vdwg.mxu0
      %v1661 = vrcp.pop %v1609
      %v1662 = vmul.f32 %v1656, %v1661
      %s1663 = scalar_lea.vmem %s3, 32
      %v1664 = vld [vmem:[%s1663] sm:$0xf]
      %v1665 = vld [vmem:[%s1663 + $0x4] sm:$0xf]
      %v1666 = vld [vmem:[%s1663 + $0x8] sm:$0xf]
      %v1667 = vld [vmem:[%s1663 + $0xc] sm:$0xf]
      %v1668 = vpack.c.bf16 %v1662, %v1662
      %v1673 = vunpack.c.l.b16 %v1664
      %v1674 = vunpack.c.l.b16 %v1665
      %v1675 = vunpack.c.l.b16 %v1666
      %v1676 = vunpack.c.l.b16 %v1667
      %v1677 = vpack.c.b16 %v1674, %v1673
      %v1678 = vpack.c.b16 %v1676, %v1675
      %v1680 = vsel %vm602, %v1677, 0
      %v1683 = vsel %vm602, %v1678, 0
      %v1686 = vsel %vm627, %v1668, 0
      %1688 = vmatprep.subr.bf16.mxu0 0
      %1689 = vmatpush1.bf16.msra.mxu0 %v1686
      %1690 = vmatprep.subr.bf16.mxu0 0
      %1691 = vmatpush1.bf16.msra.mxu0 0
      %1692 = vmatprep.subr.bf16.mxu0 0
      %1693 = vmatpush1.bf16.msra.mxu0 0
      %1694 = vmatprep.subr.bf16.mxu0 0
      %1695 = vmatpush1.bf16.msra.mxu0 0
      %1696 = vmatprep.subr.bf16.mxu0 0
      %1697 = vmatpush1.bf16.msra.mxu0 0
      %1698 = vmatprep.subr.bf16.mxu0 0
      %1699 = vmatpush1.bf16.msra.mxu0 0
      %1700 = vmatprep.subr.bf16.mxu0 0
      %1701 = vmatpush1.bf16.msra.mxu0 0
      %1702 = vmatprep.subr.bf16.mxu0 0
      %1703 = vmatpush1.bf16.msra.mxu0 0
      %1704 = vmatprep.subr.bf16.mxu0 0
      %1705 = vmatpush1.bf16.msra.mxu0 0
      %1706 = vmatprep.subr.bf16.mxu0 0
      %1707 = vmatpush1.bf16.msra.mxu0 0
      %1708 = vmatprep.subr.bf16.mxu0 0
      %1709 = vmatpush1.bf16.msra.mxu0 0
      %1710 = vmatprep.subr.bf16.mxu0 0
      %1711 = vmatpush1.bf16.msra.mxu0 0
      %1712 = vmatprep.subr.bf16.mxu0 0
      %1713 = vmatpush1.bf16.msra.mxu0 0
      %1714 = vmatprep.subr.bf16.mxu0 0
      %1715 = vmatpush1.bf16.msra.mxu0 0
      %1716 = vmatprep.subr.bf16.mxu0 0
      %1717 = vmatpush1.bf16.msra.mxu0 0
      %1718 = vmatprep.subr.bf16.mxu0 0
      %1719 = vmatpush1.bf16.msra.mxu0 0
      %1720 = vmatprep.mubr.bf16.mxu0 0
      %1721 = vmatmul.mubr.bf16.gmra.mrb[0].mxu0 %v1680
      %v1722 = vpop.f32.mrb[0].mxu0
      %v1723 = vadd.f32 0.0, %v1722
      %v1724 = vpop.f32.mrb[0].mxu0
      %v1725 = vpop.f32.mrb[0].mxu0
      %v1726 = vadd.f32 0.0, %v1725
      %v1727 = vpop.f32.mrb[0].mxu0
      %1728 = vmatprep.mubr.bf16.mxu0 0
      %1729 = vmatmul.mubr.bf16.gmra.mrb[0].mxu0 %v1683
      %v1730 = vpop.f32.mrb[0].mxu0
      %v1731 = vadd.f32 0.0, %v1730
      %v1732 = vpop.f32.mrb[0].mxu0
      %v1733 = vpop.f32.mrb[0].mxu0
      %v1734 = vadd.f32 0.0, %v1733
      %v1735 = vpop.f32.mrb[0].mxu0
      %1736 = vdwg.mxu0
      %v1737 = vadd.f32 %v1325, %v1723
      %v1738 = vadd.f32 %v1328, %v1726
      %v1739 = vadd.f32 %v1333, %v1731
      %v1740 = vadd.f32 %v1336, %v1734
      %v1741 = vld [vmem:[#allocation2] sm:$0xc0]
      %v1742 = vld [vmem:[#allocation2 + $0x20] sm:$0xc0]
      %v1743 = vld [vmem:[#allocation2 + $0x40] sm:$0xc0]
      %s1744 = scalar_lea.vmem %s5, 384
      %v1745 = vld [vmem:[%s1744] sm:$0xf]
      %v1746 = vld [vmem:[%s1744 + $0x4] sm:$0xf]
      %v1747 = vld [vmem:[%s1744 + $0x8] sm:$0xf]
      %v1748 = vld [vmem:[%s1744 + $0xc] sm:$0xf]
      %v1749 = vld [vmem:[%s1744 + $0x10] sm:$0xf]
      %v1750 = vld [vmem:[%s1744 + $0x14] sm:$0xf]
      %v1751 = vld [vmem:[%s1744 + $0x18] sm:$0xf]
      %v1752 = vld [vmem:[%s1744 + $0x1c] sm:$0xf]
      %v1753 = vld [vmem:[%s1744 + $0x20] sm:$0xf]
      %v1754 = vld [vmem:[%s1744 + $0x24] sm:$0xf]
      %v1755 = vld [vmem:[%s1744 + $0x28] sm:$0xf]
      %v1756 = vld [vmem:[%s1744 + $0x2c] sm:$0xf]
      %v1757 = vld [vmem:[%s1744 + $0x30] sm:$0xf]
      %v1758 = vld [vmem:[%s1744 + $0x34] sm:$0xf]
      %v1759 = vld [vmem:[%s1744 + $0x38] sm:$0xf]
      %v1760 = vld [vmem:[%s1744 + $0x3c] sm:$0xf]
      %v1761 = vunpack.c.l.bf16 %v1745
      %v1762 = vunpack.c.l.bf16 %v1746
      %v1763 = vunpack.c.l.bf16 %v1747
      %v1764 = vunpack.c.l.bf16 %v1748
      %v1765 = vunpack.c.l.bf16 %v1749
      %v1766 = vunpack.c.l.bf16 %v1750
      %v1767 = vunpack.c.l.bf16 %v1751
      %v1768 = vunpack.c.l.bf16 %v1752
      %v1769 = vunpack.c.l.bf16 %v1753
      %v1770 = vunpack.c.l.bf16 %v1754
      %v1771 = vunpack.c.l.bf16 %v1755
      %v1772 = vunpack.c.l.bf16 %v1756
      %v1773 = vunpack.c.l.bf16 %v1757
      %v1774 = vunpack.c.l.bf16 %v1758
      %v1775 = vunpack.c.l.bf16 %v1759
      %v1776 = vunpack.c.l.bf16 %v1760
      %v1778 = vrot.slane %v1742, 6
      %1780 = vxpose.xlu0.c.b16.start [1/8] %v1778, 128
      %1781 = vxpose.xlu0.c.b16.cont [2/8] 0, 128
      %1782 = vxpose.xlu0.c.b16.cont [3/8] 0, 128
      %1783 = vxpose.xlu0.c.b16.cont [4/8] 0, 128
      %1784 = vxpose.xlu0.c.b16.cont [5/8] 0, 128
      %1785 = vxpose.xlu0.c.b16.cont [6/8] 0, 128
      %1786 = vxpose.xlu0.c.b16.cont [7/8] 0, 128
      %1787 = vxpose.xlu0.c.b16.end [8/8] 0, 128
      %v1788 = vpop.trf.xlu0
      %v1789 = vpop.trf.xlu0
      %v1790 = vpop.trf.xlu0
      %v1791 = vpop.trf.xlu0
      %v1792 = vpop.trf.xlu0
      %v1793 = vpop.trf.xlu0
      %v1794 = vpop.trf.xlu0
      %v1795 = vpop.trf.xlu0
      %v1797 = vrot.slane %v1741, 6
      %v1799 = vsel %vm602, %v1788, 0
      %v1802 = vsel %vm602, %v1789, 0
      %v1805 = vsel %vm602, %v1790, 0
      %v1808 = vsel %vm602, %v1791, 0
      %v1811 = vsel %vm602, %v1792, 0
      %v1814 = vsel %vm602, %v1793, 0
      %v1817 = vsel %vm602, %v1794, 0
      %v1820 = vsel %vm602, %v1795, 0
      %v1823 = vsel %vm627, %v1797, 0
      %1825 = vmatprep.subr.bf16.mxu0 0
      %1826 = vmatpush1.bf16.msra.mxu0 %v1823
      %1827 = vmatprep.subr.bf16.mxu0 0
      %1828 = vmatpush1.bf16.msra.mxu0 0
      %1829 = vmatprep.subr.bf16.mxu0 0
      %1830 = vmatpush1.bf16.msra.mxu0 0
      %1831 = vmatprep.subr.bf16.mxu0 0
      %1832 = vmatpush1.bf16.msra.mxu0 0
      %1833 = vmatprep.subr.bf16.mxu0 0
      %1834 = vmatpush1.bf16.msra.mxu0 0
      %1835 = vmatprep.subr.bf16.mxu0 0
      %1836 = vmatpush1.bf16.msra.mxu0 0
      %1837 = vmatprep.subr.bf16.mxu0 0
      %1838 = vmatpush1.bf16.msra.mxu0 0
      %1839 = vmatprep.subr.bf16.mxu0 0
      %1840 = vmatpush1.bf16.msra.mxu0 0
      %1841 = vmatprep.subr.bf16.mxu0 0
      %1842 = vmatpush1.bf16.msra.mxu0 0
      %1843 = vmatprep.subr.bf16.mxu0 0
      %1844 = vmatpush1.bf16.msra.mxu0 0
      %1845 = vmatprep.subr.bf16.mxu0 0
      %1846 = vmatpush1.bf16.msra.mxu0 0
      %1847 = vmatprep.subr.bf16.mxu0 0
      %1848 = vmatpush1.bf16.msra.mxu0 0
      %1849 = vmatprep.subr.bf16.mxu0 0
      %1850 = vmatpush1.bf16.msra.mxu0 0
      %1851 = vmatprep.subr.bf16.mxu0 0
      %1852 = vmatpush1.bf16.msra.mxu0 0
      %1853 = vmatprep.subr.bf16.mxu0 0
      %1854 = vmatpush1.bf16.msra.mxu0 0
      %1855 = vmatprep.subr.bf16.mxu0 0
      %1856 = vmatpush1.bf16.msra.mxu0 0
      %1857 = vmatprep.mubr.bf16.mxu0 0
      %1858 = vmatmul.mubr.bf16.gmra.mrb[0].mxu0 %v1799
      %v1859 = vpop.f32.mrb[0].mxu0
      %v1860 = vadd.f32 %v1761, %v1859
      %v1861 = vpop.f32.mrb[0].mxu0
      %v1862 = vpop.f32.mrb[0].mxu0
      %v1863 = vadd.f32 %v1762, %v1862
      %v1864 = vpop.f32.mrb[0].mxu0
      %1865 = vmatprep.mubr.bf16.mxu0 0
      %1866 = vmatmul.mubr.bf16.gmra.mrb[0].mxu0 %v1802
      %v1867 = vpop.f32.mrb[0].mxu0
      %v1868 = vadd.f32 %v1763, %v1867
      %v1869 = vpop.f32.mrb[0].mxu0
      %v1870 = vpop.f32.mrb[0].mxu0
      %v1871 = vadd.f32 %v1764, %v1870
      %v1872 = vpop.f32.mrb[0].mxu0
      %1873 = vmatprep.mubr.bf16.mxu0 0
      %1874 = vmatmul.mubr.bf16.gmra.mrb[0].mxu0 %v1805
      %v1875 = vpop.f32.mrb[0].mxu0
      %v1876 = vadd.f32 %v1765, %v1875
      %v1877 = vpop.f32.mrb[0].mxu0
      %v1878 = vpop.f32.mrb[0].mxu0
      %v1879 = vadd.f32 %v1766, %v1878
      %v1880 = vpop.f32.mrb[0].mxu0
      %1881 = vmatprep.mubr.bf16.mxu0 0
      %1882 = vmatmul.mubr.bf16.gmra.mrb[0].mxu0 %v1808
      %v1883 = vpop.f32.mrb[0].mxu0
      %v1884 = vadd.f32 %v1767, %v1883
      %v1885 = vpop.f32.mrb[0].mxu0
      %v1886 = vpop.f32.mrb[0].mxu0
      %v1887 = vadd.f32 %v1768, %v1886
      %v1888 = vpop.f32.mrb[0].mxu0
      %1889 = vmatprep.mubr.bf16.mxu0 0
      %1890 = vmatmul.mubr.bf16.gmra.mrb[0].mxu0 %v1811
      %v1891 = vpop.f32.mrb[0].mxu0
      %v1892 = vadd.f32 %v1769, %v1891
      %v1893 = vpop.f32.mrb[0].mxu0
      %v1894 = vpop.f32.mrb[0].mxu0
      %v1895 = vadd.f32 %v1770, %v1894
      %v1896 = vpop.f32.mrb[0].mxu0
      %1897 = vmatprep.mubr.bf16.mxu0 0
      %1898 = vmatmul.mubr.bf16.gmra.mrb[0].mxu0 %v1814
      %v1899 = vpop.f32.mrb[0].mxu0
      %v1900 = vadd.f32 %v1771, %v1899
      %v1901 = vpop.f32.mrb[0].mxu0
      %v1902 = vpop.f32.mrb[0].mxu0
      %v1903 = vadd.f32 %v1772, %v1902
      %v1904 = vpop.f32.mrb[0].mxu0
      %1905 = vmatprep.mubr.bf16.mxu0 0
      %1906 = vmatmul.mubr.bf16.gmra.mrb[0].mxu0 %v1817
      %v1907 = vpop.f32.mrb[0].mxu0
      %v1908 = vadd.f32 %v1773, %v1907
      %v1909 = vpop.f32.mrb[0].mxu0
      %v1910 = vpop.f32.mrb[0].mxu0
      %v1911 = vadd.f32 %v1774, %v1910
      %v1912 = vpop.f32.mrb[0].mxu0
      %1913 = vmatprep.mubr.bf16.mxu0 0
      %1914 = vmatmul.mubr.bf16.gmra.mrb[0].mxu0 %v1820
      %v1915 = vpop.f32.mrb[0].mxu0
      %v1916 = vadd.f32 %v1775, %v1915
      %v1917 = vpop.f32.mrb[0].mxu0
      %v1918 = vpop.f32.mrb[0].mxu0
      %v1919 = vadd.f32 %v1776, %v1918
      %v1920 = vpop.f32.mrb[0].mxu0
      %1921 = vdwg.mxu0
      %v1922 = vmax.f32 %v1860, %v1876
      %v1923 = vmax.f32 %v1863, %v1879
      %v1924 = vmax.f32 %v1868, %v1884
      %v1925 = vmax.f32 %v1871, %v1887
      %v1926 = vmax.f32 %v1922, %v1892
      %v1927 = vmax.f32 %v1923, %v1895
      %v1928 = vmax.f32 %v1924, %v1900
      %v1929 = vmax.f32 %v1925, %v1903
      %v1930 = vmax.f32 %v1926, %v1908
      %v1931 = vmax.f32 %v1927, %v1911
      %v1932 = vmax.f32 %v1928, %v1916
      %v1933 = vmax.f32 %v1929, %v1919
      %v1934 = vmax.f32 %v1930, %v1931
      %v1935 = vmax.f32 %v1932, %v1933
      %v1936 = vmax.f32 %v1934, %v1935
      %v1937 = vrot.slane %v1936, 4
      %v1938 = vmax.f32 %v1936, %v1937
      %v1939 = vrot.slane %v1938, 2
      %v1940 = vmax.f32 %v1938, %v1939
      %v1941 = vrot.slane %v1940, 1
      %v1942 = vmax.f32 %v1940, %v1941
      %v1943 = vsub.f32 %v1860, %v1942
      %v1944 = vsub.f32 %v1863, %v1942
      %v1945 = vsub.f32 %v1868, %v1942
      %v1946 = vsub.f32 %v1871, %v1942
      %v1947 = vsub.f32 %v1876, %v1942
      %v1948 = vsub.f32 %v1879, %v1942
      %v1949 = vsub.f32 %v1884, %v1942
      %v1950 = vsub.f32 %v1887, %v1942
      %v1951 = vsub.f32 %v1892, %v1942
      %v1952 = vsub.f32 %v1895, %v1942
      %v1953 = vsub.f32 %v1900, %v1942
      %v1954 = vsub.f32 %v1903, %v1942
      %v1955 = vsub.f32 %v1908, %v1942
      %v1956 = vsub.f32 %v1911, %v1942
      %v1957 = vsub.f32 %v1916, %v1942
      %v1958 = vsub.f32 %v1919, %v1942
      %v1959 = vmul.f32 %v1943, 1.442695
      %v1960 = vpow.pop %v1959
      %v1961 = vmul.f32 %v1944, 1.442695
      %v1962 = vpow.pop %v1961
      %v1963 = vmul.f32 %v1945, 1.442695
      %v1964 = vpow.pop %v1963
      %v1965 = vmul.f32 %v1946, 1.442695
      %v1966 = vpow.pop %v1965
      %v1967 = vmul.f32 %v1947, 1.442695
      %v1968 = vpow.pop %v1967
      %v1969 = vmul.f32 %v1948, 1.442695
      %v1970 = vpow.pop %v1969
      %v1971 = vmul.f32 %v1949, 1.442695
      %v1972 = vpow.pop %v1971
      %v1973 = vmul.f32 %v1950, 1.442695
      %v1974 = vpow.pop %v1973
      %v1975 = vmul.f32 %v1951, 1.442695
      %v1976 = vpow.pop %v1975
      %v1977 = vmul.f32 %v1952, 1.442695
      %v1978 = vpow.pop %v1977
      %v1979 = vmul.f32 %v1953, 1.442695
      %v1980 = vpow.pop %v1979
      %v1981 = vmul.f32 %v1954, 1.442695
      %v1982 = vpow.pop %v1981
      %v1983 = vmul.f32 %v1955, 1.442695
      %v1984 = vpow.pop %v1983
      %v1985 = vmul.f32 %v1956, 1.442695
      %v1986 = vpow.pop %v1985
      %v1987 = vmul.f32 %v1957, 1.442695
      %v1988 = vpow.pop %v1987
      %v1989 = vmul.f32 %v1958, 1.442695
      %v1990 = vpow.pop %v1989
      %v1991 = vadd.f32 %v1960, %v1962
      %v1992 = vadd.f32 %v1991, %v1964
      %v1993 = vadd.f32 %v1992, %v1966
      %v1994 = vadd.f32 %v1993, %v1968
      %v1995 = vadd.f32 %v1994, %v1970
      %v1996 = vadd.f32 %v1995, %v1972
      %v1997 = vadd.f32 %v1996, %v1974
      %v1998 = vadd.f32 %v1997, %v1976
      %v1999 = vadd.f32 %v1998, %v1978
      %v2000 = vadd.f32 %v1999, %v1980
      %v2001 = vadd.f32 %v2000, %v1982
      %v2002 = vadd.f32 %v2001, %v1984
      %v2003 = vadd.f32 %v2002, %v1986
      %v2004 = vadd.f32 %v2003, %v1988
      %v2005 = vadd.f32 %v2004, %v1990
      %v2006 = vrot.slane %v2005, 4
      %v2007 = vadd.f32 %v2005, %v2006
      %v2008 = vrot.slane %v2007, 2
      %v2009 = vadd.f32 %v2007, %v2008
      %v2010 = vrot.slane %v2009, 1
      %v2011 = vadd.f32 %v2009, %v2010
      %v2012 = vpack.c.bf16 %v1962, %v1960
      %v2013 = vpack.c.bf16 %v1966, %v1964
      %v2014 = vpack.c.bf16 %v1970, %v1968
      %v2015 = vpack.c.bf16 %v1974, %v1972
      %v2016 = vpack.c.bf16 %v1978, %v1976
      %v2017 = vpack.c.bf16 %v1982, %v1980
      %v2018 = vpack.c.bf16 %v1986, %v1984
      %v2019 = vpack.c.bf16 %v1990, %v1988
      %v2021 = vrot.slane %v1743, 6
      %2023 = vmatprep.subr.bf16.mxu0 0
      %2024 = vmatpush1.bf16.msra.mxu0 %v2012
      %2025 = vmatprep.subr.bf16.mxu0 0
      %2026 = vmatpush1.bf16.msra.mxu0 %v2013
      %2027 = vmatprep.subr.bf16.mxu0 0
      %2028 = vmatpush1.bf16.msra.mxu0 %v2014
      %2029 = vmatprep.subr.bf16.mxu0 0
      %2030 = vmatpush1.bf16.msra.mxu0 %v2015
      %2031 = vmatprep.subr.bf16.mxu0 0
      %2032 = vmatpush1.bf16.msra.mxu0 %v2016
      %2033 = vmatprep.subr.bf16.mxu0 0
      %2034 = vmatpush1.bf16.msra.mxu0 %v2017
      %2035 = vmatprep.subr.bf16.mxu0 0
      %2036 = vmatpush1.bf16.msra.mxu0 %v2018
      %2037 = vmatprep.subr.bf16.mxu0 0
      %2038 = vmatpush1.bf16.msra.mxu0 %v2019
      %2039 = vmatprep.subr.bf16.mxu0 0
      %2040 = vmatpush1.bf16.msra.mxu0 0
      %2041 = vmatprep.subr.bf16.mxu0 0
      %2042 = vmatpush1.bf16.msra.mxu0 0
      %2043 = vmatprep.subr.bf16.mxu0 0
      %2044 = vmatpush1.bf16.msra.mxu0 0
      %2045 = vmatprep.subr.bf16.mxu0 0
      %2046 = vmatpush1.bf16.msra.mxu0 0
      %2047 = vmatprep.subr.bf16.mxu0 0
      %2048 = vmatpush1.bf16.msra.mxu0 0
      %2049 = vmatprep.subr.bf16.mxu0 0
      %2050 = vmatpush1.bf16.msra.mxu0 0
      %2051 = vmatprep.subr.bf16.mxu0 0
      %2052 = vmatpush1.bf16.msra.mxu0 0
      %2053 = vmatprep.subr.bf16.mxu0 0
      %2054 = vmatpush1.bf16.msra.mxu0 0
      %2055 = vmatprep.mubr.bf16.mxu0 0
      %2056 = vmatmul.mubr.bf16.gmra.mrb[0].mxu0 %v2021
      %v2057 = vpop.f32.mrb[0].mxu0
      %v2058 = vadd.f32 0.0, %v2057
      %v2059 = vpop.f32.mrb[0].mxu0
      %v2060 = vpop.f32.mrb[0].mxu0
      %v2061 = vpop.f32.mrb[0].mxu0
      %2062 = vdwg.mxu0
      %v2063 = vrcp.pop %v2011
      %v2064 = vmul.f32 %v2058, %v2063
      %s2065 = scalar_lea.vmem %s3, 48
      %v2066 = vld [vmem:[%s2065] sm:$0xf]
      %v2067 = vld [vmem:[%s2065 + $0x4] sm:$0xf]
      %v2068 = vld [vmem:[%s2065 + $0x8] sm:$0xf]
      %v2069 = vld [vmem:[%s2065 + $0xc] sm:$0xf]
      %v2070 = vpack.c.bf16 %v2064, %v2064
      %v2075 = vunpack.c.l.b16 %v2066
      %v2076 = vunpack.c.l.b16 %v2067
      %v2077 = vunpack.c.l.b16 %v2068
      %v2078 = vunpack.c.l.b16 %v2069
      %v2079 = vpack.c.b16 %v2076, %v2075
      %v2080 = vpack.c.b16 %v2078, %v2077
      %v2082 = vsel %vm602, %v2079, 0
      %v2085 = vsel %vm602, %v2080, 0
      %v2088 = vsel %vm627, %v2070, 0
      %2090 = vmatprep.subr.bf16.mxu0 0
      %2091 = vmatpush1.bf16.msra.mxu0 %v2088
      %2092 = vmatprep.subr.bf16.mxu0 0
      %2093 = vmatpush1.bf16.msra.mxu0 0
      %2094 = vmatprep.subr.bf16.mxu0 0
      %2095 = vmatpush1.bf16.msra.mxu0 0
      %2096 = vmatprep.subr.bf16.mxu0 0
      %2097 = vmatpush1.bf16.msra.mxu0 0
      %2098 = vmatprep.subr.bf16.mxu0 0
      %2099 = vmatpush1.bf16.msra.mxu0 0
      %2100 = vmatprep.subr.bf16.mxu0 0
      %2101 = vmatpush1.bf16.msra.mxu0 0
      %2102 = vmatprep.subr.bf16.mxu0 0
      %2103 = vmatpush1.bf16.msra.mxu0 0
      %2104 = vmatprep.subr.bf16.mxu0 0
      %2105 = vmatpush1.bf16.msra.mxu0 0
      %2106 = vmatprep.subr.bf16.mxu0 0
      %2107 = vmatpush1.bf16.msra.mxu0 0
      %2108 = vmatprep.subr.bf16.mxu0 0
      %2109 = vmatpush1.bf16.msra.mxu0 0
      %2110 = vmatprep.subr.bf16.mxu0 0
      %2111 = vmatpush1.bf16.msra.mxu0 0
      %2112 = vmatprep.subr.bf16.mxu0 0
      %2113 = vmatpush1.bf16.msra.mxu0 0
      %2114 = vmatprep.subr.bf16.mxu0 0
      %2115 = vmatpush1.bf16.msra.mxu0 0
      %2116 = vmatprep.subr.bf16.mxu0 0
      %2117 = vmatpush1.bf16.msra.mxu0 0
      %2118 = vmatprep.subr.bf16.mxu0 0
      %2119 = vmatpush1.bf16.msra.mxu0 0
      %2120 = vmatprep.subr.bf16.mxu0 0
      %2121 = vmatpush1.bf16.msra.mxu0 0
      %2122 = vmatprep.mubr.bf16.mxu0 0
      %2123 = vmatmul.mubr.bf16.gmra.mrb[0].mxu0 %v2082
      %v2124 = vpop.f32.mrb[0].mxu0
      %v2125 = vadd.f32 0.0, %v2124
      %v2126 = vpop.f32.mrb[0].mxu0
      %v2127 = vpop.f32.mrb[0].mxu0
      %v2128 = vadd.f32 0.0, %v2127
      %v2129 = vpop.f32.mrb[0].mxu0
      %2130 = vmatprep.mubr.bf16.mxu0 0
      %2131 = vmatmul.mubr.bf16.gmra.mrb[0].mxu0 %v2085
      %v2132 = vpop.f32.mrb[0].mxu0
      %v2133 = vadd.f32 0.0, %v2132
      %v2134 = vpop.f32.mrb[0].mxu0
      %v2135 = vpop.f32.mrb[0].mxu0
      %v2136 = vadd.f32 0.0, %v2135
      %v2137 = vpop.f32.mrb[0].mxu0
      %2138 = vdwg.mxu0
      %v2139 = vadd.f32 %v1737, %v2125
      %v2140 = vadd.f32 %v1738, %v2128
      %v2141 = vadd.f32 %v1739, %v2133
      %v2142 = vadd.f32 %v1740, %v2136
      %v2143 = vld [vmem:[#allocation2 + $0x10] sm:$0x3]
      %v2144 = vld [vmem:[#allocation2 + $0x30] sm:$0x3]
      %v2145 = vld [vmem:[#allocation2 + $0x50] sm:$0x3]
      %s2146 = scalar_lea.vmem %s5, 512
      %v2147 = vld [vmem:[%s2146] sm:$0xf]
      %v2148 = vld [vmem:[%s2146 + $0x4] sm:$0xf]
      %v2149 = vld [vmem:[%s2146 + $0x8] sm:$0xf]
      %v2150 = vld [vmem:[%s2146 + $0xc] sm:$0xf]
      %v2151 = vld [vmem:[%s2146 + $0x10] sm:$0xf]
      %v2152 = vld [vmem:[%s2146 + $0x14] sm:$0xf]
      %v2153 = vld [vmem:[%s2146 + $0x18] sm:$0xf]
      %v2154 = vld [vmem:[%s2146 + $0x1c] sm:$0xf]
      %v2155 = vld [vmem:[%s2146 + $0x20] sm:$0xf]
      %v2156 = vld [vmem:[%s2146 + $0x24] sm:$0xf]
      %v2157 = vld [vmem:[%s2146 + $0x28] sm:$0xf]
      %v2158 = vld [vmem:[%s2146 + $0x2c] sm:$0xf]
      %v2159 = vld [vmem:[%s2146 + $0x30] sm:$0xf]
      %v2160 = vld [vmem:[%s2146 + $0x34] sm:$0xf]
      %v2161 = vld [vmem:[%s2146 + $0x38] sm:$0xf]
      %v2162 = vld [vmem:[%s2146 + $0x3c] sm:$0xf]
      %v2163 = vunpack.c.l.bf16 %v2147
      %v2164 = vunpack.c.l.bf16 %v2148
      %v2165 = vunpack.c.l.bf16 %v2149
      %v2166 = vunpack.c.l.bf16 %v2150
      %v2167 = vunpack.c.l.bf16 %v2151
      %v2168 = vunpack.c.l.bf16 %v2152
      %v2169 = vunpack.c.l.bf16 %v2153
      %v2170 = vunpack.c.l.bf16 %v2154
      %v2171 = vunpack.c.l.bf16 %v2155
      %v2172 = vunpack.c.l.bf16 %v2156
      %v2173 = vunpack.c.l.bf16 %v2157
      %v2174 = vunpack.c.l.bf16 %v2158
      %v2175 = vunpack.c.l.bf16 %v2159
      %v2176 = vunpack.c.l.bf16 %v2160
      %v2177 = vunpack.c.l.bf16 %v2161
      %v2178 = vunpack.c.l.bf16 %v2162
      %2179 = vxpose.xlu0.c.b16.start [1/8] %v2144, 128
      %2180 = vxpose.xlu0.c.b16.cont [2/8] 0, 128
      %2181 = vxpose.xlu0.c.b16.cont [3/8] 0, 128
      %2182 = vxpose.xlu0.c.b16.cont [4/8] 0, 128
      %2183 = vxpose.xlu0.c.b16.cont [5/8] 0, 128
      %2184 = vxpose.xlu0.c.b16.cont [6/8] 0, 128
      %2185 = vxpose.xlu0.c.b16.cont [7/8] 0, 128
      %2186 = vxpose.xlu0.c.b16.end [8/8] 0, 128
      %v2187 = vpop.trf.xlu0
      %v2188 = vpop.trf.xlu0
      %v2189 = vpop.trf.xlu0
      %v2190 = vpop.trf.xlu0
      %v2191 = vpop.trf.xlu0
      %v2192 = vpop.trf.xlu0
      %v2193 = vpop.trf.xlu0
      %v2194 = vpop.trf.xlu0
      %v2196 = vsel %vm602, %v2187, 0
      %v2199 = vsel %vm602, %v2188, 0
      %v2202 = vsel %vm602, %v2189, 0
      %v2205 = vsel %vm602, %v2190, 0
      %v2208 = vsel %vm602, %v2191, 0
      %v2211 = vsel %vm602, %v2192, 0
      %v2214 = vsel %vm602, %v2193, 0
      %v2217 = vsel %vm602, %v2194, 0
      %v2220 = vsel %vm627, %v2143, 0
      %2222 = vmatprep.subr.bf16.mxu0 0
      %2223 = vmatpush1.bf16.msra.mxu0 %v2220
      %2224 = vmatprep.subr.bf16.mxu0 0
      %2225 = vmatpush1.bf16.msra.mxu0 0
      %2226 = vmatprep.subr.bf16.mxu0 0
      %2227 = vmatpush1.bf16.msra.mxu0 0
      %2228 = vmatprep.subr.bf16.mxu0 0
      %2229 = vmatpush1.bf16.msra.mxu0 0
      %2230 = vmatprep.subr.bf16.mxu0 0
      %2231 = vmatpush1.bf16.msra.mxu0 0
      %2232 = vmatprep.subr.bf16.mxu0 0
      %2233 = vmatpush1.bf16.msra.mxu0 0
      %2234 = vmatprep.subr.bf16.mxu0 0
      %2235 = vmatpush1.bf16.msra.mxu0 0
      %2236 = vmatprep.subr.bf16.mxu0 0
      %2237 = vmatpush1.bf16.msra.mxu0 0
      %2238 = vmatprep.subr.bf16.mxu0 0
      %2239 = vmatpush1.bf16.msra.mxu0 0
      %2240 = vmatprep.subr.bf16.mxu0 0
      %2241 = vmatpush1.bf16.msra.mxu0 0
      %2242 = vmatprep.subr.bf16.mxu0 0
      %2243 = vmatpush1.bf16.msra.mxu0 0
      %2244 = vmatprep.subr.bf16.mxu0 0
      %2245 = vmatpush1.bf16.msra.mxu0 0
      %2246 = vmatprep.subr.bf16.mxu0 0
      %2247 = vmatpush1.bf16.msra.mxu0 0
      %2248 = vmatprep.subr.bf16.mxu0 0
      %2249 = vmatpush1.bf16.msra.mxu0 0
      %2250 = vmatprep.subr.bf16.mxu0 0
      %2251 = vmatpush1.bf16.msra.mxu0 0
      %2252 = vmatprep.subr.bf16.mxu0 0
      %2253 = vmatpush1.bf16.msra.mxu0 0
      %2254 = vmatprep.mubr.bf16.mxu0 0
      %2255 = vmatmul.mubr.bf16.gmra.mrb[0].mxu0 %v2196
      %v2256 = vpop.f32.mrb[0].mxu0
      %v2257 = vadd.f32 %v2163, %v2256
      %v2258 = vpop.f32.mrb[0].mxu0
      %v2259 = vpop.f32.mrb[0].mxu0
      %v2260 = vadd.f32 %v2164, %v2259
      %v2261 = vpop.f32.mrb[0].mxu0
      %2262 = vmatprep.mubr.bf16.mxu0 0
      %2263 = vmatmul.mubr.bf16.gmra.mrb[0].mxu0 %v2199
      %v2264 = vpop.f32.mrb[0].mxu0
      %v2265 = vadd.f32 %v2165, %v2264
      %v2266 = vpop.f32.mrb[0].mxu0
      %v2267 = vpop.f32.mrb[0].mxu0
      %v2268 = vadd.f32 %v2166, %v2267
      %v2269 = vpop.f32.mrb[0].mxu0
      %2270 = vmatprep.mubr.bf16.mxu0 0
      %2271 = vmatmul.mubr.bf16.gmra.mrb[0].mxu0 %v2202
      %v2272 = vpop.f32.mrb[0].mxu0
      %v2273 = vadd.f32 %v2167, %v2272
      %v2274 = vpop.f32.mrb[0].mxu0
      %v2275 = vpop.f32.mrb[0].mxu0
      %v2276 = vadd.f32 %v2168, %v2275
      %v2277 = vpop.f32.mrb[0].mxu0
      %2278 = vmatprep.mubr.bf16.mxu0 0
      %2279 = vmatmul.mubr.bf16.gmra.mrb[0].mxu0 %v2205
      %v2280 = vpop.f32.mrb[0].mxu0
      %v2281 = vadd.f32 %v2169, %v2280
      %v2282 = vpop.f32.mrb[0].mxu0
      %v2283 = vpop.f32.mrb[0].mxu0
      %v2284 = vadd.f32 %v2170, %v2283
      %v2285 = vpop.f32.mrb[0].mxu0
      %2286 = vmatprep.mubr.bf16.mxu0 0
      %2287 = vmatmul.mubr.bf16.gmra.mrb[0].mxu0 %v2208
      %v2288 = vpop.f32.mrb[0].mxu0
      %v2289 = vadd.f32 %v2171, %v2288
      %v2290 = vpop.f32.mrb[0].mxu0
      %v2291 = vpop.f32.mrb[0].mxu0
      %v2292 = vadd.f32 %v2172, %v2291
      %v2293 = vpop.f32.mrb[0].mxu0
      %2294 = vmatprep.mubr.bf16.mxu0 0
      %2295 = vmatmul.mubr.bf16.gmra.mrb[0].mxu0 %v2211
      %v2296 = vpop.f32.mrb[0].mxu0
      %v2297 = vadd.f32 %v2173, %v2296
      %v2298 = vpop.f32.mrb[0].mxu0
      %v2299 = vpop.f32.mrb[0].mxu0
      %v2300 = vadd.f32 %v2174, %v2299
      %v2301 = vpop.f32.mrb[0].mxu0
      %2302 = vmatprep.mubr.bf16.mxu0 0
      %2303 = vmatmul.mubr.bf16.gmra.mrb[0].mxu0 %v2214
      %v2304 = vpop.f32.mrb[0].mxu0
      %v2305 = vadd.f32 %v2175, %v2304
      %v2306 = vpop.f32.mrb[0].mxu0
      %v2307 = vpop.f32.mrb[0].mxu0
      %v2308 = vadd.f32 %v2176, %v2307
      %v2309 = vpop.f32.mrb[0].mxu0
      %2310 = vmatprep.mubr.bf16.mxu0 0
      %2311 = vmatmul.mubr.bf16.gmra.mrb[0].mxu0 %v2217
      %v2312 = vpop.f32.mrb[0].mxu0
      %v2313 = vadd.f32 %v2177, %v2312
      %v2314 = vpop.f32.mrb[0].mxu0
      %v2315 = vpop.f32.mrb[0].mxu0
      %v2316 = vadd.f32 %v2178, %v2315
      %v2317 = vpop.f32.mrb[0].mxu0
      %2318 = vdwg.mxu0
      %v2319 = vmax.f32 %v2257, %v2273
      %v2320 = vmax.f32 %v2260, %v2276
      %v2321 = vmax.f32 %v2265, %v2281
      %v2322 = vmax.f32 %v2268, %v2284
      %v2323 = vmax.f32 %v2319, %v2289
      %v2324 = vmax.f32 %v2320, %v2292
      %v2325 = vmax.f32 %v2321, %v2297
      %v2326 = vmax.f32 %v2322, %v2300
      %v2327 = vmax.f32 %v2323, %v2305
      %v2328 = vmax.f32 %v2324, %v2308
      %v2329 = vmax.f32 %v2325, %v2313
      %v2330 = vmax.f32 %v2326, %v2316
      %v2331 = vmax.f32 %v2327, %v2328
      %v2332 = vmax.f32 %v2329, %v2330
      %v2333 = vmax.f32 %v2331, %v2332
      %v2334 = vrot.slane %v2333, 4
      %v2335 = vmax.f32 %v2333, %v2334
      %v2336 = vrot.slane %v2335, 2
      %v2337 = vmax.f32 %v2335, %v2336
      %v2338 = vrot.slane %v2337, 1
      %v2339 = vmax.f32 %v2337, %v2338
      %v2340 = vsub.f32 %v2257, %v2339
      %v2341 = vsub.f32 %v2260, %v2339
      %v2342 = vsub.f32 %v2265, %v2339
      %v2343 = vsub.f32 %v2268, %v2339
      %v2344 = vsub.f32 %v2273, %v2339
      %v2345 = vsub.f32 %v2276, %v2339
      %v2346 = vsub.f32 %v2281, %v2339
      %v2347 = vsub.f32 %v2284, %v2339
      %v2348 = vsub.f32 %v2289, %v2339
      %v2349 = vsub.f32 %v2292, %v2339
      %v2350 = vsub.f32 %v2297, %v2339
      %v2351 = vsub.f32 %v2300, %v2339
      %v2352 = vsub.f32 %v2305, %v2339
      %v2353 = vsub.f32 %v2308, %v2339
      %v2354 = vsub.f32 %v2313, %v2339
      %v2355 = vsub.f32 %v2316, %v2339
      %v2356 = vmul.f32 %v2340, 1.442695
      %v2357 = vpow.pop %v2356
      %v2358 = vmul.f32 %v2341, 1.442695
      %v2359 = vpow.pop %v2358
      %v2360 = vmul.f32 %v2342, 1.442695
      %v2361 = vpow.pop %v2360
      %v2362 = vmul.f32 %v2343, 1.442695
      %v2363 = vpow.pop %v2362
      %v2364 = vmul.f32 %v2344, 1.442695
      %v2365 = vpow.pop %v2364
      %v2366 = vmul.f32 %v2345, 1.442695
      %v2367 = vpow.pop %v2366
      %v2368 = vmul.f32 %v2346, 1.442695
      %v2369 = vpow.pop %v2368
      %v2370 = vmul.f32 %v2347, 1.442695
      %v2371 = vpow.pop %v2370
      %v2372 = vmul.f32 %v2348, 1.442695
      %v2373 = vpow.pop %v2372
      %v2374 = vmul.f32 %v2349, 1.442695
      %v2375 = vpow.pop %v2374
      %v2376 = vmul.f32 %v2350, 1.442695
      %v2377 = vpow.pop %v2376
      %v2378 = vmul.f32 %v2351, 1.442695
      %v2379 = vpow.pop %v2378
      %v2380 = vmul.f32 %v2352, 1.442695
      %v2381 = vpow.pop %v2380
      %v2382 = vmul.f32 %v2353, 1.442695
      %v2383 = vpow.pop %v2382
      %v2384 = vmul.f32 %v2354, 1.442695
      %v2385 = vpow.pop %v2384
      %v2386 = vmul.f32 %v2355, 1.442695
      %v2387 = vpow.pop %v2386
      %v2388 = vadd.f32 %v2357, %v2359
      %v2389 = vadd.f32 %v2388, %v2361
      %v2390 = vadd.f32 %v2389, %v2363
      %v2391 = vadd.f32 %v2390, %v2365
      %v2392 = vadd.f32 %v2391, %v2367
      %v2393 = vadd.f32 %v2392, %v2369
      %v2394 = vadd.f32 %v2393, %v2371
      %v2395 = vadd.f32 %v2394, %v2373
      %v2396 = vadd.f32 %v2395, %v2375
      %v2397 = vadd.f32 %v2396, %v2377
      %v2398 = vadd.f32 %v2397, %v2379
      %v2399 = vadd.f32 %v2398, %v2381
      %v2400 = vadd.f32 %v2399, %v2383
      %v2401 = vadd.f32 %v2400, %v2385
      %v2402 = vadd.f32 %v2401, %v2387
      %v2403 = vrot.slane %v2402, 4
      %v2404 = vadd.f32 %v2402, %v2403
      %v2405 = vrot.slane %v2404, 2
      %v2406 = vadd.f32 %v2404, %v2405
      %v2407 = vrot.slane %v2406, 1
      %v2408 = vadd.f32 %v2406, %v2407
      %v2409 = vpack.c.bf16 %v2359, %v2357
      %v2410 = vpack.c.bf16 %v2363, %v2361
      %v2411 = vpack.c.bf16 %v2367, %v2365
      %v2412 = vpack.c.bf16 %v2371, %v2369
      %v2413 = vpack.c.bf16 %v2375, %v2373
      %v2414 = vpack.c.bf16 %v2379, %v2377
      %v2415 = vpack.c.bf16 %v2383, %v2381
      %v2416 = vpack.c.bf16 %v2387, %v2385
      %2417 = vmatprep.subr.bf16.mxu0 0
      %2418 = vmatpush1.bf16.msra.mxu0 %v2409
      %2419 = vmatprep.subr.bf16.mxu0 0
      %2420 = vmatpush1.bf16.msra.mxu0 %v2410
      %2421 = vmatprep.subr.bf16.mxu0 0
      %2422 = vmatpush1.bf16.msra.mxu0 %v2411
      %2423 = vmatprep.subr.bf16.mxu0 0
      %2424 = vmatpush1.bf16.msra.mxu0 %v2412
      %2425 = vmatprep.subr.bf16.mxu0 0
      %2426 = vmatpush1.bf16.msra.mxu0 %v2413
      %2427 = vmatprep.subr.bf16.mxu0 0
      %2428 = vmatpush1.bf16.msra.mxu0 %v2414
      %2429 = vmatprep.subr.bf16.mxu0 0
      %2430 = vmatpush1.bf16.msra.mxu0 %v2415
      %2431 = vmatprep.subr.bf16.mxu0 0
      %2432 = vmatpush1.bf16.msra.mxu0 %v2416
      %2433 = vmatprep.subr.bf16.mxu0 0
      %2434 = vmatpush1.bf16.msra.mxu0 0
      %2435 = vmatprep.subr.bf16.mxu0 0
      %2436 = vmatpush1.bf16.msra.mxu0 0
      %2437 = vmatprep.subr.bf16.mxu0 0
      %2438 = vmatpush1.bf16.msra.mxu0 0
      %2439 = vmatprep.subr.bf16.mxu0 0
      %2440 = vmatpush1.bf16.msra.mxu0 0
      %2441 = vmatprep.subr.bf16.mxu0 0
      %2442 = vmatpush1.bf16.msra.mxu0 0
      %2443 = vmatprep.subr.bf16.mxu0 0
      %2444 = vmatpush1.bf16.msra.mxu0 0
      %2445 = vmatprep.subr.bf16.mxu0 0
      %2446 = vmatpush1.bf16.msra.mxu0 0
      %2447 = vmatprep.subr.bf16.mxu0 0
      %2448 = vmatpush1.bf16.msra.mxu0 0
      %2449 = vmatprep.mubr.bf16.mxu0 0
      %2450 = vmatmul.mubr.bf16.gmra.mrb[0].mxu0 %v2145
      %v2451 = vpop.f32.mrb[0].mxu0
      %v2452 = vadd.f32 0.0, %v2451
      %v2453 = vpop.f32.mrb[0].mxu0
      %v2454 = vpop.f32.mrb[0].mxu0
      %v2455 = vpop.f32.mrb[0].mxu0
      %2456 = vdwg.mxu0
      %v2457 = vrcp.pop %v2408
      %v2458 = vmul.f32 %v2452, %v2457
      %s2459 = scalar_lea.vmem %s3, 64
      %v2460 = vld [vmem:[%s2459] sm:$0xf]
      %v2461 = vld [vmem:[%s2459 + $0x4] sm:$0xf]
      %v2462 = vld [vmem:[%s2459 + $0x8] sm:$0xf]
      %v2463 = vld [vmem:[%s2459 + $0xc] sm:$0xf]
      %v2464 = vpack.c.bf16 %v2458, %v2458
      %v2465 = vld [vmem:[#allocation2 + $0x10] sm:$0xc]
      %v2466 = vld [vmem:[#allocation2 + $0x30] sm:$0xc]
      %v2467 = vld [vmem:[#allocation2 + $0x50] sm:$0xc]
      %s2468 = scalar_lea.vmem %s5, 640
      %v2469 = vld [vmem:[%s2468] sm:$0xf]
      %v2470 = vld [vmem:[%s2468 + $0x4] sm:$0xf]
      %v2471 = vld [vmem:[%s2468 + $0x8] sm:$0xf]
      %v2472 = vld [vmem:[%s2468 + $0xc] sm:$0xf]
      %v2473 = vld [vmem:[%s2468 + $0x10] sm:$0xf]
      %v2474 = vld [vmem:[%s2468 + $0x14] sm:$0xf]
      %v2475 = vld [vmem:[%s2468 + $0x18] sm:$0xf]
      %v2476 = vld [vmem:[%s2468 + $0x1c] sm:$0xf]
      %v2477 = vld [vmem:[%s2468 + $0x20] sm:$0xf]
      %v2478 = vld [vmem:[%s2468 + $0x24] sm:$0xf]
      %v2479 = vld [vmem:[%s2468 + $0x28] sm:$0xf]
      %v2480 = vld [vmem:[%s2468 + $0x2c] sm:$0xf]
      %v2481 = vld [vmem:[%s2468 + $0x30] sm:$0xf]
      %v2482 = vld [vmem:[%s2468 + $0x34] sm:$0xf]
      %v2483 = vld [vmem:[%s2468 + $0x38] sm:$0xf]
      %v2484 = vld [vmem:[%s2468 + $0x3c] sm:$0xf]
      %v2485 = vunpack.c.l.bf16 %v2469
      %v2486 = vunpack.c.l.bf16 %v2470
      %v2487 = vunpack.c.l.bf16 %v2471
      %v2488 = vunpack.c.l.bf16 %v2472
      %v2489 = vunpack.c.l.bf16 %v2473
      %v2490 = vunpack.c.l.bf16 %v2474
      %v2491 = vunpack.c.l.bf16 %v2475
      %v2492 = vunpack.c.l.bf16 %v2476
      %v2493 = vunpack.c.l.bf16 %v2477
      %v2494 = vunpack.c.l.bf16 %v2478
      %v2495 = vunpack.c.l.bf16 %v2479
      %v2496 = vunpack.c.l.bf16 %v2480
      %v2497 = vunpack.c.l.bf16 %v2481
      %v2498 = vunpack.c.l.bf16 %v2482
      %v2499 = vunpack.c.l.bf16 %v2483
      %v2500 = vunpack.c.l.bf16 %v2484
      %v2502 = vrot.slane %v2466, 2
      %2504 = vxpose.xlu0.c.b16.start [1/8] %v2502, 128
      %2505 = vxpose.xlu0.c.b16.cont [2/8] 0, 128
      %2506 = vxpose.xlu0.c.b16.cont [3/8] 0, 128
      %2507 = vxpose.xlu0.c.b16.cont [4/8] 0, 128
      %2508 = vxpose.xlu0.c.b16.cont [5/8] 0, 128
      %2509 = vxpose.xlu0.c.b16.cont [6/8] 0, 128
      %2510 = vxpose.xlu0.c.b16.cont [7/8] 0, 128
      %2511 = vxpose.xlu0.c.b16.end [8/8] 0, 128
      %v2512 = vpop.trf.xlu0
      %v2513 = vpop.trf.xlu0
      %v2514 = vpop.trf.xlu0
      %v2515 = vpop.trf.xlu0
      %v2516 = vpop.trf.xlu0
      %v2517 = vpop.trf.xlu0
      %v2518 = vpop.trf.xlu0
      %v2519 = vpop.trf.xlu0
      %v2521 = vrot.slane %v2465, 2
      %v2523 = vsel %vm602, %v2512, 0
      %v2526 = vsel %vm602, %v2513, 0
      %v2529 = vsel %vm602, %v2514, 0
      %v2532 = vsel %vm602, %v2515, 0
      %v2535 = vsel %vm602, %v2516, 0
      %v2538 = vsel %vm602, %v2517, 0
      %v2541 = vsel %vm602, %v2518, 0
      %v2544 = vsel %vm602, %v2519, 0
      %v2547 = vsel %vm627, %v2521, 0
      %2549 = vmatprep.subr.bf16.mxu0 0
      %2550 = vmatpush1.bf16.msra.mxu0 %v2547
      %2551 = vmatprep.subr.bf16.mxu0 0
      %2552 = vmatpush1.bf16.msra.mxu0 0
      %2553 = vmatprep.subr.bf16.mxu0 0
      %2554 = vmatpush1.bf16.msra.mxu0 0
      %2555 = vmatprep.subr.bf16.mxu0 0
      %2556 = vmatpush1.bf16.msra.mxu0 0
      %2557 = vmatprep.subr.bf16.mxu0 0
      %2558 = vmatpush1.bf16.msra.mxu0 0
      %2559 = vmatprep.subr.bf16.mxu0 0
      %2560 = vmatpush1.bf16.msra.mxu0 0
      %2561 = vmatprep.subr.bf16.mxu0 0
      %2562 = vmatpush1.bf16.msra.mxu0 0
      %2563 = vmatprep.subr.bf16.mxu0 0
      %2564 = vmatpush1.bf16.msra.mxu0 0
      %2565 = vmatprep.subr.bf16.mxu0 0
      %2566 = vmatpush1.bf16.msra.mxu0 0
      %2567 = vmatprep.subr.bf16.mxu0 0
      %2568 = vmatpush1.bf16.msra.mxu0 0
      %2569 = vmatprep.subr.bf16.mxu0 0
      %2570 = vmatpush1.bf16.msra.mxu0 0
      %2571 = vmatprep.subr.bf16.mxu0 0
      %2572 = vmatpush1.bf16.msra.mxu0 0
      %2573 = vmatprep.subr.bf16.mxu0 0
      %2574 = vmatpush1.bf16.msra.mxu0 0
      %2575 = vmatprep.subr.bf16.mxu0 0
      %2576 = vmatpush1.bf16.msra.mxu0 0
      %2577 = vmatprep.subr.bf16.mxu0 0
      %2578 = vmatpush1.bf16.msra.mxu0 0
      %2579 = vmatprep.subr.bf16.mxu0 0
      %2580 = vmatpush1.bf16.msra.mxu0 0
      %2581 = vmatprep.mubr.bf16.mxu0 0
      %2582 = vmatmul.mubr.bf16.gmra.mrb[0].mxu0 %v2523
      %v2583 = vpop.f32.mrb[0].mxu0
      %v2584 = vadd.f32 %v2485, %v2583
      %v2585 = vpop.f32.mrb[0].mxu0
      %v2586 = vpop.f32.mrb[0].mxu0
      %v2587 = vadd.f32 %v2486, %v2586
      %v2588 = vpop.f32.mrb[0].mxu0
      %2589 = vmatprep.mubr.bf16.mxu0 0
      %2590 = vmatmul.mubr.bf16.gmra.mrb[0].mxu0 %v2526
      %v2591 = vpop.f32.mrb[0].mxu0
      %v2592 = vadd.f32 %v2487, %v2591
      %v2593 = vpop.f32.mrb[0].mxu0
      %v2594 = vpop.f32.mrb[0].mxu0
      %v2595 = vadd.f32 %v2488, %v2594
      %v2596 = vpop.f32.mrb[0].mxu0
      %2597 = vmatprep.mubr.bf16.mxu0 0
      %2598 = vmatmul.mubr.bf16.gmra.mrb[0].mxu0 %v2529
      %v2599 = vpop.f32.mrb[0].mxu0
      %v2600 = vadd.f32 %v2489, %v2599
      %v2601 = vpop.f32.mrb[0].mxu0
      %v2602 = vpop.f32.mrb[0].mxu0
      %v2603 = vadd.f32 %v2490, %v2602
      %v2604 = vpop.f32.mrb[0].mxu0
      %2605 = vmatprep.mubr.bf16.mxu0 0
      %2606 = vmatmul.mubr.bf16.gmra.mrb[0].mxu0 %v2532
      %v2607 = vpop.f32.mrb[0].mxu0
      %v2608 = vadd.f32 %v2491, %v2607
      %v2609 = vpop.f32.mrb[0].mxu0
      %v2610 = vpop.f32.mrb[0].mxu0
      %v2611 = vadd.f32 %v2492, %v2610
      %v2612 = vpop.f32.mrb[0].mxu0
      %2613 = vmatprep.mubr.bf16.mxu0 0
      %2614 = vmatmul.mubr.bf16.gmra.mrb[0].mxu0 %v2535
      %v2615 = vpop.f32.mrb[0].mxu0
      %v2616 = vadd.f32 %v2493, %v2615
      %v2617 = vpop.f32.mrb[0].mxu0
      %v2618 = vpop.f32.mrb[0].mxu0
      %v2619 = vadd.f32 %v2494, %v2618
      %v2620 = vpop.f32.mrb[0].mxu0
      %2621 = vmatprep.mubr.bf16.mxu0 0
      %2622 = vmatmul.mubr.bf16.gmra.mrb[0].mxu0 %v2538
      %v2623 = vpop.f32.mrb[0].mxu0
      %v2624 = vadd.f32 %v2495, %v2623
      %v2625 = vpop.f32.mrb[0].mxu0
      %v2626 = vpop.f32.mrb[0].mxu0
      %v2627 = vadd.f32 %v2496, %v2626
      %v2628 = vpop.f32.mrb[0].mxu0
      %2629 = vmatprep.mubr.bf16.mxu0 0
      %2630 = vmatmul.mubr.bf16.gmra.mrb[0].mxu0 %v2541
      %v2631 = vpop.f32.mrb[0].mxu0
      %v2632 = vadd.f32 %v2497, %v2631
      %v2633 = vpop.f32.mrb[0].mxu0
      %v2634 = vpop.f32.mrb[0].mxu0
      %v2635 = vadd.f32 %v2498, %v2634
      %v2636 = vpop.f32.mrb[0].mxu0
      %2637 = vmatprep.mubr.bf16.mxu0 0
      %2638 = vmatmul.mubr.bf16.gmra.mrb[0].mxu0 %v2544
      %v2639 = vpop.f32.mrb[0].mxu0
      %v2640 = vadd.f32 %v2499, %v2639
      %v2641 = vpop.f32.mrb[0].mxu0
      %v2642 = vpop.f32.mrb[0].mxu0
      %v2643 = vadd.f32 %v2500, %v2642
      %v2644 = vpop.f32.mrb[0].mxu0
      %2645 = vdwg.mxu0
      %v2646 = vmax.f32 %v2584, %v2600
      %v2647 = vmax.f32 %v2587, %v2603
      %v2648 = vmax.f32 %v2592, %v2608
      %v2649 = vmax.f32 %v2595, %v2611
      %v2650 = vmax.f32 %v2646, %v2616
      %v2651 = vmax.f32 %v2647, %v2619
      %v2652 = vmax.f32 %v2648, %v2624
      %v2653 = vmax.f32 %v2649, %v2627
      %v2654 = vmax.f32 %v2650, %v2632
      %v2655 = vmax.f32 %v2651, %v2635
      %v2656 = vmax.f32 %v2652, %v2640
      %v2657 = vmax.f32 %v2653, %v2643
      %v2658 = vmax.f32 %v2654, %v2655
      %v2659 = vmax.f32 %v2656, %v2657
      %v2660 = vmax.f32 %v2658, %v2659
      %v2661 = vrot.slane %v2660, 4
      %v2662 = vmax.f32 %v2660, %v2661
      %v2663 = vrot.slane %v2662, 2
      %v2664 = vmax.f32 %v2662, %v2663
      %v2665 = vrot.slane %v2664, 1
      %v2666 = vmax.f32 %v2664, %v2665
      %v2667 = vsub.f32 %v2584, %v2666
      %v2668 = vsub.f32 %v2587, %v2666
      %v2669 = vsub.f32 %v2592, %v2666
      %v2670 = vsub.f32 %v2595, %v2666
      %v2671 = vsub.f32 %v2600, %v2666
      %v2672 = vsub.f32 %v2603, %v2666
      %v2673 = vsub.f32 %v2608, %v2666
      %v2674 = vsub.f32 %v2611, %v2666
      %v2675 = vsub.f32 %v2616, %v2666
      %v2676 = vsub.f32 %v2619, %v2666
      %v2677 = vsub.f32 %v2624, %v2666
      %v2678 = vsub.f32 %v2627, %v2666
      %v2679 = vsub.f32 %v2632, %v2666
      %v2680 = vsub.f32 %v2635, %v2666
      %v2681 = vsub.f32 %v2640, %v2666
      %v2682 = vsub.f32 %v2643, %v2666
      %v2683 = vmul.f32 %v2667, 1.442695
      %v2684 = vpow.pop %v2683
      %v2685 = vmul.f32 %v2668, 1.442695
      %v2686 = vpow.pop %v2685
      %v2687 = vmul.f32 %v2669, 1.442695
      %v2688 = vpow.pop %v2687
      %v2689 = vmul.f32 %v2670, 1.442695
      %v2690 = vpow.pop %v2689
      %v2691 = vmul.f32 %v2671, 1.442695
      %v2692 = vpow.pop %v2691
      %v2693 = vmul.f32 %v2672, 1.442695
      %v2694 = vpow.pop %v2693
      %v2695 = vmul.f32 %v2673, 1.442695
      %v2696 = vpow.pop %v2695
      %v2697 = vmul.f32 %v2674, 1.442695
      %v2698 = vpow.pop %v2697
      %v2699 = vmul.f32 %v2675, 1.442695
      %v2700 = vpow.pop %v2699
      %v2701 = vmul.f32 %v2676, 1.442695
      %v2702 = vpow.pop %v2701
      %v2703 = vmul.f32 %v2677, 1.442695
      %v2704 = vpow.pop %v2703
      %v2705 = vmul.f32 %v2678, 1.442695
      %v2706 = vpow.pop %v2705
      %v2707 = vmul.f32 %v2679, 1.442695
      %v2708 = vpow.pop %v2707
      %v2709 = vmul.f32 %v2680, 1.442695
      %v2710 = vpow.pop %v2709
      %v2711 = vmul.f32 %v2681, 1.442695
      %v2712 = vpow.pop %v2711
      %v2713 = vmul.f32 %v2682, 1.442695
      %v2714 = vpow.pop %v2713
      %v2715 = vadd.f32 %v2684, %v2686
      %v2716 = vadd.f32 %v2715, %v2688
      %v2717 = vadd.f32 %v2716, %v2690
      %v2718 = vadd.f32 %v2717, %v2692
      %v2719 = vadd.f32 %v2718, %v2694
      %v2720 = vadd.f32 %v2719, %v2696
      %v2721 = vadd.f32 %v2720, %v2698
      %v2722 = vadd.f32 %v2721, %v2700
      %v2723 = vadd.f32 %v2722, %v2702
      %v2724 = vadd.f32 %v2723, %v2704
      %v2725 = vadd.f32 %v2724, %v2706
      %v2726 = vadd.f32 %v2725, %v2708
      %v2727 = vadd.f32 %v2726, %v2710
      %v2728 = vadd.f32 %v2727, %v2712
      %v2729 = vadd.f32 %v2728, %v2714
      %v2730 = vrot.slane %v2729, 4
      %v2731 = vadd.f32 %v2729, %v2730
      %v2732 = vrot.slane %v2731, 2
      %v2733 = vadd.f32 %v2731, %v2732
      %v2734 = vrot.slane %v2733, 1
      %v2735 = vadd.f32 %v2733, %v2734
      %v2736 = vpack.c.bf16 %v2686, %v2684
      %v2737 = vpack.c.bf16 %v2690, %v2688
      %v2738 = vpack.c.bf16 %v2694, %v2692
      %v2739 = vpack.c.bf16 %v2698, %v2696
      %v2740 = vpack.c.bf16 %v2702, %v2700
      %v2741 = vpack.c.bf16 %v2706, %v2704
      %v2742 = vpack.c.bf16 %v2710, %v2708
      %v2743 = vpack.c.bf16 %v2714, %v2712
      %v2745 = vrot.slane %v2467, 2
      %2747 = vmatprep.subr.bf16.mxu0 0
      %2748 = vmatpush1.bf16.msra.mxu0 %v2736
      %2749 = vmatprep.subr.bf16.mxu0 0
      %2750 = vmatpush1.bf16.msra.mxu0 %v2737
      %2751 = vmatprep.subr.bf16.mxu0 0
      %2752 = vmatpush1.bf16.msra.mxu0 %v2738
      %2753 = vmatprep.subr.bf16.mxu0 0
      %2754 = vmatpush1.bf16.msra.mxu0 %v2739
      %2755 = vmatprep.subr.bf16.mxu0 0
      %2756 = vmatpush1.bf16.msra.mxu0 %v2740
      %2757 = vmatprep.subr.bf16.mxu0 0
      %2758 = vmatpush1.bf16.msra.mxu0 %v2741
      %2759 = vmatprep.subr.bf16.mxu0 0
      %2760 = vmatpush1.bf16.msra.mxu0 %v2742
      %2761 = vmatprep.subr.bf16.mxu0 0
      %2762 = vmatpush1.bf16.msra.mxu0 %v2743
      %2763 = vmatprep.subr.bf16.mxu0 0
      %2764 = vmatpush1.bf16.msra.mxu0 0
      %2765 = vmatprep.subr.bf16.mxu0 0
      %2766 = vmatpush1.bf16.msra.mxu0 0
      %2767 = vmatprep.subr.bf16.mxu0 0
      %2768 = vmatpush1.bf16.msra.mxu0 0
      %2769 = vmatprep.subr.bf16.mxu0 0
      %2770 = vmatpush1.bf16.msra.mxu0 0
      %2771 = vmatprep.subr.bf16.mxu0 0
      %2772 = vmatpush1.bf16.msra.mxu0 0
      %2773 = vmatprep.subr.bf16.mxu0 0
      %2774 = vmatpush1.bf16.msra.mxu0 0
      %2775 = vmatprep.subr.bf16.mxu0 0
      %2776 = vmatpush1.bf16.msra.mxu0 0
      %2777 = vmatprep.subr.bf16.mxu0 0
      %2778 = vmatpush1.bf16.msra.mxu0 0
      %2779 = vmatprep.mubr.bf16.mxu0 0
      %2780 = vmatmul.mubr.bf16.gmra.mrb[0].mxu0 %v2745
      %v2781 = vpop.f32.mrb[0].mxu0
      %v2782 = vadd.f32 0.0, %v2781
      %v2783 = vpop.f32.mrb[0].mxu0
      %v2784 = vpop.f32.mrb[0].mxu0
      %v2785 = vpop.f32.mrb[0].mxu0
      %2786 = vdwg.mxu0
      %v2787 = vrcp.pop %v2735
      %v2788 = vmul.f32 %v2782, %v2787
      %s2789 = scalar_lea.vmem %s3, 80
      %v2790 = vld [vmem:[%s2789] sm:$0xf]
      %v2791 = vld [vmem:[%s2789 + $0x4] sm:$0xf]
      %v2792 = vld [vmem:[%s2789 + $0x8] sm:$0xf]
      %v2793 = vld [vmem:[%s2789 + $0xc] sm:$0xf]
      %v2794 = vpack.c.bf16 %v2788, %v2788
      %v2799 = vunpack.c.l.b16 %v2790
      %v2800 = vunpack.c.l.b16 %v2791
      %v2801 = vunpack.c.l.b16 %v2792
      %v2802 = vunpack.c.l.b16 %v2793
      %v2803 = vpack.c.b16 %v2800, %v2799
      %v2804 = vpack.c.b16 %v2802, %v2801
      %v2806 = vsel %vm602, %v2803, 0
      %v2809 = vsel %vm602, %v2804, 0
      %v2812 = vsel %vm627, %v2794, 0
      %2814 = vmatprep.subr.bf16.mxu0 0
      %2815 = vmatpush1.bf16.msra.mxu0 %v2812
      %2816 = vmatprep.subr.bf16.mxu0 0
      %2817 = vmatpush1.bf16.msra.mxu0 0
      %2818 = vmatprep.subr.bf16.mxu0 0
      %2819 = vmatpush1.bf16.msra.mxu0 0
      %2820 = vmatprep.subr.bf16.mxu0 0
      %2821 = vmatpush1.bf16.msra.mxu0 0
      %2822 = vmatprep.subr.bf16.mxu0 0
      %2823 = vmatpush1.bf16.msra.mxu0 0
      %2824 = vmatprep.subr.bf16.mxu0 0
      %2825 = vmatpush1.bf16.msra.mxu0 0
      %2826 = vmatprep.subr.bf16.mxu0 0
      %2827 = vmatpush1.bf16.msra.mxu0 0
      %2828 = vmatprep.subr.bf16.mxu0 0
      %2829 = vmatpush1.bf16.msra.mxu0 0
      %2830 = vmatprep.subr.bf16.mxu0 0
      %2831 = vmatpush1.bf16.msra.mxu0 0
      %2832 = vmatprep.subr.bf16.mxu0 0
      %2833 = vmatpush1.bf16.msra.mxu0 0
      %2834 = vmatprep.subr.bf16.mxu0 0
      %2835 = vmatpush1.bf16.msra.mxu0 0
      %2836 = vmatprep.subr.bf16.mxu0 0
      %2837 = vmatpush1.bf16.msra.mxu0 0
      %2838 = vmatprep.subr.bf16.mxu0 0
      %2839 = vmatpush1.bf16.msra.mxu0 0
      %2840 = vmatprep.subr.bf16.mxu0 0
      %2841 = vmatpush1.bf16.msra.mxu0 0
      %2842 = vmatprep.subr.bf16.mxu0 0
      %2843 = vmatpush1.bf16.msra.mxu0 0
      %2844 = vmatprep.subr.bf16.mxu0 0
      %2845 = vmatpush1.bf16.msra.mxu0 0
      %2846 = vmatprep.mubr.bf16.mxu0 0
      %2847 = vmatmul.mubr.bf16.gmra.mrb[0].mxu0 %v2806
      %v2848 = vpop.f32.mrb[0].mxu0
      %v2849 = vadd.f32 0.0, %v2848
      %v2850 = vpop.f32.mrb[0].mxu0
      %v2851 = vpop.f32.mrb[0].mxu0
      %v2852 = vadd.f32 0.0, %v2851
      %v2853 = vpop.f32.mrb[0].mxu0
      %2854 = vmatprep.mubr.bf16.mxu0 0
      %2855 = vmatmul.mubr.bf16.gmra.mrb[0].mxu0 %v2809
      %v2856 = vpop.f32.mrb[0].mxu0
      %v2857 = vadd.f32 0.0, %v2856
      %v2858 = vpop.f32.mrb[0].mxu0
      %v2859 = vpop.f32.mrb[0].mxu0
      %v2860 = vadd.f32 0.0, %v2859
      %v2861 = vpop.f32.mrb[0].mxu0
      %2862 = vdwg.mxu0
      %v2867 = vunpack.c.l.b16 %v2460
      %v2868 = vunpack.c.l.b16 %v2461
      %v2869 = vunpack.c.l.b16 %v2462
      %v2870 = vunpack.c.l.b16 %v2463
      %v2871 = vpack.c.b16 %v2868, %v2867
      %v2872 = vpack.c.b16 %v2870, %v2869
      %v2874 = vsel %vm602, %v2871, 0
      %v2877 = vsel %vm602, %v2872, 0
      %v2880 = vsel %vm627, %v2464, 0
      %2882 = vmatprep.subr.bf16.mxu0 0
      %2883 = vmatpush1.bf16.msra.mxu0 %v2880
      %2884 = vmatprep.subr.bf16.mxu0 0
      %2885 = vmatpush1.bf16.msra.mxu0 0
      %2886 = vmatprep.subr.bf16.mxu0 0
      %2887 = vmatpush1.bf16.msra.mxu0 0
      %2888 = vmatprep.subr.bf16.mxu0 0
      %2889 = vmatpush1.bf16.msra.mxu0 0
      %2890 = vmatprep.subr.bf16.mxu0 0
      %2891 = vmatpush1.bf16.msra.mxu0 0
      %2892 = vmatprep.subr.bf16.mxu0 0
      %2893 = vmatpush1.bf16.msra.mxu0 0
      %2894 = vmatprep.subr.bf16.mxu0 0
      %2895 = vmatpush1.bf16.msra.mxu0 0
      %2896 = vmatprep.subr.bf16.mxu0 0
      %2897 = vmatpush1.bf16.msra.mxu0 0
      %2898 = vmatprep.subr.bf16.mxu0 0
      %2899 = vmatpush1.bf16.msra.mxu0 0
      %2900 = vmatprep.subr.bf16.mxu0 0
      %2901 = vmatpush1.bf16.msra.mxu0 0
      %2902 = vmatprep.subr.bf16.mxu0 0
      %2903 = vmatpush1.bf16.msra.mxu0 0
      %2904 = vmatprep.subr.bf16.mxu0 0
      %2905 = vmatpush1.bf16.msra.mxu0 0
      %2906 = vmatprep.subr.bf16.mxu0 0
      %2907 = vmatpush1.bf16.msra.mxu0 0
      %2908 = vmatprep.subr.bf16.mxu0 0
      %2909 = vmatpush1.bf16.msra.mxu0 0
      %2910 = vmatprep.subr.bf16.mxu0 0
      %2911 = vmatpush1.bf16.msra.mxu0 0
      %2912 = vmatprep.subr.bf16.mxu0 0
      %2913 = vmatpush1.bf16.msra.mxu0 0
      %2914 = vmatprep.mubr.bf16.mxu0 0
      %2915 = vmatmul.mubr.bf16.gmra.mrb[0].mxu0 %v2874
      %v2916 = vpop.f32.mrb[0].mxu0
      %v2917 = vadd.f32 %v2849, %v2916
      %v2918 = vpop.f32.mrb[0].mxu0
      %v2919 = vpop.f32.mrb[0].mxu0
      %v2920 = vadd.f32 %v2852, %v2919
      %v2921 = vpop.f32.mrb[0].mxu0
      %2922 = vmatprep.mubr.bf16.mxu0 0
      %2923 = vmatmul.mubr.bf16.gmra.mrb[0].mxu0 %v2877
      %v2924 = vpop.f32.mrb[0].mxu0
      %v2925 = vadd.f32 %v2857, %v2924
      %v2926 = vpop.f32.mrb[0].mxu0
      %v2927 = vpop.f32.mrb[0].mxu0
      %v2928 = vadd.f32 %v2860, %v2927
      %v2929 = vpop.f32.mrb[0].mxu0
      %2930 = vdwg.mxu0
      %v2931 = vld [vmem:[#allocation2 + $0x10] sm:$0x30]
      %v2932 = vld [vmem:[#allocation2 + $0x30] sm:$0x30]
      %v2933 = vld [vmem:[#allocation2 + $0x50] sm:$0x30]
      %s2934 = scalar_lea.vmem %s5, 768
      %v2935 = vld [vmem:[%s2934] sm:$0xf]
      %v2936 = vld [vmem:[%s2934 + $0x4] sm:$0xf]
      %v2937 = vld [vmem:[%s2934 + $0x8] sm:$0xf]
      %v2938 = vld [vmem:[%s2934 + $0xc] sm:$0xf]
      %v2939 = vld [vmem:[%s2934 + $0x10] sm:$0xf]
      %v2940 = vld [vmem:[%s2934 + $0x14] sm:$0xf]
      %v2941 = vld [vmem:[%s2934 + $0x18] sm:$0xf]
      %v2942 = vld [vmem:[%s2934 + $0x1c] sm:$0xf]
      %v2943 = vld [vmem:[%s2934 + $0x20] sm:$0xf]
      %v2944 = vld [vmem:[%s2934 + $0x24] sm:$0xf]
      %v2945 = vld [vmem:[%s2934 + $0x28] sm:$0xf]
      %v2946 = vld [vmem:[%s2934 + $0x2c] sm:$0xf]
      %v2947 = vld [vmem:[%s2934 + $0x30] sm:$0xf]
      %v2948 = vld [vmem:[%s2934 + $0x34] sm:$0xf]
      %v2949 = vld [vmem:[%s2934 + $0x38] sm:$0xf]
      %v2950 = vld [vmem:[%s2934 + $0x3c] sm:$0xf]
      %v2951 = vunpack.c.l.bf16 %v2935
      %v2952 = vunpack.c.l.bf16 %v2936
      %v2953 = vunpack.c.l.bf16 %v2937
      %v2954 = vunpack.c.l.bf16 %v2938
      %v2955 = vunpack.c.l.bf16 %v2939
      %v2956 = vunpack.c.l.bf16 %v2940
      %v2957 = vunpack.c.l.bf16 %v2941
      %v2958 = vunpack.c.l.bf16 %v2942
      %v2959 = vunpack.c.l.bf16 %v2943
      %v2960 = vunpack.c.l.bf16 %v2944
      %v2961 = vunpack.c.l.bf16 %v2945
      %v2962 = vunpack.c.l.bf16 %v2946
      %v2963 = vunpack.c.l.bf16 %v2947
      %v2964 = vunpack.c.l.bf16 %v2948
      %v2965 = vunpack.c.l.bf16 %v2949
      %v2966 = vunpack.c.l.bf16 %v2950
      %v2968 = vrot.slane %v2932, 4
      %2970 = vxpose.xlu0.c.b16.start [1/8] %v2968, 128
      %2971 = vxpose.xlu0.c.b16.cont [2/8] 0, 128
      %2972 = vxpose.xlu0.c.b16.cont [3/8] 0, 128
      %2973 = vxpose.xlu0.c.b16.cont [4/8] 0, 128
      %2974 = vxpose.xlu0.c.b16.cont [5/8] 0, 128
      %2975 = vxpose.xlu0.c.b16.cont [6/8] 0, 128
      %2976 = vxpose.xlu0.c.b16.cont [7/8] 0, 128
      %2977 = vxpose.xlu0.c.b16.end [8/8] 0, 128
      %v2978 = vpop.trf.xlu0
      %v2979 = vpop.trf.xlu0
      %v2980 = vpop.trf.xlu0
      %v2981 = vpop.trf.xlu0
      %v2982 = vpop.trf.xlu0
      %v2983 = vpop.trf.xlu0
      %v2984 = vpop.trf.xlu0
      %v2985 = vpop.trf.xlu0
      %v2987 = vrot.slane %v2931, 4
      %v2989 = vsel %vm602, %v2978, 0
      %v2992 = vsel %vm602, %v2979, 0
      %v2995 = vsel %vm602, %v2980, 0
      %v2998 = vsel %vm602, %v2981, 0
      %v3001 = vsel %vm602, %v2982, 0
      %v3004 = vsel %vm602, %v2983, 0
      %v3007 = vsel %vm602, %v2984, 0
      %v3010 = vsel %vm602, %v2985, 0
      %v3013 = vsel %vm627, %v2987, 0
      %3015 = vmatprep.subr.bf16.mxu0 0
      %3016 = vmatpush1.bf16.msra.mxu0 %v3013
      %3017 = vmatprep.subr.bf16.mxu0 0
      %3018 = vmatpush1.bf16.msra.mxu0 0
      %3019 = vmatprep.subr.bf16.mxu0 0
      %3020 = vmatpush1.bf16.msra.mxu0 0
      %3021 = vmatprep.subr.bf16.mxu0 0
      %3022 = vmatpush1.bf16.msra.mxu0 0
      %3023 = vmatprep.subr.bf16.mxu0 0
      %3024 = vmatpush1.bf16.msra.mxu0 0
      %3025 = vmatprep.subr.bf16.mxu0 0
      %3026 = vmatpush1.bf16.msra.mxu0 0
      %3027 = vmatprep.subr.bf16.mxu0 0
      %3028 = vmatpush1.bf16.msra.mxu0 0
      %3029 = vmatprep.subr.bf16.mxu0 0
      %3030 = vmatpush1.bf16.msra.mxu0 0
      %3031 = vmatprep.subr.bf16.mxu0 0
      %3032 = vmatpush1.bf16.msra.mxu0 0
      %3033 = vmatprep.subr.bf16.mxu0 0
      %3034 = vmatpush1.bf16.msra.mxu0 0
      %3035 = vmatprep.subr.bf16.mxu0 0
      %3036 = vmatpush1.bf16.msra.mxu0 0
      %3037 = vmatprep.subr.bf16.mxu0 0
      %3038 = vmatpush1.bf16.msra.mxu0 0
      %3039 = vmatprep.subr.bf16.mxu0 0
      %3040 = vmatpush1.bf16.msra.mxu0 0
      %3041 = vmatprep.subr.bf16.mxu0 0
      %3042 = vmatpush1.bf16.msra.mxu0 0
      %3043 = vmatprep.subr.bf16.mxu0 0
      %3044 = vmatpush1.bf16.msra.mxu0 0
      %3045 = vmatprep.subr.bf16.mxu0 0
      %3046 = vmatpush1.bf16.msra.mxu0 0
      %3047 = vmatprep.mubr.bf16.mxu0 0
      %3048 = vmatmul.mubr.bf16.gmra.mrb[0].mxu0 %v2989
      %v3049 = vpop.f32.mrb[0].mxu0
      %v3050 = vadd.f32 %v2951, %v3049
      %v3051 = vpop.f32.mrb[0].mxu0
      %v3052 = vpop.f32.mrb[0].mxu0
      %v3053 = vadd.f32 %v2952, %v3052
      %v3054 = vpop.f32.mrb[0].mxu0
      %3055 = vmatprep.mubr.bf16.mxu0 0
      %3056 = vmatmul.mubr.bf16.gmra.mrb[0].mxu0 %v2992
      %v3057 = vpop.f32.mrb[0].mxu0
      %v3058 = vadd.f32 %v2953, %v3057
      %v3059 = vpop.f32.mrb[0].mxu0
      %v3060 = vpop.f32.mrb[0].mxu0
      %v3061 = vadd.f32 %v2954, %v3060
      %v3062 = vpop.f32.mrb[0].mxu0
      %3063 = vmatprep.mubr.bf16.mxu0 0
      %3064 = vmatmul.mubr.bf16.gmra.mrb[0].mxu0 %v2995
      %v3065 = vpop.f32.mrb[0].mxu0
      %v3066 = vadd.f32 %v2955, %v3065
      %v3067 = vpop.f32.mrb[0].mxu0
      %v3068 = vpop.f32.mrb[0].mxu0
      %v3069 = vadd.f32 %v2956, %v3068
      %v3070 = vpop.f32.mrb[0].mxu0
      %3071 = vmatprep.mubr.bf16.mxu0 0
      %3072 = vmatmul.mubr.bf16.gmra.mrb[0].mxu0 %v2998
      %v3073 = vpop.f32.mrb[0].mxu0
      %v3074 = vadd.f32 %v2957, %v3073
      %v3075 = vpop.f32.mrb[0].mxu0
      %v3076 = vpop.f32.mrb[0].mxu0
      %v3077 = vadd.f32 %v2958, %v3076
      %v3078 = vpop.f32.mrb[0].mxu0
      %3079 = vmatprep.mubr.bf16.mxu0 0
      %3080 = vmatmul.mubr.bf16.gmra.mrb[0].mxu0 %v3001
      %v3081 = vpop.f32.mrb[0].mxu0
      %v3082 = vadd.f32 %v2959, %v3081
      %v3083 = vpop.f32.mrb[0].mxu0
      %v3084 = vpop.f32.mrb[0].mxu0
      %v3085 = vadd.f32 %v2960, %v3084
      %v3086 = vpop.f32.mrb[0].mxu0
      %3087 = vmatprep.mubr.bf16.mxu0 0
      %3088 = vmatmul.mubr.bf16.gmra.mrb[0].mxu0 %v3004
      %v3089 = vpop.f32.mrb[0].mxu0
      %v3090 = vadd.f32 %v2961, %v3089
      %v3091 = vpop.f32.mrb[0].mxu0
      %v3092 = vpop.f32.mrb[0].mxu0
      %v3093 = vadd.f32 %v2962, %v3092
      %v3094 = vpop.f32.mrb[0].mxu0
      %3095 = vmatprep.mubr.bf16.mxu0 0
      %3096 = vmatmul.mubr.bf16.gmra.mrb[0].mxu0 %v3007
      %v3097 = vpop.f32.mrb[0].mxu0
      %v3098 = vadd.f32 %v2963, %v3097
      %v3099 = vpop.f32.mrb[0].mxu0
      %v3100 = vpop.f32.mrb[0].mxu0
      %v3101 = vadd.f32 %v2964, %v3100
      %v3102 = vpop.f32.mrb[0].mxu0
      %3103 = vmatprep.mubr.bf16.mxu0 0
      %3104 = vmatmul.mubr.bf16.gmra.mrb[0].mxu0 %v3010
      %v3105 = vpop.f32.mrb[0].mxu0
      %v3106 = vadd.f32 %v2965, %v3105
      %v3107 = vpop.f32.mrb[0].mxu0
      %v3108 = vpop.f32.mrb[0].mxu0
      %v3109 = vadd.f32 %v2966, %v3108
      %v3110 = vpop.f32.mrb[0].mxu0
      %3111 = vdwg.mxu0
      %v3112 = vmax.f32 %v3050, %v3066
      %v3113 = vmax.f32 %v3053, %v3069
      %v3114 = vmax.f32 %v3058, %v3074
      %v3115 = vmax.f32 %v3061, %v3077
      %v3116 = vmax.f32 %v3112, %v3082
      %v3117 = vmax.f32 %v3113, %v3085
      %v3118 = vmax.f32 %v3114, %v3090
      %v3119 = vmax.f32 %v3115, %v3093
      %v3120 = vmax.f32 %v3116, %v3098
      %v3121 = vmax.f32 %v3117, %v3101
      %v3122 = vmax.f32 %v3118, %v3106
      %v3123 = vmax.f32 %v3119, %v3109
      %v3124 = vmax.f32 %v3120, %v3121
      %v3125 = vmax.f32 %v3122, %v3123
      %v3126 = vmax.f32 %v3124, %v3125
      %v3127 = vrot.slane %v3126, 4
      %v3128 = vmax.f32 %v3126, %v3127
      %v3129 = vrot.slane %v3128, 2
      %v3130 = vmax.f32 %v3128, %v3129
      %v3131 = vrot.slane %v3130, 1
      %v3132 = vmax.f32 %v3130, %v3131
      %v3133 = vsub.f32 %v3050, %v3132
      %v3134 = vsub.f32 %v3053, %v3132
      %v3135 = vsub.f32 %v3058, %v3132
      %v3136 = vsub.f32 %v3061, %v3132
      %v3137 = vsub.f32 %v3066, %v3132
      %v3138 = vsub.f32 %v3069, %v3132
      %v3139 = vsub.f32 %v3074, %v3132
      %v3140 = vsub.f32 %v3077, %v3132
      %v3141 = vsub.f32 %v3082, %v3132
      %v3142 = vsub.f32 %v3085, %v3132
      %v3143 = vsub.f32 %v3090, %v3132
      %v3144 = vsub.f32 %v3093, %v3132
      %v3145 = vsub.f32 %v3098, %v3132
      %v3146 = vsub.f32 %v3101, %v3132
      %v3147 = vsub.f32 %v3106, %v3132
      %v3148 = vsub.f32 %v3109, %v3132
      %v3149 = vmul.f32 %v3133, 1.442695
      %v3150 = vpow.pop %v3149
      %v3151 = vmul.f32 %v3134, 1.442695
      %v3152 = vpow.pop %v3151
      %v3153 = vmul.f32 %v3135, 1.442695
      %v3154 = vpow.pop %v3153
      %v3155 = vmul.f32 %v3136, 1.442695
      %v3156 = vpow.pop %v3155
      %v3157 = vmul.f32 %v3137, 1.442695
      %v3158 = vpow.pop %v3157
      %v3159 = vmul.f32 %v3138, 1.442695
      %v3160 = vpow.pop %v3159
      %v3161 = vmul.f32 %v3139, 1.442695
      %v3162 = vpow.pop %v3161
      %v3163 = vmul.f32 %v3140, 1.442695
      %v3164 = vpow.pop %v3163
      %v3165 = vmul.f32 %v3141, 1.442695
      %v3166 = vpow.pop %v3165
      %v3167 = vmul.f32 %v3142, 1.442695
      %v3168 = vpow.pop %v3167
      %v3169 = vmul.f32 %v3143, 1.442695
      %v3170 = vpow.pop %v3169
      %v3171 = vmul.f32 %v3144, 1.442695
      %v3172 = vpow.pop %v3171
      %v3173 = vmul.f32 %v3145, 1.442695
      %v3174 = vpow.pop %v3173
      %v3175 = vmul.f32 %v3146, 1.442695
      %v3176 = vpow.pop %v3175
      %v3177 = vmul.f32 %v3147, 1.442695
      %v3178 = vpow.pop %v3177
      %v3179 = vmul.f32 %v3148, 1.442695
      %v3180 = vpow.pop %v3179
      %v3181 = vadd.f32 %v3150, %v3152
      %v3182 = vadd.f32 %v3181, %v3154
      %v3183 = vadd.f32 %v3182, %v3156
      %v3184 = vadd.f32 %v3183, %v3158
      %v3185 = vadd.f32 %v3184, %v3160
      %v3186 = vadd.f32 %v3185, %v3162
      %v3187 = vadd.f32 %v3186, %v3164
      %v3188 = vadd.f32 %v3187, %v3166
      %v3189 = vadd.f32 %v3188, %v3168
      %v3190 = vadd.f32 %v3189, %v3170
      %v3191 = vadd.f32 %v3190, %v3172
      %v3192 = vadd.f32 %v3191, %v3174
      %v3193 = vadd.f32 %v3192, %v3176
      %v3194 = vadd.f32 %v3193, %v3178
      %v3195 = vadd.f32 %v3194, %v3180
      %v3196 = vrot.slane %v3195, 4
      %v3197 = vadd.f32 %v3195, %v3196
      %v3198 = vrot.slane %v3197, 2
      %v3199 = vadd.f32 %v3197, %v3198
      %v3200 = vrot.slane %v3199, 1
      %v3201 = vadd.f32 %v3199, %v3200
      %v3202 = vpack.c.bf16 %v3152, %v3150
      %v3203 = vpack.c.bf16 %v3156, %v3154
      %v3204 = vpack.c.bf16 %v3160, %v3158
      %v3205 = vpack.c.bf16 %v3164, %v3162
      %v3206 = vpack.c.bf16 %v3168, %v3166
      %v3207 = vpack.c.bf16 %v3172, %v3170
      %v3208 = vpack.c.bf16 %v3176, %v3174
      %v3209 = vpack.c.bf16 %v3180, %v3178
      %v3211 = vrot.slane %v2933, 4
      %3213 = vmatprep.subr.bf16.mxu0 0
      %3214 = vmatpush1.bf16.msra.mxu0 %v3202
      %3215 = vmatprep.subr.bf16.mxu0 0
      %3216 = vmatpush1.bf16.msra.mxu0 %v3203
      %3217 = vmatprep.subr.bf16.mxu0 0
      %3218 = vmatpush1.bf16.msra.mxu0 %v3204
      %3219 = vmatprep.subr.bf16.mxu0 0
      %3220 = vmatpush1.bf16.msra.mxu0 %v3205
      %3221 = vmatprep.subr.bf16.mxu0 0
      %3222 = vmatpush1.bf16.msra.mxu0 %v3206
      %3223 = vmatprep.subr.bf16.mxu0 0
      %3224 = vmatpush1.bf16.msra.mxu0 %v3207
      %3225 = vmatprep.subr.bf16.mxu0 0
      %3226 = vmatpush1.bf16.msra.mxu0 %v3208
      %3227 = vmatprep.subr.bf16.mxu0 0
      %3228 = vmatpush1.bf16.msra.mxu0 %v3209
      %3229 = vmatprep.subr.bf16.mxu0 0
      %3230 = vmatpush1.bf16.msra.mxu0 0
      %3231 = vmatprep.subr.bf16.mxu0 0
      %3232 = vmatpush1.bf16.msra.mxu0 0
      %3233 = vmatprep.subr.bf16.mxu0 0
      %3234 = vmatpush1.bf16.msra.mxu0 0
      %3235 = vmatprep.subr.bf16.mxu0 0
      %3236 = vmatpush1.bf16.msra.mxu0 0
      %3237 = vmatprep.subr.bf16.mxu0 0
      %3238 = vmatpush1.bf16.msra.mxu0 0
      %3239 = vmatprep.subr.bf16.mxu0 0
      %3240 = vmatpush1.bf16.msra.mxu0 0
      %3241 = vmatprep.subr.bf16.mxu0 0
      %3242 = vmatpush1.bf16.msra.mxu0 0
      %3243 = vmatprep.subr.bf16.mxu0 0
      %3244 = vmatpush1.bf16.msra.mxu0 0
      %3245 = vmatprep.mubr.bf16.mxu0 0
      %3246 = vmatmul.mubr.bf16.gmra.mrb[0].mxu0 %v3211
      %v3247 = vpop.f32.mrb[0].mxu0
      %v3248 = vadd.f32 0.0, %v3247
      %v3249 = vpop.f32.mrb[0].mxu0
      %v3250 = vpop.f32.mrb[0].mxu0
      %v3251 = vpop.f32.mrb[0].mxu0
      %3252 = vdwg.mxu0
      %v3253 = vrcp.pop %v3201
      %v3254 = vmul.f32 %v3248, %v3253
      %s3255 = scalar_lea.vmem %s3, 96
      %v3256 = vld [vmem:[%s3255] sm:$0xf]
      %v3257 = vld [vmem:[%s3255 + $0x4] sm:$0xf]
      %v3258 = vld [vmem:[%s3255 + $0x8] sm:$0xf]
      %v3259 = vld [vmem:[%s3255 + $0xc] sm:$0xf]
      %v3260 = vpack.c.bf16 %v3254, %v3254
      %v3265 = vunpack.c.l.b16 %v3256
      %v3266 = vunpack.c.l.b16 %v3257
      %v3267 = vunpack.c.l.b16 %v3258
      %v3268 = vunpack.c.l.b16 %v3259
      %v3269 = vpack.c.b16 %v3266, %v3265
      %v3270 = vpack.c.b16 %v3268, %v3267
      %v3272 = vsel %vm602, %v3269, 0
      %v3275 = vsel %vm602, %v3270, 0
      %v3278 = vsel %vm627, %v3260, 0
      %3280 = vmatprep.subr.bf16.mxu0 0
      %3281 = vmatpush1.bf16.msra.mxu0 %v3278
      %3282 = vmatprep.subr.bf16.mxu0 0
      %3283 = vmatpush1.bf16.msra.mxu0 0
      %3284 = vmatprep.subr.bf16.mxu0 0
      %3285 = vmatpush1.bf16.msra.mxu0 0
      %3286 = vmatprep.subr.bf16.mxu0 0
      %3287 = vmatpush1.bf16.msra.mxu0 0
      %3288 = vmatprep.subr.bf16.mxu0 0
      %3289 = vmatpush1.bf16.msra.mxu0 0
      %3290 = vmatprep.subr.bf16.mxu0 0
      %3291 = vmatpush1.bf16.msra.mxu0 0
      %3292 = vmatprep.subr.bf16.mxu0 0
      %3293 = vmatpush1.bf16.msra.mxu0 0
      %3294 = vmatprep.subr.bf16.mxu0 0
      %3295 = vmatpush1.bf16.msra.mxu0 0
      %3296 = vmatprep.subr.bf16.mxu0 0
      %3297 = vmatpush1.bf16.msra.mxu0 0
      %3298 = vmatprep.subr.bf16.mxu0 0
      %3299 = vmatpush1.bf16.msra.mxu0 0
      %3300 = vmatprep.subr.bf16.mxu0 0
      %3301 = vmatpush1.bf16.msra.mxu0 0
      %3302 = vmatprep.subr.bf16.mxu0 0
      %3303 = vmatpush1.bf16.msra.mxu0 0
      %3304 = vmatprep.subr.bf16.mxu0 0
      %3305 = vmatpush1.bf16.msra.mxu0 0
      %3306 = vmatprep.subr.bf16.mxu0 0
      %3307 = vmatpush1.bf16.msra.mxu0 0
      %3308 = vmatprep.subr.bf16.mxu0 0
      %3309 = vmatpush1.bf16.msra.mxu0 0
      %3310 = vmatprep.subr.bf16.mxu0 0
      %3311 = vmatpush1.bf16.msra.mxu0 0
      %3312 = vmatprep.mubr.bf16.mxu0 0
      %3313 = vmatmul.mubr.bf16.gmra.mrb[0].mxu0 %v3272
      %v3314 = vpop.f32.mrb[0].mxu0
      %v3315 = vadd.f32 0.0, %v3314
      %v3316 = vpop.f32.mrb[0].mxu0
      %v3317 = vpop.f32.mrb[0].mxu0
      %v3318 = vadd.f32 0.0, %v3317
      %v3319 = vpop.f32.mrb[0].mxu0
      %3320 = vmatprep.mubr.bf16.mxu0 0
      %3321 = vmatmul.mubr.bf16.gmra.mrb[0].mxu0 %v3275
      %v3322 = vpop.f32.mrb[0].mxu0
      %v3323 = vadd.f32 0.0, %v3322
      %v3324 = vpop.f32.mrb[0].mxu0
      %v3325 = vpop.f32.mrb[0].mxu0
      %v3326 = vadd.f32 0.0, %v3325
      %v3327 = vpop.f32.mrb[0].mxu0
      %3328 = vdwg.mxu0
      %v3329 = vadd.f32 %v2917, %v3315
      %v3330 = vadd.f32 %v2920, %v3318
      %v3331 = vadd.f32 %v2925, %v3323
      %v3332 = vadd.f32 %v2928, %v3326
      %v3333 = vld [vmem:[#allocation2 + $0x10] sm:$0xc0]
      %v3334 = vld [vmem:[#allocation2 + $0x30] sm:$0xc0]
      %v3335 = vld [vmem:[#allocation2 + $0x50] sm:$0xc0]
      %s3336 = scalar_lea.vmem %s5, 896
      %v3337 = vld [vmem:[%s3336] sm:$0xf]
      %v3338 = vld [vmem:[%s3336 + $0x4] sm:$0xf]
      %v3339 = vld [vmem:[%s3336 + $0x8] sm:$0xf]
      %v3340 = vld [vmem:[%s3336 + $0xc] sm:$0xf]
      %v3341 = vld [vmem:[%s3336 + $0x10] sm:$0xf]
      %v3342 = vld [vmem:[%s3336 + $0x14] sm:$0xf]
      %v3343 = vld [vmem:[%s3336 + $0x18] sm:$0xf]
      %v3344 = vld [vmem:[%s3336 + $0x1c] sm:$0xf]
      %v3345 = vld [vmem:[%s3336 + $0x20] sm:$0xf]
      %v3346 = vld [vmem:[%s3336 + $0x24] sm:$0xf]
      %v3347 = vld [vmem:[%s3336 + $0x28] sm:$0xf]
      %v3348 = vld [vmem:[%s3336 + $0x2c] sm:$0xf]
      %v3349 = vld [vmem:[%s3336 + $0x30] sm:$0xf]
      %v3350 = vld [vmem:[%s3336 + $0x34] sm:$0xf]
      %v3351 = vld [vmem:[%s3336 + $0x38] sm:$0xf]
      %v3352 = vld [vmem:[%s3336 + $0x3c] sm:$0xf]
      %v3353 = vunpack.c.l.bf16 %v3337
      %v3354 = vunpack.c.l.bf16 %v3338
      %v3355 = vunpack.c.l.bf16 %v3339
      %v3356 = vunpack.c.l.bf16 %v3340
      %v3357 = vunpack.c.l.bf16 %v3341
      %v3358 = vunpack.c.l.bf16 %v3342
      %v3359 = vunpack.c.l.bf16 %v3343
      %v3360 = vunpack.c.l.bf16 %v3344
      %v3361 = vunpack.c.l.bf16 %v3345
      %v3362 = vunpack.c.l.bf16 %v3346
      %v3363 = vunpack.c.l.bf16 %v3347
      %v3364 = vunpack.c.l.bf16 %v3348
      %v3365 = vunpack.c.l.bf16 %v3349
      %v3366 = vunpack.c.l.bf16 %v3350
      %v3367 = vunpack.c.l.bf16 %v3351
      %v3368 = vunpack.c.l.bf16 %v3352
      %v3370 = vrot.slane %v3334, 6
      %3372 = vxpose.xlu0.c.b16.start [1/8] %v3370, 128
      %3373 = vxpose.xlu0.c.b16.cont [2/8] 0, 128
      %3374 = vxpose.xlu0.c.b16.cont [3/8] 0, 128
      %3375 = vxpose.xlu0.c.b16.cont [4/8] 0, 128
      %3376 = vxpose.xlu0.c.b16.cont [5/8] 0, 128
      %3377 = vxpose.xlu0.c.b16.cont [6/8] 0, 128
      %3378 = vxpose.xlu0.c.b16.cont [7/8] 0, 128
      %3379 = vxpose.xlu0.c.b16.end [8/8] 0, 128
      %v3380 = vpop.trf.xlu0
      %v3381 = vpop.trf.xlu0
      %v3382 = vpop.trf.xlu0
      %v3383 = vpop.trf.xlu0
      %v3384 = vpop.trf.xlu0
      %v3385 = vpop.trf.xlu0
      %v3386 = vpop.trf.xlu0
      %v3387 = vpop.trf.xlu0
      %v3389 = vrot.slane %v3333, 6
      %v3391 = vsel %vm602, %v3380, 0
      %v3394 = vsel %vm602, %v3381, 0
      %v3397 = vsel %vm602, %v3382, 0
      %v3400 = vsel %vm602, %v3383, 0
      %v3403 = vsel %vm602, %v3384, 0
      %v3406 = vsel %vm602, %v3385, 0
      %v3409 = vsel %vm602, %v3386, 0
      %v3412 = vsel %vm602, %v3387, 0
      %v3415 = vsel %vm627, %v3389, 0
      %3417 = vmatprep.subr.bf16.mxu0 0
      %3418 = vmatpush1.bf16.msra.mxu0 %v3415
      %3419 = vmatprep.subr.bf16.mxu0 0
      %3420 = vmatpush1.bf16.msra.mxu0 0
      %3421 = vmatprep.subr.bf16.mxu0 0
      %3422 = vmatpush1.bf16.msra.mxu0 0
      %3423 = vmatprep.subr.bf16.mxu0 0
      %3424 = vmatpush1.bf16.msra.mxu0 0
      %3425 = vmatprep.subr.bf16.mxu0 0
      %3426 = vmatpush1.bf16.msra.mxu0 0
      %3427 = vmatprep.subr.bf16.mxu0 0
      %3428 = vmatpush1.bf16.msra.mxu0 0
      %3429 = vmatprep.subr.bf16.mxu0 0
      %3430 = vmatpush1.bf16.msra.mxu0 0
      %3431 = vmatprep.subr.bf16.mxu0 0
      %3432 = vmatpush1.bf16.msra.mxu0 0
      %3433 = vmatprep.subr.bf16.mxu0 0
      %3434 = vmatpush1.bf16.msra.mxu0 0
      %3435 = vmatprep.subr.bf16.mxu0 0
      %3436 = vmatpush1.bf16.msra.mxu0 0
      %3437 = vmatprep.subr.bf16.mxu0 0
      %3438 = vmatpush1.bf16.msra.mxu0 0
      %3439 = vmatprep.subr.bf16.mxu0 0
      %3440 = vmatpush1.bf16.msra.mxu0 0
      %3441 = vmatprep.subr.bf16.mxu0 0
      %3442 = vmatpush1.bf16.msra.mxu0 0
      %3443 = vmatprep.subr.bf16.mxu0 0
      %3444 = vmatpush1.bf16.msra.mxu0 0
      %3445 = vmatprep.subr.bf16.mxu0 0
      %3446 = vmatpush1.bf16.msra.mxu0 0
      %3447 = vmatprep.subr.bf16.mxu0 0
      %3448 = vmatpush1.bf16.msra.mxu0 0
      %3449 = vmatprep.mubr.bf16.mxu0 0
      %3450 = vmatmul.mubr.bf16.gmra.mrb[0].mxu0 %v3391
      %v3451 = vpop.f32.mrb[0].mxu0
      %v3452 = vadd.f32 %v3353, %v3451
      %v3453 = vpop.f32.mrb[0].mxu0
      %v3454 = vpop.f32.mrb[0].mxu0
      %v3455 = vadd.f32 %v3354, %v3454
      %v3456 = vpop.f32.mrb[0].mxu0
      %3457 = vmatprep.mubr.bf16.mxu0 0
      %3458 = vmatmul.mubr.bf16.gmra.mrb[0].mxu0 %v3394
      %v3459 = vpop.f32.mrb[0].mxu0
      %v3460 = vadd.f32 %v3355, %v3459
      %v3461 = vpop.f32.mrb[0].mxu0
      %v3462 = vpop.f32.mrb[0].mxu0
      %v3463 = vadd.f32 %v3356, %v3462
      %v3464 = vpop.f32.mrb[0].mxu0
      %3465 = vmatprep.mubr.bf16.mxu0 0
      %3466 = vmatmul.mubr.bf16.gmra.mrb[0].mxu0 %v3397
      %v3467 = vpop.f32.mrb[0].mxu0
      %v3468 = vadd.f32 %v3357, %v3467
      %v3469 = vpop.f32.mrb[0].mxu0
      %v3470 = vpop.f32.mrb[0].mxu0
      %v3471 = vadd.f32 %v3358, %v3470
      %v3472 = vpop.f32.mrb[0].mxu0
      %3473 = vmatprep.mubr.bf16.mxu0 0
      %3474 = vmatmul.mubr.bf16.gmra.mrb[0].mxu0 %v3400
      %v3475 = vpop.f32.mrb[0].mxu0
      %v3476 = vadd.f32 %v3359, %v3475
      %v3477 = vpop.f32.mrb[0].mxu0
      %v3478 = vpop.f32.mrb[0].mxu0
      %v3479 = vadd.f32 %v3360, %v3478
      %v3480 = vpop.f32.mrb[0].mxu0
      %3481 = vmatprep.mubr.bf16.mxu0 0
      %3482 = vmatmul.mubr.bf16.gmra.mrb[0].mxu0 %v3403
      %v3483 = vpop.f32.mrb[0].mxu0
      %v3484 = vadd.f32 %v3361, %v3483
      %v3485 = vpop.f32.mrb[0].mxu0
      %v3486 = vpop.f32.mrb[0].mxu0
      %v3487 = vadd.f32 %v3362, %v3486
      %v3488 = vpop.f32.mrb[0].mxu0
      %3489 = vmatprep.mubr.bf16.mxu0 0
      %3490 = vmatmul.mubr.bf16.gmra.mrb[0].mxu0 %v3406
      %v3491 = vpop.f32.mrb[0].mxu0
      %v3492 = vadd.f32 %v3363, %v3491
      %v3493 = vpop.f32.mrb[0].mxu0
      %v3494 = vpop.f32.mrb[0].mxu0
      %v3495 = vadd.f32 %v3364, %v3494
      %v3496 = vpop.f32.mrb[0].mxu0
      %3497 = vmatprep.mubr.bf16.mxu0 0
      %3498 = vmatmul.mubr.bf16.gmra.mrb[0].mxu0 %v3409
      %v3499 = vpop.f32.mrb[0].mxu0
      %v3500 = vadd.f32 %v3365, %v3499
      %v3501 = vpop.f32.mrb[0].mxu0
      %v3502 = vpop.f32.mrb[0].mxu0
      %v3503 = vadd.f32 %v3366, %v3502
      %v3504 = vpop.f32.mrb[0].mxu0
      %3505 = vmatprep.mubr.bf16.mxu0 0
      %3506 = vmatmul.mubr.bf16.gmra.mrb[0].mxu0 %v3412
      %v3507 = vpop.f32.mrb[0].mxu0
      %v3508 = vadd.f32 %v3367, %v3507
      %v3509 = vpop.f32.mrb[0].mxu0
      %v3510 = vpop.f32.mrb[0].mxu0
      %v3511 = vadd.f32 %v3368, %v3510
      %v3512 = vpop.f32.mrb[0].mxu0
      %3513 = vdwg.mxu0
      %v3514 = vmax.f32 %v3452, %v3468
      %v3515 = vmax.f32 %v3455, %v3471
      %v3516 = vmax.f32 %v3460, %v3476
      %v3517 = vmax.f32 %v3463, %v3479
      %v3518 = vmax.f32 %v3514, %v3484
      %v3519 = vmax.f32 %v3515, %v3487
      %v3520 = vmax.f32 %v3516, %v3492
      %v3521 = vmax.f32 %v3517, %v3495
      %v3522 = vmax.f32 %v3518, %v3500
      %v3523 = vmax.f32 %v3519, %v3503
      %v3524 = vmax.f32 %v3520, %v3508
      %v3525 = vmax.f32 %v3521, %v3511
      %v3526 = vmax.f32 %v3522, %v3523
      %v3527 = vmax.f32 %v3524, %v3525
      %v3528 = vmax.f32 %v3526, %v3527
      %v3529 = vrot.slane %v3528, 4
      %v3530 = vmax.f32 %v3528, %v3529
      %v3531 = vrot.slane %v3530, 2
      %v3532 = vmax.f32 %v3530, %v3531
      %v3533 = vrot.slane %v3532, 1
      %v3534 = vmax.f32 %v3532, %v3533
      %v3535 = vsub.f32 %v3452, %v3534
      %v3536 = vsub.f32 %v3455, %v3534
      %v3537 = vsub.f32 %v3460, %v3534
      %v3538 = vsub.f32 %v3463, %v3534
      %v3539 = vsub.f32 %v3468, %v3534
      %v3540 = vsub.f32 %v3471, %v3534
      %v3541 = vsub.f32 %v3476, %v3534
      %v3542 = vsub.f32 %v3479, %v3534
      %v3543 = vsub.f32 %v3484, %v3534
      %v3544 = vsub.f32 %v3487, %v3534
      %v3545 = vsub.f32 %v3492, %v3534
      %v3546 = vsub.f32 %v3495, %v3534
      %v3547 = vsub.f32 %v3500, %v3534
      %v3548 = vsub.f32 %v3503, %v3534
      %v3549 = vsub.f32 %v3508, %v3534
      %v3550 = vsub.f32 %v3511, %v3534
      %v3551 = vmul.f32 %v3535, 1.442695
      %v3552 = vpow.pop %v3551
      %v3553 = vmul.f32 %v3536, 1.442695
      %v3554 = vpow.pop %v3553
      %v3555 = vmul.f32 %v3537, 1.442695
      %v3556 = vpow.pop %v3555
      %v3557 = vmul.f32 %v3538, 1.442695
      %v3558 = vpow.pop %v3557
      %v3559 = vmul.f32 %v3539, 1.442695
      %v3560 = vpow.pop %v3559
      %v3561 = vmul.f32 %v3540, 1.442695
      %v3562 = vpow.pop %v3561
      %v3563 = vmul.f32 %v3541, 1.442695
      %v3564 = vpow.pop %v3563
      %v3565 = vmul.f32 %v3542, 1.442695
      %v3566 = vpow.pop %v3565
      %v3567 = vmul.f32 %v3543, 1.442695
      %v3568 = vpow.pop %v3567
      %v3569 = vmul.f32 %v3544, 1.442695
      %v3570 = vpow.pop %v3569
      %v3571 = vmul.f32 %v3545, 1.442695
      %v3572 = vpow.pop %v3571
      %v3573 = vmul.f32 %v3546, 1.442695
      %v3574 = vpow.pop %v3573
      %v3575 = vmul.f32 %v3547, 1.442695
      %v3576 = vpow.pop %v3575
      %v3577 = vmul.f32 %v3548, 1.442695
      %v3578 = vpow.pop %v3577
      %v3579 = vmul.f32 %v3549, 1.442695
      %v3580 = vpow.pop %v3579
      %v3581 = vmul.f32 %v3550, 1.442695
      %v3582 = vpow.pop %v3581
      %v3583 = vadd.f32 %v3552, %v3554
      %v3584 = vadd.f32 %v3583, %v3556
      %v3585 = vadd.f32 %v3584, %v3558
      %v3586 = vadd.f32 %v3585, %v3560
      %v3587 = vadd.f32 %v3586, %v3562
      %v3588 = vadd.f32 %v3587, %v3564
      %v3589 = vadd.f32 %v3588, %v3566
      %v3590 = vadd.f32 %v3589, %v3568
      %v3591 = vadd.f32 %v3590, %v3570
      %v3592 = vadd.f32 %v3591, %v3572
      %v3593 = vadd.f32 %v3592, %v3574
      %v3594 = vadd.f32 %v3593, %v3576
      %v3595 = vadd.f32 %v3594, %v3578
      %v3596 = vadd.f32 %v3595, %v3580
      %v3597 = vadd.f32 %v3596, %v3582
      %v3598 = vrot.slane %v3597, 4
      %v3599 = vadd.f32 %v3597, %v3598
      %v3600 = vrot.slane %v3599, 2
      %v3601 = vadd.f32 %v3599, %v3600
      %v3602 = vrot.slane %v3601, 1
      %v3603 = vadd.f32 %v3601, %v3602
      %v3604 = vpack.c.bf16 %v3554, %v3552
      %v3605 = vpack.c.bf16 %v3558, %v3556
      %v3606 = vpack.c.bf16 %v3562, %v3560
      %v3607 = vpack.c.bf16 %v3566, %v3564
      %v3608 = vpack.c.bf16 %v3570, %v3568
      %v3609 = vpack.c.bf16 %v3574, %v3572
      %v3610 = vpack.c.bf16 %v3578, %v3576
      %v3611 = vpack.c.bf16 %v3582, %v3580
      %v3613 = vrot.slane %v3335, 6
      %3615 = vmatprep.subr.bf16.mxu0 0
      %3616 = vmatpush1.bf16.msra.mxu0 %v3604
      %3617 = vmatprep.subr.bf16.mxu0 0
      %3618 = vmatpush1.bf16.msra.mxu0 %v3605
      %3619 = vmatprep.subr.bf16.mxu0 0
      %3620 = vmatpush1.bf16.msra.mxu0 %v3606
      %3621 = vmatprep.subr.bf16.mxu0 0
      %3622 = vmatpush1.bf16.msra.mxu0 %v3607
      %3623 = vmatprep.subr.bf16.mxu0 0
      %3624 = vmatpush1.bf16.msra.mxu0 %v3608
      %3625 = vmatprep.subr.bf16.mxu0 0
      %3626 = vmatpush1.bf16.msra.mxu0 %v3609
      %3627 = vmatprep.subr.bf16.mxu0 0
      %3628 = vmatpush1.bf16.msra.mxu0 %v3610
      %3629 = vmatprep.subr.bf16.mxu0 0
      %3630 = vmatpush1.bf16.msra.mxu0 %v3611
      %3631 = vmatprep.subr.bf16.mxu0 0
      %3632 = vmatpush1.bf16.msra.mxu0 0
      %3633 = vmatprep.subr.bf16.mxu0 0
      %3634 = vmatpush1.bf16.msra.mxu0 0
      %3635 = vmatprep.subr.bf16.mxu0 0
      %3636 = vmatpush1.bf16.msra.mxu0 0
      %3637 = vmatprep.subr.bf16.mxu0 0
      %3638 = vmatpush1.bf16.msra.mxu0 0
      %3639 = vmatprep.subr.bf16.mxu0 0
      %3640 = vmatpush1.bf16.msra.mxu0 0
      %3641 = vmatprep.subr.bf16.mxu0 0
      %3642 = vmatpush1.bf16.msra.mxu0 0
      %3643 = vmatprep.subr.bf16.mxu0 0
      %3644 = vmatpush1.bf16.msra.mxu0 0
      %3645 = vmatprep.subr.bf16.mxu0 0
      %3646 = vmatpush1.bf16.msra.mxu0 0
      %3647 = vmatprep.mubr.bf16.mxu0 0
      %3648 = vmatmul.mubr.bf16.gmra.mrb[0].mxu0 %v3613
      %v3649 = vpop.f32.mrb[0].mxu0
      %v3650 = vadd.f32 0.0, %v3649
      %v3651 = vpop.f32.mrb[0].mxu0
      %v3652 = vpop.f32.mrb[0].mxu0
      %v3653 = vpop.f32.mrb[0].mxu0
      %3654 = vdwg.mxu0
      %v3655 = vrcp.pop %v3603
      %v3656 = vmul.f32 %v3650, %v3655
      %s3657 = scalar_lea.vmem %s3, 112
      %v3658 = vld [vmem:[%s3657] sm:$0xf]
      %v3659 = vld [vmem:[%s3657 + $0x4] sm:$0xf]
      %v3660 = vld [vmem:[%s3657 + $0x8] sm:$0xf]
      %v3661 = vld [vmem:[%s3657 + $0xc] sm:$0xf]
      %v3662 = vpack.c.bf16 %v3656, %v3656
      %v3667 = vunpack.c.l.b16 %v3658
      %v3668 = vunpack.c.l.b16 %v3659
      %v3669 = vunpack.c.l.b16 %v3660
      %v3670 = vunpack.c.l.b16 %v3661
      %v3671 = vpack.c.b16 %v3668, %v3667
      %v3672 = vpack.c.b16 %v3670, %v3669
      %v3674 = vsel %vm602, %v3671, 0
      %v3677 = vsel %vm602, %v3672, 0
      %v3680 = vsel %vm627, %v3662, 0
      %3682 = vmatprep.subr.bf16.mxu0 0
      %3683 = vmatpush1.bf16.msra.mxu0 %v3680
      %3684 = vmatprep.subr.bf16.mxu0 0
      %3685 = vmatpush1.bf16.msra.mxu0 0
      %3686 = vmatprep.subr.bf16.mxu0 0
      %3687 = vmatpush1.bf16.msra.mxu0 0
      %3688 = vmatprep.subr.bf16.mxu0 0
      %3689 = vmatpush1.bf16.msra.mxu0 0
      %3690 = vmatprep.subr.bf16.mxu0 0
      %3691 = vmatpush1.bf16.msra.mxu0 0
      %3692 = vmatprep.subr.bf16.mxu0 0
      %3693 = vmatpush1.bf16.msra.mxu0 0
      %3694 = vmatprep.subr.bf16.mxu0 0
      %3695 = vmatpush1.bf16.msra.mxu0 0
      %3696 = vmatprep.subr.bf16.mxu0 0
      %3697 = vmatpush1.bf16.msra.mxu0 0
      %3698 = vmatprep.subr.bf16.mxu0 0
      %3699 = vmatpush1.bf16.msra.mxu0 0
      %3700 = vmatprep.subr.bf16.mxu0 0
      %3701 = vmatpush1.bf16.msra.mxu0 0
      %3702 = vmatprep.subr.bf16.mxu0 0
      %3703 = vmatpush1.bf16.msra.mxu0 0
      %3704 = vmatprep.subr.bf16.mxu0 0
      %3705 = vmatpush1.bf16.msra.mxu0 0
      %3706 = vmatprep.subr.bf16.mxu0 0
      %3707 = vmatpush1.bf16.msra.mxu0 0
      %3708 = vmatprep.subr.bf16.mxu0 0
      %3709 = vmatpush1.bf16.msra.mxu0 0
      %3710 = vmatprep.subr.bf16.mxu0 0
      %3711 = vmatpush1.bf16.msra.mxu0 0
      %3712 = vmatprep.subr.bf16.mxu0 0
      %3713 = vmatpush1.bf16.msra.mxu0 0
      %3714 = vmatprep.mubr.bf16.mxu0 0
      %3715 = vmatmul.mubr.bf16.gmra.mrb[0].mxu0 %v3674
      %v3716 = vpop.f32.mrb[0].mxu0
      %v3717 = vadd.f32 0.0, %v3716
      %v3718 = vpop.f32.mrb[0].mxu0
      %v3719 = vpop.f32.mrb[0].mxu0
      %v3720 = vadd.f32 0.0, %v3719
      %v3721 = vpop.f32.mrb[0].mxu0
      %3722 = vmatprep.mubr.bf16.mxu0 0
      %3723 = vmatmul.mubr.bf16.gmra.mrb[0].mxu0 %v3677
      %v3724 = vpop.f32.mrb[0].mxu0
      %v3725 = vadd.f32 0.0, %v3724
      %v3726 = vpop.f32.mrb[0].mxu0
      %v3727 = vpop.f32.mrb[0].mxu0
      %v3728 = vadd.f32 0.0, %v3727
      %v3729 = vpop.f32.mrb[0].mxu0
      %3730 = vdwg.mxu0
      %v3731 = vadd.f32 %v3329, %v3717
      %v3732 = vadd.f32 %v3330, %v3720
      %v3733 = vadd.f32 %v3331, %v3725
      %v3734 = vadd.f32 %v3332, %v3728
      %v3735 = vld [vmem:[%s4] sm:$0xff]
      %v3736 = vld [vmem:[%s4 + $0x8] sm:$0xff]
      %v3737 = vld [vmem:[%s4 + $0x10] sm:$0xff]
      %v3738 = vld [vmem:[%s4 + $0x18] sm:$0xff]
      %3740 = vset.pattern.permute.xlu0 0
      %3741 = vperm.xlu0 %3740, %v3735
      %v3742 = vpop.permute.xlu0 %3741
      %3745 = vset.pattern.permute.xlu0 0
      %3746 = vperm.xlu0 %3745, %v3736
      %v3747 = vpop.permute.xlu0 %3746
      %3750 = vset.pattern.permute.xlu0 0
      %3751 = vperm.xlu0 %3750, %v3737
      %v3752 = vpop.permute.xlu0 %3751
      %3755 = vset.pattern.permute.xlu0 0
      %3756 = vperm.xlu0 %3755, %v3738
      %v3757 = vpop.permute.xlu0 %3756
      %v3759 = vadd.f32 %v2139, %v3742
      %v3760 = vadd.f32 %v2140, %v3747
      %v3761 = vadd.f32 %v2141, %v3752
      %v3762 = vadd.f32 %v2142, %v3757
      %3763 = vst [vmem:[%s251] sm:$0xff] %v3759
      %3764 = vst [vmem:[%s251 + $0x10] sm:$0xff] %v3760
      %3765 = vst [vmem:[%s251 + $0x20] sm:$0xff] %v3761
      %3766 = vst [vmem:[%s251 + $0x30] sm:$0xff] %v3762
      %s3767 = scalar_lea.vmem %s251, 64
      %3768 = vst [vmem:[%s3767] sm:$0xff] %v3731
      %3769 = vst [vmem:[%s3767 + $0x10] sm:$0xff] %v3732
      %3770 = vst [vmem:[%s3767 + $0x20] sm:$0xff] %v3733
      %3771 = vst [vmem:[%s3767 + $0x30] sm:$0xff] %v3734
      %v3772 = vld [vmem:[#allocation2 + $0x8] sm:$0x3]
      %v3773 = vld [vmem:[#allocation2 + $0x28] sm:$0x3]
      %v3774 = vld [vmem:[#allocation2 + $0x48] sm:$0x3]
      %s3775 = scalar_lea.vmem %s5, 64
      %v3776 = vld [vmem:[%s3775] sm:$0xf]
      %v3777 = vld [vmem:[%s3775 + $0x4] sm:$0xf]
      %v3778 = vld [vmem:[%s3775 + $0x8] sm:$0xf]
      %v3779 = vld [vmem:[%s3775 + $0xc] sm:$0xf]
      %v3780 = vld [vmem:[%s3775 + $0x10] sm:$0xf]
      %v3781 = vld [vmem:[%s3775 + $0x14] sm:$0xf]
      %v3782 = vld [vmem:[%s3775 + $0x18] sm:$0xf]
      %v3783 = vld [vmem:[%s3775 + $0x1c] sm:$0xf]
      %v3784 = vld [vmem:[%s3775 + $0x20] sm:$0xf]
      %v3785 = vld [vmem:[%s3775 + $0x24] sm:$0xf]
      %v3786 = vld [vmem:[%s3775 + $0x28] sm:$0xf]
      %v3787 = vld [vmem:[%s3775 + $0x2c] sm:$0xf]
      %v3788 = vld [vmem:[%s3775 + $0x30] sm:$0xf]
      %v3789 = vld [vmem:[%s3775 + $0x34] sm:$0xf]
      %v3790 = vld [vmem:[%s3775 + $0x38] sm:$0xf]
      %v3791 = vld [vmem:[%s3775 + $0x3c] sm:$0xf]
      %v3792 = vunpack.c.l.bf16 %v3776
      %v3793 = vunpack.c.l.bf16 %v3777
      %v3794 = vunpack.c.l.bf16 %v3778
      %v3795 = vunpack.c.l.bf16 %v3779
      %v3796 = vunpack.c.l.bf16 %v3780
      %v3797 = vunpack.c.l.bf16 %v3781
      %v3798 = vunpack.c.l.bf16 %v3782
      %v3799 = vunpack.c.l.bf16 %v3783
      %v3800 = vunpack.c.l.bf16 %v3784
      %v3801 = vunpack.c.l.bf16 %v3785
      %v3802 = vunpack.c.l.bf16 %v3786
      %v3803 = vunpack.c.l.bf16 %v3787
      %v3804 = vunpack.c.l.bf16 %v3788
      %v3805 = vunpack.c.l.bf16 %v3789
      %v3806 = vunpack.c.l.bf16 %v3790
      %v3807 = vunpack.c.l.bf16 %v3791
      %3808 = vxpose.xlu0.c.b16.start [1/8] %v3773, 128
      %3809 = vxpose.xlu0.c.b16.cont [2/8] 0, 128
      %3810 = vxpose.xlu0.c.b16.cont [3/8] 0, 128
      %3811 = vxpose.xlu0.c.b16.cont [4/8] 0, 128
      %3812 = vxpose.xlu0.c.b16.cont [5/8] 0, 128
      %3813 = vxpose.xlu0.c.b16.cont [6/8] 0, 128
      %3814 = vxpose.xlu0.c.b16.cont [7/8] 0, 128
      %3815 = vxpose.xlu0.c.b16.end [8/8] 0, 128
      %v3816 = vpop.trf.xlu0
      %v3817 = vpop.trf.xlu0
      %v3818 = vpop.trf.xlu0
      %v3819 = vpop.trf.xlu0
      %v3820 = vpop.trf.xlu0
      %v3821 = vpop.trf.xlu0
      %v3822 = vpop.trf.xlu0
      %v3823 = vpop.trf.xlu0
      %v3825 = vsel %vm602, %v3816, 0
      %v3828 = vsel %vm602, %v3817, 0
      %v3831 = vsel %vm602, %v3818, 0
      %v3834 = vsel %vm602, %v3819, 0
      %v3837 = vsel %vm602, %v3820, 0
      %v3840 = vsel %vm602, %v3821, 0
      %v3843 = vsel %vm602, %v3822, 0
      %v3846 = vsel %vm602, %v3823, 0
      %v3849 = vsel %vm627, %v3772, 0
      %3851 = vmatprep.subr.bf16.mxu0 0
      %3852 = vmatpush1.bf16.msra.mxu0 %v3849
      %3853 = vmatprep.subr.bf16.mxu0 0
      %3854 = vmatpush1.bf16.msra.mxu0 0
      %3855 = vmatprep.subr.bf16.mxu0 0
      %3856 = vmatpush1.bf16.msra.mxu0 0
      %3857 = vmatprep.subr.bf16.mxu0 0
      %3858 = vmatpush1.bf16.msra.mxu0 0
      %3859 = vmatprep.subr.bf16.mxu0 0
      %3860 = vmatpush1.bf16.msra.mxu0 0
      %3861 = vmatprep.subr.bf16.mxu0 0
      %3862 = vmatpush1.bf16.msra.mxu0 0
      %3863 = vmatprep.subr.bf16.mxu0 0
      %3864 = vmatpush1.bf16.msra.mxu0 0
      %3865 = vmatprep.subr.bf16.mxu0 0
      %3866 = vmatpush1.bf16.msra.mxu0 0
      %3867 = vmatprep.subr.bf16.mxu0 0
      %3868 = vmatpush1.bf16.msra.mxu0 0
      %3869 = vmatprep.subr.bf16.mxu0 0
      %3870 = vmatpush1.bf16.msra.mxu0 0
      %3871 = vmatprep.subr.bf16.mxu0 0
      %3872 = vmatpush1.bf16.msra.mxu0 0
      %3873 = vmatprep.subr.bf16.mxu0 0
      %3874 = vmatpush1.bf16.msra.mxu0 0
      %3875 = vmatprep.subr.bf16.mxu0 0
      %3876 = vmatpush1.bf16.msra.mxu0 0
      %3877 = vmatprep.subr.bf16.mxu0 0
      %3878 = vmatpush1.bf16.msra.mxu0 0
      %3879 = vmatprep.subr.bf16.mxu0 0
      %3880 = vmatpush1.bf16.msra.mxu0 0
      %3881 = vmatprep.subr.bf16.mxu0 0
      %3882 = vmatpush1.bf16.msra.mxu0 0
      %3883 = vmatprep.mubr.bf16.mxu0 0
      %3884 = vmatmul.mubr.bf16.gmra.mrb[0].mxu0 %v3825
      %v3885 = vpop.f32.mrb[0].mxu0
      %v3886 = vadd.f32 %v3792, %v3885
      %v3887 = vpop.f32.mrb[0].mxu0
      %v3888 = vpop.f32.mrb[0].mxu0
      %v3889 = vadd.f32 %v3793, %v3888
      %v3890 = vpop.f32.mrb[0].mxu0
      %3891 = vmatprep.mubr.bf16.mxu0 0
      %3892 = vmatmul.mubr.bf16.gmra.mrb[0].mxu0 %v3828
      %v3893 = vpop.f32.mrb[0].mxu0
      %v3894 = vadd.f32 %v3794, %v3893
      %v3895 = vpop.f32.mrb[0].mxu0
      %v3896 = vpop.f32.mrb[0].mxu0
      %v3897 = vadd.f32 %v3795, %v3896
      %v3898 = vpop.f32.mrb[0].mxu0
      %3899 = vmatprep.mubr.bf16.mxu0 0
      %3900 = vmatmul.mubr.bf16.gmra.mrb[0].mxu0 %v3831
      %v3901 = vpop.f32.mrb[0].mxu0
      %v3902 = vadd.f32 %v3796, %v3901
      %v3903 = vpop.f32.mrb[0].mxu0
      %v3904 = vpop.f32.mrb[0].mxu0
      %v3905 = vadd.f32 %v3797, %v3904
      %v3906 = vpop.f32.mrb[0].mxu0
      %3907 = vmatprep.mubr.bf16.mxu0 0
      %3908 = vmatmul.mubr.bf16.gmra.mrb[0].mxu0 %v3834
      %v3909 = vpop.f32.mrb[0].mxu0
      %v3910 = vadd.f32 %v3798, %v3909
      %v3911 = vpop.f32.mrb[0].mxu0
      %v3912 = vpop.f32.mrb[0].mxu0
      %v3913 = vadd.f32 %v3799, %v3912
      %v3914 = vpop.f32.mrb[0].mxu0
      %3915 = vmatprep.mubr.bf16.mxu0 0
      %3916 = vmatmul.mubr.bf16.gmra.mrb[0].mxu0 %v3837
      %v3917 = vpop.f32.mrb[0].mxu0
      %v3918 = vadd.f32 %v3800, %v3917
      %v3919 = vpop.f32.mrb[0].mxu0
      %v3920 = vpop.f32.mrb[0].mxu0
      %v3921 = vadd.f32 %v3801, %v3920
      %v3922 = vpop.f32.mrb[0].mxu0
      %3923 = vmatprep.mubr.bf16.mxu0 0
      %3924 = vmatmul.mubr.bf16.gmra.mrb[0].mxu0 %v3840
      %v3925 = vpop.f32.mrb[0].mxu0
      %v3926 = vadd.f32 %v3802, %v3925
      %v3927 = vpop.f32.mrb[0].mxu0
      %v3928 = vpop.f32.mrb[0].mxu0
      %v3929 = vadd.f32 %v3803, %v3928
      %v3930 = vpop.f32.mrb[0].mxu0
      %3931 = vmatprep.mubr.bf16.mxu0 0
      %3932 = vmatmul.mubr.bf16.gmra.mrb[0].mxu0 %v3843
      %v3933 = vpop.f32.mrb[0].mxu0
      %v3934 = vadd.f32 %v3804, %v3933
      %v3935 = vpop.f32.mrb[0].mxu0
      %v3936 = vpop.f32.mrb[0].mxu0
      %v3937 = vadd.f32 %v3805, %v3936
      %v3938 = vpop.f32.mrb[0].mxu0
      %3939 = vmatprep.mubr.bf16.mxu0 0
      %3940 = vmatmul.mubr.bf16.gmra.mrb[0].mxu0 %v3846
      %v3941 = vpop.f32.mrb[0].mxu0
      %v3942 = vadd.f32 %v3806, %v3941
      %v3943 = vpop.f32.mrb[0].mxu0
      %v3944 = vpop.f32.mrb[0].mxu0
      %v3945 = vadd.f32 %v3807, %v3944
      %v3946 = vpop.f32.mrb[0].mxu0
      %3947 = vdwg.mxu0
      %v3948 = vmax.f32 %v3886, %v3902
      %v3949 = vmax.f32 %v3889, %v3905
      %v3950 = vmax.f32 %v3894, %v3910
      %v3951 = vmax.f32 %v3897, %v3913
      %v3952 = vmax.f32 %v3948, %v3918
      %v3953 = vmax.f32 %v3949, %v3921
      %v3954 = vmax.f32 %v3950, %v3926
      %v3955 = vmax.f32 %v3951, %v3929
      %v3956 = vmax.f32 %v3952, %v3934
      %v3957 = vmax.f32 %v3953, %v3937
      %v3958 = vmax.f32 %v3954, %v3942
      %v3959 = vmax.f32 %v3955, %v3945
      %v3960 = vmax.f32 %v3956, %v3957
      %v3961 = vmax.f32 %v3958, %v3959
      %v3962 = vmax.f32 %v3960, %v3961
      %v3963 = vrot.slane %v3962, 4
      %v3964 = vmax.f32 %v3962, %v3963
      %v3965 = vrot.slane %v3964, 2
      %v3966 = vmax.f32 %v3964, %v3965
      %v3967 = vrot.slane %v3966, 1
      %v3968 = vmax.f32 %v3966, %v3967
      %v3969 = vsub.f32 %v3886, %v3968
      %v3970 = vsub.f32 %v3889, %v3968
      %v3971 = vsub.f32 %v3894, %v3968
      %v3972 = vsub.f32 %v3897, %v3968
      %v3973 = vsub.f32 %v3902, %v3968
      %v3974 = vsub.f32 %v3905, %v3968
      %v3975 = vsub.f32 %v3910, %v3968
      %v3976 = vsub.f32 %v3913, %v3968
      %v3977 = vsub.f32 %v3918, %v3968
      %v3978 = vsub.f32 %v3921, %v3968
      %v3979 = vsub.f32 %v3926, %v3968
      %v3980 = vsub.f32 %v3929, %v3968
      %v3981 = vsub.f32 %v3934, %v3968
      %v3982 = vsub.f32 %v3937, %v3968
      %v3983 = vsub.f32 %v3942, %v3968
      %v3984 = vsub.f32 %v3945, %v3968
      %v3985 = vmul.f32 %v3969, 1.442695
      %v3986 = vpow.pop %v3985
      %v3987 = vmul.f32 %v3970, 1.442695
      %v3988 = vpow.pop %v3987
      %v3989 = vmul.f32 %v3971, 1.442695
      %v3990 = vpow.pop %v3989
      %v3991 = vmul.f32 %v3972, 1.442695
      %v3992 = vpow.pop %v3991
      %v3993 = vmul.f32 %v3973, 1.442695
      %v3994 = vpow.pop %v3993
      %v3995 = vmul.f32 %v3974, 1.442695
      %v3996 = vpow.pop %v3995
      %v3997 = vmul.f32 %v3975, 1.442695
      %v3998 = vpow.pop %v3997
      %v3999 = vmul.f32 %v3976, 1.442695
      %v4000 = vpow.pop %v3999
      %v4001 = vmul.f32 %v3977, 1.442695
      %v4002 = vpow.pop %v4001
      %v4003 = vmul.f32 %v3978, 1.442695
      %v4004 = vpow.pop %v4003
      %v4005 = vmul.f32 %v3979, 1.442695
      %v4006 = vpow.pop %v4005
      %v4007 = vmul.f32 %v3980, 1.442695
      %v4008 = vpow.pop %v4007
      %v4009 = vmul.f32 %v3981, 1.442695
      %v4010 = vpow.pop %v4009
      %v4011 = vmul.f32 %v3982, 1.442695
      %v4012 = vpow.pop %v4011
      %v4013 = vmul.f32 %v3983, 1.442695
      %v4014 = vpow.pop %v4013
      %v4015 = vmul.f32 %v3984, 1.442695
      %v4016 = vpow.pop %v4015
      %v4017 = vadd.f32 %v3986, %v3988
      %v4018 = vadd.f32 %v4017, %v3990
      %v4019 = vadd.f32 %v4018, %v3992
      %v4020 = vadd.f32 %v4019, %v3994
      %v4021 = vadd.f32 %v4020, %v3996
      %v4022 = vadd.f32 %v4021, %v3998
      %v4023 = vadd.f32 %v4022, %v4000
      %v4024 = vadd.f32 %v4023, %v4002
      %v4025 = vadd.f32 %v4024, %v4004
      %v4026 = vadd.f32 %v4025, %v4006
      %v4027 = vadd.f32 %v4026, %v4008
      %v4028 = vadd.f32 %v4027, %v4010
      %v4029 = vadd.f32 %v4028, %v4012
      %v4030 = vadd.f32 %v4029, %v4014
      %v4031 = vadd.f32 %v4030, %v4016
      %v4032 = vrot.slane %v4031, 4
      %v4033 = vadd.f32 %v4031, %v4032
      %v4034 = vrot.slane %v4033, 2
      %v4035 = vadd.f32 %v4033, %v4034
      %v4036 = vrot.slane %v4035, 1
      %v4037 = vadd.f32 %v4035, %v4036
      %v4038 = vpack.c.bf16 %v3988, %v3986
      %v4039 = vpack.c.bf16 %v3992, %v3990
      %v4040 = vpack.c.bf16 %v3996, %v3994
      %v4041 = vpack.c.bf16 %v4000, %v3998
      %v4042 = vpack.c.bf16 %v4004, %v4002
      %v4043 = vpack.c.bf16 %v4008, %v4006
      %v4044 = vpack.c.bf16 %v4012, %v4010
      %v4045 = vpack.c.bf16 %v4016, %v4014
      %4046 = vmatprep.subr.bf16.mxu0 0
      %4047 = vmatpush1.bf16.msra.mxu0 %v4038
      %4048 = vmatprep.subr.bf16.mxu0 0
      %4049 = vmatpush1.bf16.msra.mxu0 %v4039
      %4050 = vmatprep.subr.bf16.mxu0 0
      %4051 = vmatpush1.bf16.msra.mxu0 %v4040
      %4052 = vmatprep.subr.bf16.mxu0 0
      %4053 = vmatpush1.bf16.msra.mxu0 %v4041
      %4054 = vmatprep.subr.bf16.mxu0 0
      %4055 = vmatpush1.bf16.msra.mxu0 %v4042
      %4056 = vmatprep.subr.bf16.mxu0 0
      %4057 = vmatpush1.bf16.msra.mxu0 %v4043
      %4058 = vmatprep.subr.bf16.mxu0 0
      %4059 = vmatpush1.bf16.msra.mxu0 %v4044
      %4060 = vmatprep.subr.bf16.mxu0 0
      %4061 = vmatpush1.bf16.msra.mxu0 %v4045
      %4062 = vmatprep.subr.bf16.mxu0 0
      %4063 = vmatpush1.bf16.msra.mxu0 0
      %4064 = vmatprep.subr.bf16.mxu0 0
      %4065 = vmatpush1.bf16.msra.mxu0 0
      %4066 = vmatprep.subr.bf16.mxu0 0
      %4067 = vmatpush1.bf16.msra.mxu0 0
      %4068 = vmatprep.subr.bf16.mxu0 0
      %4069 = vmatpush1.bf16.msra.mxu0 0
      %4070 = vmatprep.subr.bf16.mxu0 0
      %4071 = vmatpush1.bf16.msra.mxu0 0
      %4072 = vmatprep.subr.bf16.mxu0 0
      %4073 = vmatpush1.bf16.msra.mxu0 0
      %4074 = vmatprep.subr.bf16.mxu0 0
      %4075 = vmatpush1.bf16.msra.mxu0 0
      %4076 = vmatprep.subr.bf16.mxu0 0
      %4077 = vmatpush1.bf16.msra.mxu0 0
      %4078 = vmatprep.mubr.bf16.mxu0 0
      %4079 = vmatmul.mubr.bf16.gmra.mrb[0].mxu0 %v3774
      %v4080 = vpop.f32.mrb[0].mxu0
      %v4081 = vadd.f32 0.0, %v4080
      %v4082 = vpop.f32.mrb[0].mxu0
      %v4083 = vpop.f32.mrb[0].mxu0
      %v4084 = vpop.f32.mrb[0].mxu0
      %4085 = vdwg.mxu0
      %v4086 = vrcp.pop %v4037
      %v4087 = vmul.f32 %v4081, %v4086
      %v4088 = vld [vmem:[%s3] sm:$0xf]
      %v4089 = vld [vmem:[%s3 + $0x4] sm:$0xf]
      %v4090 = vld [vmem:[%s3 + $0x8] sm:$0xf]
      %v4091 = vld [vmem:[%s3 + $0xc] sm:$0xf]
      %v4092 = vpack.c.bf16 %v4087, %v4087
      %v4093 = vld [vmem:[#allocation2 + $0x8] sm:$0xc]
      %v4094 = vld [vmem:[#allocation2 + $0x28] sm:$0xc]
      %v4095 = vld [vmem:[#allocation2 + $0x48] sm:$0xc]
      %s4096 = scalar_lea.vmem %s5, 192
      %v4097 = vld [vmem:[%s4096] sm:$0xf]
      %v4098 = vld [vmem:[%s4096 + $0x4] sm:$0xf]
      %v4099 = vld [vmem:[%s4096 + $0x8] sm:$0xf]
      %v4100 = vld [vmem:[%s4096 + $0xc] sm:$0xf]
      %v4101 = vld [vmem:[%s4096 + $0x10] sm:$0xf]
      %v4102 = vld [vmem:[%s4096 + $0x14] sm:$0xf]
      %v4103 = vld [vmem:[%s4096 + $0x18] sm:$0xf]
      %v4104 = vld [vmem:[%s4096 + $0x1c] sm:$0xf]
      %v4105 = vld [vmem:[%s4096 + $0x20] sm:$0xf]
      %v4106 = vld [vmem:[%s4096 + $0x24] sm:$0xf]
      %v4107 = vld [vmem:[%s4096 + $0x28] sm:$0xf]
      %v4108 = vld [vmem:[%s4096 + $0x2c] sm:$0xf]
      %v4109 = vld [vmem:[%s4096 + $0x30] sm:$0xf]
      %v4110 = vld [vmem:[%s4096 + $0x34] sm:$0xf]
      %v4111 = vld [vmem:[%s4096 + $0x38] sm:$0xf]
      %v4112 = vld [vmem:[%s4096 + $0x3c] sm:$0xf]
      %v4113 = vunpack.c.l.bf16 %v4097
      %v4114 = vunpack.c.l.bf16 %v4098
      %v4115 = vunpack.c.l.bf16 %v4099
      %v4116 = vunpack.c.l.bf16 %v4100
      %v4117 = vunpack.c.l.bf16 %v4101
      %v4118 = vunpack.c.l.bf16 %v4102
      %v4119 = vunpack.c.l.bf16 %v4103
      %v4120 = vunpack.c.l.bf16 %v4104
      %v4121 = vunpack.c.l.bf16 %v4105
      %v4122 = vunpack.c.l.bf16 %v4106
      %v4123 = vunpack.c.l.bf16 %v4107
      %v4124 = vunpack.c.l.bf16 %v4108
      %v4125 = vunpack.c.l.bf16 %v4109
      %v4126 = vunpack.c.l.bf16 %v4110
      %v4127 = vunpack.c.l.bf16 %v4111
      %v4128 = vunpack.c.l.bf16 %v4112
      %v4130 = vrot.slane %v4094, 2
      %4132 = vxpose.xlu0.c.b16.start [1/8] %v4130, 128
      %4133 = vxpose.xlu0.c.b16.cont [2/8] 0, 128
      %4134 = vxpose.xlu0.c.b16.cont [3/8] 0, 128
      %4135 = vxpose.xlu0.c.b16.cont [4/8] 0, 128
      %4136 = vxpose.xlu0.c.b16.cont [5/8] 0, 128
      %4137 = vxpose.xlu0.c.b16.cont [6/8] 0, 128
      %4138 = vxpose.xlu0.c.b16.cont [7/8] 0, 128
      %4139 = vxpose.xlu0.c.b16.end [8/8] 0, 128
      %v4140 = vpop.trf.xlu0
      %v4141 = vpop.trf.xlu0
      %v4142 = vpop.trf.xlu0
      %v4143 = vpop.trf.xlu0
      %v4144 = vpop.trf.xlu0
      %v4145 = vpop.trf.xlu0
      %v4146 = vpop.trf.xlu0
      %v4147 = vpop.trf.xlu0
      %v4149 = vrot.slane %v4093, 2
      %v4151 = vsel %vm602, %v4140, 0
      %v4154 = vsel %vm602, %v4141, 0
      %v4157 = vsel %vm602, %v4142, 0
      %v4160 = vsel %vm602, %v4143, 0
      %v4163 = vsel %vm602, %v4144, 0
      %v4166 = vsel %vm602, %v4145, 0
      %v4169 = vsel %vm602, %v4146, 0
      %v4172 = vsel %vm602, %v4147, 0
      %v4175 = vsel %vm627, %v4149, 0
      %4177 = vmatprep.subr.bf16.mxu0 0
      %4178 = vmatpush1.bf16.msra.mxu0 %v4175
      %4179 = vmatprep.subr.bf16.mxu0 0
      %4180 = vmatpush1.bf16.msra.mxu0 0
      %4181 = vmatprep.subr.bf16.mxu0 0
      %4182 = vmatpush1.bf16.msra.mxu0 0
      %4183 = vmatprep.subr.bf16.mxu0 0
      %4184 = vmatpush1.bf16.msra.mxu0 0
      %4185 = vmatprep.subr.bf16.mxu0 0
      %4186 = vmatpush1.bf16.msra.mxu0 0
      %4187 = vmatprep.subr.bf16.mxu0 0
      %4188 = vmatpush1.bf16.msra.mxu0 0
      %4189 = vmatprep.subr.bf16.mxu0 0
      %4190 = vmatpush1.bf16.msra.mxu0 0
      %4191 = vmatprep.subr.bf16.mxu0 0
      %4192 = vmatpush1.bf16.msra.mxu0 0
      %4193 = vmatprep.subr.bf16.mxu0 0
      %4194 = vmatpush1.bf16.msra.mxu0 0
      %4195 = vmatprep.subr.bf16.mxu0 0
      %4196 = vmatpush1.bf16.msra.mxu0 0
      %4197 = vmatprep.subr.bf16.mxu0 0
      %4198 = vmatpush1.bf16.msra.mxu0 0
      %4199 = vmatprep.subr.bf16.mxu0 0
      %4200 = vmatpush1.bf16.msra.mxu0 0
      %4201 = vmatprep.subr.bf16.mxu0 0
      %4202 = vmatpush1.bf16.msra.mxu0 0
      %4203 = vmatprep.subr.bf16.mxu0 0
      %4204 = vmatpush1.bf16.msra.mxu0 0
      %4205 = vmatprep.subr.bf16.mxu0 0
      %4206 = vmatpush1.bf16.msra.mxu0 0
      %4207 = vmatprep.subr.bf16.mxu0 0
      %4208 = vmatpush1.bf16.msra.mxu0 0
      %4209 = vmatprep.mubr.bf16.mxu0 0
      %4210 = vmatmul.mubr.bf16.gmra.mrb[0].mxu0 %v4151
      %v4211 = vpop.f32.mrb[0].mxu0
      %v4212 = vadd.f32 %v4113, %v4211
      %v4213 = vpop.f32.mrb[0].mxu0
      %v4214 = vpop.f32.mrb[0].mxu0
      %v4215 = vadd.f32 %v4114, %v4214
      %v4216 = vpop.f32.mrb[0].mxu0
      %4217 = vmatprep.mubr.bf16.mxu0 0
      %4218 = vmatmul.mubr.bf16.gmra.mrb[0].mxu0 %v4154
      %v4219 = vpop.f32.mrb[0].mxu0
      %v4220 = vadd.f32 %v4115, %v4219
      %v4221 = vpop.f32.mrb[0].mxu0
      %v4222 = vpop.f32.mrb[0].mxu0
      %v4223 = vadd.f32 %v4116, %v4222
      %v4224 = vpop.f32.mrb[0].mxu0
      %4225 = vmatprep.mubr.bf16.mxu0 0
      %4226 = vmatmul.mubr.bf16.gmra.mrb[0].mxu0 %v4157
      %v4227 = vpop.f32.mrb[0].mxu0
      %v4228 = vadd.f32 %v4117, %v4227
      %v4229 = vpop.f32.mrb[0].mxu0
      %v4230 = vpop.f32.mrb[0].mxu0
      %v4231 = vadd.f32 %v4118, %v4230
      %v4232 = vpop.f32.mrb[0].mxu0
      %4233 = vmatprep.mubr.bf16.mxu0 0
      %4234 = vmatmul.mubr.bf16.gmra.mrb[0].mxu0 %v4160
      %v4235 = vpop.f32.mrb[0].mxu0
      %v4236 = vadd.f32 %v4119, %v4235
      %v4237 = vpop.f32.mrb[0].mxu0
      %v4238 = vpop.f32.mrb[0].mxu0
      %v4239 = vadd.f32 %v4120, %v4238
      %v4240 = vpop.f32.mrb[0].mxu0
      %4241 = vmatprep.mubr.bf16.mxu0 0
      %4242 = vmatmul.mubr.bf16.gmra.mrb[0].mxu0 %v4163
      %v4243 = vpop.f32.mrb[0].mxu0
      %v4244 = vadd.f32 %v4121, %v4243
      %v4245 = vpop.f32.mrb[0].mxu0
      %v4246 = vpop.f32.mrb[0].mxu0
      %v4247 = vadd.f32 %v4122, %v4246
      %v4248 = vpop.f32.mrb[0].mxu0
      %4249 = vmatprep.mubr.bf16.mxu0 0
      %4250 = vmatmul.mubr.bf16.gmra.mrb[0].mxu0 %v4166
      %v4251 = vpop.f32.mrb[0].mxu0
      %v4252 = vadd.f32 %v4123, %v4251
      %v4253 = vpop.f32.mrb[0].mxu0
      %v4254 = vpop.f32.mrb[0].mxu0
      %v4255 = vadd.f32 %v4124, %v4254
      %v4256 = vpop.f32.mrb[0].mxu0
      %4257 = vmatprep.mubr.bf16.mxu0 0
      %4258 = vmatmul.mubr.bf16.gmra.mrb[0].mxu0 %v4169
      %v4259 = vpop.f32.mrb[0].mxu0
      %v4260 = vadd.f32 %v4125, %v4259
      %v4261 = vpop.f32.mrb[0].mxu0
      %v4262 = vpop.f32.mrb[0].mxu0
      %v4263 = vadd.f32 %v4126, %v4262
      %v4264 = vpop.f32.mrb[0].mxu0
      %4265 = vmatprep.mubr.bf16.mxu0 0
      %4266 = vmatmul.mubr.bf16.gmra.mrb[0].mxu0 %v4172
      %v4267 = vpop.f32.mrb[0].mxu0
      %v4268 = vadd.f32 %v4127, %v4267
      %v4269 = vpop.f32.mrb[0].mxu0
      %v4270 = vpop.f32.mrb[0].mxu0
      %v4271 = vadd.f32 %v4128, %v4270
      %v4272 = vpop.f32.mrb[0].mxu0
      %4273 = vdwg.mxu0
      %v4274 = vmax.f32 %v4212, %v4228
      %v4275 = vmax.f32 %v4215, %v4231
      %v4276 = vmax.f32 %v4220, %v4236
      %v4277 = vmax.f32 %v4223, %v4239
      %v4278 = vmax.f32 %v4274, %v4244
      %v4279 = vmax.f32 %v4275, %v4247
      %v4280 = vmax.f32 %v4276, %v4252
      %v4281 = vmax.f32 %v4277, %v4255
      %v4282 = vmax.f32 %v4278, %v4260
      %v4283 = vmax.f32 %v4279, %v4263
      %v4284 = vmax.f32 %v4280, %v4268
      %v4285 = vmax.f32 %v4281, %v4271
      %v4286 = vmax.f32 %v4282, %v4283
      %v4287 = vmax.f32 %v4284, %v4285
      %v4288 = vmax.f32 %v4286, %v4287
      %v4289 = vrot.slane %v4288, 4
      %v4290 = vmax.f32 %v4288, %v4289
      %v4291 = vrot.slane %v4290, 2
      %v4292 = vmax.f32 %v4290, %v4291
      %v4293 = vrot.slane %v4292, 1
      %v4294 = vmax.f32 %v4292, %v4293
      %v4295 = vsub.f32 %v4212, %v4294
      %v4296 = vsub.f32 %v4215, %v4294
      %v4297 = vsub.f32 %v4220, %v4294
      %v4298 = vsub.f32 %v4223, %v4294
      %v4299 = vsub.f32 %v4228, %v4294
      %v4300 = vsub.f32 %v4231, %v4294
      %v4301 = vsub.f32 %v4236, %v4294
      %v4302 = vsub.f32 %v4239, %v4294
      %v4303 = vsub.f32 %v4244, %v4294
      %v4304 = vsub.f32 %v4247, %v4294
      %v4305 = vsub.f32 %v4252, %v4294
      %v4306 = vsub.f32 %v4255, %v4294
      %v4307 = vsub.f32 %v4260, %v4294
      %v4308 = vsub.f32 %v4263, %v4294
      %v4309 = vsub.f32 %v4268, %v4294
      %v4310 = vsub.f32 %v4271, %v4294
      %v4311 = vmul.f32 %v4295, 1.442695
      %v4312 = vpow.pop %v4311
      %v4313 = vmul.f32 %v4296, 1.442695
      %v4314 = vpow.pop %v4313
      %v4315 = vmul.f32 %v4297, 1.442695
      %v4316 = vpow.pop %v4315
      %v4317 = vmul.f32 %v4298, 1.442695
      %v4318 = vpow.pop %v4317
      %v4319 = vmul.f32 %v4299, 1.442695
      %v4320 = vpow.pop %v4319
      %v4321 = vmul.f32 %v4300, 1.442695
      %v4322 = vpow.pop %v4321
      %v4323 = vmul.f32 %v4301, 1.442695
      %v4324 = vpow.pop %v4323
      %v4325 = vmul.f32 %v4302, 1.442695
      %v4326 = vpow.pop %v4325
      %v4327 = vmul.f32 %v4303, 1.442695
      %v4328 = vpow.pop %v4327
      %v4329 = vmul.f32 %v4304, 1.442695
      %v4330 = vpow.pop %v4329
      %v4331 = vmul.f32 %v4305, 1.442695
      %v4332 = vpow.pop %v4331
      %v4333 = vmul.f32 %v4306, 1.442695
      %v4334 = vpow.pop %v4333
      %v4335 = vmul.f32 %v4307, 1.442695
      %v4336 = vpow.pop %v4335
      %v4337 = vmul.f32 %v4308, 1.442695
      %v4338 = vpow.pop %v4337
      %v4339 = vmul.f32 %v4309, 1.442695
      %v4340 = vpow.pop %v4339
      %v4341 = vmul.f32 %v4310, 1.442695
      %v4342 = vpow.pop %v4341
      %v4343 = vadd.f32 %v4312, %v4314
      %v4344 = vadd.f32 %v4343, %v4316
      %v4345 = vadd.f32 %v4344, %v4318
      %v4346 = vadd.f32 %v4345, %v4320
      %v4347 = vadd.f32 %v4346, %v4322
      %v4348 = vadd.f32 %v4347, %v4324
      %v4349 = vadd.f32 %v4348, %v4326
      %v4350 = vadd.f32 %v4349, %v4328
      %v4351 = vadd.f32 %v4350, %v4330
      %v4352 = vadd.f32 %v4351, %v4332
      %v4353 = vadd.f32 %v4352, %v4334
      %v4354 = vadd.f32 %v4353, %v4336
      %v4355 = vadd.f32 %v4354, %v4338
      %v4356 = vadd.f32 %v4355, %v4340
      %v4357 = vadd.f32 %v4356, %v4342
      %v4358 = vrot.slane %v4357, 4
      %v4359 = vadd.f32 %v4357, %v4358
      %v4360 = vrot.slane %v4359, 2
      %v4361 = vadd.f32 %v4359, %v4360
      %v4362 = vrot.slane %v4361, 1
      %v4363 = vadd.f32 %v4361, %v4362
      %v4364 = vpack.c.bf16 %v4314, %v4312
      %v4365 = vpack.c.bf16 %v4318, %v4316
      %v4366 = vpack.c.bf16 %v4322, %v4320
      %v4367 = vpack.c.bf16 %v4326, %v4324
      %v4368 = vpack.c.bf16 %v4330, %v4328
      %v4369 = vpack.c.bf16 %v4334, %v4332
      %v4370 = vpack.c.bf16 %v4338, %v4336
      %v4371 = vpack.c.bf16 %v4342, %v4340
      %v4373 = vrot.slane %v4095, 2
      %4375 = vmatprep.subr.bf16.mxu0 0
      %4376 = vmatpush1.bf16.msra.mxu0 %v4364
      %4377 = vmatprep.subr.bf16.mxu0 0
      %4378 = vmatpush1.bf16.msra.mxu0 %v4365
      %4379 = vmatprep.subr.bf16.mxu0 0
      %4380 = vmatpush1.bf16.msra.mxu0 %v4366
      %4381 = vmatprep.subr.bf16.mxu0 0
      %4382 = vmatpush1.bf16.msra.mxu0 %v4367
      %4383 = vmatprep.subr.bf16.mxu0 0
      %4384 = vmatpush1.bf16.msra.mxu0 %v4368
      %4385 = vmatprep.subr.bf16.mxu0 0
      %4386 = vmatpush1.bf16.msra.mxu0 %v4369
      %4387 = vmatprep.subr.bf16.mxu0 0
      %4388 = vmatpush1.bf16.msra.mxu0 %v4370
      %4389 = vmatprep.subr.bf16.mxu0 0
      %4390 = vmatpush1.bf16.msra.mxu0 %v4371
      %4391 = vmatprep.subr.bf16.mxu0 0
      %4392 = vmatpush1.bf16.msra.mxu0 0
      %4393 = vmatprep.subr.bf16.mxu0 0
      %4394 = vmatpush1.bf16.msra.mxu0 0
      %4395 = vmatprep.subr.bf16.mxu0 0
      %4396 = vmatpush1.bf16.msra.mxu0 0
      %4397 = vmatprep.subr.bf16.mxu0 0
      %4398 = vmatpush1.bf16.msra.mxu0 0
      %4399 = vmatprep.subr.bf16.mxu0 0
      %4400 = vmatpush1.bf16.msra.mxu0 0
      %4401 = vmatprep.subr.bf16.mxu0 0
      %4402 = vmatpush1.bf16.msra.mxu0 0
      %4403 = vmatprep.subr.bf16.mxu0 0
      %4404 = vmatpush1.bf16.msra.mxu0 0
      %4405 = vmatprep.subr.bf16.mxu0 0
      %4406 = vmatpush1.bf16.msra.mxu0 0
      %4407 = vmatprep.mubr.bf16.mxu0 0
      %4408 = vmatmul.mubr.bf16.gmra.mrb[0].mxu0 %v4373
      %v4409 = vpop.f32.mrb[0].mxu0
      %v4410 = vadd.f32 0.0, %v4409
      %v4411 = vpop.f32.mrb[0].mxu0
      %v4412 = vpop.f32.mrb[0].mxu0
      %v4413 = vpop.f32.mrb[0].mxu0
      %4414 = vdwg.mxu0
      %v4415 = vrcp.pop %v4363
      %v4416 = vmul.f32 %v4410, %v4415
      %v4417 = vld [vmem:[%s1197] sm:$0xf]
      %v4418 = vld [vmem:[%s1197 + $0x4] sm:$0xf]
      %v4419 = vld [vmem:[%s1197 + $0x8] sm:$0xf]
      %v4420 = vld [vmem:[%s1197 + $0xc] sm:$0xf]
      %v4421 = vpack.c.bf16 %v4416, %v4416
      %v4426 = vunpack.c.l.b16 %v4417
      %v4427 = vunpack.c.l.b16 %v4418
      %v4428 = vunpack.c.l.b16 %v4419
      %v4429 = vunpack.c.l.b16 %v4420
      %v4430 = vpack.c.b16 %v4427, %v4426
      %v4431 = vpack.c.b16 %v4429, %v4428
      %v4433 = vsel %vm602, %v4430, 0
      %v4436 = vsel %vm602, %v4431, 0
      %v4439 = vsel %vm627, %v4421, 0
      %4441 = vmatprep.subr.bf16.mxu0 0
      %4442 = vmatpush1.bf16.msra.mxu0 %v4439
      %4443 = vmatprep.subr.bf16.mxu0 0
      %4444 = vmatpush1.bf16.msra.mxu0 0
      %4445 = vmatprep.subr.bf16.mxu0 0
      %4446 = vmatpush1.bf16.msra.mxu0 0
      %4447 = vmatprep.subr.bf16.mxu0 0
      %4448 = vmatpush1.bf16.msra.mxu0 0
      %4449 = vmatprep.subr.bf16.mxu0 0
      %4450 = vmatpush1.bf16.msra.mxu0 0
      %4451 = vmatprep.subr.bf16.mxu0 0
      %4452 = vmatpush1.bf16.msra.mxu0 0
      %4453 = vmatprep.subr.bf16.mxu0 0
      %4454 = vmatpush1.bf16.msra.mxu0 0
      %4455 = vmatprep.subr.bf16.mxu0 0
      %4456 = vmatpush1.bf16.msra.mxu0 0
      %4457 = vmatprep.subr.bf16.mxu0 0
      %4458 = vmatpush1.bf16.msra.mxu0 0
      %4459 = vmatprep.subr.bf16.mxu0 0
      %4460 = vmatpush1.bf16.msra.mxu0 0
      %4461 = vmatprep.subr.bf16.mxu0 0
      %4462 = vmatpush1.bf16.msra.mxu0 0
      %4463 = vmatprep.subr.bf16.mxu0 0
      %4464 = vmatpush1.bf16.msra.mxu0 0
      %4465 = vmatprep.subr.bf16.mxu0 0
      %4466 = vmatpush1.bf16.msra.mxu0 0
      %4467 = vmatprep.subr.bf16.mxu0 0
      %4468 = vmatpush1.bf16.msra.mxu0 0
      %4469 = vmatprep.subr.bf16.mxu0 0
      %4470 = vmatpush1.bf16.msra.mxu0 0
      %4471 = vmatprep.subr.bf16.mxu0 0
      %4472 = vmatpush1.bf16.msra.mxu0 0
      %4473 = vmatprep.mubr.bf16.mxu0 0
      %4474 = vmatmul.mubr.bf16.gmra.mrb[0].mxu0 %v4433
      %v4475 = vpop.f32.mrb[0].mxu0
      %v4476 = vadd.f32 0.0, %v4475
      %v4477 = vpop.f32.mrb[0].mxu0
      %v4478 = vpop.f32.mrb[0].mxu0
      %v4479 = vadd.f32 0.0, %v4478
      %v4480 = vpop.f32.mrb[0].mxu0
      %4481 = vmatprep.mubr.bf16.mxu0 0
      %4482 = vmatmul.mubr.bf16.gmra.mrb[0].mxu0 %v4436
      %v4483 = vpop.f32.mrb[0].mxu0
      %v4484 = vadd.f32 0.0, %v4483
      %v4485 = vpop.f32.mrb[0].mxu0
      %v4486 = vpop.f32.mrb[0].mxu0
      %v4487 = vadd.f32 0.0, %v4486
      %v4488 = vpop.f32.mrb[0].mxu0
      %4489 = vdwg.mxu0
      %v4494 = vunpack.c.l.b16 %v4088
      %v4495 = vunpack.c.l.b16 %v4089
      %v4496 = vunpack.c.l.b16 %v4090
      %v4497 = vunpack.c.l.b16 %v4091
      %v4498 = vpack.c.b16 %v4495, %v4494
      %v4499 = vpack.c.b16 %v4497, %v4496
      %v4501 = vsel %vm602, %v4498, 0
      %v4504 = vsel %vm602, %v4499, 0
      %v4507 = vsel %vm627, %v4092, 0
      %4509 = vmatprep.subr.bf16.mxu0 0
      %4510 = vmatpush1.bf16.msra.mxu0 %v4507
      %4511 = vmatprep.subr.bf16.mxu0 0
      %4512 = vmatpush1.bf16.msra.mxu0 0
      %4513 = vmatprep.subr.bf16.mxu0 0
      %4514 = vmatpush1.bf16.msra.mxu0 0
      %4515 = vmatprep.subr.bf16.mxu0 0
      %4516 = vmatpush1.bf16.msra.mxu0 0
      %4517 = vmatprep.subr.bf16.mxu0 0
      %4518 = vmatpush1.bf16.msra.mxu0 0
      %4519 = vmatprep.subr.bf16.mxu0 0
      %4520 = vmatpush1.bf16.msra.mxu0 0
      %4521 = vmatprep.subr.bf16.mxu0 0
      %4522 = vmatpush1.bf16.msra.mxu0 0
      %4523 = vmatprep.subr.bf16.mxu0 0
      %4524 = vmatpush1.bf16.msra.mxu0 0
      %4525 = vmatprep.subr.bf16.mxu0 0
      %4526 = vmatpush1.bf16.msra.mxu0 0
      %4527 = vmatprep.subr.bf16.mxu0 0
      %4528 = vmatpush1.bf16.msra.mxu0 0
      %4529 = vmatprep.subr.bf16.mxu0 0
      %4530 = vmatpush1.bf16.msra.mxu0 0
      %4531 = vmatprep.subr.bf16.mxu0 0
      %4532 = vmatpush1.bf16.msra.mxu0 0
      %4533 = vmatprep.subr.bf16.mxu0 0
      %4534 = vmatpush1.bf16.msra.mxu0 0
      %4535 = vmatprep.subr.bf16.mxu0 0
      %4536 = vmatpush1.bf16.msra.mxu0 0
      %4537 = vmatprep.subr.bf16.mxu0 0
      %4538 = vmatpush1.bf16.msra.mxu0 0
      %4539 = vmatprep.subr.bf16.mxu0 0
      %4540 = vmatpush1.bf16.msra.mxu0 0
      %4541 = vmatprep.mubr.bf16.mxu0 0
      %4542 = vmatmul.mubr.bf16.gmra.mrb[0].mxu0 %v4501
      %v4543 = vpop.f32.mrb[0].mxu0
      %v4544 = vadd.f32 %v4476, %v4543
      %v4545 = vpop.f32.mrb[0].mxu0
      %v4546 = vpop.f32.mrb[0].mxu0
      %v4547 = vadd.f32 %v4479, %v4546
      %v4548 = vpop.f32.mrb[0].mxu0
      %4549 = vmatprep.mubr.bf16.mxu0 0
      %4550 = vmatmul.mubr.bf16.gmra.mrb[0].mxu0 %v4504
      %v4551 = vpop.f32.mrb[0].mxu0
      %v4552 = vadd.f32 %v4484, %v4551
      %v4553 = vpop.f32.mrb[0].mxu0
      %v4554 = vpop.f32.mrb[0].mxu0
      %v4555 = vadd.f32 %v4487, %v4554
      %v4556 = vpop.f32.mrb[0].mxu0
      %4557 = vdwg.mxu0
      %v4558 = vld [vmem:[#allocation2 + $0x8] sm:$0x30]
      %v4559 = vld [vmem:[#allocation2 + $0x28] sm:$0x30]
      %v4560 = vld [vmem:[#allocation2 + $0x48] sm:$0x30]
      %s4561 = scalar_lea.vmem %s5, 320
      %v4562 = vld [vmem:[%s4561] sm:$0xf]
      %v4563 = vld [vmem:[%s4561 + $0x4] sm:$0xf]
      %v4564 = vld [vmem:[%s4561 + $0x8] sm:$0xf]
      %v4565 = vld [vmem:[%s4561 + $0xc] sm:$0xf]
      %v4566 = vld [vmem:[%s4561 + $0x10] sm:$0xf]
      %v4567 = vld [vmem:[%s4561 + $0x14] sm:$0xf]
      %v4568 = vld [vmem:[%s4561 + $0x18] sm:$0xf]
      %v4569 = vld [vmem:[%s4561 + $0x1c] sm:$0xf]
      %v4570 = vld [vmem:[%s4561 + $0x20] sm:$0xf]
      %v4571 = vld [vmem:[%s4561 + $0x24] sm:$0xf]
      %v4572 = vld [vmem:[%s4561 + $0x28] sm:$0xf]
      %v4573 = vld [vmem:[%s4561 + $0x2c] sm:$0xf]
      %v4574 = vld [vmem:[%s4561 + $0x30] sm:$0xf]
      %v4575 = vld [vmem:[%s4561 + $0x34] sm:$0xf]
      %v4576 = vld [vmem:[%s4561 + $0x38] sm:$0xf]
      %v4577 = vld [vmem:[%s4561 + $0x3c] sm:$0xf]
      %v4578 = vunpack.c.l.bf16 %v4562
      %v4579 = vunpack.c.l.bf16 %v4563
      %v4580 = vunpack.c.l.bf16 %v4564
      %v4581 = vunpack.c.l.bf16 %v4565
      %v4582 = vunpack.c.l.bf16 %v4566
      %v4583 = vunpack.c.l.bf16 %v4567
      %v4584 = vunpack.c.l.bf16 %v4568
      %v4585 = vunpack.c.l.bf16 %v4569
      %v4586 = vunpack.c.l.bf16 %v4570
      %v4587 = vunpack.c.l.bf16 %v4571
      %v4588 = vunpack.c.l.bf16 %v4572
      %v4589 = vunpack.c.l.bf16 %v4573
      %v4590 = vunpack.c.l.bf16 %v4574
      %v4591 = vunpack.c.l.bf16 %v4575
      %v4592 = vunpack.c.l.bf16 %v4576
      %v4593 = vunpack.c.l.bf16 %v4577
      %v4595 = vrot.slane %v4559, 4
      %4597 = vxpose.xlu0.c.b16.start [1/8] %v4595, 128
      %4598 = vxpose.xlu0.c.b16.cont [2/8] 0, 128
      %4599 = vxpose.xlu0.c.b16.cont [3/8] 0, 128
      %4600 = vxpose.xlu0.c.b16.cont [4/8] 0, 128
      %4601 = vxpose.xlu0.c.b16.cont [5/8] 0, 128
      %4602 = vxpose.xlu0.c.b16.cont [6/8] 0, 128
      %4603 = vxpose.xlu0.c.b16.cont [7/8] 0, 128
      %4604 = vxpose.xlu0.c.b16.end [8/8] 0, 128
      %v4605 = vpop.trf.xlu0
      %v4606 = vpop.trf.xlu0
      %v4607 = vpop.trf.xlu0
      %v4608 = vpop.trf.xlu0
      %v4609 = vpop.trf.xlu0
      %v4610 = vpop.trf.xlu0
      %v4611 = vpop.trf.xlu0
      %v4612 = vpop.trf.xlu0
      %v4614 = vrot.slane %v4558, 4
      %v4616 = vsel %vm602, %v4605, 0
      %v4619 = vsel %vm602, %v4606, 0
      %v4622 = vsel %vm602, %v4607, 0
      %v4625 = vsel %vm602, %v4608, 0
      %v4628 = vsel %vm602, %v4609, 0
      %v4631 = vsel %vm602, %v4610, 0
      %v4634 = vsel %vm602, %v4611, 0
      %v4637 = vsel %vm602, %v4612, 0
      %v4640 = vsel %vm627, %v4614, 0
      %4642 = vmatprep.subr.bf16.mxu0 0
      %4643 = vmatpush1.bf16.msra.mxu0 %v4640
      %4644 = vmatprep.subr.bf16.mxu0 0
      %4645 = vmatpush1.bf16.msra.mxu0 0
      %4646 = vmatprep.subr.bf16.mxu0 0
      %4647 = vmatpush1.bf16.msra.mxu0 0
      %4648 = vmatprep.subr.bf16.mxu0 0
      %4649 = vmatpush1.bf16.msra.mxu0 0
      %4650 = vmatprep.subr.bf16.mxu0 0
      %4651 = vmatpush1.bf16.msra.mxu0 0
      %4652 = vmatprep.subr.bf16.mxu0 0
      %4653 = vmatpush1.bf16.msra.mxu0 0
      %4654 = vmatprep.subr.bf16.mxu0 0
      %4655 = vmatpush1.bf16.msra.mxu0 0
      %4656 = vmatprep.subr.bf16.mxu0 0
      %4657 = vmatpush1.bf16.msra.mxu0 0
      %4658 = vmatprep.subr.bf16.mxu0 0
      %4659 = vmatpush1.bf16.msra.mxu0 0
      %4660 = vmatprep.subr.bf16.mxu0 0
      %4661 = vmatpush1.bf16.msra.mxu0 0
      %4662 = vmatprep.subr.bf16.mxu0 0
      %4663 = vmatpush1.bf16.msra.mxu0 0
      %4664 = vmatprep.subr.bf16.mxu0 0
      %4665 = vmatpush1.bf16.msra.mxu0 0
      %4666 = vmatprep.subr.bf16.mxu0 0
      %4667 = vmatpush1.bf16.msra.mxu0 0
      %4668 = vmatprep.subr.bf16.mxu0 0
      %4669 = vmatpush1.bf16.msra.mxu0 0
      %4670 = vmatprep.subr.bf16.mxu0 0
      %4671 = vmatpush1.bf16.msra.mxu0 0
      %4672 = vmatprep.subr.bf16.mxu0 0
      %4673 = vmatpush1.bf16.msra.mxu0 0
      %4674 = vmatprep.mubr.bf16.mxu0 0
      %4675 = vmatmul.mubr.bf16.gmra.mrb[0].mxu0 %v4616
      %v4676 = vpop.f32.mrb[0].mxu0
      %v4677 = vadd.f32 %v4578, %v4676
      %v4678 = vpop.f32.mrb[0].mxu0
      %v4679 = vpop.f32.mrb[0].mxu0
      %v4680 = vadd.f32 %v4579, %v4679
      %v4681 = vpop.f32.mrb[0].mxu0
      %4682 = vmatprep.mubr.bf16.mxu0 0
      %4683 = vmatmul.mubr.bf16.gmra.mrb[0].mxu0 %v4619
      %v4684 = vpop.f32.mrb[0].mxu0
      %v4685 = vadd.f32 %v4580, %v4684
      %v4686 = vpop.f32.mrb[0].mxu0
      %v4687 = vpop.f32.mrb[0].mxu0
      %v4688 = vadd.f32 %v4581, %v4687
      %v4689 = vpop.f32.mrb[0].mxu0
      %4690 = vmatprep.mubr.bf16.mxu0 0
      %4691 = vmatmul.mubr.bf16.gmra.mrb[0].mxu0 %v4622
      %v4692 = vpop.f32.mrb[0].mxu0
      %v4693 = vadd.f32 %v4582, %v4692
      %v4694 = vpop.f32.mrb[0].mxu0
      %v4695 = vpop.f32.mrb[0].mxu0
      %v4696 = vadd.f32 %v4583, %v4695
      %v4697 = vpop.f32.mrb[0].mxu0
      %4698 = vmatprep.mubr.bf16.mxu0 0
      %4699 = vmatmul.mubr.bf16.gmra.mrb[0].mxu0 %v4625
      %v4700 = vpop.f32.mrb[0].mxu0
      %v4701 = vadd.f32 %v4584, %v4700
      %v4702 = vpop.f32.mrb[0].mxu0
      %v4703 = vpop.f32.mrb[0].mxu0
      %v4704 = vadd.f32 %v4585, %v4703
      %v4705 = vpop.f32.mrb[0].mxu0
      %4706 = vmatprep.mubr.bf16.mxu0 0
      %4707 = vmatmul.mubr.bf16.gmra.mrb[0].mxu0 %v4628
      %v4708 = vpop.f32.mrb[0].mxu0
      %v4709 = vadd.f32 %v4586, %v4708
      %v4710 = vpop.f32.mrb[0].mxu0
      %v4711 = vpop.f32.mrb[0].mxu0
      %v4712 = vadd.f32 %v4587, %v4711
      %v4713 = vpop.f32.mrb[0].mxu0
      %4714 = vmatprep.mubr.bf16.mxu0 0
      %4715 = vmatmul.mubr.bf16.gmra.mrb[0].mxu0 %v4631
      %v4716 = vpop.f32.mrb[0].mxu0
      %v4717 = vadd.f32 %v4588, %v4716
      %v4718 = vpop.f32.mrb[0].mxu0
      %v4719 = vpop.f32.mrb[0].mxu0
      %v4720 = vadd.f32 %v4589, %v4719
      %v4721 = vpop.f32.mrb[0].mxu0
      %4722 = vmatprep.mubr.bf16.mxu0 0
      %4723 = vmatmul.mubr.bf16.gmra.mrb[0].mxu0 %v4634
      %v4724 = vpop.f32.mrb[0].mxu0
      %v4725 = vadd.f32 %v4590, %v4724
      %v4726 = vpop.f32.mrb[0].mxu0
      %v4727 = vpop.f32.mrb[0].mxu0
      %v4728 = vadd.f32 %v4591, %v4727
      %v4729 = vpop.f32.mrb[0].mxu0
      %4730 = vmatprep.mubr.bf16.mxu0 0
      %4731 = vmatmul.mubr.bf16.gmra.mrb[0].mxu0 %v4637
      %v4732 = vpop.f32.mrb[0].mxu0
      %v4733 = vadd.f32 %v4592, %v4732
      %v4734 = vpop.f32.mrb[0].mxu0
      %v4735 = vpop.f32.mrb[0].mxu0
      %v4736 = vadd.f32 %v4593, %v4735
      %v4737 = vpop.f32.mrb[0].mxu0
      %4738 = vdwg.mxu0
      %v4739 = vmax.f32 %v4677, %v4693
      %v4740 = vmax.f32 %v4680, %v4696
      %v4741 = vmax.f32 %v4685, %v4701
      %v4742 = vmax.f32 %v4688, %v4704
      %v4743 = vmax.f32 %v4739, %v4709
      %v4744 = vmax.f32 %v4740, %v4712
      %v4745 = vmax.f32 %v4741, %v4717
      %v4746 = vmax.f32 %v4742, %v4720
      %v4747 = vmax.f32 %v4743, %v4725
      %v4748 = vmax.f32 %v4744, %v4728
      %v4749 = vmax.f32 %v4745, %v4733
      %v4750 = vmax.f32 %v4746, %v4736
      %v4751 = vmax.f32 %v4747, %v4748
      %v4752 = vmax.f32 %v4749, %v4750
      %v4753 = vmax.f32 %v4751, %v4752
      %v4754 = vrot.slane %v4753, 4
      %v4755 = vmax.f32 %v4753, %v4754
      %v4756 = vrot.slane %v4755, 2
      %v4757 = vmax.f32 %v4755, %v4756
      %v4758 = vrot.slane %v4757, 1
      %v4759 = vmax.f32 %v4757, %v4758
      %v4760 = vsub.f32 %v4677, %v4759
      %v4761 = vsub.f32 %v4680, %v4759
      %v4762 = vsub.f32 %v4685, %v4759
      %v4763 = vsub.f32 %v4688, %v4759
      %v4764 = vsub.f32 %v4693, %v4759
      %v4765 = vsub.f32 %v4696, %v4759
      %v4766 = vsub.f32 %v4701, %v4759
      %v4767 = vsub.f32 %v4704, %v4759
      %v4768 = vsub.f32 %v4709, %v4759
      %v4769 = vsub.f32 %v4712, %v4759
      %v4770 = vsub.f32 %v4717, %v4759
      %v4771 = vsub.f32 %v4720, %v4759
      %v4772 = vsub.f32 %v4725, %v4759
      %v4773 = vsub.f32 %v4728, %v4759
      %v4774 = vsub.f32 %v4733, %v4759
      %v4775 = vsub.f32 %v4736, %v4759
      %v4776 = vmul.f32 %v4760, 1.442695
      %v4777 = vpow.pop %v4776
      %v4778 = vmul.f32 %v4761, 1.442695
      %v4779 = vpow.pop %v4778
      %v4780 = vmul.f32 %v4762, 1.442695
      %v4781 = vpow.pop %v4780
      %v4782 = vmul.f32 %v4763, 1.442695
      %v4783 = vpow.pop %v4782
      %v4784 = vmul.f32 %v4764, 1.442695
      %v4785 = vpow.pop %v4784
      %v4786 = vmul.f32 %v4765, 1.442695
      %v4787 = vpow.pop %v4786
      %v4788 = vmul.f32 %v4766, 1.442695
      %v4789 = vpow.pop %v4788
      %v4790 = vmul.f32 %v4767, 1.442695
      %v4791 = vpow.pop %v4790
      %v4792 = vmul.f32 %v4768, 1.442695
      %v4793 = vpow.pop %v4792
      %v4794 = vmul.f32 %v4769, 1.442695
      %v4795 = vpow.pop %v4794
      %v4796 = vmul.f32 %v4770, 1.442695
      %v4797 = vpow.pop %v4796
      %v4798 = vmul.f32 %v4771, 1.442695
      %v4799 = vpow.pop %v4798
      %v4800 = vmul.f32 %v4772, 1.442695
      %v4801 = vpow.pop %v4800
      %v4802 = vmul.f32 %v4773, 1.442695
      %v4803 = vpow.pop %v4802
      %v4804 = vmul.f32 %v4774, 1.442695
      %v4805 = vpow.pop %v4804
      %v4806 = vmul.f32 %v4775, 1.442695
      %v4807 = vpow.pop %v4806
      %v4808 = vadd.f32 %v4777, %v4779
      %v4809 = vadd.f32 %v4808, %v4781
      %v4810 = vadd.f32 %v4809, %v4783
      %v4811 = vadd.f32 %v4810, %v4785
      %v4812 = vadd.f32 %v4811, %v4787
      %v4813 = vadd.f32 %v4812, %v4789
      %v4814 = vadd.f32 %v4813, %v4791
      %v4815 = vadd.f32 %v4814, %v4793
      %v4816 = vadd.f32 %v4815, %v4795
      %v4817 = vadd.f32 %v4816, %v4797
      %v4818 = vadd.f32 %v4817, %v4799
      %v4819 = vadd.f32 %v4818, %v4801
      %v4820 = vadd.f32 %v4819, %v4803
      %v4821 = vadd.f32 %v4820, %v4805
      %v4822 = vadd.f32 %v4821, %v4807
      %v4823 = vrot.slane %v4822, 4
      %v4824 = vadd.f32 %v4822, %v4823
      %v4825 = vrot.slane %v4824, 2
      %v4826 = vadd.f32 %v4824, %v4825
      %v4827 = vrot.slane %v4826, 1
      %v4828 = vadd.f32 %v4826, %v4827
      %v4829 = vpack.c.bf16 %v4779, %v4777
      %v4830 = vpack.c.bf16 %v4783, %v4781
      %v4831 = vpack.c.bf16 %v4787, %v4785
      %v4832 = vpack.c.bf16 %v4791, %v4789
      %v4833 = vpack.c.bf16 %v4795, %v4793
      %v4834 = vpack.c.bf16 %v4799, %v4797
      %v4835 = vpack.c.bf16 %v4803, %v4801
      %v4836 = vpack.c.bf16 %v4807, %v4805
      %v4838 = vrot.slane %v4560, 4
      %4840 = vmatprep.subr.bf16.mxu0 0
      %4841 = vmatpush1.bf16.msra.mxu0 %v4829
      %4842 = vmatprep.subr.bf16.mxu0 0
      %4843 = vmatpush1.bf16.msra.mxu0 %v4830
      %4844 = vmatprep.subr.bf16.mxu0 0
      %4845 = vmatpush1.bf16.msra.mxu0 %v4831
      %4846 = vmatprep.subr.bf16.mxu0 0
      %4847 = vmatpush1.bf16.msra.mxu0 %v4832
      %4848 = vmatprep.subr.bf16.mxu0 0
      %4849 = vmatpush1.bf16.msra.mxu0 %v4833
      %4850 = vmatprep.subr.bf16.mxu0 0
      %4851 = vmatpush1.bf16.msra.mxu0 %v4834
      %4852 = vmatprep.subr.bf16.mxu0 0
      %4853 = vmatpush1.bf16.msra.mxu0 %v4835
      %4854 = vmatprep.subr.bf16.mxu0 0
      %4855 = vmatpush1.bf16.msra.mxu0 %v4836
      %4856 = vmatprep.subr.bf16.mxu0 0
      %4857 = vmatpush1.bf16.msra.mxu0 0
      %4858 = vmatprep.subr.bf16.mxu0 0
      %4859 = vmatpush1.bf16.msra.mxu0 0
      %4860 = vmatprep.subr.bf16.mxu0 0
      %4861 = vmatpush1.bf16.msra.mxu0 0
      %4862 = vmatprep.subr.bf16.mxu0 0
      %4863 = vmatpush1.bf16.msra.mxu0 0
      %4864 = vmatprep.subr.bf16.mxu0 0
      %4865 = vmatpush1.bf16.msra.mxu0 0
      %4866 = vmatprep.subr.bf16.mxu0 0
      %4867 = vmatpush1.bf16.msra.mxu0 0
      %4868 = vmatprep.subr.bf16.mxu0 0
      %4869 = vmatpush1.bf16.msra.mxu0 0
      %4870 = vmatprep.subr.bf16.mxu0 0
      %4871 = vmatpush1.bf16.msra.mxu0 0
      %4872 = vmatprep.mubr.bf16.mxu0 0
      %4873 = vmatmul.mubr.bf16.gmra.mrb[0].mxu0 %v4838
      %v4874 = vpop.f32.mrb[0].mxu0
      %v4875 = vadd.f32 0.0, %v4874
      %v4876 = vpop.f32.mrb[0].mxu0
      %v4877 = vpop.f32.mrb[0].mxu0
      %v4878 = vpop.f32.mrb[0].mxu0
      %4879 = vdwg.mxu0
      %v4880 = vrcp.pop %v4828
      %v4881 = vmul.f32 %v4875, %v4880
      %v4882 = vld [vmem:[%s1663] sm:$0xf]
      %v4883 = vld [vmem:[%s1663 + $0x4] sm:$0xf]
      %v4884 = vld [vmem:[%s1663 + $0x8] sm:$0xf]
      %v4885 = vld [vmem:[%s1663 + $0xc] sm:$0xf]
      %v4886 = vpack.c.bf16 %v4881, %v4881
      %v4891 = vunpack.c.l.b16 %v4882
      %v4892 = vunpack.c.l.b16 %v4883
      %v4893 = vunpack.c.l.b16 %v4884
      %v4894 = vunpack.c.l.b16 %v4885
      %v4895 = vpack.c.b16 %v4892, %v4891
      %v4896 = vpack.c.b16 %v4894, %v4893
      %v4898 = vsel %vm602, %v4895, 0
      %v4901 = vsel %vm602, %v4896, 0
      %v4904 = vsel %vm627, %v4886, 0
      %4906 = vmatprep.subr.bf16.mxu0 0
      %4907 = vmatpush1.bf16.msra.mxu0 %v4904
      %4908 = vmatprep.subr.bf16.mxu0 0
      %4909 = vmatpush1.bf16.msra.mxu0 0
      %4910 = vmatprep.subr.bf16.mxu0 0
      %4911 = vmatpush1.bf16.msra.mxu0 0
      %4912 = vmatprep.subr.bf16.mxu0 0
      %4913 = vmatpush1.bf16.msra.mxu0 0
      %4914 = vmatprep.subr.bf16.mxu0 0
      %4915 = vmatpush1.bf16.msra.mxu0 0
      %4916 = vmatprep.subr.bf16.mxu0 0
      %4917 = vmatpush1.bf16.msra.mxu0 0
      %4918 = vmatprep.subr.bf16.mxu0 0
      %4919 = vmatpush1.bf16.msra.mxu0 0
      %4920 = vmatprep.subr.bf16.mxu0 0
      %4921 = vmatpush1.bf16.msra.mxu0 0
      %4922 = vmatprep.subr.bf16.mxu0 0
      %4923 = vmatpush1.bf16.msra.mxu0 0
      %4924 = vmatprep.subr.bf16.mxu0 0
      %4925 = vmatpush1.bf16.msra.mxu0 0
      %4926 = vmatprep.subr.bf16.mxu0 0
      %4927 = vmatpush1.bf16.msra.mxu0 0
      %4928 = vmatprep.subr.bf16.mxu0 0
      %4929 = vmatpush1.bf16.msra.mxu0 0
      %4930 = vmatprep.subr.bf16.mxu0 0
      %4931 = vmatpush1.bf16.msra.mxu0 0
      %4932 = vmatprep.subr.bf16.mxu0 0
      %4933 = vmatpush1.bf16.msra.mxu0 0
      %4934 = vmatprep.subr.bf16.mxu0 0
      %4935 = vmatpush1.bf16.msra.mxu0 0
      %4936 = vmatprep.subr.bf16.mxu0 0
      %4937 = vmatpush1.bf16.msra.mxu0 0
      %4938 = vmatprep.mubr.bf16.mxu0 0
      %4939 = vmatmul.mubr.bf16.gmra.mrb[0].mxu0 %v4898
      %v4940 = vpop.f32.mrb[0].mxu0
      %v4941 = vadd.f32 0.0, %v4940
      %v4942 = vpop.f32.mrb[0].mxu0
      %v4943 = vpop.f32.mrb[0].mxu0
      %v4944 = vadd.f32 0.0, %v4943
      %v4945 = vpop.f32.mrb[0].mxu0
      %4946 = vmatprep.mubr.bf16.mxu0 0
      %4947 = vmatmul.mubr.bf16.gmra.mrb[0].mxu0 %v4901
      %v4948 = vpop.f32.mrb[0].mxu0
      %v4949 = vadd.f32 0.0, %v4948
      %v4950 = vpop.f32.mrb[0].mxu0
      %v4951 = vpop.f32.mrb[0].mxu0
      %v4952 = vadd.f32 0.0, %v4951
      %v4953 = vpop.f32.mrb[0].mxu0
      %4954 = vdwg.mxu0
      %v4955 = vadd.f32 %v4544, %v4941
      %v4956 = vadd.f32 %v4547, %v4944
      %v4957 = vadd.f32 %v4552, %v4949
      %v4958 = vadd.f32 %v4555, %v4952
      %v4959 = vld [vmem:[#allocation2 + $0x8] sm:$0xc0]
      %v4960 = vld [vmem:[#allocation2 + $0x28] sm:$0xc0]
      %v4961 = vld [vmem:[#allocation2 + $0x48] sm:$0xc0]
      %s4962 = scalar_lea.vmem %s5, 448
      %v4963 = vld [vmem:[%s4962] sm:$0xf]
      %v4964 = vld [vmem:[%s4962 + $0x4] sm:$0xf]
      %v4965 = vld [vmem:[%s4962 + $0x8] sm:$0xf]
      %v4966 = vld [vmem:[%s4962 + $0xc] sm:$0xf]
      %v4967 = vld [vmem:[%s4962 + $0x10] sm:$0xf]
      %v4968 = vld [vmem:[%s4962 + $0x14] sm:$0xf]
      %v4969 = vld [vmem:[%s4962 + $0x18] sm:$0xf]
      %v4970 = vld [vmem:[%s4962 + $0x1c] sm:$0xf]
      %v4971 = vld [vmem:[%s4962 + $0x20] sm:$0xf]
      %v4972 = vld [vmem:[%s4962 + $0x24] sm:$0xf]
      %v4973 = vld [vmem:[%s4962 + $0x28] sm:$0xf]
      %v4974 = vld [vmem:[%s4962 + $0x2c] sm:$0xf]
      %v4975 = vld [vmem:[%s4962 + $0x30] sm:$0xf]
      %v4976 = vld [vmem:[%s4962 + $0x34] sm:$0xf]
      %v4977 = vld [vmem:[%s4962 + $0x38] sm:$0xf]
      %v4978 = vld [vmem:[%s4962 + $0x3c] sm:$0xf]
      %v4979 = vunpack.c.l.bf16 %v4963
      %v4980 = vunpack.c.l.bf16 %v4964
      %v4981 = vunpack.c.l.bf16 %v4965
      %v4982 = vunpack.c.l.bf16 %v4966
      %v4983 = vunpack.c.l.bf16 %v4967
      %v4984 = vunpack.c.l.bf16 %v4968
      %v4985 = vunpack.c.l.bf16 %v4969
      %v4986 = vunpack.c.l.bf16 %v4970
      %v4987 = vunpack.c.l.bf16 %v4971
      %v4988 = vunpack.c.l.bf16 %v4972
      %v4989 = vunpack.c.l.bf16 %v4973
      %v4990 = vunpack.c.l.bf16 %v4974
      %v4991 = vunpack.c.l.bf16 %v4975
      %v4992 = vunpack.c.l.bf16 %v4976
      %v4993 = vunpack.c.l.bf16 %v4977
      %v4994 = vunpack.c.l.bf16 %v4978
      %v4996 = vrot.slane %v4960, 6
      %4998 = vxpose.xlu0.c.b16.start [1/8] %v4996, 128
      %4999 = vxpose.xlu0.c.b16.cont [2/8] 0, 128
      %5000 = vxpose.xlu0.c.b16.cont [3/8] 0, 128
      %5001 = vxpose.xlu0.c.b16.cont [4/8] 0, 128
      %5002 = vxpose.xlu0.c.b16.cont [5/8] 0, 128
      %5003 = vxpose.xlu0.c.b16.cont [6/8] 0, 128
      %5004 = vxpose.xlu0.c.b16.cont [7/8] 0, 128
      %5005 = vxpose.xlu0.c.b16.end [8/8] 0, 128
      %v5006 = vpop.trf.xlu0
      %v5007 = vpop.trf.xlu0
      %v5008 = vpop.trf.xlu0
      %v5009 = vpop.trf.xlu0
      %v5010 = vpop.trf.xlu0
      %v5011 = vpop.trf.xlu0
      %v5012 = vpop.trf.xlu0
      %v5013 = vpop.trf.xlu0
      %v5015 = vrot.slane %v4959, 6
      %v5017 = vsel %vm602, %v5006, 0
      %v5020 = vsel %vm602, %v5007, 0
      %v5023 = vsel %vm602, %v5008, 0
      %v5026 = vsel %vm602, %v5009, 0
      %v5029 = vsel %vm602, %v5010, 0
      %v5032 = vsel %vm602, %v5011, 0
      %v5035 = vsel %vm602, %v5012, 0
      %v5038 = vsel %vm602, %v5013, 0
      %v5041 = vsel %vm627, %v5015, 0
      %5043 = vmatprep.subr.bf16.mxu0 0
      %5044 = vmatpush1.bf16.msra.mxu0 %v5041
      %5045 = vmatprep.subr.bf16.mxu0 0
      %5046 = vmatpush1.bf16.msra.mxu0 0
      %5047 = vmatprep.subr.bf16.mxu0 0
      %5048 = vmatpush1.bf16.msra.mxu0 0
      %5049 = vmatprep.subr.bf16.mxu0 0
      %5050 = vmatpush1.bf16.msra.mxu0 0
      %5051 = vmatprep.subr.bf16.mxu0 0
      %5052 = vmatpush1.bf16.msra.mxu0 0
      %5053 = vmatprep.subr.bf16.mxu0 0
      %5054 = vmatpush1.bf16.msra.mxu0 0
      %5055 = vmatprep.subr.bf16.mxu0 0
      %5056 = vmatpush1.bf16.msra.mxu0 0
      %5057 = vmatprep.subr.bf16.mxu0 0
      %5058 = vmatpush1.bf16.msra.mxu0 0
      %5059 = vmatprep.subr.bf16.mxu0 0
      %5060 = vmatpush1.bf16.msra.mxu0 0
      %5061 = vmatprep.subr.bf16.mxu0 0
      %5062 = vmatpush1.bf16.msra.mxu0 0
      %5063 = vmatprep.subr.bf16.mxu0 0
      %5064 = vmatpush1.bf16.msra.mxu0 0
      %5065 = vmatprep.subr.bf16.mxu0 0
      %5066 = vmatpush1.bf16.msra.mxu0 0
      %5067 = vmatprep.subr.bf16.mxu0 0
      %5068 = vmatpush1.bf16.msra.mxu0 0
      %5069 = vmatprep.subr.bf16.mxu0 0
      %5070 = vmatpush1.bf16.msra.mxu0 0
      %5071 = vmatprep.subr.bf16.mxu0 0
      %5072 = vmatpush1.bf16.msra.mxu0 0
      %5073 = vmatprep.subr.bf16.mxu0 0
      %5074 = vmatpush1.bf16.msra.mxu0 0
      %5075 = vmatprep.mubr.bf16.mxu0 0
      %5076 = vmatmul.mubr.bf16.gmra.mrb[0].mxu0 %v5017
      %v5077 = vpop.f32.mrb[0].mxu0
      %v5078 = vadd.f32 %v4979, %v5077
      %v5079 = vpop.f32.mrb[0].mxu0
      %v5080 = vpop.f32.mrb[0].mxu0
      %v5081 = vadd.f32 %v4980, %v5080
      %v5082 = vpop.f32.mrb[0].mxu0
      %5083 = vmatprep.mubr.bf16.mxu0 0
      %5084 = vmatmul.mubr.bf16.gmra.mrb[0].mxu0 %v5020
      %v5085 = vpop.f32.mrb[0].mxu0
      %v5086 = vadd.f32 %v4981, %v5085
      %v5087 = vpop.f32.mrb[0].mxu0
      %v5088 = vpop.f32.mrb[0].mxu0
      %v5089 = vadd.f32 %v4982, %v5088
      %v5090 = vpop.f32.mrb[0].mxu0
      %5091 = vmatprep.mubr.bf16.mxu0 0
      %5092 = vmatmul.mubr.bf16.gmra.mrb[0].mxu0 %v5023
      %v5093 = vpop.f32.mrb[0].mxu0
      %v5094 = vadd.f32 %v4983, %v5093
      %v5095 = vpop.f32.mrb[0].mxu0
      %v5096 = vpop.f32.mrb[0].mxu0
      %v5097 = vadd.f32 %v4984, %v5096
      %v5098 = vpop.f32.mrb[0].mxu0
      %5099 = vmatprep.mubr.bf16.mxu0 0
      %5100 = vmatmul.mubr.bf16.gmra.mrb[0].mxu0 %v5026
      %v5101 = vpop.f32.mrb[0].mxu0
      %v5102 = vadd.f32 %v4985, %v5101
      %v5103 = vpop.f32.mrb[0].mxu0
      %v5104 = vpop.f32.mrb[0].mxu0
      %v5105 = vadd.f32 %v4986, %v5104
      %v5106 = vpop.f32.mrb[0].mxu0
      %5107 = vmatprep.mubr.bf16.mxu0 0
      %5108 = vmatmul.mubr.bf16.gmra.mrb[0].mxu0 %v5029
      %v5109 = vpop.f32.mrb[0].mxu0
      %v5110 = vadd.f32 %v4987, %v5109
      %v5111 = vpop.f32.mrb[0].mxu0
      %v5112 = vpop.f32.mrb[0].mxu0
      %v5113 = vadd.f32 %v4988, %v5112
      %v5114 = vpop.f32.mrb[0].mxu0
      %5115 = vmatprep.mubr.bf16.mxu0 0
      %5116 = vmatmul.mubr.bf16.gmra.mrb[0].mxu0 %v5032
      %v5117 = vpop.f32.mrb[0].mxu0
      %v5118 = vadd.f32 %v4989, %v5117
      %v5119 = vpop.f32.mrb[0].mxu0
      %v5120 = vpop.f32.mrb[0].mxu0
      %v5121 = vadd.f32 %v4990, %v5120
      %v5122 = vpop.f32.mrb[0].mxu0
      %5123 = vmatprep.mubr.bf16.mxu0 0
      %5124 = vmatmul.mubr.bf16.gmra.mrb[0].mxu0 %v5035
      %v5125 = vpop.f32.mrb[0].mxu0
      %v5126 = vadd.f32 %v4991, %v5125
      %v5127 = vpop.f32.mrb[0].mxu0
      %v5128 = vpop.f32.mrb[0].mxu0
      %v5129 = vadd.f32 %v4992, %v5128
      %v5130 = vpop.f32.mrb[0].mxu0
      %5131 = vmatprep.mubr.bf16.mxu0 0
      %5132 = vmatmul.mubr.bf16.gmra.mrb[0].mxu0 %v5038
      %v5133 = vpop.f32.mrb[0].mxu0
      %v5134 = vadd.f32 %v4993, %v5133
      %v5135 = vpop.f32.mrb[0].mxu0
      %v5136 = vpop.f32.mrb[0].mxu0
      %v5137 = vadd.f32 %v4994, %v5136
      %v5138 = vpop.f32.mrb[0].mxu0
      %5139 = vdwg.mxu0
      %v5140 = vmax.f32 %v5078, %v5094
      %v5141 = vmax.f32 %v5081, %v5097
      %v5142 = vmax.f32 %v5086, %v5102
      %v5143 = vmax.f32 %v5089, %v5105
      %v5144 = vmax.f32 %v5140, %v5110
      %v5145 = vmax.f32 %v5141, %v5113
      %v5146 = vmax.f32 %v5142, %v5118
      %v5147 = vmax.f32 %v5143, %v5121
      %v5148 = vmax.f32 %v5144, %v5126
      %v5149 = vmax.f32 %v5145, %v5129
      %v5150 = vmax.f32 %v5146, %v5134
      %v5151 = vmax.f32 %v5147, %v5137
      %v5152 = vmax.f32 %v5148, %v5149
      %v5153 = vmax.f32 %v5150, %v5151
      %v5154 = vmax.f32 %v5152, %v5153
      %v5155 = vrot.slane %v5154, 4
      %v5156 = vmax.f32 %v5154, %v5155
      %v5157 = vrot.slane %v5156, 2
      %v5158 = vmax.f32 %v5156, %v5157
      %v5159 = vrot.slane %v5158, 1
      %v5160 = vmax.f32 %v5158, %v5159
      %v5161 = vsub.f32 %v5078, %v5160
      %v5162 = vsub.f32 %v5081, %v5160
      %v5163 = vsub.f32 %v5086, %v5160
      %v5164 = vsub.f32 %v5089, %v5160
      %v5165 = vsub.f32 %v5094, %v5160
      %v5166 = vsub.f32 %v5097, %v5160
      %v5167 = vsub.f32 %v5102, %v5160
      %v5168 = vsub.f32 %v5105, %v5160
      %v5169 = vsub.f32 %v5110, %v5160
      %v5170 = vsub.f32 %v5113, %v5160
      %v5171 = vsub.f32 %v5118, %v5160
      %v5172 = vsub.f32 %v5121, %v5160
      %v5173 = vsub.f32 %v5126, %v5160
      %v5174 = vsub.f32 %v5129, %v5160
      %v5175 = vsub.f32 %v5134, %v5160
      %v5176 = vsub.f32 %v5137, %v5160
      %v5177 = vmul.f32 %v5161, 1.442695
      %v5178 = vpow.pop %v5177
      %v5179 = vmul.f32 %v5162, 1.442695
      %v5180 = vpow.pop %v5179
      %v5181 = vmul.f32 %v5163, 1.442695
      %v5182 = vpow.pop %v5181
      %v5183 = vmul.f32 %v5164, 1.442695
      %v5184 = vpow.pop %v5183
      %v5185 = vmul.f32 %v5165, 1.442695
      %v5186 = vpow.pop %v5185
      %v5187 = vmul.f32 %v5166, 1.442695
      %v5188 = vpow.pop %v5187
      %v5189 = vmul.f32 %v5167, 1.442695
      %v5190 = vpow.pop %v5189
      %v5191 = vmul.f32 %v5168, 1.442695
      %v5192 = vpow.pop %v5191
      %v5193 = vmul.f32 %v5169, 1.442695
      %v5194 = vpow.pop %v5193
      %v5195 = vmul.f32 %v5170, 1.442695
      %v5196 = vpow.pop %v5195
      %v5197 = vmul.f32 %v5171, 1.442695
      %v5198 = vpow.pop %v5197
      %v5199 = vmul.f32 %v5172, 1.442695
      %v5200 = vpow.pop %v5199
      %v5201 = vmul.f32 %v5173, 1.442695
      %v5202 = vpow.pop %v5201
      %v5203 = vmul.f32 %v5174, 1.442695
      %v5204 = vpow.pop %v5203
      %v5205 = vmul.f32 %v5175, 1.442695
      %v5206 = vpow.pop %v5205
      %v5207 = vmul.f32 %v5176, 1.442695
      %v5208 = vpow.pop %v5207
      %v5209 = vadd.f32 %v5178, %v5180
      %v5210 = vadd.f32 %v5209, %v5182
      %v5211 = vadd.f32 %v5210, %v5184
      %v5212 = vadd.f32 %v5211, %v5186
      %v5213 = vadd.f32 %v5212, %v5188
      %v5214 = vadd.f32 %v5213, %v5190
      %v5215 = vadd.f32 %v5214, %v5192
      %v5216 = vadd.f32 %v5215, %v5194
      %v5217 = vadd.f32 %v5216, %v5196
      %v5218 = vadd.f32 %v5217, %v5198
      %v5219 = vadd.f32 %v5218, %v5200
      %v5220 = vadd.f32 %v5219, %v5202
      %v5221 = vadd.f32 %v5220, %v5204
      %v5222 = vadd.f32 %v5221, %v5206
      %v5223 = vadd.f32 %v5222, %v5208
      %v5224 = vrot.slane %v5223, 4
      %v5225 = vadd.f32 %v5223, %v5224
      %v5226 = vrot.slane %v5225, 2
      %v5227 = vadd.f32 %v5225, %v5226
      %v5228 = vrot.slane %v5227, 1
      %v5229 = vadd.f32 %v5227, %v5228
      %v5230 = vpack.c.bf16 %v5180, %v5178
      %v5231 = vpack.c.bf16 %v5184, %v5182
      %v5232 = vpack.c.bf16 %v5188, %v5186
      %v5233 = vpack.c.bf16 %v5192, %v5190
      %v5234 = vpack.c.bf16 %v5196, %v5194
      %v5235 = vpack.c.bf16 %v5200, %v5198
      %v5236 = vpack.c.bf16 %v5204, %v5202
      %v5237 = vpack.c.bf16 %v5208, %v5206
      %v5239 = vrot.slane %v4961, 6
      %5241 = vmatprep.subr.bf16.mxu0 0
      %5242 = vmatpush1.bf16.msra.mxu0 %v5230
      %5243 = vmatprep.subr.bf16.mxu0 0
      %5244 = vmatpush1.bf16.msra.mxu0 %v5231
      %5245 = vmatprep.subr.bf16.mxu0 0
      %5246 = vmatpush1.bf16.msra.mxu0 %v5232
      %5247 = vmatprep.subr.bf16.mxu0 0
      %5248 = vmatpush1.bf16.msra.mxu0 %v5233
      %5249 = vmatprep.subr.bf16.mxu0 0
      %5250 = vmatpush1.bf16.msra.mxu0 %v5234
      %5251 = vmatprep.subr.bf16.mxu0 0
      %5252 = vmatpush1.bf16.msra.mxu0 %v5235
      %5253 = vmatprep.subr.bf16.mxu0 0
      %5254 = vmatpush1.bf16.msra.mxu0 %v5236
      %5255 = vmatprep.subr.bf16.mxu0 0
      %5256 = vmatpush1.bf16.msra.mxu0 %v5237
      %5257 = vmatprep.subr.bf16.mxu0 0
      %5258 = vmatpush1.bf16.msra.mxu0 0
      %5259 = vmatprep.subr.bf16.mxu0 0
      %5260 = vmatpush1.bf16.msra.mxu0 0
      %5261 = vmatprep.subr.bf16.mxu0 0
      %5262 = vmatpush1.bf16.msra.mxu0 0
      %5263 = vmatprep.subr.bf16.mxu0 0
      %5264 = vmatpush1.bf16.msra.mxu0 0
      %5265 = vmatprep.subr.bf16.mxu0 0
      %5266 = vmatpush1.bf16.msra.mxu0 0
      %5267 = vmatprep.subr.bf16.mxu0 0
      %5268 = vmatpush1.bf16.msra.mxu0 0
      %5269 = vmatprep.subr.bf16.mxu0 0
      %5270 = vmatpush1.bf16.msra.mxu0 0
      %5271 = vmatprep.subr.bf16.mxu0 0
      %5272 = vmatpush1.bf16.msra.mxu0 0
      %5273 = vmatprep.mubr.bf16.mxu0 0
      %5274 = vmatmul.mubr.bf16.gmra.mrb[0].mxu0 %v5239
      %v5275 = vpop.f32.mrb[0].mxu0
      %v5276 = vadd.f32 0.0, %v5275
      %v5277 = vpop.f32.mrb[0].mxu0
      %v5278 = vpop.f32.mrb[0].mxu0
      %v5279 = vpop.f32.mrb[0].mxu0
      %5280 = vdwg.mxu0
      %v5281 = vrcp.pop %v5229
      %v5282 = vmul.f32 %v5276, %v5281
      %v5283 = vld [vmem:[%s2065] sm:$0xf]
      %v5284 = vld [vmem:[%s2065 + $0x4] sm:$0xf]
      %v5285 = vld [vmem:[%s2065 + $0x8] sm:$0xf]
      %v5286 = vld [vmem:[%s2065 + $0xc] sm:$0xf]
      %v5287 = vpack.c.bf16 %v5282, %v5282
      %v5292 = vunpack.c.l.b16 %v5283
      %v5293 = vunpack.c.l.b16 %v5284
      %v5294 = vunpack.c.l.b16 %v5285
      %v5295 = vunpack.c.l.b16 %v5286
      %v5296 = vpack.c.b16 %v5293, %v5292
      %v5297 = vpack.c.b16 %v5295, %v5294
      %v5299 = vsel %vm602, %v5296, 0
      %v5302 = vsel %vm602, %v5297, 0
      %v5305 = vsel %vm627, %v5287, 0
      %5307 = vmatprep.subr.bf16.mxu0 0
      %5308 = vmatpush1.bf16.msra.mxu0 %v5305
      %5309 = vmatprep.subr.bf16.mxu0 0
      %5310 = vmatpush1.bf16.msra.mxu0 0
      %5311 = vmatprep.subr.bf16.mxu0 0
      %5312 = vmatpush1.bf16.msra.mxu0 0
      %5313 = vmatprep.subr.bf16.mxu0 0
      %5314 = vmatpush1.bf16.msra.mxu0 0
      %5315 = vmatprep.subr.bf16.mxu0 0
      %5316 = vmatpush1.bf16.msra.mxu0 0
      %5317 = vmatprep.subr.bf16.mxu0 0
      %5318 = vmatpush1.bf16.msra.mxu0 0
      %5319 = vmatprep.subr.bf16.mxu0 0
      %5320 = vmatpush1.bf16.msra.mxu0 0
      %5321 = vmatprep.subr.bf16.mxu0 0
      %5322 = vmatpush1.bf16.msra.mxu0 0
      %5323 = vmatprep.subr.bf16.mxu0 0
      %5324 = vmatpush1.bf16.msra.mxu0 0
      %5325 = vmatprep.subr.bf16.mxu0 0
      %5326 = vmatpush1.bf16.msra.mxu0 0
      %5327 = vmatprep.subr.bf16.mxu0 0
      %5328 = vmatpush1.bf16.msra.mxu0 0
      %5329 = vmatprep.subr.bf16.mxu0 0
      %5330 = vmatpush1.bf16.msra.mxu0 0
      %5331 = vmatprep.subr.bf16.mxu0 0
      %5332 = vmatpush1.bf16.msra.mxu0 0
      %5333 = vmatprep.subr.bf16.mxu0 0
      %5334 = vmatpush1.bf16.msra.mxu0 0
      %5335 = vmatprep.subr.bf16.mxu0 0
      %5336 = vmatpush1.bf16.msra.mxu0 0
      %5337 = vmatprep.subr.bf16.mxu0 0
      %5338 = vmatpush1.bf16.msra.mxu0 0
      %5339 = vmatprep.mubr.bf16.mxu0 0
      %5340 = vmatmul.mubr.bf16.gmra.mrb[0].mxu0 %v5299
      %v5341 = vpop.f32.mrb[0].mxu0
      %v5342 = vadd.f32 0.0, %v5341
      %v5343 = vpop.f32.mrb[0].mxu0
      %v5344 = vpop.f32.mrb[0].mxu0
      %v5345 = vadd.f32 0.0, %v5344
      %v5346 = vpop.f32.mrb[0].mxu0
      %5347 = vmatprep.mubr.bf16.mxu0 0
      %5348 = vmatmul.mubr.bf16.gmra.mrb[0].mxu0 %v5302
      %v5349 = vpop.f32.mrb[0].mxu0
      %v5350 = vadd.f32 0.0, %v5349
      %v5351 = vpop.f32.mrb[0].mxu0
      %v5352 = vpop.f32.mrb[0].mxu0
      %v5353 = vadd.f32 0.0, %v5352
      %v5354 = vpop.f32.mrb[0].mxu0
      %5355 = vdwg.mxu0
      %v5356 = vadd.f32 %v4955, %v5342
      %v5357 = vadd.f32 %v4956, %v5345
      %v5358 = vadd.f32 %v4957, %v5350
      %v5359 = vadd.f32 %v4958, %v5353
      %v5360 = vld [vmem:[#allocation2 + $0x18] sm:$0x3]
      %v5361 = vld [vmem:[#allocation2 + $0x38] sm:$0x3]
      %v5362 = vld [vmem:[#allocation2 + $0x58] sm:$0x3]
      %s5363 = scalar_lea.vmem %s5, 576
      %v5364 = vld [vmem:[%s5363] sm:$0xf]
      %v5365 = vld [vmem:[%s5363 + $0x4] sm:$0xf]
      %v5366 = vld [vmem:[%s5363 + $0x8] sm:$0xf]
      %v5367 = vld [vmem:[%s5363 + $0xc] sm:$0xf]
      %v5368 = vld [vmem:[%s5363 + $0x10] sm:$0xf]
      %v5369 = vld [vmem:[%s5363 + $0x14] sm:$0xf]
      %v5370 = vld [vmem:[%s5363 + $0x18] sm:$0xf]
      %v5371 = vld [vmem:[%s5363 + $0x1c] sm:$0xf]
      %v5372 = vld [vmem:[%s5363 + $0x20] sm:$0xf]
      %v5373 = vld [vmem:[%s5363 + $0x24] sm:$0xf]
      %v5374 = vld [vmem:[%s5363 + $0x28] sm:$0xf]
      %v5375 = vld [vmem:[%s5363 + $0x2c] sm:$0xf]
      %v5376 = vld [vmem:[%s5363 + $0x30] sm:$0xf]
      %v5377 = vld [vmem:[%s5363 + $0x34] sm:$0xf]
      %v5378 = vld [vmem:[%s5363 + $0x38] sm:$0xf]
      %v5379 = vld [vmem:[%s5363 + $0x3c] sm:$0xf]
      %v5380 = vunpack.c.l.bf16 %v5364
      %v5381 = vunpack.c.l.bf16 %v5365
      %v5382 = vunpack.c.l.bf16 %v5366
      %v5383 = vunpack.c.l.bf16 %v5367
      %v5384 = vunpack.c.l.bf16 %v5368
      %v5385 = vunpack.c.l.bf16 %v5369
      %v5386 = vunpack.c.l.bf16 %v5370
      %v5387 = vunpack.c.l.bf16 %v5371
      %v5388 = vunpack.c.l.bf16 %v5372
      %v5389 = vunpack.c.l.bf16 %v5373
      %v5390 = vunpack.c.l.bf16 %v5374
      %v5391 = vunpack.c.l.bf16 %v5375
      %v5392 = vunpack.c.l.bf16 %v5376
      %v5393 = vunpack.c.l.bf16 %v5377
      %v5394 = vunpack.c.l.bf16 %v5378
      %v5395 = vunpack.c.l.bf16 %v5379
      %5396 = vxpose.xlu0.c.b16.start [1/8] %v5361, 128
      %5397 = vxpose.xlu0.c.b16.cont [2/8] 0, 128
      %5398 = vxpose.xlu0.c.b16.cont [3/8] 0, 128
      %5399 = vxpose.xlu0.c.b16.cont [4/8] 0, 128
      %5400 = vxpose.xlu0.c.b16.cont [5/8] 0, 128
      %5401 = vxpose.xlu0.c.b16.cont [6/8] 0, 128
      %5402 = vxpose.xlu0.c.b16.cont [7/8] 0, 128
      %5403 = vxpose.xlu0.c.b16.end [8/8] 0, 128
      %v5404 = vpop.trf.xlu0
      %v5405 = vpop.trf.xlu0
      %v5406 = vpop.trf.xlu0
      %v5407 = vpop.trf.xlu0
      %v5408 = vpop.trf.xlu0
      %v5409 = vpop.trf.xlu0
      %v5410 = vpop.trf.xlu0
      %v5411 = vpop.trf.xlu0
      %v5413 = vsel %vm602, %v5404, 0
      %v5416 = vsel %vm602, %v5405, 0
      %v5419 = vsel %vm602, %v5406, 0
      %v5422 = vsel %vm602, %v5407, 0
      %v5425 = vsel %vm602, %v5408, 0
      %v5428 = vsel %vm602, %v5409, 0
      %v5431 = vsel %vm602, %v5410, 0
      %v5434 = vsel %vm602, %v5411, 0
      %v5437 = vsel %vm627, %v5360, 0
      %5439 = vmatprep.subr.bf16.mxu0 0
      %5440 = vmatpush1.bf16.msra.mxu0 %v5437
      %5441 = vmatprep.subr.bf16.mxu0 0
      %5442 = vmatpush1.bf16.msra.mxu0 0
      %5443 = vmatprep.subr.bf16.mxu0 0
      %5444 = vmatpush1.bf16.msra.mxu0 0
      %5445 = vmatprep.subr.bf16.mxu0 0
      %5446 = vmatpush1.bf16.msra.mxu0 0
      %5447 = vmatprep.subr.bf16.mxu0 0
      %5448 = vmatpush1.bf16.msra.mxu0 0
      %5449 = vmatprep.subr.bf16.mxu0 0
      %5450 = vmatpush1.bf16.msra.mxu0 0
      %5451 = vmatprep.subr.bf16.mxu0 0
      %5452 = vmatpush1.bf16.msra.mxu0 0
      %5453 = vmatprep.subr.bf16.mxu0 0
      %5454 = vmatpush1.bf16.msra.mxu0 0
      %5455 = vmatprep.subr.bf16.mxu0 0
      %5456 = vmatpush1.bf16.msra.mxu0 0
      %5457 = vmatprep.subr.bf16.mxu0 0
      %5458 = vmatpush1.bf16.msra.mxu0 0
      %5459 = vmatprep.subr.bf16.mxu0 0
      %5460 = vmatpush1.bf16.msra.mxu0 0
      %5461 = vmatprep.subr.bf16.mxu0 0
      %5462 = vmatpush1.bf16.msra.mxu0 0
      %5463 = vmatprep.subr.bf16.mxu0 0
      %5464 = vmatpush1.bf16.msra.mxu0 0
      %5465 = vmatprep.subr.bf16.mxu0 0
      %5466 = vmatpush1.bf16.msra.mxu0 0
      %5467 = vmatprep.subr.bf16.mxu0 0
      %5468 = vmatpush1.bf16.msra.mxu0 0
      %5469 = vmatprep.subr.bf16.mxu0 0
      %5470 = vmatpush1.bf16.msra.mxu0 0
      %5471 = vmatprep.mubr.bf16.mxu0 0
      %5472 = vmatmul.mubr.bf16.gmra.mrb[0].mxu0 %v5413
      %v5473 = vpop.f32.mrb[0].mxu0
      %v5474 = vadd.f32 %v5380, %v5473
      %v5475 = vpop.f32.mrb[0].mxu0
      %v5476 = vpop.f32.mrb[0].mxu0
      %v5477 = vadd.f32 %v5381, %v5476
      %v5478 = vpop.f32.mrb[0].mxu0
      %5479 = vmatprep.mubr.bf16.mxu0 0
      %5480 = vmatmul.mubr.bf16.gmra.mrb[0].mxu0 %v5416
      %v5481 = vpop.f32.mrb[0].mxu0
      %v5482 = vadd.f32 %v5382, %v5481
      %v5483 = vpop.f32.mrb[0].mxu0
      %v5484 = vpop.f32.mrb[0].mxu0
      %v5485 = vadd.f32 %v5383, %v5484
      %v5486 = vpop.f32.mrb[0].mxu0
      %5487 = vmatprep.mubr.bf16.mxu0 0
      %5488 = vmatmul.mubr.bf16.gmra.mrb[0].mxu0 %v5419
      %v5489 = vpop.f32.mrb[0].mxu0
      %v5490 = vadd.f32 %v5384, %v5489
      %v5491 = vpop.f32.mrb[0].mxu0
      %v5492 = vpop.f32.mrb[0].mxu0
      %v5493 = vadd.f32 %v5385, %v5492
      %v5494 = vpop.f32.mrb[0].mxu0
      %5495 = vmatprep.mubr.bf16.mxu0 0
      %5496 = vmatmul.mubr.bf16.gmra.mrb[0].mxu0 %v5422
      %v5497 = vpop.f32.mrb[0].mxu0
      %v5498 = vadd.f32 %v5386, %v5497
      %v5499 = vpop.f32.mrb[0].mxu0
      %v5500 = vpop.f32.mrb[0].mxu0
      %v5501 = vadd.f32 %v5387, %v5500
      %v5502 = vpop.f32.mrb[0].mxu0
      %5503 = vmatprep.mubr.bf16.mxu0 0
      %5504 = vmatmul.mubr.bf16.gmra.mrb[0].mxu0 %v5425
      %v5505 = vpop.f32.mrb[0].mxu0
      %v5506 = vadd.f32 %v5388, %v5505
      %v5507 = vpop.f32.mrb[0].mxu0
      %v5508 = vpop.f32.mrb[0].mxu0
      %v5509 = vadd.f32 %v5389, %v5508
      %v5510 = vpop.f32.mrb[0].mxu0
      %5511 = vmatprep.mubr.bf16.mxu0 0
      %5512 = vmatmul.mubr.bf16.gmra.mrb[0].mxu0 %v5428
      %v5513 = vpop.f32.mrb[0].mxu0
      %v5514 = vadd.f32 %v5390, %v5513
      %v5515 = vpop.f32.mrb[0].mxu0
      %v5516 = vpop.f32.mrb[0].mxu0
      %v5517 = vadd.f32 %v5391, %v5516
      %v5518 = vpop.f32.mrb[0].mxu0
      %5519 = vmatprep.mubr.bf16.mxu0 0
      %5520 = vmatmul.mubr.bf16.gmra.mrb[0].mxu0 %v5431
      %v5521 = vpop.f32.mrb[0].mxu0
      %v5522 = vadd.f32 %v5392, %v5521
      %v5523 = vpop.f32.mrb[0].mxu0
      %v5524 = vpop.f32.mrb[0].mxu0
      %v5525 = vadd.f32 %v5393, %v5524
      %v5526 = vpop.f32.mrb[0].mxu0
      %5527 = vmatprep.mubr.bf16.mxu0 0
      %5528 = vmatmul.mubr.bf16.gmra.mrb[0].mxu0 %v5434
      %v5529 = vpop.f32.mrb[0].mxu0
      %v5530 = vadd.f32 %v5394, %v5529
      %v5531 = vpop.f32.mrb[0].mxu0
      %v5532 = vpop.f32.mrb[0].mxu0
      %v5533 = vadd.f32 %v5395, %v5532
      %v5534 = vpop.f32.mrb[0].mxu0
      %5535 = vdwg.mxu0
      %v5536 = vmax.f32 %v5474, %v5490
      %v5537 = vmax.f32 %v5477, %v5493
      %v5538 = vmax.f32 %v5482, %v5498
      %v5539 = vmax.f32 %v5485, %v5501
      %v5540 = vmax.f32 %v5536, %v5506
      %v5541 = vmax.f32 %v5537, %v5509
      %v5542 = vmax.f32 %v5538, %v5514
      %v5543 = vmax.f32 %v5539, %v5517
      %v5544 = vmax.f32 %v5540, %v5522
      %v5545 = vmax.f32 %v5541, %v5525
      %v5546 = vmax.f32 %v5542, %v5530
      %v5547 = vmax.f32 %v5543, %v5533
      %v5548 = vmax.f32 %v5544, %v5545
      %v5549 = vmax.f32 %v5546, %v5547
      %v5550 = vmax.f32 %v5548, %v5549
      %v5551 = vrot.slane %v5550, 4
      %v5552 = vmax.f32 %v5550, %v5551
      %v5553 = vrot.slane %v5552, 2
      %v5554 = vmax.f32 %v5552, %v5553
      %v5555 = vrot.slane %v5554, 1
      %v5556 = vmax.f32 %v5554, %v5555
      %v5557 = vsub.f32 %v5474, %v5556
      %v5558 = vsub.f32 %v5477, %v5556
      %v5559 = vsub.f32 %v5482, %v5556
      %v5560 = vsub.f32 %v5485, %v5556
      %v5561 = vsub.f32 %v5490, %v5556
      %v5562 = vsub.f32 %v5493, %v5556
      %v5563 = vsub.f32 %v5498, %v5556
      %v5564 = vsub.f32 %v5501, %v5556
      %v5565 = vsub.f32 %v5506, %v5556
      %v5566 = vsub.f32 %v5509, %v5556
      %v5567 = vsub.f32 %v5514, %v5556
      %v5568 = vsub.f32 %v5517, %v5556
      %v5569 = vsub.f32 %v5522, %v5556
      %v5570 = vsub.f32 %v5525, %v5556
      %v5571 = vsub.f32 %v5530, %v5556
      %v5572 = vsub.f32 %v5533, %v5556
      %v5573 = vmul.f32 %v5557, 1.442695
      %v5574 = vpow.pop %v5573
      %v5575 = vmul.f32 %v5558, 1.442695
      %v5576 = vpow.pop %v5575
      %v5577 = vmul.f32 %v5559, 1.442695
      %v5578 = vpow.pop %v5577
      %v5579 = vmul.f32 %v5560, 1.442695
      %v5580 = vpow.pop %v5579
      %v5581 = vmul.f32 %v5561, 1.442695
      %v5582 = vpow.pop %v5581
      %v5583 = vmul.f32 %v5562, 1.442695
      %v5584 = vpow.pop %v5583
      %v5585 = vmul.f32 %v5563, 1.442695
      %v5586 = vpow.pop %v5585
      %v5587 = vmul.f32 %v5564, 1.442695
      %v5588 = vpow.pop %v5587
      %v5589 = vmul.f32 %v5565, 1.442695
      %v5590 = vpow.pop %v5589
      %v5591 = vmul.f32 %v5566, 1.442695
      %v5592 = vpow.pop %v5591
      %v5593 = vmul.f32 %v5567, 1.442695
      %v5594 = vpow.pop %v5593
      %v5595 = vmul.f32 %v5568, 1.442695
      %v5596 = vpow.pop %v5595
      %v5597 = vmul.f32 %v5569, 1.442695
      %v5598 = vpow.pop %v5597
      %v5599 = vmul.f32 %v5570, 1.442695
      %v5600 = vpow.pop %v5599
      %v5601 = vmul.f32 %v5571, 1.442695
      %v5602 = vpow.pop %v5601
      %v5603 = vmul.f32 %v5572, 1.442695
      %v5604 = vpow.pop %v5603
      %v5605 = vadd.f32 %v5574, %v5576
      %v5606 = vadd.f32 %v5605, %v5578
      %v5607 = vadd.f32 %v5606, %v5580
      %v5608 = vadd.f32 %v5607, %v5582
      %v5609 = vadd.f32 %v5608, %v5584
      %v5610 = vadd.f32 %v5609, %v5586
      %v5611 = vadd.f32 %v5610, %v5588
      %v5612 = vadd.f32 %v5611, %v5590
      %v5613 = vadd.f32 %v5612, %v5592
      %v5614 = vadd.f32 %v5613, %v5594
      %v5615 = vadd.f32 %v5614, %v5596
      %v5616 = vadd.f32 %v5615, %v5598
      %v5617 = vadd.f32 %v5616, %v5600
      %v5618 = vadd.f32 %v5617, %v5602
      %v5619 = vadd.f32 %v5618, %v5604
      %v5620 = vrot.slane %v5619, 4
      %v5621 = vadd.f32 %v5619, %v5620
      %v5622 = vrot.slane %v5621, 2
      %v5623 = vadd.f32 %v5621, %v5622
      %v5624 = vrot.slane %v5623, 1
      %v5625 = vadd.f32 %v5623, %v5624
      %v5626 = vpack.c.bf16 %v5576, %v5574
      %v5627 = vpack.c.bf16 %v5580, %v5578
      %v5628 = vpack.c.bf16 %v5584, %v5582
      %v5629 = vpack.c.bf16 %v5588, %v5586
      %v5630 = vpack.c.bf16 %v5592, %v5590
      %v5631 = vpack.c.bf16 %v5596, %v5594
      %v5632 = vpack.c.bf16 %v5600, %v5598
      %v5633 = vpack.c.bf16 %v5604, %v5602
      %5634 = vmatprep.subr.bf16.mxu0 0
      %5635 = vmatpush1.bf16.msra.mxu0 %v5626
      %5636 = vmatprep.subr.bf16.mxu0 0
      %5637 = vmatpush1.bf16.msra.mxu0 %v5627
      %5638 = vmatprep.subr.bf16.mxu0 0
      %5639 = vmatpush1.bf16.msra.mxu0 %v5628
      %5640 = vmatprep.subr.bf16.mxu0 0
      %5641 = vmatpush1.bf16.msra.mxu0 %v5629
      %5642 = vmatprep.subr.bf16.mxu0 0
      %5643 = vmatpush1.bf16.msra.mxu0 %v5630
      %5644 = vmatprep.subr.bf16.mxu0 0
      %5645 = vmatpush1.bf16.msra.mxu0 %v5631
      %5646 = vmatprep.subr.bf16.mxu0 0
      %5647 = vmatpush1.bf16.msra.mxu0 %v5632
      %5648 = vmatprep.subr.bf16.mxu0 0
      %5649 = vmatpush1.bf16.msra.mxu0 %v5633
      %5650 = vmatprep.subr.bf16.mxu0 0
      %5651 = vmatpush1.bf16.msra.mxu0 0
      %5652 = vmatprep.subr.bf16.mxu0 0
      %5653 = vmatpush1.bf16.msra.mxu0 0
      %5654 = vmatprep.subr.bf16.mxu0 0
      %5655 = vmatpush1.bf16.msra.mxu0 0
      %5656 = vmatprep.subr.bf16.mxu0 0
      %5657 = vmatpush1.bf16.msra.mxu0 0
      %5658 = vmatprep.subr.bf16.mxu0 0
      %5659 = vmatpush1.bf16.msra.mxu0 0
      %5660 = vmatprep.subr.bf16.mxu0 0
      %5661 = vmatpush1.bf16.msra.mxu0 0
      %5662 = vmatprep.subr.bf16.mxu0 0
      %5663 = vmatpush1.bf16.msra.mxu0 0
      %5664 = vmatprep.subr.bf16.mxu0 0
      %5665 = vmatpush1.bf16.msra.mxu0 0
      %5666 = vmatprep.mubr.bf16.mxu0 0
      %5667 = vmatmul.mubr.bf16.gmra.mrb[0].mxu0 %v5362
      %v5668 = vpop.f32.mrb[0].mxu0
      %v5669 = vadd.f32 0.0, %v5668
      %v5670 = vpop.f32.mrb[0].mxu0
      %v5671 = vpop.f32.mrb[0].mxu0
      %v5672 = vpop.f32.mrb[0].mxu0
      %5673 = vdwg.mxu0
      %v5674 = vrcp.pop %v5625
      %v5675 = vmul.f32 %v5669, %v5674
      %v5676 = vld [vmem:[%s2459] sm:$0xf]
      %v5677 = vld [vmem:[%s2459 + $0x4] sm:$0xf]
      %v5678 = vld [vmem:[%s2459 + $0x8] sm:$0xf]
      %v5679 = vld [vmem:[%s2459 + $0xc] sm:$0xf]
      %v5680 = vpack.c.bf16 %v5675, %v5675
      %v5681 = vld [vmem:[#allocation2 + $0x18] sm:$0xc]
      %v5682 = vld [vmem:[#allocation2 + $0x38] sm:$0xc]
      %v5683 = vld [vmem:[#allocation2 + $0x58] sm:$0xc]
      %s5684 = scalar_lea.vmem %s5, 704
      %v5685 = vld [vmem:[%s5684] sm:$0xf]
      %v5686 = vld [vmem:[%s5684 + $0x4] sm:$0xf]
      %v5687 = vld [vmem:[%s5684 + $0x8] sm:$0xf]
      %v5688 = vld [vmem:[%s5684 + $0xc] sm:$0xf]
      %v5689 = vld [vmem:[%s5684 + $0x10] sm:$0xf]
      %v5690 = vld [vmem:[%s5684 + $0x14] sm:$0xf]
      %v5691 = vld [vmem:[%s5684 + $0x18] sm:$0xf]
      %v5692 = vld [vmem:[%s5684 + $0x1c] sm:$0xf]
      %v5693 = vld [vmem:[%s5684 + $0x20] sm:$0xf]
      %v5694 = vld [vmem:[%s5684 + $0x24] sm:$0xf]
      %v5695 = vld [vmem:[%s5684 + $0x28] sm:$0xf]
      %v5696 = vld [vmem:[%s5684 + $0x2c] sm:$0xf]
      %v5697 = vld [vmem:[%s5684 + $0x30] sm:$0xf]
      %v5698 = vld [vmem:[%s5684 + $0x34] sm:$0xf]
      %v5699 = vld [vmem:[%s5684 + $0x38] sm:$0xf]
      %v5700 = vld [vmem:[%s5684 + $0x3c] sm:$0xf]
      %v5701 = vunpack.c.l.bf16 %v5685
      %v5702 = vunpack.c.l.bf16 %v5686
      %v5703 = vunpack.c.l.bf16 %v5687
      %v5704 = vunpack.c.l.bf16 %v5688
      %v5705 = vunpack.c.l.bf16 %v5689
      %v5706 = vunpack.c.l.bf16 %v5690
      %v5707 = vunpack.c.l.bf16 %v5691
      %v5708 = vunpack.c.l.bf16 %v5692
      %v5709 = vunpack.c.l.bf16 %v5693
      %v5710 = vunpack.c.l.bf16 %v5694
      %v5711 = vunpack.c.l.bf16 %v5695
      %v5712 = vunpack.c.l.bf16 %v5696
      %v5713 = vunpack.c.l.bf16 %v5697
      %v5714 = vunpack.c.l.bf16 %v5698
      %v5715 = vunpack.c.l.bf16 %v5699
      %v5716 = vunpack.c.l.bf16 %v5700
      %v5718 = vrot.slane %v5682, 2
      %5720 = vxpose.xlu0.c.b16.start [1/8] %v5718, 128
      %5721 = vxpose.xlu0.c.b16.cont [2/8] 0, 128
      %5722 = vxpose.xlu0.c.b16.cont [3/8] 0, 128
      %5723 = vxpose.xlu0.c.b16.cont [4/8] 0, 128
      %5724 = vxpose.xlu0.c.b16.cont [5/8] 0, 128
      %5725 = vxpose.xlu0.c.b16.cont [6/8] 0, 128
      %5726 = vxpose.xlu0.c.b16.cont [7/8] 0, 128
      %5727 = vxpose.xlu0.c.b16.end [8/8] 0, 128
      %v5728 = vpop.trf.xlu0
      %v5729 = vpop.trf.xlu0
      %v5730 = vpop.trf.xlu0
      %v5731 = vpop.trf.xlu0
      %v5732 = vpop.trf.xlu0
      %v5733 = vpop.trf.xlu0
      %v5734 = vpop.trf.xlu0
      %v5735 = vpop.trf.xlu0
      %v5737 = vrot.slane %v5681, 2
      %v5739 = vsel %vm602, %v5728, 0
      %v5742 = vsel %vm602, %v5729, 0
      %v5745 = vsel %vm602, %v5730, 0
      %v5748 = vsel %vm602, %v5731, 0
      %v5751 = vsel %vm602, %v5732, 0
      %v5754 = vsel %vm602, %v5733, 0
      %v5757 = vsel %vm602, %v5734, 0
      %v5760 = vsel %vm602, %v5735, 0
      %v5763 = vsel %vm627, %v5737, 0
      %5765 = vmatprep.subr.bf16.mxu0 0
      %5766 = vmatpush1.bf16.msra.mxu0 %v5763
      %5767 = vmatprep.subr.bf16.mxu0 0
      %5768 = vmatpush1.bf16.msra.mxu0 0
      %5769 = vmatprep.subr.bf16.mxu0 0
      %5770 = vmatpush1.bf16.msra.mxu0 0
      %5771 = vmatprep.subr.bf16.mxu0 0
      %5772 = vmatpush1.bf16.msra.mxu0 0
      %5773 = vmatprep.subr.bf16.mxu0 0
      %5774 = vmatpush1.bf16.msra.mxu0 0
      %5775 = vmatprep.subr.bf16.mxu0 0
      %5776 = vmatpush1.bf16.msra.mxu0 0
      %5777 = vmatprep.subr.bf16.mxu0 0
      %5778 = vmatpush1.bf16.msra.mxu0 0
      %5779 = vmatprep.subr.bf16.mxu0 0
      %5780 = vmatpush1.bf16.msra.mxu0 0
      %5781 = vmatprep.subr.bf16.mxu0 0
      %5782 = vmatpush1.bf16.msra.mxu0 0
      %5783 = vmatprep.subr.bf16.mxu0 0
      %5784 = vmatpush1.bf16.msra.mxu0 0
      %5785 = vmatprep.subr.bf16.mxu0 0
      %5786 = vmatpush1.bf16.msra.mxu0 0
      %5787 = vmatprep.subr.bf16.mxu0 0
      %5788 = vmatpush1.bf16.msra.mxu0 0
      %5789 = vmatprep.subr.bf16.mxu0 0
      %5790 = vmatpush1.bf16.msra.mxu0 0
      %5791 = vmatprep.subr.bf16.mxu0 0
      %5792 = vmatpush1.bf16.msra.mxu0 0
      %5793 = vmatprep.subr.bf16.mxu0 0
      %5794 = vmatpush1.bf16.msra.mxu0 0
      %5795 = vmatprep.subr.bf16.mxu0 0
      %5796 = vmatpush1.bf16.msra.mxu0 0
      %5797 = vmatprep.mubr.bf16.mxu0 0
      %5798 = vmatmul.mubr.bf16.gmra.mrb[0].mxu0 %v5739
      %v5799 = vpop.f32.mrb[0].mxu0
      %v5800 = vadd.f32 %v5701, %v5799
      %v5801 = vpop.f32.mrb[0].mxu0
      %v5802 = vpop.f32.mrb[0].mxu0
      %v5803 = vadd.f32 %v5702, %v5802
      %v5804 = vpop.f32.mrb[0].mxu0
      %5805 = vmatprep.mubr.bf16.mxu0 0
      %5806 = vmatmul.mubr.bf16.gmra.mrb[0].mxu0 %v5742
      %v5807 = vpop.f32.mrb[0].mxu0
      %v5808 = vadd.f32 %v5703, %v5807
      %v5809 = vpop.f32.mrb[0].mxu0
      %v5810 = vpop.f32.mrb[0].mxu0
      %v5811 = vadd.f32 %v5704, %v5810
      %v5812 = vpop.f32.mrb[0].mxu0
      %5813 = vmatprep.mubr.bf16.mxu0 0
      %5814 = vmatmul.mubr.bf16.gmra.mrb[0].mxu0 %v5745
      %v5815 = vpop.f32.mrb[0].mxu0
      %v5816 = vadd.f32 %v5705, %v5815
      %v5817 = vpop.f32.mrb[0].mxu0
      %v5818 = vpop.f32.mrb[0].mxu0
      %v5819 = vadd.f32 %v5706, %v5818
      %v5820 = vpop.f32.mrb[0].mxu0
      %5821 = vmatprep.mubr.bf16.mxu0 0
      %5822 = vmatmul.mubr.bf16.gmra.mrb[0].mxu0 %v5748
      %v5823 = vpop.f32.mrb[0].mxu0
      %v5824 = vadd.f32 %v5707, %v5823
      %v5825 = vpop.f32.mrb[0].mxu0
      %v5826 = vpop.f32.mrb[0].mxu0
      %v5827 = vadd.f32 %v5708, %v5826
      %v5828 = vpop.f32.mrb[0].mxu0
      %5829 = vmatprep.mubr.bf16.mxu0 0
      %5830 = vmatmul.mubr.bf16.gmra.mrb[0].mxu0 %v5751
      %v5831 = vpop.f32.mrb[0].mxu0
      %v5832 = vadd.f32 %v5709, %v5831
      %v5833 = vpop.f32.mrb[0].mxu0
      %v5834 = vpop.f32.mrb[0].mxu0
      %v5835 = vadd.f32 %v5710, %v5834
      %v5836 = vpop.f32.mrb[0].mxu0
      %5837 = vmatprep.mubr.bf16.mxu0 0
      %5838 = vmatmul.mubr.bf16.gmra.mrb[0].mxu0 %v5754
      %v5839 = vpop.f32.mrb[0].mxu0
      %v5840 = vadd.f32 %v5711, %v5839
      %v5841 = vpop.f32.mrb[0].mxu0
      %v5842 = vpop.f32.mrb[0].mxu0
      %v5843 = vadd.f32 %v5712, %v5842
      %v5844 = vpop.f32.mrb[0].mxu0
      %5845 = vmatprep.mubr.bf16.mxu0 0
      %5846 = vmatmul.mubr.bf16.gmra.mrb[0].mxu0 %v5757
      %v5847 = vpop.f32.mrb[0].mxu0
      %v5848 = vadd.f32 %v5713, %v5847
      %v5849 = vpop.f32.mrb[0].mxu0
      %v5850 = vpop.f32.mrb[0].mxu0
      %v5851 = vadd.f32 %v5714, %v5850
      %v5852 = vpop.f32.mrb[0].mxu0
      %5853 = vmatprep.mubr.bf16.mxu0 0
      %5854 = vmatmul.mubr.bf16.gmra.mrb[0].mxu0 %v5760
      %v5855 = vpop.f32.mrb[0].mxu0
      %v5856 = vadd.f32 %v5715, %v5855
      %v5857 = vpop.f32.mrb[0].mxu0
      %v5858 = vpop.f32.mrb[0].mxu0
      %v5859 = vadd.f32 %v5716, %v5858
      %v5860 = vpop.f32.mrb[0].mxu0
      %5861 = vdwg.mxu0
      %v5862 = vmax.f32 %v5800, %v5816
      %v5863 = vmax.f32 %v5803, %v5819
      %v5864 = vmax.f32 %v5808, %v5824
      %v5865 = vmax.f32 %v5811, %v5827
      %v5866 = vmax.f32 %v5862, %v5832
      %v5867 = vmax.f32 %v5863, %v5835
      %v5868 = vmax.f32 %v5864, %v5840
      %v5869 = vmax.f32 %v5865, %v5843
      %v5870 = vmax.f32 %v5866, %v5848
      %v5871 = vmax.f32 %v5867, %v5851
      %v5872 = vmax.f32 %v5868, %v5856
      %v5873 = vmax.f32 %v5869, %v5859
      %v5874 = vmax.f32 %v5870, %v5871
      %v5875 = vmax.f32 %v5872, %v5873
      %v5876 = vmax.f32 %v5874, %v5875
      %v5877 = vrot.slane %v5876, 4
      %v5878 = vmax.f32 %v5876, %v5877
      %v5879 = vrot.slane %v5878, 2
      %v5880 = vmax.f32 %v5878, %v5879
      %v5881 = vrot.slane %v5880, 1
      %v5882 = vmax.f32 %v5880, %v5881
      %v5883 = vsub.f32 %v5800, %v5882
      %v5884 = vsub.f32 %v5803, %v5882
      %v5885 = vsub.f32 %v5808, %v5882
      %v5886 = vsub.f32 %v5811, %v5882
      %v5887 = vsub.f32 %v5816, %v5882
      %v5888 = vsub.f32 %v5819, %v5882
      %v5889 = vsub.f32 %v5824, %v5882
      %v5890 = vsub.f32 %v5827, %v5882
      %v5891 = vsub.f32 %v5832, %v5882
      %v5892 = vsub.f32 %v5835, %v5882
      %v5893 = vsub.f32 %v5840, %v5882
      %v5894 = vsub.f32 %v5843, %v5882
      %v5895 = vsub.f32 %v5848, %v5882
      %v5896 = vsub.f32 %v5851, %v5882
      %v5897 = vsub.f32 %v5856, %v5882
      %v5898 = vsub.f32 %v5859, %v5882
      %v5899 = vmul.f32 %v5883, 1.442695
      %v5900 = vpow.pop %v5899
      %v5901 = vmul.f32 %v5884, 1.442695
      %v5902 = vpow.pop %v5901
      %v5903 = vmul.f32 %v5885, 1.442695
      %v5904 = vpow.pop %v5903
      %v5905 = vmul.f32 %v5886, 1.442695
      %v5906 = vpow.pop %v5905
      %v5907 = vmul.f32 %v5887, 1.442695
      %v5908 = vpow.pop %v5907
      %v5909 = vmul.f32 %v5888, 1.442695
      %v5910 = vpow.pop %v5909
      %v5911 = vmul.f32 %v5889, 1.442695
      %v5912 = vpow.pop %v5911
      %v5913 = vmul.f32 %v5890, 1.442695
      %v5914 = vpow.pop %v5913
      %v5915 = vmul.f32 %v5891, 1.442695
      %v5916 = vpow.pop %v5915
      %v5917 = vmul.f32 %v5892, 1.442695
      %v5918 = vpow.pop %v5917
      %v5919 = vmul.f32 %v5893, 1.442695
      %v5920 = vpow.pop %v5919
      %v5921 = vmul.f32 %v5894, 1.442695
      %v5922 = vpow.pop %v5921
      %v5923 = vmul.f32 %v5895, 1.442695
      %v5924 = vpow.pop %v5923
      %v5925 = vmul.f32 %v5896, 1.442695
      %v5926 = vpow.pop %v5925
      %v5927 = vmul.f32 %v5897, 1.442695
      %v5928 = vpow.pop %v5927
      %v5929 = vmul.f32 %v5898, 1.442695
      %v5930 = vpow.pop %v5929
      %v5931 = vadd.f32 %v5900, %v5902
      %v5932 = vadd.f32 %v5931, %v5904
      %v5933 = vadd.f32 %v5932, %v5906
      %v5934 = vadd.f32 %v5933, %v5908
      %v5935 = vadd.f32 %v5934, %v5910
      %v5936 = vadd.f32 %v5935, %v5912
      %v5937 = vadd.f32 %v5936, %v5914
      %v5938 = vadd.f32 %v5937, %v5916
      %v5939 = vadd.f32 %v5938, %v5918
      %v5940 = vadd.f32 %v5939, %v5920
      %v5941 = vadd.f32 %v5940, %v5922
      %v5942 = vadd.f32 %v5941, %v5924
      %v5943 = vadd.f32 %v5942, %v5926
      %v5944 = vadd.f32 %v5943, %v5928
      %v5945 = vadd.f32 %v5944, %v5930
      %v5946 = vrot.slane %v5945, 4
      %v5947 = vadd.f32 %v5945, %v5946
      %v5948 = vrot.slane %v5947, 2
      %v5949 = vadd.f32 %v5947, %v5948
      %v5950 = vrot.slane %v5949, 1
      %v5951 = vadd.f32 %v5949, %v5950
      %v5952 = vpack.c.bf16 %v5902, %v5900
      %v5953 = vpack.c.bf16 %v5906, %v5904
      %v5954 = vpack.c.bf16 %v5910, %v5908
      %v5955 = vpack.c.bf16 %v5914, %v5912
      %v5956 = vpack.c.bf16 %v5918, %v5916
      %v5957 = vpack.c.bf16 %v5922, %v5920
      %v5958 = vpack.c.bf16 %v5926, %v5924
      %v5959 = vpack.c.bf16 %v5930, %v5928
      %v5961 = vrot.slane %v5683, 2
      %5963 = vmatprep.subr.bf16.mxu0 0
      %5964 = vmatpush1.bf16.msra.mxu0 %v5952
      %5965 = vmatprep.subr.bf16.mxu0 0
      %5966 = vmatpush1.bf16.msra.mxu0 %v5953
      %5967 = vmatprep.subr.bf16.mxu0 0
      %5968 = vmatpush1.bf16.msra.mxu0 %v5954
      %5969 = vmatprep.subr.bf16.mxu0 0
      %5970 = vmatpush1.bf16.msra.mxu0 %v5955
      %5971 = vmatprep.subr.bf16.mxu0 0
      %5972 = vmatpush1.bf16.msra.mxu0 %v5956
      %5973 = vmatprep.subr.bf16.mxu0 0
      %5974 = vmatpush1.bf16.msra.mxu0 %v5957
      %5975 = vmatprep.subr.bf16.mxu0 0
      %5976 = vmatpush1.bf16.msra.mxu0 %v5958
      %5977 = vmatprep.subr.bf16.mxu0 0
      %5978 = vmatpush1.bf16.msra.mxu0 %v5959
      %5979 = vmatprep.subr.bf16.mxu0 0
      %5980 = vmatpush1.bf16.msra.mxu0 0
      %5981 = vmatprep.subr.bf16.mxu0 0
      %5982 = vmatpush1.bf16.msra.mxu0 0
      %5983 = vmatprep.subr.bf16.mxu0 0
      %5984 = vmatpush1.bf16.msra.mxu0 0
      %5985 = vmatprep.subr.bf16.mxu0 0
      %5986 = vmatpush1.bf16.msra.mxu0 0
      %5987 = vmatprep.subr.bf16.mxu0 0
      %5988 = vmatpush1.bf16.msra.mxu0 0
      %5989 = vmatprep.subr.bf16.mxu0 0
      %5990 = vmatpush1.bf16.msra.mxu0 0
      %5991 = vmatprep.subr.bf16.mxu0 0
      %5992 = vmatpush1.bf16.msra.mxu0 0
      %5993 = vmatprep.subr.bf16.mxu0 0
      %5994 = vmatpush1.bf16.msra.mxu0 0
      %5995 = vmatprep.mubr.bf16.mxu0 0
      %5996 = vmatmul.mubr.bf16.gmra.mrb[0].mxu0 %v5961
      %v5997 = vpop.f32.mrb[0].mxu0
      %v5998 = vadd.f32 0.0, %v5997
      %v5999 = vpop.f32.mrb[0].mxu0
      %v6000 = vpop.f32.mrb[0].mxu0
      %v6001 = vpop.f32.mrb[0].mxu0
      %6002 = vdwg.mxu0
      %v6003 = vrcp.pop %v5951
      %v6004 = vmul.f32 %v5998, %v6003
      %v6005 = vld [vmem:[%s2789] sm:$0xf]
      %v6006 = vld [vmem:[%s2789 + $0x4] sm:$0xf]
      %v6007 = vld [vmem:[%s2789 + $0x8] sm:$0xf]
      %v6008 = vld [vmem:[%s2789 + $0xc] sm:$0xf]
      %v6009 = vpack.c.bf16 %v6004, %v6004
      %v6014 = vunpack.c.l.b16 %v6005
      %v6015 = vunpack.c.l.b16 %v6006
      %v6016 = vunpack.c.l.b16 %v6007
      %v6017 = vunpack.c.l.b16 %v6008
      %v6018 = vpack.c.b16 %v6015, %v6014
      %v6019 = vpack.c.b16 %v6017, %v6016
      %v6021 = vsel %vm602, %v6018, 0
      %v6024 = vsel %vm602, %v6019, 0
      %v6027 = vsel %vm627, %v6009, 0
      %6029 = vmatprep.subr.bf16.mxu0 0
      %6030 = vmatpush1.bf16.msra.mxu0 %v6027
      %6031 = vmatprep.subr.bf16.mxu0 0
      %6032 = vmatpush1.bf16.msra.mxu0 0
      %6033 = vmatprep.subr.bf16.mxu0 0
      %6034 = vmatpush1.bf16.msra.mxu0 0
      %6035 = vmatprep.subr.bf16.mxu0 0
      %6036 = vmatpush1.bf16.msra.mxu0 0
      %6037 = vmatprep.subr.bf16.mxu0 0
      %6038 = vmatpush1.bf16.msra.mxu0 0
      %6039 = vmatprep.subr.bf16.mxu0 0
      %6040 = vmatpush1.bf16.msra.mxu0 0
      %6041 = vmatprep.subr.bf16.mxu0 0
      %6042 = vmatpush1.bf16.msra.mxu0 0
      %6043 = vmatprep.subr.bf16.mxu0 0
      %6044 = vmatpush1.bf16.msra.mxu0 0
      %6045 = vmatprep.subr.bf16.mxu0 0
      %6046 = vmatpush1.bf16.msra.mxu0 0
      %6047 = vmatprep.subr.bf16.mxu0 0
      %6048 = vmatpush1.bf16.msra.mxu0 0
      %6049 = vmatprep.subr.bf16.mxu0 0
      %6050 = vmatpush1.bf16.msra.mxu0 0
      %6051 = vmatprep.subr.bf16.mxu0 0
      %6052 = vmatpush1.bf16.msra.mxu0 0
      %6053 = vmatprep.subr.bf16.mxu0 0
      %6054 = vmatpush1.bf16.msra.mxu0 0
      %6055 = vmatprep.subr.bf16.mxu0 0
      %6056 = vmatpush1.bf16.msra.mxu0 0
      %6057 = vmatprep.subr.bf16.mxu0 0
      %6058 = vmatpush1.bf16.msra.mxu0 0
      %6059 = vmatprep.subr.bf16.mxu0 0
      %6060 = vmatpush1.bf16.msra.mxu0 0
      %6061 = vmatprep.mubr.bf16.mxu0 0
      %6062 = vmatmul.mubr.bf16.gmra.mrb[0].mxu0 %v6021
      %v6063 = vpop.f32.mrb[0].mxu0
      %v6064 = vadd.f32 0.0, %v6063
      %v6065 = vpop.f32.mrb[0].mxu0
      %v6066 = vpop.f32.mrb[0].mxu0
      %v6067 = vadd.f32 0.0, %v6066
      %v6068 = vpop.f32.mrb[0].mxu0
      %6069 = vmatprep.mubr.bf16.mxu0 0
      %6070 = vmatmul.mubr.bf16.gmra.mrb[0].mxu0 %v6024
      %v6071 = vpop.f32.mrb[0].mxu0
      %v6072 = vadd.f32 0.0, %v6071
      %v6073 = vpop.f32.mrb[0].mxu0
      %v6074 = vpop.f32.mrb[0].mxu0
      %v6075 = vadd.f32 0.0, %v6074
      %v6076 = vpop.f32.mrb[0].mxu0
      %6077 = vdwg.mxu0
      %v6082 = vunpack.c.l.b16 %v5676
      %v6083 = vunpack.c.l.b16 %v5677
      %v6084 = vunpack.c.l.b16 %v5678
      %v6085 = vunpack.c.l.b16 %v5679
      %v6086 = vpack.c.b16 %v6083, %v6082
      %v6087 = vpack.c.b16 %v6085, %v6084
      %v6089 = vsel %vm602, %v6086, 0
      %v6092 = vsel %vm602, %v6087, 0
      %v6095 = vsel %vm627, %v5680, 0
      %6097 = vmatprep.subr.bf16.mxu0 0
      %6098 = vmatpush1.bf16.msra.mxu0 %v6095
      %6099 = vmatprep.subr.bf16.mxu0 0
      %6100 = vmatpush1.bf16.msra.mxu0 0
      %6101 = vmatprep.subr.bf16.mxu0 0
      %6102 = vmatpush1.bf16.msra.mxu0 0
      %6103 = vmatprep.subr.bf16.mxu0 0
      %6104 = vmatpush1.bf16.msra.mxu0 0
      %6105 = vmatprep.subr.bf16.mxu0 0
      %6106 = vmatpush1.bf16.msra.mxu0 0
      %6107 = vmatprep.subr.bf16.mxu0 0
      %6108 = vmatpush1.bf16.msra.mxu0 0
      %6109 = vmatprep.subr.bf16.mxu0 0
      %6110 = vmatpush1.bf16.msra.mxu0 0
      %6111 = vmatprep.subr.bf16.mxu0 0
      %6112 = vmatpush1.bf16.msra.mxu0 0
      %6113 = vmatprep.subr.bf16.mxu0 0
      %6114 = vmatpush1.bf16.msra.mxu0 0
      %6115 = vmatprep.subr.bf16.mxu0 0
      %6116 = vmatpush1.bf16.msra.mxu0 0
      %6117 = vmatprep.subr.bf16.mxu0 0
      %6118 = vmatpush1.bf16.msra.mxu0 0
      %6119 = vmatprep.subr.bf16.mxu0 0
      %6120 = vmatpush1.bf16.msra.mxu0 0
      %6121 = vmatprep.subr.bf16.mxu0 0
      %6122 = vmatpush1.bf16.msra.mxu0 0
      %6123 = vmatprep.subr.bf16.mxu0 0
      %6124 = vmatpush1.bf16.msra.mxu0 0
      %6125 = vmatprep.subr.bf16.mxu0 0
      %6126 = vmatpush1.bf16.msra.mxu0 0
      %6127 = vmatprep.subr.bf16.mxu0 0
      %6128 = vmatpush1.bf16.msra.mxu0 0
      %6129 = vmatprep.mubr.bf16.mxu0 0
      %6130 = vmatmul.mubr.bf16.gmra.mrb[0].mxu0 %v6089
      %v6131 = vpop.f32.mrb[0].mxu0
      %v6132 = vadd.f32 %v6064, %v6131
      %v6133 = vpop.f32.mrb[0].mxu0
      %v6134 = vpop.f32.mrb[0].mxu0
      %v6135 = vadd.f32 %v6067, %v6134
      %v6136 = vpop.f32.mrb[0].mxu0
      %6137 = vmatprep.mubr.bf16.mxu0 0
      %6138 = vmatmul.mubr.bf16.gmra.mrb[0].mxu0 %v6092
      %v6139 = vpop.f32.mrb[0].mxu0
      %v6140 = vadd.f32 %v6072, %v6139
      %v6141 = vpop.f32.mrb[0].mxu0
      %v6142 = vpop.f32.mrb[0].mxu0
      %v6143 = vadd.f32 %v6075, %v6142
      %v6144 = vpop.f32.mrb[0].mxu0
      %6145 = vdwg.mxu0
      %v6146 = vld [vmem:[#allocation2 + $0x18] sm:$0x30]
      %v6147 = vld [vmem:[#allocation2 + $0x38] sm:$0x30]
      %v6148 = vld [vmem:[#allocation2 + $0x58] sm:$0x30]
      %s6149 = scalar_lea.vmem %s5, 832
      %v6150 = vld [vmem:[%s6149] sm:$0xf]
      %v6151 = vld [vmem:[%s6149 + $0x4] sm:$0xf]
      %v6152 = vld [vmem:[%s6149 + $0x8] sm:$0xf]
      %v6153 = vld [vmem:[%s6149 + $0xc] sm:$0xf]
      %v6154 = vld [vmem:[%s6149 + $0x10] sm:$0xf]
      %v6155 = vld [vmem:[%s6149 + $0x14] sm:$0xf]
      %v6156 = vld [vmem:[%s6149 + $0x18] sm:$0xf]
      %v6157 = vld [vmem:[%s6149 + $0x1c] sm:$0xf]
      %v6158 = vld [vmem:[%s6149 + $0x20] sm:$0xf]
      %v6159 = vld [vmem:[%s6149 + $0x24] sm:$0xf]
      %v6160 = vld [vmem:[%s6149 + $0x28] sm:$0xf]
      %v6161 = vld [vmem:[%s6149 + $0x2c] sm:$0xf]
      %v6162 = vld [vmem:[%s6149 + $0x30] sm:$0xf]
      %v6163 = vld [vmem:[%s6149 + $0x34] sm:$0xf]
      %v6164 = vld [vmem:[%s6149 + $0x38] sm:$0xf]
      %v6165 = vld [vmem:[%s6149 + $0x3c] sm:$0xf]
      %v6166 = vunpack.c.l.bf16 %v6150
      %v6167 = vunpack.c.l.bf16 %v6151
      %v6168 = vunpack.c.l.bf16 %v6152
      %v6169 = vunpack.c.l.bf16 %v6153
      %v6170 = vunpack.c.l.bf16 %v6154
      %v6171 = vunpack.c.l.bf16 %v6155
      %v6172 = vunpack.c.l.bf16 %v6156
      %v6173 = vunpack.c.l.bf16 %v6157
      %v6174 = vunpack.c.l.bf16 %v6158
      %v6175 = vunpack.c.l.bf16 %v6159
      %v6176 = vunpack.c.l.bf16 %v6160
      %v6177 = vunpack.c.l.bf16 %v6161
      %v6178 = vunpack.c.l.bf16 %v6162
      %v6179 = vunpack.c.l.bf16 %v6163
      %v6180 = vunpack.c.l.bf16 %v6164
      %v6181 = vunpack.c.l.bf16 %v6165
      %v6183 = vrot.slane %v6147, 4
      %6185 = vxpose.xlu0.c.b16.start [1/8] %v6183, 128
      %6186 = vxpose.xlu0.c.b16.cont [2/8] 0, 128
      %6187 = vxpose.xlu0.c.b16.cont [3/8] 0, 128
      %6188 = vxpose.xlu0.c.b16.cont [4/8] 0, 128
      %6189 = vxpose.xlu0.c.b16.cont [5/8] 0, 128
      %6190 = vxpose.xlu0.c.b16.cont [6/8] 0, 128
      %6191 = vxpose.xlu0.c.b16.cont [7/8] 0, 128
      %6192 = vxpose.xlu0.c.b16.end [8/8] 0, 128
      %v6193 = vpop.trf.xlu0
      %v6194 = vpop.trf.xlu0
      %v6195 = vpop.trf.xlu0
      %v6196 = vpop.trf.xlu0
      %v6197 = vpop.trf.xlu0
      %v6198 = vpop.trf.xlu0
      %v6199 = vpop.trf.xlu0
      %v6200 = vpop.trf.xlu0
      %v6202 = vrot.slane %v6146, 4
      %v6204 = vsel %vm602, %v6193, 0
      %v6207 = vsel %vm602, %v6194, 0
      %v6210 = vsel %vm602, %v6195, 0
      %v6213 = vsel %vm602, %v6196, 0
      %v6216 = vsel %vm602, %v6197, 0
      %v6219 = vsel %vm602, %v6198, 0
      %v6222 = vsel %vm602, %v6199, 0
      %v6225 = vsel %vm602, %v6200, 0
      %v6228 = vsel %vm627, %v6202, 0
      %6230 = vmatprep.subr.bf16.mxu0 0
      %6231 = vmatpush1.bf16.msra.mxu0 %v6228
      %6232 = vmatprep.subr.bf16.mxu0 0
      %6233 = vmatpush1.bf16.msra.mxu0 0
      %6234 = vmatprep.subr.bf16.mxu0 0
      %6235 = vmatpush1.bf16.msra.mxu0 0
      %6236 = vmatprep.subr.bf16.mxu0 0
      %6237 = vmatpush1.bf16.msra.mxu0 0
      %6238 = vmatprep.subr.bf16.mxu0 0
      %6239 = vmatpush1.bf16.msra.mxu0 0
      %6240 = vmatprep.subr.bf16.mxu0 0
      %6241 = vmatpush1.bf16.msra.mxu0 0
      %6242 = vmatprep.subr.bf16.mxu0 0
      %6243 = vmatpush1.bf16.msra.mxu0 0
      %6244 = vmatprep.subr.bf16.mxu0 0
      %6245 = vmatpush1.bf16.msra.mxu0 0
      %6246 = vmatprep.subr.bf16.mxu0 0
      %6247 = vmatpush1.bf16.msra.mxu0 0
      %6248 = vmatprep.subr.bf16.mxu0 0
      %6249 = vmatpush1.bf16.msra.mxu0 0
      %6250 = vmatprep.subr.bf16.mxu0 0
      %6251 = vmatpush1.bf16.msra.mxu0 0
      %6252 = vmatprep.subr.bf16.mxu0 0
      %6253 = vmatpush1.bf16.msra.mxu0 0
      %6254 = vmatprep.subr.bf16.mxu0 0
      %6255 = vmatpush1.bf16.msra.mxu0 0
      %6256 = vmatprep.subr.bf16.mxu0 0
      %6257 = vmatpush1.bf16.msra.mxu0 0
      %6258 = vmatprep.subr.bf16.mxu0 0
      %6259 = vmatpush1.bf16.msra.mxu0 0
      %6260 = vmatprep.subr.bf16.mxu0 0
      %6261 = vmatpush1.bf16.msra.mxu0 0
      %6262 = vmatprep.mubr.bf16.mxu0 0
      %6263 = vmatmul.mubr.bf16.gmra.mrb[0].mxu0 %v6204
      %v6264 = vpop.f32.mrb[0].mxu0
      %v6265 = vadd.f32 %v6166, %v6264
      %v6266 = vpop.f32.mrb[0].mxu0
      %v6267 = vpop.f32.mrb[0].mxu0
      %v6268 = vadd.f32 %v6167, %v6267
      %v6269 = vpop.f32.mrb[0].mxu0
      %6270 = vmatprep.mubr.bf16.mxu0 0
      %6271 = vmatmul.mubr.bf16.gmra.mrb[0].mxu0 %v6207
      %v6272 = vpop.f32.mrb[0].mxu0
      %v6273 = vadd.f32 %v6168, %v6272
      %v6274 = vpop.f32.mrb[0].mxu0
      %v6275 = vpop.f32.mrb[0].mxu0
      %v6276 = vadd.f32 %v6169, %v6275
      %v6277 = vpop.f32.mrb[0].mxu0
      %6278 = vmatprep.mubr.bf16.mxu0 0
      %6279 = vmatmul.mubr.bf16.gmra.mrb[0].mxu0 %v6210
      %v6280 = vpop.f32.mrb[0].mxu0
      %v6281 = vadd.f32 %v6170, %v6280
      %v6282 = vpop.f32.mrb[0].mxu0
      %v6283 = vpop.f32.mrb[0].mxu0
      %v6284 = vadd.f32 %v6171, %v6283
      %v6285 = vpop.f32.mrb[0].mxu0
      %6286 = vmatprep.mubr.bf16.mxu0 0
      %6287 = vmatmul.mubr.bf16.gmra.mrb[0].mxu0 %v6213
      %v6288 = vpop.f32.mrb[0].mxu0
      %v6289 = vadd.f32 %v6172, %v6288
      %v6290 = vpop.f32.mrb[0].mxu0
      %v6291 = vpop.f32.mrb[0].mxu0
      %v6292 = vadd.f32 %v6173, %v6291
      %v6293 = vpop.f32.mrb[0].mxu0
      %6294 = vmatprep.mubr.bf16.mxu0 0
      %6295 = vmatmul.mubr.bf16.gmra.mrb[0].mxu0 %v6216
      %v6296 = vpop.f32.mrb[0].mxu0
      %v6297 = vadd.f32 %v6174, %v6296
      %v6298 = vpop.f32.mrb[0].mxu0
      %v6299 = vpop.f32.mrb[0].mxu0
      %v6300 = vadd.f32 %v6175, %v6299
      %v6301 = vpop.f32.mrb[0].mxu0
      %6302 = vmatprep.mubr.bf16.mxu0 0
      %6303 = vmatmul.mubr.bf16.gmra.mrb[0].mxu0 %v6219
      %v6304 = vpop.f32.mrb[0].mxu0
      %v6305 = vadd.f32 %v6176, %v6304
      %v6306 = vpop.f32.mrb[0].mxu0
      %v6307 = vpop.f32.mrb[0].mxu0
      %v6308 = vadd.f32 %v6177, %v6307
      %v6309 = vpop.f32.mrb[0].mxu0
      %6310 = vmatprep.mubr.bf16.mxu0 0
      %6311 = vmatmul.mubr.bf16.gmra.mrb[0].mxu0 %v6222
      %v6312 = vpop.f32.mrb[0].mxu0
      %v6313 = vadd.f32 %v6178, %v6312
      %v6314 = vpop.f32.mrb[0].mxu0
      %v6315 = vpop.f32.mrb[0].mxu0
      %v6316 = vadd.f32 %v6179, %v6315
      %v6317 = vpop.f32.mrb[0].mxu0
      %6318 = vmatprep.mubr.bf16.mxu0 0
      %6319 = vmatmul.mubr.bf16.gmra.mrb[0].mxu0 %v6225
      %v6320 = vpop.f32.mrb[0].mxu0
      %v6321 = vadd.f32 %v6180, %v6320
      %v6322 = vpop.f32.mrb[0].mxu0
      %v6323 = vpop.f32.mrb[0].mxu0
      %v6324 = vadd.f32 %v6181, %v6323
      %v6325 = vpop.f32.mrb[0].mxu0
      %6326 = vdwg.mxu0
      %v6327 = vmax.f32 %v6265, %v6281
      %v6328 = vmax.f32 %v6268, %v6284
      %v6329 = vmax.f32 %v6273, %v6289
      %v6330 = vmax.f32 %v6276, %v6292
      %v6331 = vmax.f32 %v6327, %v6297
      %v6332 = vmax.f32 %v6328, %v6300
      %v6333 = vmax.f32 %v6329, %v6305
      %v6334 = vmax.f32 %v6330, %v6308
      %v6335 = vmax.f32 %v6331, %v6313
      %v6336 = vmax.f32 %v6332, %v6316
      %v6337 = vmax.f32 %v6333, %v6321
      %v6338 = vmax.f32 %v6334, %v6324
      %v6339 = vmax.f32 %v6335, %v6336
      %v6340 = vmax.f32 %v6337, %v6338
      %v6341 = vmax.f32 %v6339, %v6340
      %v6342 = vrot.slane %v6341, 4
      %v6343 = vmax.f32 %v6341, %v6342
      %v6344 = vrot.slane %v6343, 2
      %v6345 = vmax.f32 %v6343, %v6344
      %v6346 = vrot.slane %v6345, 1
      %v6347 = vmax.f32 %v6345, %v6346
      %v6348 = vsub.f32 %v6265, %v6347
      %v6349 = vsub.f32 %v6268, %v6347
      %v6350 = vsub.f32 %v6273, %v6347
      %v6351 = vsub.f32 %v6276, %v6347
      %v6352 = vsub.f32 %v6281, %v6347
      %v6353 = vsub.f32 %v6284, %v6347
      %v6354 = vsub.f32 %v6289, %v6347
      %v6355 = vsub.f32 %v6292, %v6347
      %v6356 = vsub.f32 %v6297, %v6347
      %v6357 = vsub.f32 %v6300, %v6347
      %v6358 = vsub.f32 %v6305, %v6347
      %v6359 = vsub.f32 %v6308, %v6347
      %v6360 = vsub.f32 %v6313, %v6347
      %v6361 = vsub.f32 %v6316, %v6347
      %v6362 = vsub.f32 %v6321, %v6347
      %v6363 = vsub.f32 %v6324, %v6347
      %v6364 = vmul.f32 %v6348, 1.442695
      %v6365 = vpow.pop %v6364
      %v6366 = vmul.f32 %v6349, 1.442695
      %v6367 = vpow.pop %v6366
      %v6368 = vmul.f32 %v6350, 1.442695
      %v6369 = vpow.pop %v6368
      %v6370 = vmul.f32 %v6351, 1.442695
      %v6371 = vpow.pop %v6370
      %v6372 = vmul.f32 %v6352, 1.442695
      %v6373 = vpow.pop %v6372
      %v6374 = vmul.f32 %v6353, 1.442695
      %v6375 = vpow.pop %v6374
      %v6376 = vmul.f32 %v6354, 1.442695
      %v6377 = vpow.pop %v6376
      %v6378 = vmul.f32 %v6355, 1.442695
      %v6379 = vpow.pop %v6378
      %v6380 = vmul.f32 %v6356, 1.442695
      %v6381 = vpow.pop %v6380
      %v6382 = vmul.f32 %v6357, 1.442695
      %v6383 = vpow.pop %v6382
      %v6384 = vmul.f32 %v6358, 1.442695
      %v6385 = vpow.pop %v6384
      %v6386 = vmul.f32 %v6359, 1.442695
      %v6387 = vpow.pop %v6386
      %v6388 = vmul.f32 %v6360, 1.442695
      %v6389 = vpow.pop %v6388
      %v6390 = vmul.f32 %v6361, 1.442695
      %v6391 = vpow.pop %v6390
      %v6392 = vmul.f32 %v6362, 1.442695
      %v6393 = vpow.pop %v6392
      %v6394 = vmul.f32 %v6363, 1.442695
      %v6395 = vpow.pop %v6394
      %v6396 = vadd.f32 %v6365, %v6367
      %v6397 = vadd.f32 %v6396, %v6369
      %v6398 = vadd.f32 %v6397, %v6371
      %v6399 = vadd.f32 %v6398, %v6373
      %v6400 = vadd.f32 %v6399, %v6375
      %v6401 = vadd.f32 %v6400, %v6377
      %v6402 = vadd.f32 %v6401, %v6379
      %v6403 = vadd.f32 %v6402, %v6381
      %v6404 = vadd.f32 %v6403, %v6383
      %v6405 = vadd.f32 %v6404, %v6385
      %v6406 = vadd.f32 %v6405, %v6387
      %v6407 = vadd.f32 %v6406, %v6389
      %v6408 = vadd.f32 %v6407, %v6391
      %v6409 = vadd.f32 %v6408, %v6393
      %v6410 = vadd.f32 %v6409, %v6395
      %v6411 = vrot.slane %v6410, 4
      %v6412 = vadd.f32 %v6410, %v6411
      %v6413 = vrot.slane %v6412, 2
      %v6414 = vadd.f32 %v6412, %v6413
      %v6415 = vrot.slane %v6414, 1
      %v6416 = vadd.f32 %v6414, %v6415
      %v6417 = vpack.c.bf16 %v6367, %v6365
      %v6418 = vpack.c.bf16 %v6371, %v6369
      %v6419 = vpack.c.bf16 %v6375, %v6373
      %v6420 = vpack.c.bf16 %v6379, %v6377
      %v6421 = vpack.c.bf16 %v6383, %v6381
      %v6422 = vpack.c.bf16 %v6387, %v6385
      %v6423 = vpack.c.bf16 %v6391, %v6389
      %v6424 = vpack.c.bf16 %v6395, %v6393
      %v6426 = vrot.slane %v6148, 4
      %6428 = vmatprep.subr.bf16.mxu0 0
      %6429 = vmatpush1.bf16.msra.mxu0 %v6417
      %6430 = vmatprep.subr.bf16.mxu0 0
      %6431 = vmatpush1.bf16.msra.mxu0 %v6418
      %6432 = vmatprep.subr.bf16.mxu0 0
      %6433 = vmatpush1.bf16.msra.mxu0 %v6419
      %6434 = vmatprep.subr.bf16.mxu0 0
      %6435 = vmatpush1.bf16.msra.mxu0 %v6420
      %6436 = vmatprep.subr.bf16.mxu0 0
      %6437 = vmatpush1.bf16.msra.mxu0 %v6421
      %6438 = vmatprep.subr.bf16.mxu0 0
      %6439 = vmatpush1.bf16.msra.mxu0 %v6422
      %6440 = vmatprep.subr.bf16.mxu0 0
      %6441 = vmatpush1.bf16.msra.mxu0 %v6423
      %6442 = vmatprep.subr.bf16.mxu0 0
      %6443 = vmatpush1.bf16.msra.mxu0 %v6424
      %6444 = vmatprep.subr.bf16.mxu0 0
      %6445 = vmatpush1.bf16.msra.mxu0 0
      %6446 = vmatprep.subr.bf16.mxu0 0
      %6447 = vmatpush1.bf16.msra.mxu0 0
      %6448 = vmatprep.subr.bf16.mxu0 0
      %6449 = vmatpush1.bf16.msra.mxu0 0
      %6450 = vmatprep.subr.bf16.mxu0 0
      %6451 = vmatpush1.bf16.msra.mxu0 0
      %6452 = vmatprep.subr.bf16.mxu0 0
      %6453 = vmatpush1.bf16.msra.mxu0 0
      %6454 = vmatprep.subr.bf16.mxu0 0
      %6455 = vmatpush1.bf16.msra.mxu0 0
      %6456 = vmatprep.subr.bf16.mxu0 0
      %6457 = vmatpush1.bf16.msra.mxu0 0
      %6458 = vmatprep.subr.bf16.mxu0 0
      %6459 = vmatpush1.bf16.msra.mxu0 0
      %6460 = vmatprep.mubr.bf16.mxu0 0
      %6461 = vmatmul.mubr.bf16.gmra.mrb[0].mxu0 %v6426
      %v6462 = vpop.f32.mrb[0].mxu0
      %v6463 = vadd.f32 0.0, %v6462
      %v6464 = vpop.f32.mrb[0].mxu0
      %v6465 = vpop.f32.mrb[0].mxu0
      %v6466 = vpop.f32.mrb[0].mxu0
      %6467 = vdwg.mxu0
      %v6468 = vrcp.pop %v6416
      %v6469 = vmul.f32 %v6463, %v6468
      %v6470 = vld [vmem:[%s3255] sm:$0xf]
      %v6471 = vld [vmem:[%s3255 + $0x4] sm:$0xf]
      %v6472 = vld [vmem:[%s3255 + $0x8] sm:$0xf]
      %v6473 = vld [vmem:[%s3255 + $0xc] sm:$0xf]
      %v6474 = vpack.c.bf16 %v6469, %v6469
      %v6479 = vunpack.c.l.b16 %v6470
      %v6480 = vunpack.c.l.b16 %v6471
      %v6481 = vunpack.c.l.b16 %v6472
      %v6482 = vunpack.c.l.b16 %v6473
      %v6483 = vpack.c.b16 %v6480, %v6479
      %v6484 = vpack.c.b16 %v6482, %v6481
      %v6486 = vsel %vm602, %v6483, 0
      %v6489 = vsel %vm602, %v6484, 0
      %v6492 = vsel %vm627, %v6474, 0
      %6494 = vmatprep.subr.bf16.mxu0 0
      %6495 = vmatpush1.bf16.msra.mxu0 %v6492
      %6496 = vmatprep.subr.bf16.mxu0 0
      %6497 = vmatpush1.bf16.msra.mxu0 0
      %6498 = vmatprep.subr.bf16.mxu0 0
      %6499 = vmatpush1.bf16.msra.mxu0 0
      %6500 = vmatprep.subr.bf16.mxu0 0
      %6501 = vmatpush1.bf16.msra.mxu0 0
      %6502 = vmatprep.subr.bf16.mxu0 0
      %6503 = vmatpush1.bf16.msra.mxu0 0
      %6504 = vmatprep.subr.bf16.mxu0 0
      %6505 = vmatpush1.bf16.msra.mxu0 0
      %6506 = vmatprep.subr.bf16.mxu0 0
      %6507 = vmatpush1.bf16.msra.mxu0 0
      %6508 = vmatprep.subr.bf16.mxu0 0
      %6509 = vmatpush1.bf16.msra.mxu0 0
      %6510 = vmatprep.subr.bf16.mxu0 0
      %6511 = vmatpush1.bf16.msra.mxu0 0
      %6512 = vmatprep.subr.bf16.mxu0 0
      %6513 = vmatpush1.bf16.msra.mxu0 0
      %6514 = vmatprep.subr.bf16.mxu0 0
      %6515 = vmatpush1.bf16.msra.mxu0 0
      %6516 = vmatprep.subr.bf16.mxu0 0
      %6517 = vmatpush1.bf16.msra.mxu0 0
      %6518 = vmatprep.subr.bf16.mxu0 0
      %6519 = vmatpush1.bf16.msra.mxu0 0
      %6520 = vmatprep.subr.bf16.mxu0 0
      %6521 = vmatpush1.bf16.msra.mxu0 0
      %6522 = vmatprep.subr.bf16.mxu0 0
      %6523 = vmatpush1.bf16.msra.mxu0 0
      %6524 = vmatprep.subr.bf16.mxu0 0
      %6525 = vmatpush1.bf16.msra.mxu0 0
      %6526 = vmatprep.mubr.bf16.mxu0 0
      %6527 = vmatmul.mubr.bf16.gmra.mrb[0].mxu0 %v6486
      %v6528 = vpop.f32.mrb[0].mxu0
      %v6529 = vadd.f32 0.0, %v6528
      %v6530 = vpop.f32.mrb[0].mxu0
      %v6531 = vpop.f32.mrb[0].mxu0
      %v6532 = vadd.f32 0.0, %v6531
      %v6533 = vpop.f32.mrb[0].mxu0
      %6534 = vmatprep.mubr.bf16.mxu0 0
      %6535 = vmatmul.mubr.bf16.gmra.mrb[0].mxu0 %v6489
      %v6536 = vpop.f32.mrb[0].mxu0
      %v6537 = vadd.f32 0.0, %v6536
      %v6538 = vpop.f32.mrb[0].mxu0
      %v6539 = vpop.f32.mrb[0].mxu0
      %v6540 = vadd.f32 0.0, %v6539
      %v6541 = vpop.f32.mrb[0].mxu0
      %6542 = vdwg.mxu0
      %v6543 = vadd.f32 %v6132, %v6529
      %v6544 = vadd.f32 %v6135, %v6532
      %v6545 = vadd.f32 %v6140, %v6537
      %v6546 = vadd.f32 %v6143, %v6540
      %v6547 = vld [vmem:[#allocation2 + $0x18] sm:$0xc0]
      %v6548 = vld [vmem:[#allocation2 + $0x38] sm:$0xc0]
      %v6549 = vld [vmem:[#allocation2 + $0x58] sm:$0xc0]
      %s6550 = scalar_lea.vmem %s5, 960
      %v6551 = vld [vmem:[%s6550] sm:$0xf]
      %v6552 = vld [vmem:[%s6550 + $0x4] sm:$0xf]
      %v6553 = vld [vmem:[%s6550 + $0x8] sm:$0xf]
      %v6554 = vld [vmem:[%s6550 + $0xc] sm:$0xf]
      %v6555 = vld [vmem:[%s6550 + $0x10] sm:$0xf]
      %v6556 = vld [vmem:[%s6550 + $0x14] sm:$0xf]
      %v6557 = vld [vmem:[%s6550 + $0x18] sm:$0xf]
      %v6558 = vld [vmem:[%s6550 + $0x1c] sm:$0xf]
      %v6559 = vld [vmem:[%s6550 + $0x20] sm:$0xf]
      %v6560 = vld [vmem:[%s6550 + $0x24] sm:$0xf]
      %v6561 = vld [vmem:[%s6550 + $0x28] sm:$0xf]
      %v6562 = vld [vmem:[%s6550 + $0x2c] sm:$0xf]
      %v6563 = vld [vmem:[%s6550 + $0x30] sm:$0xf]
      %v6564 = vld [vmem:[%s6550 + $0x34] sm:$0xf]
      %v6565 = vld [vmem:[%s6550 + $0x38] sm:$0xf]
      %v6566 = vld [vmem:[%s6550 + $0x3c] sm:$0xf]
      %v6567 = vunpack.c.l.bf16 %v6551
      %v6568 = vunpack.c.l.bf16 %v6552
      %v6569 = vunpack.c.l.bf16 %v6553
      %v6570 = vunpack.c.l.bf16 %v6554
      %v6571 = vunpack.c.l.bf16 %v6555
      %v6572 = vunpack.c.l.bf16 %v6556
      %v6573 = vunpack.c.l.bf16 %v6557
      %v6574 = vunpack.c.l.bf16 %v6558
      %v6575 = vunpack.c.l.bf16 %v6559
      %v6576 = vunpack.c.l.bf16 %v6560
      %v6577 = vunpack.c.l.bf16 %v6561
      %v6578 = vunpack.c.l.bf16 %v6562
      %v6579 = vunpack.c.l.bf16 %v6563
      %v6580 = vunpack.c.l.bf16 %v6564
      %v6581 = vunpack.c.l.bf16 %v6565
      %v6582 = vunpack.c.l.bf16 %v6566
      %v6584 = vrot.slane %v6548, 6
      %6586 = vxpose.xlu0.c.b16.start [1/8] %v6584, 128
      %6587 = vxpose.xlu0.c.b16.cont [2/8] 0, 128
      %6588 = vxpose.xlu0.c.b16.cont [3/8] 0, 128
      %6589 = vxpose.xlu0.c.b16.cont [4/8] 0, 128
      %6590 = vxpose.xlu0.c.b16.cont [5/8] 0, 128
      %6591 = vxpose.xlu0.c.b16.cont [6/8] 0, 128
      %6592 = vxpose.xlu0.c.b16.cont [7/8] 0, 128
      %6593 = vxpose.xlu0.c.b16.end [8/8] 0, 128
      %v6594 = vpop.trf.xlu0
      %v6595 = vpop.trf.xlu0
      %v6596 = vpop.trf.xlu0
      %v6597 = vpop.trf.xlu0
      %v6598 = vpop.trf.xlu0
      %v6599 = vpop.trf.xlu0
      %v6600 = vpop.trf.xlu0
      %v6601 = vpop.trf.xlu0
      %v6603 = vrot.slane %v6547, 6
      %v6605 = vsel %vm602, %v6594, 0
      %v6608 = vsel %vm602, %v6595, 0
      %v6611 = vsel %vm602, %v6596, 0
      %v6614 = vsel %vm602, %v6597, 0
      %v6617 = vsel %vm602, %v6598, 0
      %v6620 = vsel %vm602, %v6599, 0
      %v6623 = vsel %vm602, %v6600, 0
      %v6626 = vsel %vm602, %v6601, 0
      %v6629 = vsel %vm627, %v6603, 0
      %6631 = vmatprep.subr.bf16.mxu0 0
      %6632 = vmatpush1.bf16.msra.mxu0 %v6629
      %6633 = vmatprep.subr.bf16.mxu0 0
      %6634 = vmatpush1.bf16.msra.mxu0 0
      %6635 = vmatprep.subr.bf16.mxu0 0
      %6636 = vmatpush1.bf16.msra.mxu0 0
      %6637 = vmatprep.subr.bf16.mxu0 0
      %6638 = vmatpush1.bf16.msra.mxu0 0
      %6639 = vmatprep.subr.bf16.mxu0 0
      %6640 = vmatpush1.bf16.msra.mxu0 0
      %6641 = vmatprep.subr.bf16.mxu0 0
      %6642 = vmatpush1.bf16.msra.mxu0 0
      %6643 = vmatprep.subr.bf16.mxu0 0
      %6644 = vmatpush1.bf16.msra.mxu0 0
      %6645 = vmatprep.subr.bf16.mxu0 0
      %6646 = vmatpush1.bf16.msra.mxu0 0
      %6647 = vmatprep.subr.bf16.mxu0 0
      %6648 = vmatpush1.bf16.msra.mxu0 0
      %6649 = vmatprep.subr.bf16.mxu0 0
      %6650 = vmatpush1.bf16.msra.mxu0 0
      %6651 = vmatprep.subr.bf16.mxu0 0
      %6652 = vmatpush1.bf16.msra.mxu0 0
      %6653 = vmatprep.subr.bf16.mxu0 0
      %6654 = vmatpush1.bf16.msra.mxu0 0
      %6655 = vmatprep.subr.bf16.mxu0 0
      %6656 = vmatpush1.bf16.msra.mxu0 0
      %6657 = vmatprep.subr.bf16.mxu0 0
      %6658 = vmatpush1.bf16.msra.mxu0 0
      %6659 = vmatprep.subr.bf16.mxu0 0
      %6660 = vmatpush1.bf16.msra.mxu0 0
      %6661 = vmatprep.subr.bf16.mxu0 0
      %6662 = vmatpush1.bf16.msra.mxu0 0
      %6663 = vmatprep.mubr.bf16.mxu0 0
      %6664 = vmatmul.mubr.bf16.gmra.mrb[0].mxu0 %v6605
      %v6665 = vpop.f32.mrb[0].mxu0
      %v6666 = vadd.f32 %v6567, %v6665
      %v6667 = vpop.f32.mrb[0].mxu0
      %v6668 = vpop.f32.mrb[0].mxu0
      %v6669 = vadd.f32 %v6568, %v6668
      %v6670 = vpop.f32.mrb[0].mxu0
      %6671 = vmatprep.mubr.bf16.mxu0 0
      %6672 = vmatmul.mubr.bf16.gmra.mrb[0].mxu0 %v6608
      %v6673 = vpop.f32.mrb[0].mxu0
      %v6674 = vadd.f32 %v6569, %v6673
      %v6675 = vpop.f32.mrb[0].mxu0
      %v6676 = vpop.f32.mrb[0].mxu0
      %v6677 = vadd.f32 %v6570, %v6676
      %v6678 = vpop.f32.mrb[0].mxu0
      %6679 = vmatprep.mubr.bf16.mxu0 0
      %6680 = vmatmul.mubr.bf16.gmra.mrb[0].mxu0 %v6611
      %v6681 = vpop.f32.mrb[0].mxu0
      %v6682 = vadd.f32 %v6571, %v6681
      %v6683 = vpop.f32.mrb[0].mxu0
      %v6684 = vpop.f32.mrb[0].mxu0
      %v6685 = vadd.f32 %v6572, %v6684
      %v6686 = vpop.f32.mrb[0].mxu0
      %6687 = vmatprep.mubr.bf16.mxu0 0
      %6688 = vmatmul.mubr.bf16.gmra.mrb[0].mxu0 %v6614
      %v6689 = vpop.f32.mrb[0].mxu0
      %v6690 = vadd.f32 %v6573, %v6689
      %v6691 = vpop.f32.mrb[0].mxu0
      %v6692 = vpop.f32.mrb[0].mxu0
      %v6693 = vadd.f32 %v6574, %v6692
      %v6694 = vpop.f32.mrb[0].mxu0
      %6695 = vmatprep.mubr.bf16.mxu0 0
      %6696 = vmatmul.mubr.bf16.gmra.mrb[0].mxu0 %v6617
      %v6697 = vpop.f32.mrb[0].mxu0
      %v6698 = vadd.f32 %v6575, %v6697
      %v6699 = vpop.f32.mrb[0].mxu0
      %v6700 = vpop.f32.mrb[0].mxu0
      %v6701 = vadd.f32 %v6576, %v6700
      %v6702 = vpop.f32.mrb[0].mxu0
      %6703 = vmatprep.mubr.bf16.mxu0 0
      %6704 = vmatmul.mubr.bf16.gmra.mrb[0].mxu0 %v6620
      %v6705 = vpop.f32.mrb[0].mxu0
      %v6706 = vadd.f32 %v6577, %v6705
      %v6707 = vpop.f32.mrb[0].mxu0
      %v6708 = vpop.f32.mrb[0].mxu0
      %v6709 = vadd.f32 %v6578, %v6708
      %v6710 = vpop.f32.mrb[0].mxu0
      %6711 = vmatprep.mubr.bf16.mxu0 0
      %6712 = vmatmul.mubr.bf16.gmra.mrb[0].mxu0 %v6623
      %v6713 = vpop.f32.mrb[0].mxu0
      %v6714 = vadd.f32 %v6579, %v6713
      %v6715 = vpop.f32.mrb[0].mxu0
      %v6716 = vpop.f32.mrb[0].mxu0
      %v6717 = vadd.f32 %v6580, %v6716
      %v6718 = vpop.f32.mrb[0].mxu0
      %6719 = vmatprep.mubr.bf16.mxu0 0
      %6720 = vmatmul.mubr.bf16.gmra.mrb[0].mxu0 %v6626
      %v6721 = vpop.f32.mrb[0].mxu0
      %v6722 = vadd.f32 %v6581, %v6721
      %v6723 = vpop.f32.mrb[0].mxu0
      %v6724 = vpop.f32.mrb[0].mxu0
      %v6725 = vadd.f32 %v6582, %v6724
      %v6726 = vpop.f32.mrb[0].mxu0
      %6727 = vdwg.mxu0
      %v6728 = vmax.f32 %v6666, %v6682
      %v6729 = vmax.f32 %v6669, %v6685
      %v6730 = vmax.f32 %v6674, %v6690
      %v6731 = vmax.f32 %v6677, %v6693
      %v6732 = vmax.f32 %v6728, %v6698
      %v6733 = vmax.f32 %v6729, %v6701
      %v6734 = vmax.f32 %v6730, %v6706
      %v6735 = vmax.f32 %v6731, %v6709
      %v6736 = vmax.f32 %v6732, %v6714
      %v6737 = vmax.f32 %v6733, %v6717
      %v6738 = vmax.f32 %v6734, %v6722
      %v6739 = vmax.f32 %v6735, %v6725
      %v6740 = vmax.f32 %v6736, %v6737
      %v6741 = vmax.f32 %v6738, %v6739
      %v6742 = vmax.f32 %v6740, %v6741
      %v6743 = vrot.slane %v6742, 4
      %v6744 = vmax.f32 %v6742, %v6743
      %v6745 = vrot.slane %v6744, 2
      %v6746 = vmax.f32 %v6744, %v6745
      %v6747 = vrot.slane %v6746, 1
      %v6748 = vmax.f32 %v6746, %v6747
      %v6749 = vsub.f32 %v6666, %v6748
      %v6750 = vsub.f32 %v6669, %v6748
      %v6751 = vsub.f32 %v6674, %v6748
      %v6752 = vsub.f32 %v6677, %v6748
      %v6753 = vsub.f32 %v6682, %v6748
      %v6754 = vsub.f32 %v6685, %v6748
      %v6755 = vsub.f32 %v6690, %v6748
      %v6756 = vsub.f32 %v6693, %v6748
      %v6757 = vsub.f32 %v6698, %v6748
      %v6758 = vsub.f32 %v6701, %v6748
      %v6759 = vsub.f32 %v6706, %v6748
      %v6760 = vsub.f32 %v6709, %v6748
      %v6761 = vsub.f32 %v6714, %v6748
      %v6762 = vsub.f32 %v6717, %v6748
      %v6763 = vsub.f32 %v6722, %v6748
      %v6764 = vsub.f32 %v6725, %v6748
      %v6765 = vmul.f32 %v6749, 1.442695
      %v6766 = vpow.pop %v6765
      %v6767 = vmul.f32 %v6750, 1.442695
      %v6768 = vpow.pop %v6767
      %v6769 = vmul.f32 %v6751, 1.442695
      %v6770 = vpow.pop %v6769
      %v6771 = vmul.f32 %v6752, 1.442695
      %v6772 = vpow.pop %v6771
      %v6773 = vmul.f32 %v6753, 1.442695
      %v6774 = vpow.pop %v6773
      %v6775 = vmul.f32 %v6754, 1.442695
      %v6776 = vpow.pop %v6775
      %v6777 = vmul.f32 %v6755, 1.442695
      %v6778 = vpow.pop %v6777
      %v6779 = vmul.f32 %v6756, 1.442695
      %v6780 = vpow.pop %v6779
      %v6781 = vmul.f32 %v6757, 1.442695
      %v6782 = vpow.pop %v6781
      %v6783 = vmul.f32 %v6758, 1.442695
      %v6784 = vpow.pop %v6783
      %v6785 = vmul.f32 %v6759, 1.442695
      %v6786 = vpow.pop %v6785
      %v6787 = vmul.f32 %v6760, 1.442695
      %v6788 = vpow.pop %v6787
      %v6789 = vmul.f32 %v6761, 1.442695
      %v6790 = vpow.pop %v6789
      %v6791 = vmul.f32 %v6762, 1.442695
      %v6792 = vpow.pop %v6791
      %v6793 = vmul.f32 %v6763, 1.442695
      %v6794 = vpow.pop %v6793
      %v6795 = vmul.f32 %v6764, 1.442695
      %v6796 = vpow.pop %v6795
      %v6797 = vadd.f32 %v6766, %v6768
      %v6798 = vadd.f32 %v6797, %v6770
      %v6799 = vadd.f32 %v6798, %v6772
      %v6800 = vadd.f32 %v6799, %v6774
      %v6801 = vadd.f32 %v6800, %v6776
      %v6802 = vadd.f32 %v6801, %v6778
      %v6803 = vadd.f32 %v6802, %v6780
      %v6804 = vadd.f32 %v6803, %v6782
      %v6805 = vadd.f32 %v6804, %v6784
      %v6806 = vadd.f32 %v6805, %v6786
      %v6807 = vadd.f32 %v6806, %v6788
      %v6808 = vadd.f32 %v6807, %v6790
      %v6809 = vadd.f32 %v6808, %v6792
      %v6810 = vadd.f32 %v6809, %v6794
      %v6811 = vadd.f32 %v6810, %v6796
      %v6812 = vrot.slane %v6811, 4
      %v6813 = vadd.f32 %v6811, %v6812
      %v6814 = vrot.slane %v6813, 2
      %v6815 = vadd.f32 %v6813, %v6814
      %v6816 = vrot.slane %v6815, 1
      %v6817 = vadd.f32 %v6815, %v6816
      %v6818 = vpack.c.bf16 %v6768, %v6766
      %v6819 = vpack.c.bf16 %v6772, %v6770
      %v6820 = vpack.c.bf16 %v6776, %v6774
      %v6821 = vpack.c.bf16 %v6780, %v6778
      %v6822 = vpack.c.bf16 %v6784, %v6782
      %v6823 = vpack.c.bf16 %v6788, %v6786
      %v6824 = vpack.c.bf16 %v6792, %v6790
      %v6825 = vpack.c.bf16 %v6796, %v6794
      %v6827 = vrot.slane %v6549, 6
      %6829 = vmatprep.subr.bf16.mxu0 0
      %6830 = vmatpush1.bf16.msra.mxu0 %v6818
      %6831 = vmatprep.subr.bf16.mxu0 0
      %6832 = vmatpush1.bf16.msra.mxu0 %v6819
      %6833 = vmatprep.subr.bf16.mxu0 0
      %6834 = vmatpush1.bf16.msra.mxu0 %v6820
      %6835 = vmatprep.subr.bf16.mxu0 0
      %6836 = vmatpush1.bf16.msra.mxu0 %v6821
      %6837 = vmatprep.subr.bf16.mxu0 0
      %6838 = vmatpush1.bf16.msra.mxu0 %v6822
      %6839 = vmatprep.subr.bf16.mxu0 0
      %6840 = vmatpush1.bf16.msra.mxu0 %v6823
      %6841 = vmatprep.subr.bf16.mxu0 0
      %6842 = vmatpush1.bf16.msra.mxu0 %v6824
      %6843 = vmatprep.subr.bf16.mxu0 0
      %6844 = vmatpush1.bf16.msra.mxu0 %v6825
      %6845 = vmatprep.subr.bf16.mxu0 0
      %6846 = vmatpush1.bf16.msra.mxu0 0
      %6847 = vmatprep.subr.bf16.mxu0 0
      %6848 = vmatpush1.bf16.msra.mxu0 0
      %6849 = vmatprep.subr.bf16.mxu0 0
      %6850 = vmatpush1.bf16.msra.mxu0 0
      %6851 = vmatprep.subr.bf16.mxu0 0
      %6852 = vmatpush1.bf16.msra.mxu0 0
      %6853 = vmatprep.subr.bf16.mxu0 0
      %6854 = vmatpush1.bf16.msra.mxu0 0
      %6855 = vmatprep.subr.bf16.mxu0 0
      %6856 = vmatpush1.bf16.msra.mxu0 0
      %6857 = vmatprep.subr.bf16.mxu0 0
      %6858 = vmatpush1.bf16.msra.mxu0 0
      %6859 = vmatprep.subr.bf16.mxu0 0
      %6860 = vmatpush1.bf16.msra.mxu0 0
      %6861 = vmatprep.mubr.bf16.mxu0 0
      %6862 = vmatmul.mubr.bf16.gmra.mrb[0].mxu0 %v6827
      %v6863 = vpop.f32.mrb[0].mxu0
      %v6864 = vadd.f32 0.0, %v6863
      %v6865 = vpop.f32.mrb[0].mxu0
      %v6866 = vpop.f32.mrb[0].mxu0
      %v6867 = vpop.f32.mrb[0].mxu0
      %6868 = vdwg.mxu0
      %v6869 = vrcp.pop %v6817
      %v6870 = vmul.f32 %v6864, %v6869
      %v6871 = vld [vmem:[%s3657] sm:$0xf]
      %v6872 = vld [vmem:[%s3657 + $0x4] sm:$0xf]
      %v6873 = vld [vmem:[%s3657 + $0x8] sm:$0xf]
      %v6874 = vld [vmem:[%s3657 + $0xc] sm:$0xf]
      %v6875 = vpack.c.bf16 %v6870, %v6870
      %v6880 = vunpack.c.l.b16 %v6871
      %v6881 = vunpack.c.l.b16 %v6872
      %v6882 = vunpack.c.l.b16 %v6873
      %v6883 = vunpack.c.l.b16 %v6874
      %v6884 = vpack.c.b16 %v6881, %v6880
      %v6885 = vpack.c.b16 %v6883, %v6882
      %v6887 = vsel %vm602, %v6884, 0
      %v6890 = vsel %vm602, %v6885, 0
      %v6893 = vsel %vm627, %v6875, 0
      %6895 = vmatprep.subr.bf16.mxu0 0
      %6896 = vmatpush1.bf16.msra.mxu0 %v6893
      %6897 = vmatprep.subr.bf16.mxu0 0
      %6898 = vmatpush1.bf16.msra.mxu0 0
      %6899 = vmatprep.subr.bf16.mxu0 0
      %6900 = vmatpush1.bf16.msra.mxu0 0
      %6901 = vmatprep.subr.bf16.mxu0 0
      %6902 = vmatpush1.bf16.msra.mxu0 0
      %6903 = vmatprep.subr.bf16.mxu0 0
      %6904 = vmatpush1.bf16.msra.mxu0 0
      %6905 = vmatprep.subr.bf16.mxu0 0
      %6906 = vmatpush1.bf16.msra.mxu0 0
      %6907 = vmatprep.subr.bf16.mxu0 0
      %6908 = vmatpush1.bf16.msra.mxu0 0
      %6909 = vmatprep.subr.bf16.mxu0 0
      %6910 = vmatpush1.bf16.msra.mxu0 0
      %6911 = vmatprep.subr.bf16.mxu0 0
      %6912 = vmatpush1.bf16.msra.mxu0 0
      %6913 = vmatprep.subr.bf16.mxu0 0
      %6914 = vmatpush1.bf16.msra.mxu0 0
      %6915 = vmatprep.subr.bf16.mxu0 0
      %6916 = vmatpush1.bf16.msra.mxu0 0
      %6917 = vmatprep.subr.bf16.mxu0 0
      %6918 = vmatpush1.bf16.msra.mxu0 0
      %6919 = vmatprep.subr.bf16.mxu0 0
      %6920 = vmatpush1.bf16.msra.mxu0 0
      %6921 = vmatprep.subr.bf16.mxu0 0
      %6922 = vmatpush1.bf16.msra.mxu0 0
      %6923 = vmatprep.subr.bf16.mxu0 0
      %6924 = vmatpush1.bf16.msra.mxu0 0
      %6925 = vmatprep.subr.bf16.mxu0 0
      %6926 = vmatpush1.bf16.msra.mxu0 0
      %6927 = vmatprep.mubr.bf16.mxu0 0
      %6928 = vmatmul.mubr.bf16.gmra.mrb[0].mxu0 %v6887
      %v6929 = vpop.f32.mrb[0].mxu0
      %v6930 = vadd.f32 0.0, %v6929
      %v6931 = vpop.f32.mrb[0].mxu0
      %v6932 = vpop.f32.mrb[0].mxu0
      %v6933 = vadd.f32 0.0, %v6932
      %v6934 = vpop.f32.mrb[0].mxu0
      %6935 = vmatprep.mubr.bf16.mxu0 0
      %6936 = vmatmul.mubr.bf16.gmra.mrb[0].mxu0 %v6890
      %v6937 = vpop.f32.mrb[0].mxu0
      %v6938 = vadd.f32 0.0, %v6937
      %v6939 = vpop.f32.mrb[0].mxu0
      %v6940 = vpop.f32.mrb[0].mxu0
      %v6941 = vadd.f32 0.0, %v6940
      %v6942 = vpop.f32.mrb[0].mxu0
      %6943 = vdwg.mxu0
      %v6944 = vadd.f32 %v6543, %v6930
      %v6945 = vadd.f32 %v6544, %v6933
      %v6946 = vadd.f32 %v6545, %v6938
      %v6947 = vadd.f32 %v6546, %v6941
      %v6948 = vld [vmem:[%s4] sm:$0xff]
      %v6949 = vld [vmem:[%s4 + $0x8] sm:$0xff]
      %v6950 = vld [vmem:[%s4 + $0x10] sm:$0xff]
      %v6951 = vld [vmem:[%s4 + $0x18] sm:$0xff]
      %6953 = vset.pattern.permute.xlu0 0
      %6954 = vperm.xlu0 %6953, %v6948
      %v6955 = vpop.permute.xlu0 %6954
      %6958 = vset.pattern.permute.xlu0 0
      %6959 = vperm.xlu0 %6958, %v6949
      %v6960 = vpop.permute.xlu0 %6959
      %6963 = vset.pattern.permute.xlu0 0
      %6964 = vperm.xlu0 %6963, %v6950
      %v6965 = vpop.permute.xlu0 %6964
      %6968 = vset.pattern.permute.xlu0 0
      %6969 = vperm.xlu0 %6968, %v6951
      %v6970 = vpop.permute.xlu0 %6969
      %v6972 = vadd.f32 %v5356, %v6955
      %v6973 = vadd.f32 %v5357, %v6960
      %v6974 = vadd.f32 %v5358, %v6965
      %v6975 = vadd.f32 %v5359, %v6970
      %6976 = vst [vmem:[%s251 + $0x8] sm:$0xff] %v6972
      %6977 = vst [vmem:[%s251 + $0x18] sm:$0xff] %v6973
      %6978 = vst [vmem:[%s251 + $0x28] sm:$0xff] %v6974
      %6979 = vst [vmem:[%s251 + $0x38] sm:$0xff] %v6975
      %6980 = vst [vmem:[%s3767 + $0x8] sm:$0xff] %v6944
      %6981 = vst [vmem:[%s3767 + $0x18] sm:$0xff] %v6945
      %6982 = vst [vmem:[%s3767 + $0x28] sm:$0xff] %v6946
      %6983 = vst [vmem:[%s3767 + $0x38] sm:$0xff] %v6947
      %p6984 = scmp.lt.s32.totalorder %s17, 1
      %s6985 = scalar_select %p6984, %s17, 1
      %s6986 = smul.addr %s6985, 16
      %s6987 = smul.addr %s6986, 8
      %s6988 = scalar_lea.vmem %s6, %s6987
      // Predicated region
      $region45: #{_lambda_.1} parent=43 // pred_check
        %p6989 = pneg %p166
      $region46: #{_lambda_.1} parent=43 // pred_check_branch
        %6991 = sbr.rel (%p6989) target = $region48
      $region47: #{_lambda_.1} parent=43 // pred_region
        _
      $region48: #{_lambda_.1} parent=43 // pred_fallthru
        _
    $region44: #{_lambda_.1} parent=5 // pred_fallthru
      _
    %p6992 = scmp.le.s32.totalorder 2, %s12
    // Predicated region
    $region49: #{_lambda_.1} parent=5 // pred_check
      %p6993 = pneg %p6992
    $region50: #{_lambda_.1} parent=5 // pred_check_branch
      %6995 = sbr.rel (%p6993) target = $region52
    $region51: #{_lambda_.1} parent=5 // pred_region
      %s6996 = ssub.s32 %s12, 2
      // Predicated region
      $region53: #{_lambda_.1} parent=51 // pred_check
        %p6997 = pneg %p172
      $region54: #{_lambda_.1} parent=51 // pred_check_branch
        %6999 = sbr.rel (%p6997) target = $region56
      $region55: #{_lambda_.1} parent=51 // pred_region
        %p7000 = scmp.lt.s32.totalorder %s18, 1
        %s7001 = scalar_select %p7000, %s18, 1
        %s7002 = smul.addr %s7001, 16
        %s7003 = smul.addr %s7002, 8
        %s7004 = scalar_lea.vmem %s6, %s7003
      $region56: #{_lambda_.1} parent=51 // pred_fallthru
        _
    $region52: #{_lambda_.1} parent=5 // pred_fallthru
      _
  $region6: #{_lambda_.1} parent=0 // loop_footer
    %s16 = sadd.s32 1, %s12
  $region7: #{_lambda_.1} parent=0 // loop_footer_branch
    %11 = sbr.rel target = $region3
  $region8: #{_lambda_.1} parent=0 // loop_exit
    _

</llo_original>
